<compile_context>
chip_gen: v7x
topology: tpu7x:2x2x1
jax: 0.10.0
libtpu: 0.0.40
codegen_flags: <defaults>
</compile_context>

<pallas_src>
import functools
import numpy as np

import jax
import jax.numpy as jnp
from jax import lax
from jax.experimental import pallas as pl
from jax.experimental.pallas import tpu as pltpu

# ----------------------- small config (consistent with E2E defaults, scaled down) ----------
IDIM = 8          # input feature dim
ODIM = 12         # output vocab size (blank=0, sos=eos=ODIM-1)
ELAYERS = 2       # encoder blstmp layers
EUNITS = 16       # encoder LSTM hidden per direction
EPROJS = 16       # encoder projection units
ADIM = 16         # attention transformation dim (dot attention)
DUNITS = 16       # decoder LSTM units
MTLALPHA = 0.5
BLANK = 0
SOS = EOS = ODIM - 1
IGNORE_ID = -1
ATT_SCALING = 2.0  # espnet AttDot scaling
UNROLL = 8         # cap recurrence unroll (review: avoid vreg spills at realistic T/L)

F32 = jnp.float32
BF16 = jnp.bfloat16
_VMEM = pl.BlockSpec(memory_space=pltpu.MemorySpace.VMEM)
_COMPILER_PARAMS = pltpu.CompilerParams(vmem_limit_bytes=32 * 1024 * 1024)


# ----------------------------- fused BLSTMP encoder layer kernel ---------------------------
def _blstmp_layer_kernel(x_ref, ilc_ref, ilr_ref, wih_ref, bih_ref,
                         whhf_ref, whhb_ref, wpf_ref, wpb_ref, bp_ref,
                         y_ref, gf_scr, gb_scr, hf_scr, hb_scr, *, last):
    # One fused BLSTMP layer (bidirectional LSTM + bt projection + pad handling).
    #   x_ref   : (T, B, F)  time-major layer input
    #   ilc/ilr : (B,1)/(1,B) int32 sequence lengths
    #   wih     : (F, 8H)    [W_ih_fwd | W_ih_bwd] pre-transposed, bih (1, 8H)
    #   whhf/b  : (H, 4H)    per-direction recurrent weights
    #   wpf/wpb : (H, P)     projection weight split by direction (rows of the (2H,P) matrix)
    #   y_ref   : (T, B, P)  tanh(proj) for non-last layers; last layer: proj with padded
    #                        frames zeroed (== espnet Encoder masked_fill)
    T, B, _ = x_ref.shape
    H = whhf_ref.shape[0]
    G = 4 * H

    # ---- hoisted input->gate matmul for BOTH directions and all T (one MXU matmul) ----
    x_flat = x_ref[...].reshape(T * B, x_ref.shape[2])
    g_all = jnp.dot(x_flat.astype(BF16), wih_ref[...].astype(BF16),
                    preferred_element_type=jnp.float32) + bih_ref[...]
    g_all = g_all.reshape(T, B, 2 * G)
    gf_scr[...] = g_all[:, :, :G]
    gb_scr[...] = g_all[:, :, G:]

    il_col = ilc_ref[...]                       # (B, 1) int32
    whhf = whhf_ref[...]
    whhb = whhb_ref[...]

    def lstm_gates(pre, c):
        # PyTorch gate order i, f, g, o.  NOTE: keep 4H a multiple of 128 at realistic H
        # so these slices are lane-aligned.
        i = jax.nn.sigmoid(pre[:, 0:H])
        f = jax.nn.sigmoid(pre[:, H:2 * H])
        g = jnp.tanh(pre[:, 2 * H:3 * H])
        o = jax.nn.sigmoid(pre[:, 3 * H:4 * H])
        c_new = f * c + i * g
        h_new = o * jnp.tanh(c_new)
        return h_new, c_new

    # ---- single time loop, two independent direction chains (no per-step concat/select) ---
    def step(s, carry):
        hf, cf, hb, cb = carry
        t_b = T - 1 - s
        # forward chain (original time s)
        pre_f = gf_scr[s] + jnp.dot(hf, whhf, preferred_element_type=jnp.float32)
        hf, cf = lstm_gates(pre_f, cf)
        hf_scr[pl.ds(s, 1)] = hf[None]
        # backward chain (original time T-1-s); length-gated start replaces the
        # pack_padded per-sequence reversal: state stays 0 until t_b < ilens[b]
        pre_b = gb_scr[t_b] + jnp.dot(hb, whhb, preferred_element_type=jnp.float32)
        hb_c, cb_c = lstm_gates(pre_b, cb)
        upd = t_b < il_col                      # (B, 1) bool
        hb = jnp.where(upd, hb_c, hb)
        cb = jnp.where(upd, cb_c, cb)
        hb_scr[pl.ds(t_b, 1)] = hb[None]
        return hf, cf, hb, cb

    zero = jnp.zeros((B, H), jnp.float32)
    lax.fori_loop(0, T, step, (zero, zero, zero, zero), unroll=min(T, UNROLL))

    # ---- hoisted projection over all T (fused w_bt), single dense output-slab store ----
    valid_h = lax.broadcasted_iota(jnp.int32, (T, B, H), 0) < il_col   # (B,1) bcast -> (T,B,H)
    hf_all = jnp.where(valid_h, hf_scr[...], 0.0).reshape(T * B, H)    # pad_packed zeros
    hb_all = hb_scr[...].reshape(T * B, H)                             # already 0 on pads
    proj = (jnp.dot(hf_all.astype(BF16), wpf_ref[...].astype(BF16),
                    preferred_element_type=jnp.float32)
            + jnp.dot(hb_all.astype(BF16), wpb_ref[...].astype(BF16),
                      preferred_element_type=jnp.float32)) + bp_ref[...]
    P = y_ref.shape[2]
    y = proj.reshape(T, B, P)
    if last:
        valid_p = lax.broadcasted_iota(jnp.int32, (T, B, P), 0) < il_col
        y = jnp.where(valid_p, y, 0.0)          # espnet Encoder masked_fill(pad, 0)
    else:
        y = jnp.tanh(y)
    y_ref[...] = y


def pallas_blstmp_layer(x_tm, ilens_col, ilens_row, p, last):
    T, B, _ = x_tm.shape
    H = EUNITS
    P = p["w_bt_f"].shape[1]
    return pl.pallas_call(
        functools.partial(_blstmp_layer_kernel, last=last),
        out_shape=jax.ShapeDtypeStruct((T, B, P), F32),
        in_specs=[_VMEM] * 10,
        out_specs=_VMEM,
        scratch_shapes=[pltpu.VMEM((T, B, 4 * H), F32),
                        pltpu.VMEM((T, B, 4 * H), F32),
                        pltpu.VMEM((T, B, H), F32),
                        pltpu.VMEM((T, B, H), F32)],
        compiler_params=_COMPILER_PARAMS,
    )(x_tm.astype(F32), ilens_col, ilens_row,
      p["w_ih"], p["b_ih"].reshape(1, -1),
      p["w_hh_f"], p["w_hh_b"],
      p["w_bt_f"], p["w_bt_b"], p["b_bt"].reshape(1, -1))


# ----------------------- fused CTC + attention-encoder-projection head ---------------------
def _head_kernel(x_ref, w_ref, b_ref, logp_ref, encp_ref):
    # One read of hs_pad, one MXU matmul with RHS = [W_ctc | W_mlp_enc]:
    #   logp = log_softmax(hs @ W_ctc + b_ctc)   (CTC branch)
    #   encp = tanh(hs @ W_mlp_enc + b_mlp_enc)  (AttDot pre_compute_enc_h)
    y = jnp.dot(x_ref[...].astype(BF16), w_ref[...].astype(BF16),
                preferred_element_type=jnp.float32) + b_ref[...]
    yc = y[:, :ODIM]
    m = jnp.max(yc, axis=-1, keepdims=True)
    lse = jnp.log(jnp.sum(jnp.exp(yc - m), axis=-1, keepdims=True)) + m
    logp_ref[...] = yc - lse
    encp_ref[...] = jnp.tanh(y[:, ODIM:])


def pallas_ctc_att_head(x, w_cat, b_cat):
    N, P = x.shape
    # Single row-block grid marked 'parallel' (lets the 2nd TensorCore share work on v7x).
    # TODO(synk): at realistic B*T split rows into multiple (8k, 128)-aligned blocks.
    return pl.pallas_call(
        _head_kernel,
        grid=(1,),
        out_shape=(jax.ShapeDtypeStruct((N, ODIM), F32),
                   jax.ShapeDtypeStruct((N, ADIM), F32)),
        in_specs=[pl.BlockSpec((N, P), lambda i: (i, 0)),
                  pl.BlockSpec((P, ODIM + ADIM), lambda i: (0, 0)),
                  pl.BlockSpec((1, ODIM + ADIM), lambda i: (0, 0))],
        out_specs=(pl.BlockSpec((N, ODIM), lambda i: (i, 0)),
                   pl.BlockSpec((N, ADIM), lambda i: (i, 0))),
        compiler_params=pltpu.CompilerParams(dimension_semantics=("parallel",),
                                             vmem_limit_bytes=32 * 1024 * 1024),
    )(x.astype(F32), w_cat.astype(F32), b_cat.reshape(1, -1).astype(F32))


# -------------------------------- attention decoder kernel ---------------------------------
def _decoder_kernel(enc_ref, encp_ref, mask_ref, emb_ref,
                    wdec_ref, bdec_ref, wih_e_ref, wih_a_ref, bg_ref,
                    whh_ref, wout_ref, bout_ref,
                    o_ref, gemb_scr, hdec_scr):
    # AttDot attention + 1-layer LSTMCell decoder + output linear.
    #   enc:(B,T,P) (padded frames already 0), encp:(B,T,A), mask:(B,T) 1=valid,
    #   emb:(L,B,D) time-major, o:(L,B,V).  Weights pre-transposed to (in, out).
    L, B, D = emb_ref.shape
    enc = enc_ref[...]
    encp = encp_ref[...]
    mask = (mask_ref[...] > 0.0)[:, None, :]                 # (B,1,T)
    wdec = wdec_ref[...]
    bdec = bdec_ref[...]
    wih_a = wih_a_ref[...]
    whh = whh_ref[...]
    neg = jnp.float32(-1e30)

    # ---- hoisted: embedding half of the LSTMCell input matmul + gate bias, for all L ----
    gemb = jnp.dot(emb_ref[...].reshape(L * B, D).astype(BF16),
                   wih_e_ref[...].astype(BF16),
                   preferred_element_type=jnp.float32) + bg_ref[...]
    gemb_scr[...] = gemb.reshape(L, B, 4 * D)

    def step(l, carry):
        h, c = carry
        # --- AttDot attention (scaling=2.0 applied BEFORE masking; MXU batched matmuls) ---
        dec_p = jnp.tanh(jnp.dot(h, wdec, preferred_element_type=jnp.float32) + bdec)   # (B,A)
        e = jnp.einsum('bqa,bta->bqt', dec_p[:, None, :], encp,
                       preferred_element_type=jnp.float32)                              # (B,1,T)
        e = jnp.where(mask, ATT_SCALING * e, neg)
        w = jax.nn.softmax(e, axis=-1)
        att_c = jnp.einsum('bqt,btp->bqp', w, enc,
                           preferred_element_type=jnp.float32)[:, 0, :]                 # (B,P)
        # --- LSTMCell gates = gemb[l] + att_c @ W_ih_att + h @ W_hh (no per-step concat) ---
        gates = (gemb_scr[l]
                 + jnp.dot(att_c, wih_a, preferred_element_type=jnp.float32)
                 + jnp.dot(h, whh, preferred_element_type=jnp.float32))
        i = jax.nn.sigmoid(gates[:, 0:D])
        f = jax.nn.sigmoid(gates[:, D:2 * D])
        g = jnp.tanh(gates[:, 2 * D:3 * D])
        og = jax.nn.sigmoid(gates[:, 3 * D:4 * D])
        c = f * c + i * g
        h = og * jnp.tanh(c)
        hdec_scr[pl.ds(l, 1)] = h[None]
        return h, c

    zero = jnp.zeros((B, D), jnp.float32)
    lax.fori_loop(0, L, step, (zero, zero), unroll=min(L, UNROLL))

    # ---- hoisted output projection: one matmul + one dense logits store ----
    h_all = hdec_scr[...].reshape(L * B, D)
    logits = jnp.dot(h_all.astype(BF16), wout_ref[...].astype(BF16),
                     preferred_element_type=jnp.float32) + bout_ref[...]
    o_ref[...] = logits.reshape(L, B, o_ref.shape[2])


def pallas_decoder(enc, encp, att_mask, emb, dp):
    L, B, _ = emb.shape
    V = dp["w_out"].shape[1]
    return pl.pallas_call(
        _decoder_kernel,
        out_shape=jax.ShapeDtypeStruct((L, B, V), F32),
        in_specs=[_VMEM] * 12,
        out_specs=_VMEM,
        scratch_shapes=[pltpu.VMEM((L, B, 4 * DUNITS), F32),
                        pltpu.VMEM((L, B, DUNITS), F32)],
        compiler_params=_COMPILER_PARAMS,
    )(enc.astype(F32), encp.astype(F32), att_mask.astype(F32), emb.astype(F32),
      dp["w_mlp_dec"], dp["b_mlp_dec"].reshape(1, -1),
      dp["w_ih_emb"], dp["w_ih_att"], dp["b_gates"].reshape(1, -1),
      dp["w_hh"], dp["w_out"], dp["b_out"].reshape(1, -1))


# -------------------------------------- CTC loss (plain JAX DP) ----------------------------
def ctc_loss_single(logp, t_len, labels, u_len):
    """Standard CTC negative log-likelihood for one sequence (log-domain forward algorithm)."""
    Tmax, _ = logp.shape
    Umax = labels.shape[0]
    S = 2 * Umax + 1
    neg_inf = jnp.float32(-1e30)

    ext = jnp.zeros((S,), jnp.int32).at[1::2].set(labels)             # blank-interleaved labels
    same_as_two_back = jnp.concatenate([jnp.array([True, True]), ext[2:] == ext[:-2]])
    allow_skip = jnp.logical_and(ext != BLANK, jnp.logical_not(same_as_two_back))

    alpha0 = jnp.full((S,), neg_inf)
    alpha0 = alpha0.at[0].set(logp[0, BLANK])
    alpha0 = alpha0.at[1].set(logp[0, ext[1]])

    def step(alpha, t):
        lp_t = logp[t][ext]
        a0 = alpha
        a1 = jnp.concatenate([jnp.full((1,), neg_inf), alpha[:-1]])
        a2 = jnp.concatenate([jnp.full((2,), neg_inf), alpha[:-2]])
        a2 = jnp.where(allow_skip, a2, neg_inf)
        m = jnp.maximum(jnp.maximum(a0, a1), a2)
        lse = m + jnp.log(jnp.exp(a0 - m) + jnp.exp(a1 - m) + jnp.exp(a2 - m))
        new_alpha = lse + lp_t
        new_alpha = jnp.where(t < t_len, new_alpha, alpha)            # freeze after true length
        return new_alpha, None

    alpha_final, _ = lax.scan(step, alpha0, jnp.arange(1, Tmax))
    s_eff = 2 * u_len + 1
    a_last = alpha_final[s_eff - 1]
    a_prev = alpha_final[s_eff - 2]
    m = jnp.maximum(a_last, a_prev)
    ll = m + jnp.log(jnp.exp(a_last - m) + jnp.exp(a_prev - m))
    return -ll


# -------------------------------------- full forward ---------------------------------------
def e2e_forward(params, xs_pad, ilens, ys_pad):
    B, T, _ = xs_pad.shape
    ilens = ilens.astype(jnp.int32)
    ilens_col = ilens.reshape(B, 1)
    ilens_row = ilens.reshape(1, B)

    # ---- Encoder: blstmp stack, kept time-major (one transpose in, one out) ----
    x_tm = jnp.transpose(xs_pad.astype(F32), (1, 0, 2))               # (T, B, idim)
    for li, p in enumerate(params["enc"]):
        x_tm = pallas_blstmp_layer(x_tm, ilens_col, ilens_row, p, last=(li == ELAYERS - 1))
    hs_pad = jnp.transpose(x_tm, (1, 0, 2))                           # (B, T, P), pads == 0
    hlens = ilens

    # ---- fused CTC head + attention encoder projection (single read of hs_pad) ----
    logp_flat, encp_flat = pallas_ctc_att_head(hs_pad.reshape(B * T, EPROJS),
                                               params["head"]["w"], params["head"]["b"])
    logp = logp_flat.reshape(B, T, ODIM)
    encp = encp_flat.reshape(B, T, ADIM)

    # ---- CTC branch: DP loss, batch-averaged ----
    ys_mask = ys_pad != IGNORE_ID
    olens = jnp.sum(ys_mask, axis=1).astype(jnp.int32)
    labels = jnp.where(ys_mask, ys_pad, 0).astype(jnp.int32)
    loss_ctc = jnp.mean(jax.vmap(ctc_loss_single)(logp, hlens, labels, olens))

    # ---- Attention decoder branch ----
    ys_in = jnp.concatenate(
        [jnp.full((B, 1), SOS, jnp.int32), jnp.where(ys_mask, ys_pad, EOS).astype(jnp.int32)],
        axis=1)                                                       # (B, Lmax+1), padded w/ eos
    ys_out = jnp.concatenate(
        [jnp.where(ys_mask, ys_pad, IGNORE_ID).astype(jnp.int32),
         jnp.full((B, 1), IGNORE_ID, jnp.int32)], axis=1)
    ys_out = ys_out.at[jnp.arange(B), olens].set(EOS)                 # append eos at true length

    emb = params["dec"]["embed"][ys_in.T]                             # (L, B, D) time-major
    att_mask = (jnp.arange(T)[None, :] < hlens[:, None]).astype(F32)  # (B, T)
    logits_lbv = pallas_decoder(hs_pad, encp, att_mask, emb, params["dec"])   # (L, B, V)
    L = logits_lbv.shape[0]
    logits = jnp.transpose(logits_lbv, (1, 0, 2)).reshape(B * L, ODIM)

    tflat = ys_out.reshape(-1)
    vmask = tflat != IGNORE_ID
    tsafe = jnp.where(vmask, tflat, 0)
    lp_dec = jax.nn.log_softmax(logits, axis=-1)
    nll = -jnp.take_along_axis(lp_dec, tsafe[:, None], axis=1)[:, 0]
    denom = jnp.sum(vmask).astype(F32)
    ce = jnp.sum(jnp.where(vmask, nll, 0.0)) / denom
    # espnet: loss *= (mean(len(ys_in)) - 1) == mean(target lengths)
    loss_att = ce * jnp.mean(olens.astype(F32))
    acc = jnp.sum(jnp.where(vmask, jnp.argmax(logits, axis=-1) == tflat, False)).astype(F32) / denom

    loss = MTLALPHA * loss_ctc + (1.0 - MTLALPHA) * loss_att
    return loss, loss_ctc, loss_att, acc


# -------------------------------------- parameter init -------------------------------------
def init_params(key):
    keys = iter(jax.random.split(key, 64))

    def lecun_t(shape, fan_in=None):
        # weights stored pre-transposed as (in, out); chainer/LeCun: W ~ N(0, fan_in**-0.5)
        fan_in = shape[0] if fan_in is None else fan_in
        return (1.0 / np.sqrt(fan_in)) * jax.random.normal(next(keys), shape, F32)

    params = {"enc": []}
    in_dim = IDIM
    for _ in range(ELAYERS):
        params["enc"].append({
            "w_ih": lecun_t((in_dim, 8 * EUNITS), fan_in=in_dim),     # [W_ih_fwd | W_ih_bwd]
            "b_ih": jnp.zeros((8 * EUNITS,), F32),                    # b_ih + b_hh (zeros)
            "w_hh_f": lecun_t((EUNITS, 4 * EUNITS)),
            "w_hh_b": lecun_t((EUNITS, 4 * EUNITS)),
            "w_bt_f": lecun_t((EUNITS, EPROJS), fan_in=2 * EUNITS),   # rows [0:H] of (2H,P)
            "w_bt_b": lecun_t((EUNITS, EPROJS), fan_in=2 * EUNITS),   # rows [H:2H] of (2H,P)
            "b_bt": jnp.zeros((EPROJS,), F32),
        })
        in_dim = EPROJS
    # fused CTC + mlp_enc head: single RHS [W_ctc | W_mlp_enc]
    params["head"] = {
        "w": jnp.concatenate([lecun_t((EPROJS, ODIM)), lecun_t((EPROJS, ADIM))], axis=1),
        "b": jnp.zeros((ODIM + ADIM,), F32),
    }
    # decoder LSTMCell bias_ih forget-gate block set to 1 (init_like_chainer); b_hh zeros
    b_gates = jnp.zeros((4 * DUNITS,), F32).at[DUNITS:2 * DUNITS].set(1.0)
    params["dec"] = {
        "embed": jax.random.normal(next(keys), (ODIM, DUNITS), F32),  # EmbedID.W ~ N(0, 1)
        "w_ih_emb": lecun_t((DUNITS, 4 * DUNITS), fan_in=DUNITS + EPROJS),
        "w_ih_att": lecun_t((EPROJS, 4 * DUNITS), fan_in=DUNITS + EPROJS),
        "b_gates": b_gates,
        "w_hh": lecun_t((DUNITS, 4 * DUNITS)),
        "w_out": lecun_t((DUNITS, ODIM)),
        "b_out": jnp.zeros((ODIM,), F32),
        "w_mlp_dec": lecun_t((DUNITS, ADIM)),
        "b_mlp_dec": jnp.zeros((ADIM,), F32),
    }
    return params


# --------------------------------------------- main ----------------------------------------
if __name__ == "__main__":
    key = jax.random.PRNGKey(0)
    kx, ky, kp = jax.random.split(key, 3)

    B, Tmax, Lmax = 2, 8, 4
    ilens = jnp.array([8, 6], jnp.int32)
    xs_pad = jax.random.normal(kx, (B, Tmax, IDIM), F32)
    xs_pad = xs_pad * (jnp.arange(Tmax)[None, :, None] < ilens[:, None, None]).astype(F32)

    ys = np.array(jax.random.randint(ky, (B, Lmax), 1, ODIM - 1))     # labels in [1, ODIM-2]
    olens_np = [4, 3]
    for b in range(B):
        ys[b, olens_np[b]:] = IGNORE_ID
    ys_pad = jnp.asarray(ys, jnp.int32)

    params = init_params(kp)
    fwd = jax.jit(e2e_forward)
    loss, loss_ctc, loss_att, acc = fwd(params, xs_pad, ilens, ys_pad)
    jax.block_until_ready(loss)
    assert np.isfinite(float(loss)) and np.isfinite(float(loss_ctc)) and np.isfinite(float(loss_att))
    print("KERNEL_OK")
</pallas_src>

<mosaic_0001>
module attributes {stable_mosaic.version = 11 : i64} {
  func.func @_blstmp_layer_kernel(%arg0: memref<8x2x8xf32, #tpu.memory_space<vmem>>, %arg1: memref<2x1xi32, #tpu.memory_space<vmem>>, %arg2: memref<1x2xi32, #tpu.memory_space<vmem>>, %arg3: memref<8x128xf32, #tpu.memory_space<vmem>>, %arg4: memref<1x128xf32, #tpu.memory_space<vmem>>, %arg5: memref<16x64xf32, #tpu.memory_space<vmem>>, %arg6: memref<16x64xf32, #tpu.memory_space<vmem>>, %arg7: memref<16x16xf32, #tpu.memory_space<vmem>>, %arg8: memref<16x16xf32, #tpu.memory_space<vmem>>, %arg9: memref<1x16xf32, #tpu.memory_space<vmem>>, %arg10: memref<8x2x16xf32, #tpu.memory_space<vmem>>, %arg11: memref<8x2x64xf32, #tpu.memory_space<vmem>>, %arg12: memref<8x2x64xf32, #tpu.memory_space<vmem>>, %arg13: memref<8x2x16xf32, #tpu.memory_space<vmem>>, %arg14: memref<8x2x16xf32, #tpu.memory_space<vmem>>) attributes {dimension_semantics = [], scalar_prefetch = 0 : i64, scratch_operands = 4 : i64, tpu.core_type = #tpu.core_type<tc>} {
    %c0 = arith.constant 0 : index
    %c0_0 = arith.constant 0 : index
    %c0_1 = arith.constant 0 : index
    %0 = vector.load %arg0[%c0, %c0_0, %c0_1] : memref<8x2x8xf32, #tpu.memory_space<vmem>>, vector<8x2x8xf32>
    %1 = vector.shape_cast %0 : vector<8x2x8xf32> to vector<16x8xf32>
    %2 = arith.truncf %1 : vector<16x8xf32> to vector<16x8xbf16>
    %c0_2 = arith.constant 0 : index
    %c0_3 = arith.constant 0 : index
    %3 = vector.load %arg3[%c0_2, %c0_3] : memref<8x128xf32, #tpu.memory_space<vmem>>, vector<8x128xf32>
    %4 = arith.truncf %3 : vector<8x128xf32> to vector<8x128xbf16>
    %cst = arith.constant dense<0.000000e+00> : vector<16x128xf32>
    %5 = tpu.matmul %2, %4, %cst {dimension_numbers = #tpu.dot_dimension_numbers<[1], [0], [0], [1], [0, 0, 1, 1], [], []>} : vector<16x8xbf16>, vector<8x128xbf16>, vector<16x128xf32> -> vector<16x128xf32>
    %c0_4 = arith.constant 0 : index
    %c0_5 = arith.constant 0 : index
    %6 = vector.load %arg4[%c0_4, %c0_5] : memref<1x128xf32, #tpu.memory_space<vmem>>, vector<1x128xf32>
    %7 = vector.broadcast %6 : vector<1x128xf32> to vector<16x128xf32>
    %8 = arith.addf %5, %7 : vector<16x128xf32>
    %9 = vector.shape_cast %8 : vector<16x128xf32> to vector<8x2x128xf32>
    %10 = vector.extract_strided_slice %9 {offsets = [0, 0, 0], sizes = [8, 2, 64], strides = [1, 1, 1]} : vector<8x2x128xf32> to vector<8x2x64xf32>
    %c0_6 = arith.constant 0 : index
    %c0_7 = arith.constant 0 : index
    %c0_8 = arith.constant 0 : index
    %11 = vector.load %arg11[%c0_6, %c0_7, %c0_8] : memref<8x2x64xf32, #tpu.memory_space<vmem>>, vector<8x2x64xf32>
    tpu.vector_store %arg11[%c0_6, %c0_7, %c0_8], %10 {strides = array<i32>} : memref<8x2x64xf32, #tpu.memory_space<vmem>>, vector<8x2x64xf32>,
    %12 = vector.extract_strided_slice %9 {offsets = [0, 0, 64], sizes = [8, 2, 64], strides = [1, 1, 1]} : vector<8x2x128xf32> to vector<8x2x64xf32>
    %c0_9 = arith.constant 0 : index
    %c0_10 = arith.constant 0 : index
    %c0_11 = arith.constant 0 : index
    %13 = vector.load %arg12[%c0_9, %c0_10, %c0_11] : memref<8x2x64xf32, #tpu.memory_space<vmem>>, vector<8x2x64xf32>
    tpu.vector_store %arg12[%c0_9, %c0_10, %c0_11], %12 {strides = array<i32>} : memref<8x2x64xf32, #tpu.memory_space<vmem>>, vector<8x2x64xf32>,
    %c0_12 = arith.constant 0 : index
    %c0_13 = arith.constant 0 : index
    %14 = vector.load %arg1[%c0_12, %c0_13] : memref<2x1xi32, #tpu.memory_space<vmem>>, vector<2x1xi32>
    %c0_14 = arith.constant 0 : index
    %c0_15 = arith.constant 0 : index
    %15 = vector.load %arg5[%c0_14, %c0_15] : memref<16x64xf32, #tpu.memory_space<vmem>>, vector<16x64xf32>
    %c0_16 = arith.constant 0 : index
    %c0_17 = arith.constant 0 : index
    %16 = vector.load %arg6[%c0_16, %c0_17] : memref<16x64xf32, #tpu.memory_space<vmem>>, vector<16x64xf32>
    %cst_18 = arith.constant 0.000000e+00 : f32
    %17 = vector.broadcast %cst_18 : f32 to vector<2x16xf32>
    %c0_i32 = arith.constant 0 : i32
    %c7_i32 = arith.constant 7 : i32
    %18 = arith.subi %c7_i32, %c0_i32 : i32
    %19 = arith.index_cast %c0_i32 : i32 to index
    %c0_19 = arith.constant 0 : index
    %c0_20 = arith.constant 0 : index
    %20 = vector.load %arg11[%19, %c0_19, %c0_20] : memref<8x2x64xf32, #tpu.memory_space<vmem>>, vector<1x2x64xf32>
    %21 = vector.shape_cast %20 : vector<1x2x64xf32> to vector<2x64xf32>
    %cst_21 = arith.constant dense<0.000000e+00> : vector<2x64xf32>
    %22 = tpu.matmul %17, %15, %cst_21 {dimension_numbers = #tpu.dot_dimension_numbers<[1], [0], [0], [1], [0, 0, 1, 1], [], []>} : vector<2x16xf32>, vector<16x64xf32>, vector<2x64xf32> -> vector<2x64xf32>
    %23 = arith.addf %21, %22 : vector<2x64xf32>
    %24 = vector.extract_strided_slice %23 {offsets = [0, 0], sizes = [2, 16], strides = [1, 1]} : vector<2x64xf32> to vector<2x16xf32>
    %25 = arith.negf %24 : vector<2x16xf32>
    %26 = math.exp %25 : vector<2x16xf32>
    %cst_22 = arith.constant 1.000000e+00 : f32
    %27 = vector.broadcast %cst_22 : f32 to vector<2x16xf32>
    %28 = arith.addf %27, %26 : vector<2x16xf32>
    %29 = arith.divf %27, %28 : vector<2x16xf32>
    %30 = vector.extract_strided_slice %23 {offsets = [0, 16], sizes = [2, 16], strides = [1, 1]} : vector<2x64xf32> to vector<2x16xf32>
    %31 = arith.negf %30 : vector<2x16xf32>
    %32 = math.exp %31 : vector<2x16xf32>
    %cst_23 = arith.constant 1.000000e+00 : f32
    %33 = vector.broadcast %cst_23 : f32 to vector<2x16xf32>
    %34 = arith.addf %33, %32 : vector<2x16xf32>
    %35 = arith.divf %33, %34 : vector<2x16xf32>
    %36 = vector.extract_strided_slice %23 {offsets = [0, 32], sizes = [2, 16], strides = [1, 1]} : vector<2x64xf32> to vector<2x16xf32>
    %37 = math.tanh %36 : vector<2x16xf32>
    %38 = vector.extract_strided_slice %23 {offsets = [0, 48], sizes = [2, 16], strides = [1, 1]} : vector<2x64xf32> to vector<2x16xf32>
    %39 = arith.negf %38 : vector<2x16xf32>
    %40 = math.exp %39 : vector<2x16xf32>
    %cst_24 = arith.constant 1.000000e+00 : f32
    %41 = vector.broadcast %cst_24 : f32 to vector<2x16xf32>
    %42 = arith.addf %41, %40 : vector<2x16xf32>
    %43 = arith.divf %41, %42 : vector<2x16xf32>
    %44 = arith.mulf %35, %17 : vector<2x16xf32>
    %45 = arith.mulf %29, %37 : vector<2x16xf32>
    %46 = arith.addf %44, %45 : vector<2x16xf32>
    %47 = math.tanh %46 : vector<2x16xf32>
    %48 = arith.mulf %43, %47 : vector<2x16xf32>
    %49 = vector.shape_cast %48 : vector<2x16xf32> to vector<1x2x16xf32>
    %50 = arith.index_cast %c0_i32 : i32 to index
    %c0_25 = arith.constant 0 : index
    %c0_26 = arith.constant 0 : index
    %51 = vector.load %arg13[%50, %c0_25, %c0_26] : memref<8x2x16xf32, #tpu.memory_space<vmem>>, vector<1x2x16xf32>
    tpu.vector_store %arg13[%50, %c0_25, %c0_26], %49 {strides = array<i32>} : memref<8x2x16xf32, #tpu.memory_space<vmem>>, vector<1x2x16xf32>,
    %52 = arith.index_cast %18 : i32 to index
    %c0_27 = arith.constant 0 : index
    %c0_28 = arith.constant 0 : index
    %53 = vector.load %arg12[%52, %c0_27, %c0_28] : memref<8x2x64xf32, #tpu.memory_space<vmem>>, vector<1x2x64xf32>
    %54 = vector.shape_cast %53 : vector<1x2x64xf32> to vector<2x64xf32>
    %cst_29 = arith.constant dense<0.000000e+00> : vector<2x64xf32>
    %55 = tpu.matmul %17, %16, %cst_29 {dimension_numbers = #tpu.dot_dimension_numbers<[1], [0], [0], [1], [0, 0, 1, 1], [], []>} : vector<2x16xf32>, vector<16x64xf32>, vector<2x64xf32> -> vector<2x64xf32>
    %56 = arith.addf %54, %55 : vector<2x64xf32>
    %57 = vector.extract_strided_slice %56 {offsets = [0, 0], sizes = [2, 16], strides = [1, 1]} : vector<2x64xf32> to vector<2x16xf32>
    %58 = arith.negf %57 : vector<2x16xf32>
    %59 = math.exp %58 : vector<2x16xf32>
    %cst_30 = arith.constant 1.000000e+00 : f32
    %60 = vector.broadcast %cst_30 : f32 to vector<2x16xf32>
    %61 = arith.addf %60, %59 : vector<2x16xf32>
    %62 = arith.divf %60, %61 : vector<2x16xf32>
    %63 = vector.extract_strided_slice %56 {offsets = [0, 16], sizes = [2, 16], strides = [1, 1]} : vector<2x64xf32> to vector<2x16xf32>
    %64 = arith.negf %63 : vector<2x16xf32>
    %65 = math.exp %64 : vector<2x16xf32>
    %cst_31 = arith.constant 1.000000e+00 : f32
    %66 = vector.broadcast %cst_31 : f32 to vector<2x16xf32>
    %67 = arith.addf %66, %65 : vector<2x16xf32>
    %68 = arith.divf %66, %67 : vector<2x16xf32>
    %69 = vector.extract_strided_slice %56 {offsets = [0, 32], sizes = [2, 16], strides = [1, 1]} : vector<2x64xf32> to vector<2x16xf32>
    %70 = math.tanh %69 : vector<2x16xf32>
    %71 = vector.extract_strided_slice %56 {offsets = [0, 48], sizes = [2, 16], strides = [1, 1]} : vector<2x64xf32> to vector<2x16xf32>
    %72 = arith.negf %71 : vector<2x16xf32>
    %73 = math.exp %72 : vector<2x16xf32>
    %cst_32 = arith.constant 1.000000e+00 : f32
    %74 = vector.broadcast %cst_32 : f32 to vector<2x16xf32>
    %75 = arith.addf %74, %73 : vector<2x16xf32>
    %76 = arith.divf %74, %75 : vector<2x16xf32>
    %77 = arith.mulf %68, %17 : vector<2x16xf32>
    %78 = arith.mulf %62, %70 : vector<2x16xf32>
    %79 = arith.addf %77, %78 : vector<2x16xf32>
    %80 = math.tanh %79 : vector<2x16xf32>
    %81 = arith.mulf %76, %80 : vector<2x16xf32>
    %82 = vector.broadcast %18 : i32 to vector<2x1xi32>
    %83 = arith.cmpi slt, %82, %14 : vector<2x1xi32>
    %84 = vector.shape_cast %83 : vector<2x1xi1> to vector<2x1xi1>
    %85 = vector.broadcast %84 : vector<2x1xi1> to vector<2x16xi1>
    %86 = arith.select %85, %81, %17 : vector<2x16xi1>, vector<2x16xf32>
    %87 = vector.shape_cast %83 : vector<2x1xi1> to vector<2x1xi1>
    %88 = vector.broadcast %87 : vector<2x1xi1> to vector<2x16xi1>
    %89 = arith.select %88, %79, %17 : vector<2x16xi1>, vector<2x16xf32>
    %90 = vector.shape_cast %86 : vector<2x16xf32> to vector<1x2x16xf32>
    %91 = arith.index_cast %18 : i32 to index
    %c0_33 = arith.constant 0 : index
    %c0_34 = arith.constant 0 : index
    %92 = vector.load %arg14[%91, %c0_33, %c0_34] : memref<8x2x16xf32, #tpu.memory_space<vmem>>, vector<1x2x16xf32>
    tpu.vector_store %arg14[%91, %c0_33, %c0_34], %90 {strides = array<i32>} : memref<8x2x16xf32, #tpu.memory_space<vmem>>, vector<1x2x16xf32>,
    %c1_i32 = arith.constant 1 : i32
    %c7_i32_35 = arith.constant 7 : i32
    %93 = arith.subi %c7_i32_35, %c1_i32 : i32
    %94 = arith.index_cast %c1_i32 : i32 to index
    %c0_36 = arith.constant 0 : index
    %c0_37 = arith.constant 0 : index
    %95 = vector.load %arg11[%94, %c0_36, %c0_37] : memref<8x2x64xf32, #tpu.memory_space<vmem>>, vector<1x2x64xf32>
    %96 = vector.shape_cast %95 : vector<1x2x64xf32> to vector<2x64xf32>
    %cst_38 = arith.constant dense<0.000000e+00> : vector<2x64xf32>
    %97 = tpu.matmul %48, %15, %cst_38 {dimension_numbers = #tpu.dot_dimension_numbers<[1], [0], [0], [1], [0, 0, 1, 1], [], []>} : vector<2x16xf32>, vector<16x64xf32>, vector<2x64xf32> -> vector<2x64xf32>
    %98 = arith.addf %96, %97 : vector<2x64xf32>
    %99 = vector.extract_strided_slice %98 {offsets = [0, 0], sizes = [2, 16], strides = [1, 1]} : vector<2x64xf32> to vector<2x16xf32>
    %100 = arith.negf %99 : vector<2x16xf32>
    %101 = math.exp %100 : vector<2x16xf32>
    %cst_39 = arith.constant 1.000000e+00 : f32
    %102 = vector.broadcast %cst_39 : f32 to vector<2x16xf32>
    %103 = arith.addf %102, %101 : vector<2x16xf32>
    %104 = arith.divf %102, %103 : vector<2x16xf32>
    %105 = vector.extract_strided_slice %98 {offsets = [0, 16], sizes = [2, 16], strides = [1, 1]} : vector<2x64xf32> to vector<2x16xf32>
    %106 = arith.negf %105 : vector<2x16xf32>
    %107 = math.exp %106 : vector<2x16xf32>
    %cst_40 = arith.constant 1.000000e+00 : f32
    %108 = vector.broadcast %cst_40 : f32 to vector<2x16xf32>
    %109 = arith.addf %108, %107 : vector<2x16xf32>
    %110 = arith.divf %108, %109 : vector<2x16xf32>
    %111 = vector.extract_strided_slice %98 {offsets = [0, 32], sizes = [2, 16], strides = [1, 1]} : vector<2x64xf32> to vector<2x16xf32>
    %112 = math.tanh %111 : vector<2x16xf32>
    %113 = vector.extract_strided_slice %98 {offsets = [0, 48], sizes = [2, 16], strides = [1, 1]} : vector<2x64xf32> to vector<2x16xf32>
    %114 = arith.negf %113 : vector<2x16xf32>
    %115 = math.exp %114 : vector<2x16xf32>
    %cst_41 = arith.constant 1.000000e+00 : f32
    %116 = vector.broadcast %cst_41 : f32 to vector<2x16xf32>
    %117 = arith.addf %116, %115 : vector<2x16xf32>
    %118 = arith.divf %116, %117 : vector<2x16xf32>
    %119 = arith.mulf %110, %46 : vector<2x16xf32>
    %120 = arith.mulf %104, %112 : vector<2x16xf32>
    %121 = arith.addf %119, %120 : vector<2x16xf32>
    %122 = math.tanh %121 : vector<2x16xf32>
    %123 = arith.mulf %118, %122 : vector<2x16xf32>
    %124 = vector.shape_cast %123 : vector<2x16xf32> to vector<1x2x16xf32>
    %125 = arith.index_cast %c1_i32 : i32 to index
    %c0_42 = arith.constant 0 : index
    %c0_43 = arith.constant 0 : index
    %126 = vector.load %arg13[%125, %c0_42, %c0_43] : memref<8x2x16xf32, #tpu.memory_space<vmem>>, vector<1x2x16xf32>
    tpu.vector_store %arg13[%125, %c0_42, %c0_43], %124 {strides = array<i32>} : memref<8x2x16xf32, #tpu.memory_space<vmem>>, vector<1x2x16xf32>,
    %127 = arith.index_cast %93 : i32 to index
    %c0_44 = arith.constant 0 : index
    %c0_45 = arith.constant 0 : index
    %128 = vector.load %arg12[%127, %c0_44, %c0_45] : memref<8x2x64xf32, #tpu.memory_space<vmem>>, vector<1x2x64xf32>
    %129 = vector.shape_cast %128 : vector<1x2x64xf32> to vector<2x64xf32>
    %cst_46 = arith.constant dense<0.000000e+00> : vector<2x64xf32>
    %130 = tpu.matmul %86, %16, %cst_46 {dimension_numbers = #tpu.dot_dimension_numbers<[1], [0], [0], [1], [0, 0, 1, 1], [], []>} : vector<2x16xf32>, vector<16x64xf32>, vector<2x64xf32> -> vector<2x64xf32>
    %131 = arith.addf %129, %130 : vector<2x64xf32>
    %132 = vector.extract_strided_slice %131 {offsets = [0, 0], sizes = [2, 16], strides = [1, 1]} : vector<2x64xf32> to vector<2x16xf32>
    %133 = arith.negf %132 : vector<2x16xf32>
    %134 = math.exp %133 : vector<2x16xf32>
    %cst_47 = arith.constant 1.000000e+00 : f32
    %135 = vector.broadcast %cst_47 : f32 to vector<2x16xf32>
    %136 = arith.addf %135, %134 : vector<2x16xf32>
    %137 = arith.divf %135, %136 : vector<2x16xf32>
    %138 = vector.extract_strided_slice %131 {offsets = [0, 16], sizes = [2, 16], strides = [1, 1]} : vector<2x64xf32> to vector<2x16xf32>
    %139 = arith.negf %138 : vector<2x16xf32>
    %140 = math.exp %139 : vector<2x16xf32>
    %cst_48 = arith.constant 1.000000e+00 : f32
    %141 = vector.broadcast %cst_48 : f32 to vector<2x16xf32>
    %142 = arith.addf %141, %140 : vector<2x16xf32>
    %143 = arith.divf %141, %142 : vector<2x16xf32>
    %144 = vector.extract_strided_slice %131 {offsets = [0, 32], sizes = [2, 16], strides = [1, 1]} : vector<2x64xf32> to vector<2x16xf32>
    %145 = math.tanh %144 : vector<2x16xf32>
    %146 = vector.extract_strided_slice %131 {offsets = [0, 48], sizes = [2, 16], strides = [1, 1]} : vector<2x64xf32> to vector<2x16xf32>
    %147 = arith.negf %146 : vector<2x16xf32>
    %148 = math.exp %147 : vector<2x16xf32>
    %cst_49 = arith.constant 1.000000e+00 : f32
    %149 = vector.broadcast %cst_49 : f32 to vector<2x16xf32>
    %150 = arith.addf %149, %148 : vector<2x16xf32>
    %151 = arith.divf %149, %150 : vector<2x16xf32>
    %152 = arith.mulf %143, %89 : vector<2x16xf32>
    %153 = arith.mulf %137, %145 : vector<2x16xf32>
    %154 = arith.addf %152, %153 : vector<2x16xf32>
    %155 = math.tanh %154 : vector<2x16xf32>
    %156 = arith.mulf %151, %155 : vector<2x16xf32>
    %157 = vector.broadcast %93 : i32 to vector<2x1xi32>
    %158 = arith.cmpi slt, %157, %14 : vector<2x1xi32>
    %159 = vector.shape_cast %158 : vector<2x1xi1> to vector<2x1xi1>
    %160 = vector.broadcast %159 : vector<2x1xi1> to vector<2x16xi1>
    %161 = arith.select %160, %156, %86 : vector<2x16xi1>, vector<2x16xf32>
    %162 = vector.shape_cast %158 : vector<2x1xi1> to vector<2x1xi1>
    %163 = vector.broadcast %162 : vector<2x1xi1> to vector<2x16xi1>
    %164 = arith.select %163, %154, %89 : vector<2x16xi1>, vector<2x16xf32>
    %165 = vector.shape_cast %161 : vector<2x16xf32> to vector<1x2x16xf32>
    %166 = arith.index_cast %93 : i32 to index
    %c0_50 = arith.constant 0 : index
    %c0_51 = arith.constant 0 : index
    %167 = vector.load %arg14[%166, %c0_50, %c0_51] : memref<8x2x16xf32, #tpu.memory_space<vmem>>, vector<1x2x16xf32>
    tpu.vector_store %arg14[%166, %c0_50, %c0_51], %165 {strides = array<i32>} : memref<8x2x16xf32, #tpu.memory_space<vmem>>, vector<1x2x16xf32>,
    %c2_i32 = arith.constant 2 : i32
    %c7_i32_52 = arith.constant 7 : i32
    %168 = arith.subi %c7_i32_52, %c2_i32 : i32
    %169 = arith.index_cast %c2_i32 : i32 to index
    %c0_53 = arith.constant 0 : index
    %c0_54 = arith.constant 0 : index
    %170 = vector.load %arg11[%169, %c0_53, %c0_54] : memref<8x2x64xf32, #tpu.memory_space<vmem>>, vector<1x2x64xf32>
    %171 = vector.shape_cast %170 : vector<1x2x64xf32> to vector<2x64xf32>
    %cst_55 = arith.constant dense<0.000000e+00> : vector<2x64xf32>
    %172 = tpu.matmul %123, %15, %cst_55 {dimension_numbers = #tpu.dot_dimension_numbers<[1], [0], [0], [1], [0, 0, 1, 1], [], []>} : vector<2x16xf32>, vector<16x64xf32>, vector<2x64xf32> -> vector<2x64xf32>
    %173 = arith.addf %171, %172 : vector<2x64xf32>
    %174 = vector.extract_strided_slice %173 {offsets = [0, 0], sizes = [2, 16], strides = [1, 1]} : vector<2x64xf32> to vector<2x16xf32>
    %175 = arith.negf %174 : vector<2x16xf32>
    %176 = math.exp %175 : vector<2x16xf32>
    %cst_56 = arith.constant 1.000000e+00 : f32
    %177 = vector.broadcast %cst_56 : f32 to vector<2x16xf32>
    %178 = arith.addf %177, %176 : vector<2x16xf32>
    %179 = arith.divf %177, %178 : vector<2x16xf32>
    %180 = vector.extract_strided_slice %173 {offsets = [0, 16], sizes = [2, 16], strides = [1, 1]} : vector<2x64xf32> to vector<2x16xf32>
    %181 = arith.negf %180 : vector<2x16xf32>
    %182 = math.exp %181 : vector<2x16xf32>
    %cst_57 = arith.constant 1.000000e+00 : f32
    %183 = vector.broadcast %cst_57 : f32 to vector<2x16xf32>
    %184 = arith.addf %183, %182 : vector<2x16xf32>
    %185 = arith.divf %183, %184 : vector<2x16xf32>
    %186 = vector.extract_strided_slice %173 {offsets = [0, 32], sizes = [2, 16], strides = [1, 1]} : vector<2x64xf32> to vector<2x16xf32>
    %187 = math.tanh %186 : vector<2x16xf32>
    %188 = vector.extract_strided_slice %173 {offsets = [0, 48], sizes = [2, 16], strides = [1, 1]} : vector<2x64xf32> to vector<2x16xf32>
    %189 = arith.negf %188 : vector<2x16xf32>
    %190 = math.exp %189 : vector<2x16xf32>
    %cst_58 = arith.constant 1.000000e+00 : f32
    %191 = vector.broadcast %cst_58 : f32 to vector<2x16xf32>
    %192 = arith.addf %191, %190 : vector<2x16xf32>
    %193 = arith.divf %191, %192 : vector<2x16xf32>
    %194 = arith.mulf %185, %121 : vector<2x16xf32>
    %195 = arith.mulf %179, %187 : vector<2x16xf32>
    %196 = arith.addf %194, %195 : vector<2x16xf32>
    %197 = math.tanh %196 : vector<2x16xf32>
    %198 = arith.mulf %193, %197 : vector<2x16xf32>
    %199 = vector.shape_cast %198 : vector<2x16xf32> to vector<1x2x16xf32>
    %200 = arith.index_cast %c2_i32 : i32 to index
    %c0_59 = arith.constant 0 : index
    %c0_60 = arith.constant 0 : index
    %201 = vector.load %arg13[%200, %c0_59, %c0_60] : memref<8x2x16xf32, #tpu.memory_space<vmem>>, vector<1x2x16xf32>
    tpu.vector_store %arg13[%200, %c0_59, %c0_60], %199 {strides = array<i32>} : memref<8x2x16xf32, #tpu.memory_space<vmem>>, vector<1x2x16xf32>,
    %202 = arith.index_cast %168 : i32 to index
    %c0_61 = arith.constant 0 : index
    %c0_62 = arith.constant 0 : index
    %203 = vector.load %arg12[%202, %c0_61, %c0_62] : memref<8x2x64xf32, #tpu.memory_space<vmem>>, vector<1x2x64xf32>
    %204 = vector.shape_cast %203 : vector<1x2x64xf32> to vector<2x64xf32>
    %cst_63 = arith.constant dense<0.000000e+00> : vector<2x64xf32>
    %205 = tpu.matmul %161, %16, %cst_63 {dimension_numbers = #tpu.dot_dimension_numbers<[1], [0], [0], [1], [0, 0, 1, 1], [], []>} : vector<2x16xf32>, vector<16x64xf32>, vector<2x64xf32> -> vector<2x64xf32>
    %206 = arith.addf %204, %205 : vector<2x64xf32>
    %207 = vector.extract_strided_slice %206 {offsets = [0, 0], sizes = [2, 16], strides = [1, 1]} : vector<2x64xf32> to vector<2x16xf32>
    %208 = arith.negf %207 : vector<2x16xf32>
    %209 = math.exp %208 : vector<2x16xf32>
    %cst_64 = arith.constant 1.000000e+00 : f32
    %210 = vector.broadcast %cst_64 : f32 to vector<2x16xf32>
    %211 = arith.addf %210, %209 : vector<2x16xf32>
    %212 = arith.divf %210, %211 : vector<2x16xf32>
    %213 = vector.extract_strided_slice %206 {offsets = [0, 16], sizes = [2, 16], strides = [1, 1]} : vector<2x64xf32> to vector<2x16xf32>
    %214 = arith.negf %213 : vector<2x16xf32>
    %215 = math.exp %214 : vector<2x16xf32>
    %cst_65 = arith.constant 1.000000e+00 : f32
    %216 = vector.broadcast %cst_65 : f32 to vector<2x16xf32>
    %217 = arith.addf %216, %215 : vector<2x16xf32>
    %218 = arith.divf %216, %217 : vector<2x16xf32>
    %219 = vector.extract_strided_slice %206 {offsets = [0, 32], sizes = [2, 16], strides = [1, 1]} : vector<2x64xf32> to vector<2x16xf32>
    %220 = math.tanh %219 : vector<2x16xf32>
    %221 = vector.extract_strided_slice %206 {offsets = [0, 48], sizes = [2, 16], strides = [1, 1]} : vector<2x64xf32> to vector<2x16xf32>
    %222 = arith.negf %221 : vector<2x16xf32>
    %223 = math.exp %222 : vector<2x16xf32>
    %cst_66 = arith.constant 1.000000e+00 : f32
    %224 = vector.broadcast %cst_66 : f32 to vector<2x16xf32>
    %225 = arith.addf %224, %223 : vector<2x16xf32>
    %226 = arith.divf %224, %225 : vector<2x16xf32>
    %227 = arith.mulf %218, %164 : vector<2x16xf32>
    %228 = arith.mulf %212, %220 : vector<2x16xf32>
    %229 = arith.addf %227, %228 : vector<2x16xf32>
    %230 = math.tanh %229 : vector<2x16xf32>
    %231 = arith.mulf %226, %230 : vector<2x16xf32>
    %232 = vector.broadcast %168 : i32 to vector<2x1xi32>
    %233 = arith.cmpi slt, %232, %14 : vector<2x1xi32>
    %234 = vector.shape_cast %233 : vector<2x1xi1> to vector<2x1xi1>
    %235 = vector.broadcast %234 : vector<2x1xi1> to vector<2x16xi1>
    %236 = arith.select %235, %231, %161 : vector<2x16xi1>, vector<2x16xf32>
    %237 = vector.shape_cast %233 : vector<2x1xi1> to vector<2x1xi1>
    %238 = vector.broadcast %237 : vector<2x1xi1> to vector<2x16xi1>
    %239 = arith.select %238, %229, %164 : vector<2x16xi1>, vector<2x16xf32>
    %240 = vector.shape_cast %236 : vector<2x16xf32> to vector<1x2x16xf32>
    %241 = arith.index_cast %168 : i32 to index
    %c0_67 = arith.constant 0 : index
    %c0_68 = arith.constant 0 : index
    %242 = vector.load %arg14[%241, %c0_67, %c0_68] : memref<8x2x16xf32, #tpu.memory_space<vmem>>, vector<1x2x16xf32>
    tpu.vector_store %arg14[%241, %c0_67, %c0_68], %240 {strides = array<i32>} : memref<8x2x16xf32, #tpu.memory_space<vmem>>, vector<1x2x16xf32>,
    %c3_i32 = arith.constant 3 : i32
    %c7_i32_69 = arith.constant 7 : i32
    %243 = arith.subi %c7_i32_69, %c3_i32 : i32
    %244 = arith.index_cast %c3_i32 : i32 to index
    %c0_70 = arith.constant 0 : index
    %c0_71 = arith.constant 0 : index
    %245 = vector.load %arg11[%244, %c0_70, %c0_71] : memref<8x2x64xf32, #tpu.memory_space<vmem>>, vector<1x2x64xf32>
    %246 = vector.shape_cast %245 : vector<1x2x64xf32> to vector<2x64xf32>
    %cst_72 = arith.constant dense<0.000000e+00> : vector<2x64xf32>
    %247 = tpu.matmul %198, %15, %cst_72 {dimension_numbers = #tpu.dot_dimension_numbers<[1], [0], [0], [1], [0, 0, 1, 1], [], []>} : vector<2x16xf32>, vector<16x64xf32>, vector<2x64xf32> -> vector<2x64xf32>
    %248 = arith.addf %246, %247 : vector<2x64xf32>
    %249 = vector.extract_strided_slice %248 {offsets = [0, 0], sizes = [2, 16], strides = [1, 1]} : vector<2x64xf32> to vector<2x16xf32>
    %250 = arith.negf %249 : vector<2x16xf32>
    %251 = math.exp %250 : vector<2x16xf32>
    %cst_73 = arith.constant 1.000000e+00 : f32
    %252 = vector.broadcast %cst_73 : f32 to vector<2x16xf32>
    %253 = arith.addf %252, %251 : vector<2x16xf32>
    %254 = arith.divf %252, %253 : vector<2x16xf32>
    %255 = vector.extract_strided_slice %248 {offsets = [0, 16], sizes = [2, 16], strides = [1, 1]} : vector<2x64xf32> to vector<2x16xf32>
    %256 = arith.negf %255 : vector<2x16xf32>
    %257 = math.exp %256 : vector<2x16xf32>
    %cst_74 = arith.constant 1.000000e+00 : f32
    %258 = vector.broadcast %cst_74 : f32 to vector<2x16xf32>
    %259 = arith.addf %258, %257 : vector<2x16xf32>
    %260 = arith.divf %258, %259 : vector<2x16xf32>
    %261 = vector.extract_strided_slice %248 {offsets = [0, 32], sizes = [2, 16], strides = [1, 1]} : vector<2x64xf32> to vector<2x16xf32>
    %262 = math.tanh %261 : vector<2x16xf32>
    %263 = vector.extract_strided_slice %248 {offsets = [0, 48], sizes = [2, 16], strides = [1, 1]} : vector<2x64xf32> to vector<2x16xf32>
    %264 = arith.negf %263 : vector<2x16xf32>
    %265 = math.exp %264 : vector<2x16xf32>
    %cst_75 = arith.constant 1.000000e+00 : f32
    %266 = vector.broadcast %cst_75 : f32 to vector<2x16xf32>
    %267 = arith.addf %266, %265 : vector<2x16xf32>
    %268 = arith.divf %266, %267 : vector<2x16xf32>
    %269 = arith.mulf %260, %196 : vector<2x16xf32>
    %270 = arith.mulf %254, %262 : vector<2x16xf32>
    %271 = arith.addf %269, %270 : vector<2x16xf32>
    %272 = math.tanh %271 : vector<2x16xf32>
    %273 = arith.mulf %268, %272 : vector<2x16xf32>
    %274 = vector.shape_cast %273 : vector<2x16xf32> to vector<1x2x16xf32>
    %275 = arith.index_cast %c3_i32 : i32 to index
    %c0_76 = arith.constant 0 : index
    %c0_77 = arith.constant 0 : index
    %276 = vector.load %arg13[%275, %c0_76, %c0_77] : memref<8x2x16xf32, #tpu.memory_space<vmem>>, vector<1x2x16xf32>
    tpu.vector_store %arg13[%275, %c0_76, %c0_77], %274 {strides = array<i32>} : memref<8x2x16xf32, #tpu.memory_space<vmem>>, vector<1x2x16xf32>,
    %277 = arith.index_cast %243 : i32 to index
    %c0_78 = arith.constant 0 : index
    %c0_79 = arith.constant 0 : index
    %278 = vector.load %arg12[%277, %c0_78, %c0_79] : memref<8x2x64xf32, #tpu.memory_space<vmem>>, vector<1x2x64xf32>
    %279 = vector.shape_cast %278 : vector<1x2x64xf32> to vector<2x64xf32>
    %cst_80 = arith.constant dense<0.000000e+00> : vector<2x64xf32>
    %280 = tpu.matmul %236, %16, %cst_80 {dimension_numbers = #tpu.dot_dimension_numbers<[1], [0], [0], [1], [0, 0, 1, 1], [], []>} : vector<2x16xf32>, vector<16x64xf32>, vector<2x64xf32> -> vector<2x64xf32>
    %281 = arith.addf %279, %280 : vector<2x64xf32>
    %282 = vector.extract_strided_slice %281 {offsets = [0, 0], sizes = [2, 16], strides = [1, 1]} : vector<2x64xf32> to vector<2x16xf32>
    %283 = arith.negf %282 : vector<2x16xf32>
    %284 = math.exp %283 : vector<2x16xf32>
    %cst_81 = arith.constant 1.000000e+00 : f32
    %285 = vector.broadcast %cst_81 : f32 to vector<2x16xf32>
    %286 = arith.addf %285, %284 : vector<2x16xf32>
    %287 = arith.divf %285, %286 : vector<2x16xf32>
    %288 = vector.extract_strided_slice %281 {offsets = [0, 16], sizes = [2, 16], strides = [1, 1]} : vector<2x64xf32> to vector<2x16xf32>
    %289 = arith.negf %288 : vector<2x16xf32>
    %290 = math.exp %289 : vector<2x16xf32>
    %cst_82 = arith.constant 1.000000e+00 : f32
    %291 = vector.broadcast %cst_82 : f32 to vector<2x16xf32>
    %292 = arith.addf %291, %290 : vector<2x16xf32>
    %293 = arith.divf %291, %292 : vector<2x16xf32>
    %294 = vector.extract_strided_slice %281 {offsets = [0, 32], sizes = [2, 16], strides = [1, 1]} : vector<2x64xf32> to vector<2x16xf32>
    %295 = math.tanh %294 : vector<2x16xf32>
    %296 = vector.extract_strided_slice %281 {offsets = [0, 48], sizes = [2, 16], strides = [1, 1]} : vector<2x64xf32> to vector<2x16xf32>
    %297 = arith.negf %296 : vector<2x16xf32>
    %298 = math.exp %297 : vector<2x16xf32>
    %cst_83 = arith.constant 1.000000e+00 : f32
    %299 = vector.broadcast %cst_83 : f32 to vector<2x16xf32>
    %300 = arith.addf %299, %298 : vector<2x16xf32>
    %301 = arith.divf %299, %300 : vector<2x16xf32>
    %302 = arith.mulf %293, %239 : vector<2x16xf32>
    %303 = arith.mulf %287, %295 : vector<2x16xf32>
    %304 = arith.addf %302, %303 : vector<2x16xf32>
    %305 = math.tanh %304 : vector<2x16xf32>
    %306 = arith.mulf %301, %305 : vector<2x16xf32>
    %307 = vector.broadcast %243 : i32 to vector<2x1xi32>
    %308 = arith.cmpi slt, %307, %14 : vector<2x1xi32>
    %309 = vector.shape_cast %308 : vector<2x1xi1> to vector<2x1xi1>
    %310 = vector.broadcast %309 : vector<2x1xi1> to vector<2x16xi1>
    %311 = arith.select %310, %306, %236 : vector<2x16xi1>, vector<2x16xf32>
    %312 = vector.shape_cast %308 : vector<2x1xi1> to vector<2x1xi1>
    %313 = vector.broadcast %312 : vector<2x1xi1> to vector<2x16xi1>
    %314 = arith.select %313, %304, %239 : vector<2x16xi1>, vector<2x16xf32>
    %315 = vector.shape_cast %311 : vector<2x16xf32> to vector<1x2x16xf32>
    %316 = arith.index_cast %243 : i32 to index
    %c0_84 = arith.constant 0 : index
    %c0_85 = arith.constant 0 : index
    %317 = vector.load %arg14[%316, %c0_84, %c0_85] : memref<8x2x16xf32, #tpu.memory_space<vmem>>, vector<1x2x16xf32>
    tpu.vector_store %arg14[%316, %c0_84, %c0_85], %315 {strides = array<i32>} : memref<8x2x16xf32, #tpu.memory_space<vmem>>, vector<1x2x16xf32>,
    %c4_i32 = arith.constant 4 : i32
    %c7_i32_86 = arith.constant 7 : i32
    %318 = arith.subi %c7_i32_86, %c4_i32 : i32
    %319 = arith.index_cast %c4_i32 : i32 to index
    %c0_87 = arith.constant 0 : index
    %c0_88 = arith.constant 0 : index
    %320 = vector.load %arg11[%319, %c0_87, %c0_88] : memref<8x2x64xf32, #tpu.memory_space<vmem>>, vector<1x2x64xf32>
    %321 = vector.shape_cast %320 : vector<1x2x64xf32> to vector<2x64xf32>
    %cst_89 = arith.constant dense<0.000000e+00> : vector<2x64xf32>
    %322 = tpu.matmul %273, %15, %cst_89 {dimension_numbers = #tpu.dot_dimension_numbers<[1], [0], [0], [1], [0, 0, 1, 1], [], []>} : vector<2x16xf32>, vector<16x64xf32>, vector<2x64xf32> -> vector<2x64xf32>
    %323 = arith.addf %321, %322 : vector<2x64xf32>
    %324 = vector.extract_strided_slice %323 {offsets = [0, 0], sizes = [2, 16], strides = [1, 1]} : vector<2x64xf32> to vector<2x16xf32>
    %325 = arith.negf %324 : vector<2x16xf32>
    %326 = math.exp %325 : vector<2x16xf32>
    %cst_90 = arith.constant 1.000000e+00 : f32
    %327 = vector.broadcast %cst_90 : f32 to vector<2x16xf32>
    %328 = arith.addf %327, %326 : vector<2x16xf32>
    %329 = arith.divf %327, %328 : vector<2x16xf32>
    %330 = vector.extract_strided_slice %323 {offsets = [0, 16], sizes = [2, 16], strides = [1, 1]} : vector<2x64xf32> to vector<2x16xf32>
    %331 = arith.negf %330 : vector<2x16xf32>
    %332 = math.exp %331 : vector<2x16xf32>
    %cst_91 = arith.constant 1.000000e+00 : f32
    %333 = vector.broadcast %cst_91 : f32 to vector<2x16xf32>
    %334 = arith.addf %333, %332 : vector<2x16xf32>
    %335 = arith.divf %333, %334 : vector<2x16xf32>
    %336 = vector.extract_strided_slice %323 {offsets = [0, 32], sizes = [2, 16], strides = [1, 1]} : vector<2x64xf32> to vector<2x16xf32>
    %337 = math.tanh %336 : vector<2x16xf32>
    %338 = vector.extract_strided_slice %323 {offsets = [0, 48], sizes = [2, 16], strides = [1, 1]} : vector<2x64xf32> to vector<2x16xf32>
    %339 = arith.negf %338 : vector<2x16xf32>
    %340 = math.exp %339 : vector<2x16xf32>
    %cst_92 = arith.constant 1.000000e+00 : f32
    %341 = vector.broadcast %cst_92 : f32 to vector<2x16xf32>
    %342 = arith.addf %341, %340 : vector<2x16xf32>
    %343 = arith.divf %341, %342 : vector<2x16xf32>
    %344 = arith.mulf %335, %271 : vector<2x16xf32>
    %345 = arith.mulf %329, %337 : vector<2x16xf32>
    %346 = arith.addf %344, %345 : vector<2x16xf32>
    %347 = math.tanh %346 : vector<2x16xf32>
    %348 = arith.mulf %343, %347 : vector<2x16xf32>
    %349 = vector.shape_cast %348 : vector<2x16xf32> to vector<1x2x16xf32>
    %350 = arith.index_cast %c4_i32 : i32 to index
    %c0_93 = arith.constant 0 : index
    %c0_94 = arith.constant 0 : index
    %351 = vector.load %arg13[%350, %c0_93, %c0_94] : memref<8x2x16xf32, #tpu.memory_space<vmem>>, vector<1x2x16xf32>
    tpu.vector_store %arg13[%350, %c0_93, %c0_94], %349 {strides = array<i32>} : memref<8x2x16xf32, #tpu.memory_space<vmem>>, vector<1x2x16xf32>,
    %352 = arith.index_cast %318 : i32 to index
    %c0_95 = arith.constant 0 : index
    %c0_96 = arith.constant 0 : index
    %353 = vector.load %arg12[%352, %c0_95, %c0_96] : memref<8x2x64xf32, #tpu.memory_space<vmem>>, vector<1x2x64xf32>
    %354 = vector.shape_cast %353 : vector<1x2x64xf32> to vector<2x64xf32>
    %cst_97 = arith.constant dense<0.000000e+00> : vector<2x64xf32>
    %355 = tpu.matmul %311, %16, %cst_97 {dimension_numbers = #tpu.dot_dimension_numbers<[1], [0], [0], [1], [0, 0, 1, 1], [], []>} : vector<2x16xf32>, vector<16x64xf32>, vector<2x64xf32> -> vector<2x64xf32>
    %356 = arith.addf %354, %355 : vector<2x64xf32>
    %357 = vector.extract_strided_slice %356 {offsets = [0, 0], sizes = [2, 16], strides = [1, 1]} : vector<2x64xf32> to vector<2x16xf32>
    %358 = arith.negf %357 : vector<2x16xf32>
    %359 = math.exp %358 : vector<2x16xf32>
    %cst_98 = arith.constant 1.000000e+00 : f32
    %360 = vector.broadcast %cst_98 : f32 to vector<2x16xf32>
    %361 = arith.addf %360, %359 : vector<2x16xf32>
    %362 = arith.divf %360, %361 : vector<2x16xf32>
    %363 = vector.extract_strided_slice %356 {offsets = [0, 16], sizes = [2, 16], strides = [1, 1]} : vector<2x64xf32> to vector<2x16xf32>
    %364 = arith.negf %363 : vector<2x16xf32>
    %365 = math.exp %364 : vector<2x16xf32>
    %cst_99 = arith.constant 1.000000e+00 : f32
    %366 = vector.broadcast %cst_99 : f32 to vector<2x16xf32>
    %367 = arith.addf %366, %365 : vector<2x16xf32>
    %368 = arith.divf %366, %367 : vector<2x16xf32>
    %369 = vector.extract_strided_slice %356 {offsets = [0, 32], sizes = [2, 16], strides = [1, 1]} : vector<2x64xf32> to vector<2x16xf32>
    %370 = math.tanh %369 : vector<2x16xf32>
    %371 = vector.extract_strided_slice %356 {offsets = [0, 48], sizes = [2, 16], strides = [1, 1]} : vector<2x64xf32> to vector<2x16xf32>
    %372 = arith.negf %371 : vector<2x16xf32>
    %373 = math.exp %372 : vector<2x16xf32>
    %cst_100 = arith.constant 1.000000e+00 : f32
    %374 = vector.broadcast %cst_100 : f32 to vector<2x16xf32>
    %375 = arith.addf %374, %373 : vector<2x16xf32>
    %376 = arith.divf %374, %375 : vector<2x16xf32>
    %377 = arith.mulf %368, %314 : vector<2x16xf32>
    %378 = arith.mulf %362, %370 : vector<2x16xf32>
    %379 = arith.addf %377, %378 : vector<2x16xf32>
    %380 = math.tanh %379 : vector<2x16xf32>
    %381 = arith.mulf %376, %380 : vector<2x16xf32>
    %382 = vector.broadcast %318 : i32 to vector<2x1xi32>
    %383 = arith.cmpi slt, %382, %14 : vector<2x1xi32>
    %384 = vector.shape_cast %383 : vector<2x1xi1> to vector<2x1xi1>
    %385 = vector.broadcast %384 : vector<2x1xi1> to vector<2x16xi1>
    %386 = arith.select %385, %381, %311 : vector<2x16xi1>, vector<2x16xf32>
    %387 = vector.shape_cast %383 : vector<2x1xi1> to vector<2x1xi1>
    %388 = vector.broadcast %387 : vector<2x1xi1> to vector<2x16xi1>
    %389 = arith.select %388, %379, %314 : vector<2x16xi1>, vector<2x16xf32>
    %390 = vector.shape_cast %386 : vector<2x16xf32> to vector<1x2x16xf32>
    %391 = arith.index_cast %318 : i32 to index
    %c0_101 = arith.constant 0 : index
    %c0_102 = arith.constant 0 : index
    %392 = vector.load %arg14[%391, %c0_101, %c0_102] : memref<8x2x16xf32, #tpu.memory_space<vmem>>, vector<1x2x16xf32>
    tpu.vector_store %arg14[%391, %c0_101, %c0_102], %390 {strides = array<i32>} : memref<8x2x16xf32, #tpu.memory_space<vmem>>, vector<1x2x16xf32>,
    %c5_i32 = arith.constant 5 : i32
    %c7_i32_103 = arith.constant 7 : i32
    %393 = arith.subi %c7_i32_103, %c5_i32 : i32
    %394 = arith.index_cast %c5_i32 : i32 to index
    %c0_104 = arith.constant 0 : index
    %c0_105 = arith.constant 0 : index
    %395 = vector.load %arg11[%394, %c0_104, %c0_105] : memref<8x2x64xf32, #tpu.memory_space<vmem>>, vector<1x2x64xf32>
    %396 = vector.shape_cast %395 : vector<1x2x64xf32> to vector<2x64xf32>
    %cst_106 = arith.constant dense<0.000000e+00> : vector<2x64xf32>
    %397 = tpu.matmul %348, %15, %cst_106 {dimension_numbers = #tpu.dot_dimension_numbers<[1], [0], [0], [1], [0, 0, 1, 1], [], []>} : vector<2x16xf32>, vector<16x64xf32>, vector<2x64xf32> -> vector<2x64xf32>
    %398 = arith.addf %396, %397 : vector<2x64xf32>
    %399 = vector.extract_strided_slice %398 {offsets = [0, 0], sizes = [2, 16], strides = [1, 1]} : vector<2x64xf32> to vector<2x16xf32>
    %400 = arith.negf %399 : vector<2x16xf32>
    %401 = math.exp %400 : vector<2x16xf32>
    %cst_107 = arith.constant 1.000000e+00 : f32
    %402 = vector.broadcast %cst_107 : f32 to vector<2x16xf32>
    %403 = arith.addf %402, %401 : vector<2x16xf32>
    %404 = arith.divf %402, %403 : vector<2x16xf32>
    %405 = vector.extract_strided_slice %398 {offsets = [0, 16], sizes = [2, 16], strides = [1, 1]} : vector<2x64xf32> to vector<2x16xf32>
    %406 = arith.negf %405 : vector<2x16xf32>
    %407 = math.exp %406 : vector<2x16xf32>
    %cst_108 = arith.constant 1.000000e+00 : f32
    %408 = vector.broadcast %cst_108 : f32 to vector<2x16xf32>
    %409 = arith.addf %408, %407 : vector<2x16xf32>
    %410 = arith.divf %408, %409 : vector<2x16xf32>
    %411 = vector.extract_strided_slice %398 {offsets = [0, 32], sizes = [2, 16], strides = [1, 1]} : vector<2x64xf32> to vector<2x16xf32>
    %412 = math.tanh %411 : vector<2x16xf32>
    %413 = vector.extract_strided_slice %398 {offsets = [0, 48], sizes = [2, 16], strides = [1, 1]} : vector<2x64xf32> to vector<2x16xf32>
    %414 = arith.negf %413 : vector<2x16xf32>
    %415 = math.exp %414 : vector<2x16xf32>
    %cst_109 = arith.constant 1.000000e+00 : f32
    %416 = vector.broadcast %cst_109 : f32 to vector<2x16xf32>
    %417 = arith.addf %416, %415 : vector<2x16xf32>
    %418 = arith.divf %416, %417 : vector<2x16xf32>
    %419 = arith.mulf %410, %346 : vector<2x16xf32>
    %420 = arith.mulf %404, %412 : vector<2x16xf32>
    %421 = arith.addf %419, %420 : vector<2x16xf32>
    %422 = math.tanh %421 : vector<2x16xf32>
    %423 = arith.mulf %418, %422 : vector<2x16xf32>
    %424 = vector.shape_cast %423 : vector<2x16xf32> to vector<1x2x16xf32>
    %425 = arith.index_cast %c5_i32 : i32 to index
    %c0_110 = arith.constant 0 : index
    %c0_111 = arith.constant 0 : index
    %426 = vector.load %arg13[%425, %c0_110, %c0_111] : memref<8x2x16xf32, #tpu.memory_space<vmem>>, vector<1x2x16xf32>
    tpu.vector_store %arg13[%425, %c0_110, %c0_111], %424 {strides = array<i32>} : memref<8x2x16xf32, #tpu.memory_space<vmem>>, vector<1x2x16xf32>,
    %427 = arith.index_cast %393 : i32 to index
    %c0_112 = arith.constant 0 : index
    %c0_113 = arith.constant 0 : index
    %428 = vector.load %arg12[%427, %c0_112, %c0_113] : memref<8x2x64xf32, #tpu.memory_space<vmem>>, vector<1x2x64xf32>
    %429 = vector.shape_cast %428 : vector<1x2x64xf32> to vector<2x64xf32>
    %cst_114 = arith.constant dense<0.000000e+00> : vector<2x64xf32>
    %430 = tpu.matmul %386, %16, %cst_114 {dimension_numbers = #tpu.dot_dimension_numbers<[1], [0], [0], [1], [0, 0, 1, 1], [], []>} : vector<2x16xf32>, vector<16x64xf32>, vector<2x64xf32> -> vector<2x64xf32>
    %431 = arith.addf %429, %430 : vector<2x64xf32>
    %432 = vector.extract_strided_slice %431 {offsets = [0, 0], sizes = [2, 16], strides = [1, 1]} : vector<2x64xf32> to vector<2x16xf32>
    %433 = arith.negf %432 : vector<2x16xf32>
    %434 = math.exp %433 : vector<2x16xf32>
    %cst_115 = arith.constant 1.000000e+00 : f32
    %435 = vector.broadcast %cst_115 : f32 to vector<2x16xf32>
    %436 = arith.addf %435, %434 : vector<2x16xf32>
    %437 = arith.divf %435, %436 : vector<2x16xf32>
    %438 = vector.extract_strided_slice %431 {offsets = [0, 16], sizes = [2, 16], strides = [1, 1]} : vector<2x64xf32> to vector<2x16xf32>
    %439 = arith.negf %438 : vector<2x16xf32>
    %440 = math.exp %439 : vector<2x16xf32>
    %cst_116 = arith.constant 1.000000e+00 : f32
    %441 = vector.broadcast %cst_116 : f32 to vector<2x16xf32>
    %442 = arith.addf %441, %440 : vector<2x16xf32>
    %443 = arith.divf %441, %442 : vector<2x16xf32>
    %444 = vector.extract_strided_slice %431 {offsets = [0, 32], sizes = [2, 16], strides = [1, 1]} : vector<2x64xf32> to vector<2x16xf32>
    %445 = math.tanh %444 : vector<2x16xf32>
    %446 = vector.extract_strided_slice %431 {offsets = [0, 48], sizes = [2, 16], strides = [1, 1]} : vector<2x64xf32> to vector<2x16xf32>
    %447 = arith.negf %446 : vector<2x16xf32>
    %448 = math.exp %447 : vector<2x16xf32>
    %cst_117 = arith.constant 1.000000e+00 : f32
    %449 = vector.broadcast %cst_117 : f32 to vector<2x16xf32>
    %450 = arith.addf %449, %448 : vector<2x16xf32>
    %451 = arith.divf %449, %450 : vector<2x16xf32>
    %452 = arith.mulf %443, %389 : vector<2x16xf32>
    %453 = arith.mulf %437, %445 : vector<2x16xf32>
    %454 = arith.addf %452, %453 : vector<2x16xf32>
    %455 = math.tanh %454 : vector<2x16xf32>
    %456 = arith.mulf %451, %455 : vector<2x16xf32>
    %457 = vector.broadcast %393 : i32 to vector<2x1xi32>
    %458 = arith.cmpi slt, %457, %14 : vector<2x1xi32>
    %459 = vector.shape_cast %458 : vector<2x1xi1> to vector<2x1xi1>
    %460 = vector.broadcast %459 : vector<2x1xi1> to vector<2x16xi1>
    %461 = arith.select %460, %456, %386 : vector<2x16xi1>, vector<2x16xf32>
    %462 = vector.shape_cast %458 : vector<2x1xi1> to vector<2x1xi1>
    %463 = vector.broadcast %462 : vector<2x1xi1> to vector<2x16xi1>
    %464 = arith.select %463, %454, %389 : vector<2x16xi1>, vector<2x16xf32>
    %465 = vector.shape_cast %461 : vector<2x16xf32> to vector<1x2x16xf32>
    %466 = arith.index_cast %393 : i32 to index
    %c0_118 = arith.constant 0 : index
    %c0_119 = arith.constant 0 : index
    %467 = vector.load %arg14[%466, %c0_118, %c0_119] : memref<8x2x16xf32, #tpu.memory_space<vmem>>, vector<1x2x16xf32>
    tpu.vector_store %arg14[%466, %c0_118, %c0_119], %465 {strides = array<i32>} : memref<8x2x16xf32, #tpu.memory_space<vmem>>, vector<1x2x16xf32>,
    %c6_i32 = arith.constant 6 : i32
    %c7_i32_120 = arith.constant 7 : i32
    %468 = arith.subi %c7_i32_120, %c6_i32 : i32
    %469 = arith.index_cast %c6_i32 : i32 to index
    %c0_121 = arith.constant 0 : index
    %c0_122 = arith.constant 0 : index
    %470 = vector.load %arg11[%469, %c0_121, %c0_122] : memref<8x2x64xf32, #tpu.memory_space<vmem>>, vector<1x2x64xf32>
    %471 = vector.shape_cast %470 : vector<1x2x64xf32> to vector<2x64xf32>
    %cst_123 = arith.constant dense<0.000000e+00> : vector<2x64xf32>
    %472 = tpu.matmul %423, %15, %cst_123 {dimension_numbers = #tpu.dot_dimension_numbers<[1], [0], [0], [1], [0, 0, 1, 1], [], []>} : vector<2x16xf32>, vector<16x64xf32>, vector<2x64xf32> -> vector<2x64xf32>
    %473 = arith.addf %471, %472 : vector<2x64xf32>
    %474 = vector.extract_strided_slice %473 {offsets = [0, 0], sizes = [2, 16], strides = [1, 1]} : vector<2x64xf32> to vector<2x16xf32>
    %475 = arith.negf %474 : vector<2x16xf32>
    %476 = math.exp %475 : vector<2x16xf32>
    %cst_124 = arith.constant 1.000000e+00 : f32
    %477 = vector.broadcast %cst_124 : f32 to vector<2x16xf32>
    %478 = arith.addf %477, %476 : vector<2x16xf32>
    %479 = arith.divf %477, %478 : vector<2x16xf32>
    %480 = vector.extract_strided_slice %473 {offsets = [0, 16], sizes = [2, 16], strides = [1, 1]} : vector<2x64xf32> to vector<2x16xf32>
    %481 = arith.negf %480 : vector<2x16xf32>
    %482 = math.exp %481 : vector<2x16xf32>
    %cst_125 = arith.constant 1.000000e+00 : f32
    %483 = vector.broadcast %cst_125 : f32 to vector<2x16xf32>
    %484 = arith.addf %483, %482 : vector<2x16xf32>
    %485 = arith.divf %483, %484 : vector<2x16xf32>
    %486 = vector.extract_strided_slice %473 {offsets = [0, 32], sizes = [2, 16], strides = [1, 1]} : vector<2x64xf32> to vector<2x16xf32>
    %487 = math.tanh %486 : vector<2x16xf32>
    %488 = vector.extract_strided_slice %473 {offsets = [0, 48], sizes = [2, 16], strides = [1, 1]} : vector<2x64xf32> to vector<2x16xf32>
    %489 = arith.negf %488 : vector<2x16xf32>
    %490 = math.exp %489 : vector<2x16xf32>
    %cst_126 = arith.constant 1.000000e+00 : f32
    %491 = vector.broadcast %cst_126 : f32 to vector<2x16xf32>
    %492 = arith.addf %491, %490 : vector<2x16xf32>
    %493 = arith.divf %491, %492 : vector<2x16xf32>
    %494 = arith.mulf %485, %421 : vector<2x16xf32>
    %495 = arith.mulf %479, %487 : vector<2x16xf32>
    %496 = arith.addf %494, %495 : vector<2x16xf32>
    %497 = math.tanh %496 : vector<2x16xf32>
    %498 = arith.mulf %493, %497 : vector<2x16xf32>
    %499 = vector.shape_cast %498 : vector<2x16xf32> to vector<1x2x16xf32>
    %500 = arith.index_cast %c6_i32 : i32 to index
    %c0_127 = arith.constant 0 : index
    %c0_128 = arith.constant 0 : index
    %501 = vector.load %arg13[%500, %c0_127, %c0_128] : memref<8x2x16xf32, #tpu.memory_space<vmem>>, vector<1x2x16xf32>
    tpu.vector_store %arg13[%500, %c0_127, %c0_128], %499 {strides = array<i32>} : memref<8x2x16xf32, #tpu.memory_space<vmem>>, vector<1x2x16xf32>,
    %502 = arith.index_cast %468 : i32 to index
    %c0_129 = arith.constant 0 : index
    %c0_130 = arith.constant 0 : index
    %503 = vector.load %arg12[%502, %c0_129, %c0_130] : memref<8x2x64xf32, #tpu.memory_space<vmem>>, vector<1x2x64xf32>
    %504 = vector.shape_cast %503 : vector<1x2x64xf32> to vector<2x64xf32>
    %cst_131 = arith.constant dense<0.000000e+00> : vector<2x64xf32>
    %505 = tpu.matmul %461, %16, %cst_131 {dimension_numbers = #tpu.dot_dimension_numbers<[1], [0], [0], [1], [0, 0, 1, 1], [], []>} : vector<2x16xf32>, vector<16x64xf32>, vector<2x64xf32> -> vector<2x64xf32>
    %506 = arith.addf %504, %505 : vector<2x64xf32>
    %507 = vector.extract_strided_slice %506 {offsets = [0, 0], sizes = [2, 16], strides = [1, 1]} : vector<2x64xf32> to vector<2x16xf32>
    %508 = arith.negf %507 : vector<2x16xf32>
    %509 = math.exp %508 : vector<2x16xf32>
    %cst_132 = arith.constant 1.000000e+00 : f32
    %510 = vector.broadcast %cst_132 : f32 to vector<2x16xf32>
    %511 = arith.addf %510, %509 : vector<2x16xf32>
    %512 = arith.divf %510, %511 : vector<2x16xf32>
    %513 = vector.extract_strided_slice %506 {offsets = [0, 16], sizes = [2, 16], strides = [1, 1]} : vector<2x64xf32> to vector<2x16xf32>
    %514 = arith.negf %513 : vector<2x16xf32>
    %515 = math.exp %514 : vector<2x16xf32>
    %cst_133 = arith.constant 1.000000e+00 : f32
    %516 = vector.broadcast %cst_133 : f32 to vector<2x16xf32>
    %517 = arith.addf %516, %515 : vector<2x16xf32>
    %518 = arith.divf %516, %517 : vector<2x16xf32>
    %519 = vector.extract_strided_slice %506 {offsets = [0, 32], sizes = [2, 16], strides = [1, 1]} : vector<2x64xf32> to vector<2x16xf32>
    %520 = math.tanh %519 : vector<2x16xf32>
    %521 = vector.extract_strided_slice %506 {offsets = [0, 48], sizes = [2, 16], strides = [1, 1]} : vector<2x64xf32> to vector<2x16xf32>
    %522 = arith.negf %521 : vector<2x16xf32>
    %523 = math.exp %522 : vector<2x16xf32>
    %cst_134 = arith.constant 1.000000e+00 : f32
    %524 = vector.broadcast %cst_134 : f32 to vector<2x16xf32>
    %525 = arith.addf %524, %523 : vector<2x16xf32>
    %526 = arith.divf %524, %525 : vector<2x16xf32>
    %527 = arith.mulf %518, %464 : vector<2x16xf32>
    %528 = arith.mulf %512, %520 : vector<2x16xf32>
    %529 = arith.addf %527, %528 : vector<2x16xf32>
    %530 = math.tanh %529 : vector<2x16xf32>
    %531 = arith.mulf %526, %530 : vector<2x16xf32>
    %532 = vector.broadcast %468 : i32 to vector<2x1xi32>
    %533 = arith.cmpi slt, %532, %14 : vector<2x1xi32>
    %534 = vector.shape_cast %533 : vector<2x1xi1> to vector<2x1xi1>
    %535 = vector.broadcast %534 : vector<2x1xi1> to vector<2x16xi1>
    %536 = arith.select %535, %531, %461 : vector<2x16xi1>, vector<2x16xf32>
    %537 = vector.shape_cast %533 : vector<2x1xi1> to vector<2x1xi1>
    %538 = vector.broadcast %537 : vector<2x1xi1> to vector<2x16xi1>
    %539 = arith.select %538, %529, %464 : vector<2x16xi1>, vector<2x16xf32>
    %540 = vector.shape_cast %536 : vector<2x16xf32> to vector<1x2x16xf32>
    %541 = arith.index_cast %468 : i32 to index
    %c0_135 = arith.constant 0 : index
    %c0_136 = arith.constant 0 : index
    %542 = vector.load %arg14[%541, %c0_135, %c0_136] : memref<8x2x16xf32, #tpu.memory_space<vmem>>, vector<1x2x16xf32>
    tpu.vector_store %arg14[%541, %c0_135, %c0_136], %540 {strides = array<i32>} : memref<8x2x16xf32, #tpu.memory_space<vmem>>, vector<1x2x16xf32>,
    %c7_i32_137 = arith.constant 7 : i32
    %c7_i32_138 = arith.constant 7 : i32
    %543 = arith.subi %c7_i32_138, %c7_i32_137 : i32
    %544 = arith.index_cast %c7_i32_137 : i32 to index
    %c0_139 = arith.constant 0 : index
    %c0_140 = arith.constant 0 : index
    %545 = vector.load %arg11[%544, %c0_139, %c0_140] : memref<8x2x64xf32, #tpu.memory_space<vmem>>, vector<1x2x64xf32>
    %546 = vector.shape_cast %545 : vector<1x2x64xf32> to vector<2x64xf32>
    %cst_141 = arith.constant dense<0.000000e+00> : vector<2x64xf32>
    %547 = tpu.matmul %498, %15, %cst_141 {dimension_numbers = #tpu.dot_dimension_numbers<[1], [0], [0], [1], [0, 0, 1, 1], [], []>} : vector<2x16xf32>, vector<16x64xf32>, vector<2x64xf32> -> vector<2x64xf32>
    %548 = arith.addf %546, %547 : vector<2x64xf32>
    %549 = vector.extract_strided_slice %548 {offsets = [0, 0], sizes = [2, 16], strides = [1, 1]} : vector<2x64xf32> to vector<2x16xf32>
    %550 = arith.negf %549 : vector<2x16xf32>
    %551 = math.exp %550 : vector<2x16xf32>
    %cst_142 = arith.constant 1.000000e+00 : f32
    %552 = vector.broadcast %cst_142 : f32 to vector<2x16xf32>
    %553 = arith.addf %552, %551 : vector<2x16xf32>
    %554 = arith.divf %552, %553 : vector<2x16xf32>
    %555 = vector.extract_strided_slice %548 {offsets = [0, 16], sizes = [2, 16], strides = [1, 1]} : vector<2x64xf32> to vector<2x16xf32>
    %556 = arith.negf %555 : vector<2x16xf32>
    %557 = math.exp %556 : vector<2x16xf32>
    %cst_143 = arith.constant 1.000000e+00 : f32
    %558 = vector.broadcast %cst_143 : f32 to vector<2x16xf32>
    %559 = arith.addf %558, %557 : vector<2x16xf32>
    %560 = arith.divf %558, %559 : vector<2x16xf32>
    %561 = vector.extract_strided_slice %548 {offsets = [0, 32], sizes = [2, 16], strides = [1, 1]} : vector<2x64xf32> to vector<2x16xf32>
    %562 = math.tanh %561 : vector<2x16xf32>
    %563 = vector.extract_strided_slice %548 {offsets = [0, 48], sizes = [2, 16], strides = [1, 1]} : vector<2x64xf32> to vector<2x16xf32>
    %564 = arith.negf %563 : vector<2x16xf32>
    %565 = math.exp %564 : vector<2x16xf32>
    %cst_144 = arith.constant 1.000000e+00 : f32
    %566 = vector.broadcast %cst_144 : f32 to vector<2x16xf32>
    %567 = arith.addf %566, %565 : vector<2x16xf32>
    %568 = arith.divf %566, %567 : vector<2x16xf32>
    %569 = arith.mulf %560, %496 : vector<2x16xf32>
    %570 = arith.mulf %554, %562 : vector<2x16xf32>
    %571 = arith.addf %569, %570 : vector<2x16xf32>
    %572 = math.tanh %571 : vector<2x16xf32>
    %573 = arith.mulf %568, %572 : vector<2x16xf32>
    %574 = vector.shape_cast %573 : vector<2x16xf32> to vector<1x2x16xf32>
    %575 = arith.index_cast %c7_i32_137 : i32 to index
    %c0_145 = arith.constant 0 : index
    %c0_146 = arith.constant 0 : index
    %576 = vector.load %arg13[%575, %c0_145, %c0_146] : memref<8x2x16xf32, #tpu.memory_space<vmem>>, vector<1x2x16xf32>
    tpu.vector_store %arg13[%575, %c0_145, %c0_146], %574 {strides = array<i32>} : memref<8x2x16xf32, #tpu.memory_space<vmem>>, vector<1x2x16xf32>,
    %577 = arith.index_cast %543 : i32 to index
    %c0_147 = arith.constant 0 : index
    %c0_148 = arith.constant 0 : index
    %578 = vector.load %arg12[%577, %c0_147, %c0_148] : memref<8x2x64xf32, #tpu.memory_space<vmem>>, vector<1x2x64xf32>
    %579 = vector.shape_cast %578 : vector<1x2x64xf32> to vector<2x64xf32>
    %cst_149 = arith.constant dense<0.000000e+00> : vector<2x64xf32>
    %580 = tpu.matmul %536, %16, %cst_149 {dimension_numbers = #tpu.dot_dimension_numbers<[1], [0], [0], [1], [0, 0, 1, 1], [], []>} : vector<2x16xf32>, vector<16x64xf32>, vector<2x64xf32> -> vector<2x64xf32>
    %581 = arith.addf %579, %580 : vector<2x64xf32>
    %582 = vector.extract_strided_slice %581 {offsets = [0, 0], sizes = [2, 16], strides = [1, 1]} : vector<2x64xf32> to vector<2x16xf32>
    %583 = arith.negf %582 : vector<2x16xf32>
    %584 = math.exp %583 : vector<2x16xf32>
    %cst_150 = arith.constant 1.000000e+00 : f32
    %585 = vector.broadcast %cst_150 : f32 to vector<2x16xf32>
    %586 = arith.addf %585, %584 : vector<2x16xf32>
    %587 = arith.divf %585, %586 : vector<2x16xf32>
    %588 = vector.extract_strided_slice %581 {offsets = [0, 16], sizes = [2, 16], strides = [1, 1]} : vector<2x64xf32> to vector<2x16xf32>
    %589 = arith.negf %588 : vector<2x16xf32>
    %590 = math.exp %589 : vector<2x16xf32>
    %cst_151 = arith.constant 1.000000e+00 : f32
    %591 = vector.broadcast %cst_151 : f32 to vector<2x16xf32>
    %592 = arith.addf %591, %590 : vector<2x16xf32>
    %593 = arith.divf %591, %592 : vector<2x16xf32>
    %594 = vector.extract_strided_slice %581 {offsets = [0, 32], sizes = [2, 16], strides = [1, 1]} : vector<2x64xf32> to vector<2x16xf32>
    %595 = math.tanh %594 : vector<2x16xf32>
    %596 = vector.extract_strided_slice %581 {offsets = [0, 48], sizes = [2, 16], strides = [1, 1]} : vector<2x64xf32> to vector<2x16xf32>
    %597 = arith.negf %596 : vector<2x16xf32>
    %598 = math.exp %597 : vector<2x16xf32>
    %cst_152 = arith.constant 1.000000e+00 : f32
    %599 = vector.broadcast %cst_152 : f32 to vector<2x16xf32>
    %600 = arith.addf %599, %598 : vector<2x16xf32>
    %601 = arith.divf %599, %600 : vector<2x16xf32>
    %602 = arith.mulf %593, %539 : vector<2x16xf32>
    %603 = arith.mulf %587, %595 : vector<2x16xf32>
    %604 = arith.addf %602, %603 : vector<2x16xf32>
    %605 = math.tanh %604 : vector<2x16xf32>
    %606 = arith.mulf %601, %605 : vector<2x16xf32>
    %607 = vector.broadcast %543 : i32 to vector<2x1xi32>
    %608 = arith.cmpi slt, %607, %14 : vector<2x1xi32>
    %609 = vector.shape_cast %608 : vector<2x1xi1> to vector<2x1xi1>
    %610 = vector.broadcast %609 : vector<2x1xi1> to vector<2x16xi1>
    %611 = arith.select %610, %606, %536 : vector<2x16xi1>, vector<2x16xf32>
    %612 = vector.shape_cast %608 : vector<2x1xi1> to vector<2x1xi1>
    %613 = vector.broadcast %612 : vector<2x1xi1> to vector<2x16xi1>
    %614 = arith.select %613, %604, %539 : vector<2x16xi1>, vector<2x16xf32>
    %615 = vector.shape_cast %611 : vector<2x16xf32> to vector<1x2x16xf32>
    %616 = arith.index_cast %543 : i32 to index
    %c0_153 = arith.constant 0 : index
    %c0_154 = arith.constant 0 : index
    %617 = vector.load %arg14[%616, %c0_153, %c0_154] : memref<8x2x16xf32, #tpu.memory_space<vmem>>, vector<1x2x16xf32>
    tpu.vector_store %arg14[%616, %c0_153, %c0_154], %615 {strides = array<i32>} : memref<8x2x16xf32, #tpu.memory_space<vmem>>, vector<1x2x16xf32>,
    %c8_i32 = arith.constant 8 : i32
    %618 = tpu.iota {dimensions = array<i32: 0>} : vector<8x2x16xi32>
    %619 = vector.shape_cast %14 : vector<2x1xi32> to vector<1x2x1xi32>
    %620 = vector.broadcast %619 : vector<1x2x1xi32> to vector<8x2x16xi32>
    %621 = arith.cmpi slt, %618, %620 : vector<8x2x16xi32>
    %c0_155 = arith.constant 0 : index
    %c0_156 = arith.constant 0 : index
    %c0_157 = arith.constant 0 : index
    %622 = vector.load %arg13[%c0_155, %c0_156, %c0_157] : memref<8x2x16xf32, #tpu.memory_space<vmem>>, vector<8x2x16xf32>
    %cst_158 = arith.constant 0.000000e+00 : f32
    %623 = vector.broadcast %cst_158 : f32 to vector<8x2x16xf32>
    %624 = arith.select %621, %622, %623 : vector<8x2x16xi1>, vector<8x2x16xf32>
    %625 = vector.shape_cast %624 : vector<8x2x16xf32> to vector<16x16xf32>
    %c0_159 = arith.constant 0 : index
    %c0_160 = arith.constant 0 : index
    %c0_161 = arith.constant 0 : index
    %626 = vector.load %arg14[%c0_159, %c0_160, %c0_161] : memref<8x2x16xf32, #tpu.memory_space<vmem>>, vector<8x2x16xf32>
    %627 = vector.shape_cast %626 : vector<8x2x16xf32> to vector<16x16xf32>
    %628 = arith.truncf %625 : vector<16x16xf32> to vector<16x16xbf16>
    %c0_162 = arith.constant 0 : index
    %c0_163 = arith.constant 0 : index
    %629 = vector.load %arg7[%c0_162, %c0_163] : memref<16x16xf32, #tpu.memory_space<vmem>>, vector<16x16xf32>
    %630 = arith.truncf %629 : vector<16x16xf32> to vector<16x16xbf16>
    %cst_164 = arith.constant dense<0.000000e+00> : vector<16x16xf32>
    %631 = tpu.matmul %628, %630, %cst_164 {dimension_numbers = #tpu.dot_dimension_numbers<[1], [0], [0], [1], [0, 0, 1, 1], [], []>} : vector<16x16xbf16>, vector<16x16xbf16>, vector<16x16xf32> -> vector<16x16xf32>
    %632 = arith.truncf %627 : vector<16x16xf32> to vector<16x16xbf16>
    %c0_165 = arith.constant 0 : index
    %c0_166 = arith.constant 0 : index
    %633 = vector.load %arg8[%c0_165, %c0_166] : memref<16x16xf32, #tpu.memory_space<vmem>>, vector<16x16xf32>
    %634 = arith.truncf %633 : vector<16x16xf32> to vector<16x16xbf16>
    %cst_167 = arith.constant dense<0.000000e+00> : vector<16x16xf32>
    %635 = tpu.matmul %632, %634, %cst_167 {dimension_numbers = #tpu.dot_dimension_numbers<[1], [0], [0], [1], [0, 0, 1, 1], [], []>} : vector<16x16xbf16>, vector<16x16xbf16>, vector<16x16xf32> -> vector<16x16xf32>
    %636 = arith.addf %631, %635 : vector<16x16xf32>
    %c0_168 = arith.constant 0 : index
    %c0_169 = arith.constant 0 : index
    %637 = vector.load %arg9[%c0_168, %c0_169] : memref<1x16xf32, #tpu.memory_space<vmem>>, vector<1x16xf32>
    %638 = vector.broadcast %637 : vector<1x16xf32> to vector<16x16xf32>
    %639 = arith.addf %636, %638 : vector<16x16xf32>
    %640 = vector.shape_cast %639 : vector<16x16xf32> to vector<8x2x16xf32>
    %641 = math.tanh %640 : vector<8x2x16xf32>
    %c0_170 = arith.constant 0 : index
    %c0_171 = arith.constant 0 : index
    %c0_172 = arith.constant 0 : index
    %642 = vector.load %arg10[%c0_170, %c0_171, %c0_172] : memref<8x2x16xf32, #tpu.memory_space<vmem>>, vector<8x2x16xf32>
    tpu.vector_store %arg10[%c0_170, %c0_171, %c0_172], %641 {strides = array<i32>} : memref<8x2x16xf32, #tpu.memory_space<vmem>>, vector<8x2x16xf32>,
    return
  }
}

module attributes {stable_mosaic.version = 11 : i64} {
  func.func @_head_kernel(%arg0: i32, %arg1: memref<16x16xf32, #tpu.memory_space<vmem>>, %arg2: memref<16x28xf32, #tpu.memory_space<vmem>>, %arg3: memref<1x28xf32, #tpu.memory_space<vmem>>, %arg4: memref<16x12xf32, #tpu.memory_space<vmem>>, %arg5: memref<16x16xf32, #tpu.memory_space<vmem>>) attributes {dimension_semantics = [#tpu.dimension_semantics<parallel>], iteration_bounds = array<i64: 1>, scalar_prefetch = 0 : i64, scratch_operands = 0 : i64, tpu.core_type = #tpu.core_type<tc>, window_params = [{transform_indices = @transform_0, window_bounds = array<i64: 16, 16>}, {pipeline_mode = #tpu.pipeline_mode<synchronous>, transform_indices = @transform_1, window_bounds = array<i64: 16, 28>}, {pipeline_mode = #tpu.pipeline_mode<synchronous>, transform_indices = @transform_2, window_bounds = array<i64: 1, 28>}, {transform_indices = @transform_3, window_bounds = array<i64: 16, 12>}, {transform_indices = @transform_4, window_bounds = array<i64: 16, 16>}]} {
    %c0 = arith.constant 0 : index
    %c0_0 = arith.constant 0 : index
    %0 = vector.load %arg1[%c0, %c0_0] : memref<16x16xf32, #tpu.memory_space<vmem>>, vector<16x16xf32>
    %1 = arith.truncf %0 : vector<16x16xf32> to vector<16x16xbf16>
    %c0_1 = arith.constant 0 : index
    %c0_2 = arith.constant 0 : index
    %2 = vector.load %arg2[%c0_1, %c0_2] : memref<16x28xf32, #tpu.memory_space<vmem>>, vector<16x28xf32>
    %3 = arith.truncf %2 : vector<16x28xf32> to vector<16x28xbf16>
    %cst = arith.constant dense<0.000000e+00> : vector<16x28xf32>
    %4 = tpu.matmul %1, %3, %cst {dimension_numbers = #tpu.dot_dimension_numbers<[1], [0], [0], [1], [0, 0, 1, 1], [], []>} : vector<16x16xbf16>, vector<16x28xbf16>, vector<16x28xf32> -> vector<16x28xf32>
    %c0_3 = arith.constant 0 : index
    %c0_4 = arith.constant 0 : index
    %5 = vector.load %arg3[%c0_3, %c0_4] : memref<1x28xf32, #tpu.memory_space<vmem>>, vector<1x28xf32>
    %6 = vector.broadcast %5 : vector<1x28xf32> to vector<16x28xf32>
    %7 = arith.addf %4, %6 : vector<16x28xf32>
    %8 = vector.extract_strided_slice %7 {offsets = [0, 0], sizes = [16, 12], strides = [1, 1]} : vector<16x28xf32> to vector<16x12xf32>
    %cst_5 = arith.constant dense<0xFF800000> : vector<16xf32>
    %9 = vector.multi_reduction <maximumf>, %8, %cst_5 [1] : vector<16x12xf32> to vector<16xf32>
    %10 = vector.shape_cast %9 : vector<16xf32> to vector<16x1xf32>
    %11 = vector.broadcast %10 : vector<16x1xf32> to vector<16x12xf32>
    %12 = arith.subf %8, %11 : vector<16x12xf32>
    %13 = math.exp %12 : vector<16x12xf32>
    %cst_6 = arith.constant dense<0.000000e+00> : vector<16xf32>
    %14 = vector.multi_reduction <add>, %13, %cst_6 [1] : vector<16x12xf32> to vector<16xf32>
    %15 = vector.shape_cast %14 : vector<16xf32> to vector<16x1xf32>
    %16 = math.log %15 : vector<16x1xf32>
    %17 = arith.addf %16, %10 : vector<16x1xf32>
    %18 = vector.broadcast %17 : vector<16x1xf32> to vector<16x12xf32>
    %19 = arith.subf %8, %18 : vector<16x12xf32>
    %c0_7 = arith.constant 0 : index
    %c0_8 = arith.constant 0 : index
    %20 = vector.load %arg4[%c0_7, %c0_8] : memref<16x12xf32, #tpu.memory_space<vmem>>, vector<16x12xf32>
    tpu.vector_store %arg4[%c0_7, %c0_8], %19 {strides = array<i32>} : memref<16x12xf32, #tpu.memory_space<vmem>>, vector<16x12xf32>,
    %21 = vector.extract_strided_slice %7 {offsets = [0, 12], sizes = [16, 16], strides = [1, 1]} : vector<16x28xf32> to vector<16x16xf32>
    %22 = math.tanh %21 : vector<16x16xf32>
    %c0_9 = arith.constant 0 : index
    %c0_10 = arith.constant 0 : index
    %23 = vector.load %arg5[%c0_9, %c0_10] : memref<16x16xf32, #tpu.memory_space<vmem>>, vector<16x16xf32>
    tpu.vector_store %arg5[%c0_9, %c0_10], %22 {strides = array<i32>} : memref<16x16xf32, #tpu.memory_space<vmem>>, vector<16x16xf32>,
    return
  }
  func.func @transform_0(%arg0: i32) -> (i32, i32) {
    %c0_i32 = arith.constant 0 : i32
    %c0_i32_0 = arith.constant 0 : i32
    return %arg0, %c0_i32 : i32, i32
  }
  func.func @transform_1(%arg0: i32) -> (i32, i32) {
    %c0_i32 = arith.constant 0 : i32
    %c0_i32_0 = arith.constant 0 : i32
    %c0_i32_1 = arith.constant 0 : i32
    return %c0_i32, %c0_i32_0 : i32, i32
  }
  func.func @transform_2(%arg0: i32) -> (i32, i32) {
    %c0_i32 = arith.constant 0 : i32
    %c0_i32_0 = arith.constant 0 : i32
    %c0_i32_1 = arith.constant 0 : i32
    return %c0_i32, %c0_i32_0 : i32, i32
  }
  func.func @transform_3(%arg0: i32) -> (i32, i32) {
    %c0_i32 = arith.constant 0 : i32
    %c0_i32_0 = arith.constant 0 : i32
    return %arg0, %c0_i32 : i32, i32
  }
  func.func @transform_4(%arg0: i32) -> (i32, i32) {
    %c0_i32 = arith.constant 0 : i32
    %c0_i32_0 = arith.constant 0 : i32
    return %arg0, %c0_i32 : i32, i32
  }
}

module attributes {stable_mosaic.version = 11 : i64} {
  func.func @_blstmp_layer_kernel(%arg0: memref<8x2x16xf32, #tpu.memory_space<vmem>>, %arg1: memref<2x1xi32, #tpu.memory_space<vmem>>, %arg2: memref<1x2xi32, #tpu.memory_space<vmem>>, %arg3: memref<16x128xf32, #tpu.memory_space<vmem>>, %arg4: memref<1x128xf32, #tpu.memory_space<vmem>>, %arg5: memref<16x64xf32, #tpu.memory_space<vmem>>, %arg6: memref<16x64xf32, #tpu.memory_space<vmem>>, %arg7: memref<16x16xf32, #tpu.memory_space<vmem>>, %arg8: memref<16x16xf32, #tpu.memory_space<vmem>>, %arg9: memref<1x16xf32, #tpu.memory_space<vmem>>, %arg10: memref<8x2x16xf32, #tpu.memory_space<vmem>>, %arg11: memref<8x2x64xf32, #tpu.memory_space<vmem>>, %arg12: memref<8x2x64xf32, #tpu.memory_space<vmem>>, %arg13: memref<8x2x16xf32, #tpu.memory_space<vmem>>, %arg14: memref<8x2x16xf32, #tpu.memory_space<vmem>>) attributes {dimension_semantics = [], scalar_prefetch = 0 : i64, scratch_operands = 4 : i64, tpu.core_type = #tpu.core_type<tc>} {
    %c0 = arith.constant 0 : index
    %c0_0 = arith.constant 0 : index
    %c0_1 = arith.constant 0 : index
    %0 = vector.load %arg0[%c0, %c0_0, %c0_1] : memref<8x2x16xf32, #tpu.memory_space<vmem>>, vector<8x2x16xf32>
    %1 = vector.shape_cast %0 : vector<8x2x16xf32> to vector<16x16xf32>
    %2 = arith.truncf %1 : vector<16x16xf32> to vector<16x16xbf16>
    %c0_2 = arith.constant 0 : index
    %c0_3 = arith.constant 0 : index
    %3 = vector.load %arg3[%c0_2, %c0_3] : memref<16x128xf32, #tpu.memory_space<vmem>>, vector<16x128xf32>
    %4 = arith.truncf %3 : vector<16x128xf32> to vector<16x128xbf16>
    %cst = arith.constant dense<0.000000e+00> : vector<16x128xf32>
    %5 = tpu.matmul %2, %4, %cst {dimension_numbers = #tpu.dot_dimension_numbers<[1], [0], [0], [1], [0, 0, 1, 1], [], []>} : vector<16x16xbf16>, vector<16x128xbf16>, vector<16x128xf32> -> vector<16x128xf32>
    %c0_4 = arith.constant 0 : index
    %c0_5 = arith.constant 0 : index
    %6 = vector.load %arg4[%c0_4, %c0_5] : memref<1x128xf32, #tpu.memory_space<vmem>>, vector<1x128xf32>
    %7 = vector.broadcast %6 : vector<1x128xf32> to vector<16x128xf32>
    %8 = arith.addf %5, %7 : vector<16x128xf32>
    %9 = vector.shape_cast %8 : vector<16x128xf32> to vector<8x2x128xf32>
    %10 = vector.extract_strided_slice %9 {offsets = [0, 0, 0], sizes = [8, 2, 64], strides = [1, 1, 1]} : vector<8x2x128xf32> to vector<8x2x64xf32>
    %c0_6 = arith.constant 0 : index
    %c0_7 = arith.constant 0 : index
    %c0_8 = arith.constant 0 : index
    %11 = vector.load %arg11[%c0_6, %c0_7, %c0_8] : memref<8x2x64xf32, #tpu.memory_space<vmem>>, vector<8x2x64xf32>
    tpu.vector_store %arg11[%c0_6, %c0_7, %c0_8], %10 {strides = array<i32>} : memref<8x2x64xf32, #tpu.memory_space<vmem>>, vector<8x2x64xf32>,
    %12 = vector.extract_strided_slice %9 {offsets = [0, 0, 64], sizes = [8, 2, 64], strides = [1, 1, 1]} : vector<8x2x128xf32> to vector<8x2x64xf32>
    %c0_9 = arith.constant 0 : index
    %c0_10 = arith.constant 0 : index
    %c0_11 = arith.constant 0 : index
    %13 = vector.load %arg12[%c0_9, %c0_10, %c0_11] : memref<8x2x64xf32, #tpu.memory_space<vmem>>, vector<8x2x64xf32>
    tpu.vector_store %arg12[%c0_9, %c0_10, %c0_11], %12 {strides = array<i32>} : memref<8x2x64xf32, #tpu.memory_space<vmem>>, vector<8x2x64xf32>,
    %c0_12 = arith.constant 0 : index
    %c0_13 = arith.constant 0 : index
    %14 = vector.load %arg1[%c0_12, %c0_13] : memref<2x1xi32, #tpu.memory_space<vmem>>, vector<2x1xi32>
    %c0_14 = arith.constant 0 : index
    %c0_15 = arith.constant 0 : index
    %15 = vector.load %arg5[%c0_14, %c0_15] : memref<16x64xf32, #tpu.memory_space<vmem>>, vector<16x64xf32>
    %c0_16 = arith.constant 0 : index
    %c0_17 = arith.constant 0 : index
    %16 = vector.load %arg6[%c0_16, %c0_17] : memref<16x64xf32, #tpu.memory_space<vmem>>, vector<16x64xf32>
    %cst_18 = arith.constant 0.000000e+00 : f32
    %17 = vector.broadcast %cst_18 : f32 to vector<2x16xf32>
    %c0_i32 = arith.constant 0 : i32
    %c7_i32 = arith.constant 7 : i32
    %18 = arith.subi %c7_i32, %c0_i32 : i32
    %19 = arith.index_cast %c0_i32 : i32 to index
    %c0_19 = arith.constant 0 : index
    %c0_20 = arith.constant 0 : index
    %20 = vector.load %arg11[%19, %c0_19, %c0_20] : memref<8x2x64xf32, #tpu.memory_space<vmem>>, vector<1x2x64xf32>
    %21 = vector.shape_cast %20 : vector<1x2x64xf32> to vector<2x64xf32>
    %cst_21 = arith.constant dense<0.000000e+00> : vector<2x64xf32>
    %22 = tpu.matmul %17, %15, %cst_21 {dimension_numbers = #tpu.dot_dimension_numbers<[1], [0], [0], [1], [0, 0, 1, 1], [], []>} : vector<2x16xf32>, vector<16x64xf32>, vector<2x64xf32> -> vector<2x64xf32>
    %23 = arith.addf %21, %22 : vector<2x64xf32>
    %24 = vector.extract_strided_slice %23 {offsets = [0, 0], sizes = [2, 16], strides = [1, 1]} : vector<2x64xf32> to vector<2x16xf32>
    %25 = arith.negf %24 : vector<2x16xf32>
    %26 = math.exp %25 : vector<2x16xf32>
    %cst_22 = arith.constant 1.000000e+00 : f32
    %27 = vector.broadcast %cst_22 : f32 to vector<2x16xf32>
    %28 = arith.addf %27, %26 : vector<2x16xf32>
    %29 = arith.divf %27, %28 : vector<2x16xf32>
    %30 = vector.extract_strided_slice %23 {offsets = [0, 16], sizes = [2, 16], strides = [1, 1]} : vector<2x64xf32> to vector<2x16xf32>
    %31 = arith.negf %30 : vector<2x16xf32>
    %32 = math.exp %31 : vector<2x16xf32>
    %cst_23 = arith.constant 1.000000e+00 : f32
    %33 = vector.broadcast %cst_23 : f32 to vector<2x16xf32>
    %34 = arith.addf %33, %32 : vector<2x16xf32>
    %35 = arith.divf %33, %34 : vector<2x16xf32>
    %36 = vector.extract_strided_slice %23 {offsets = [0, 32], sizes = [2, 16], strides = [1, 1]} : vector<2x64xf32> to vector<2x16xf32>
    %37 = math.tanh %36 : vector<2x16xf32>
    %38 = vector.extract_strided_slice %23 {offsets = [0, 48], sizes = [2, 16], strides = [1, 1]} : vector<2x64xf32> to vector<2x16xf32>
    %39 = arith.negf %38 : vector<2x16xf32>
    %40 = math.exp %39 : vector<2x16xf32>
    %cst_24 = arith.constant 1.000000e+00 : f32
    %41 = vector.broadcast %cst_24 : f32 to vector<2x16xf32>
    %42 = arith.addf %41, %40 : vector<2x16xf32>
    %43 = arith.divf %41, %42 : vector<2x16xf32>
    %44 = arith.mulf %35, %17 : vector<2x16xf32>
    %45 = arith.mulf %29, %37 : vector<2x16xf32>
    %46 = arith.addf %44, %45 : vector<2x16xf32>
    %47 = math.tanh %46 : vector<2x16xf32>
    %48 = arith.mulf %43, %47 : vector<2x16xf32>
    %49 = vector.shape_cast %48 : vector<2x16xf32> to vector<1x2x16xf32>
    %50 = arith.index_cast %c0_i32 : i32 to index
    %c0_25 = arith.constant 0 : index
    %c0_26 = arith.constant 0 : index
    %51 = vector.load %arg13[%50, %c0_25, %c0_26] : memref<8x2x16xf32, #tpu.memory_space<vmem>>, vector<1x2x16xf32>
    tpu.vector_store %arg13[%50, %c0_25, %c0_26], %49 {strides = array<i32>} : memref<8x2x16xf32, #tpu.memory_space<vmem>>, vector<1x2x16xf32>,
    %52 = arith.index_cast %18 : i32 to index
    %c0_27 = arith.constant 0 : index
    %c0_28 = arith.constant 0 : index
    %53 = vector.load %arg12[%52, %c0_27, %c0_28] : memref<8x2x64xf32, #tpu.memory_space<vmem>>, vector<1x2x64xf32>
    %54 = vector.shape_cast %53 : vector<1x2x64xf32> to vector<2x64xf32>
    %cst_29 = arith.constant dense<0.000000e+00> : vector<2x64xf32>
    %55 = tpu.matmul %17, %16, %cst_29 {dimension_numbers = #tpu.dot_dimension_numbers<[1], [0], [0], [1], [0, 0, 1, 1], [], []>} : vector<2x16xf32>, vector<16x64xf32>, vector<2x64xf32> -> vector<2x64xf32>
    %56 = arith.addf %54, %55 : vector<2x64xf32>
    %57 = vector.extract_strided_slice %56 {offsets = [0, 0], sizes = [2, 16], strides = [1, 1]} : vector<2x64xf32> to vector<2x16xf32>
    %58 = arith.negf %57 : vector<2x16xf32>
    %59 = math.exp %58 : vector<2x16xf32>
    %cst_30 = arith.constant 1.000000e+00 : f32
    %60 = vector.broadcast %cst_30 : f32 to vector<2x16xf32>
    %61 = arith.addf %60, %59 : vector<2x16xf32>
    %62 = arith.divf %60, %61 : vector<2x16xf32>
    %63 = vector.extract_strided_slice %56 {offsets = [0, 16], sizes = [2, 16], strides = [1, 1]} : vector<2x64xf32> to vector<2x16xf32>
    %64 = arith.negf %63 : vector<2x16xf32>
    %65 = math.exp %64 : vector<2x16xf32>
    %cst_31 = arith.constant 1.000000e+00 : f32
    %66 = vector.broadcast %cst_31 : f32 to vector<2x16xf32>
    %67 = arith.addf %66, %65 : vector<2x16xf32>
    %68 = arith.divf %66, %67 : vector<2x16xf32>
    %69 = vector.extract_strided_slice %56 {offsets = [0, 32], sizes = [2, 16], strides = [1, 1]} : vector<2x64xf32> to vector<2x16xf32>
    %70 = math.tanh %69 : vector<2x16xf32>
    %71 = vector.extract_strided_slice %56 {offsets = [0, 48], sizes = [2, 16], strides = [1, 1]} : vector<2x64xf32> to vector<2x16xf32>
    %72 = arith.negf %71 : vector<2x16xf32>
    %73 = math.exp %72 : vector<2x16xf32>
    %cst_32 = arith.constant 1.000000e+00 : f32
    %74 = vector.broadcast %cst_32 : f32 to vector<2x16xf32>
    %75 = arith.addf %74, %73 : vector<2x16xf32>
    %76 = arith.divf %74, %75 : vector<2x16xf32>
    %77 = arith.mulf %68, %17 : vector<2x16xf32>
    %78 = arith.mulf %62, %70 : vector<2x16xf32>
    %79 = arith.addf %77, %78 : vector<2x16xf32>
    %80 = math.tanh %79 : vector<2x16xf32>
    %81 = arith.mulf %76, %80 : vector<2x16xf32>
    %82 = vector.broadcast %18 : i32 to vector<2x1xi32>
    %83 = arith.cmpi slt, %82, %14 : vector<2x1xi32>
    %84 = vector.shape_cast %83 : vector<2x1xi1> to vector<2x1xi1>
    %85 = vector.broadcast %84 : vector<2x1xi1> to vector<2x16xi1>
    %86 = arith.select %85, %81, %17 : vector<2x16xi1>, vector<2x16xf32>
    %87 = vector.shape_cast %83 : vector<2x1xi1> to vector<2x1xi1>
    %88 = vector.broadcast %87 : vector<2x1xi1> to vector<2x16xi1>
    %89 = arith.select %88, %79, %17 : vector<2x16xi1>, vector<2x16xf32>
    %90 = vector.shape_cast %86 : vector<2x16xf32> to vector<1x2x16xf32>
    %91 = arith.index_cast %18 : i32 to index
    %c0_33 = arith.constant 0 : index
    %c0_34 = arith.constant 0 : index
    %92 = vector.load %arg14[%91, %c0_33, %c0_34] : memref<8x2x16xf32, #tpu.memory_space<vmem>>, vector<1x2x16xf32>
    tpu.vector_store %arg14[%91, %c0_33, %c0_34], %90 {strides = array<i32>} : memref<8x2x16xf32, #tpu.memory_space<vmem>>, vector<1x2x16xf32>,
    %c1_i32 = arith.constant 1 : i32
    %c7_i32_35 = arith.constant 7 : i32
    %93 = arith.subi %c7_i32_35, %c1_i32 : i32
    %94 = arith.index_cast %c1_i32 : i32 to index
    %c0_36 = arith.constant 0 : index
    %c0_37 = arith.constant 0 : index
    %95 = vector.load %arg11[%94, %c0_36, %c0_37] : memref<8x2x64xf32, #tpu.memory_space<vmem>>, vector<1x2x64xf32>
    %96 = vector.shape_cast %95 : vector<1x2x64xf32> to vector<2x64xf32>
    %cst_38 = arith.constant dense<0.000000e+00> : vector<2x64xf32>
    %97 = tpu.matmul %48, %15, %cst_38 {dimension_numbers = #tpu.dot_dimension_numbers<[1], [0], [0], [1], [0, 0, 1, 1], [], []>} : vector<2x16xf32>, vector<16x64xf32>, vector<2x64xf32> -> vector<2x64xf32>
    %98 = arith.addf %96, %97 : vector<2x64xf32>
    %99 = vector.extract_strided_slice %98 {offsets = [0, 0], sizes = [2, 16], strides = [1, 1]} : vector<2x64xf32> to vector<2x16xf32>
    %100 = arith.negf %99 : vector<2x16xf32>
    %101 = math.exp %100 : vector<2x16xf32>
    %cst_39 = arith.constant 1.000000e+00 : f32
    %102 = vector.broadcast %cst_39 : f32 to vector<2x16xf32>
    %103 = arith.addf %102, %101 : vector<2x16xf32>
    %104 = arith.divf %102, %103 : vector<2x16xf32>
    %105 = vector.extract_strided_slice %98 {offsets = [0, 16], sizes = [2, 16], strides = [1, 1]} : vector<2x64xf32> to vector<2x16xf32>
    %106 = arith.negf %105 : vector<2x16xf32>
    %107 = math.exp %106 : vector<2x16xf32>
    %cst_40 = arith.constant 1.000000e+00 : f32
    %108 = vector.broadcast %cst_40 : f32 to vector<2x16xf32>
    %109 = arith.addf %108, %107 : vector<2x16xf32>
    %110 = arith.divf %108, %109 : vector<2x16xf32>
    %111 = vector.extract_strided_slice %98 {offsets = [0, 32], sizes = [2, 16], strides = [1, 1]} : vector<2x64xf32> to vector<2x16xf32>
    %112 = math.tanh %111 : vector<2x16xf32>
    %113 = vector.extract_strided_slice %98 {offsets = [0, 48], sizes = [2, 16], strides = [1, 1]} : vector<2x64xf32> to vector<2x16xf32>
    %114 = arith.negf %113 : vector<2x16xf32>
    %115 = math.exp %114 : vector<2x16xf32>
    %cst_41 = arith.constant 1.000000e+00 : f32
    %116 = vector.broadcast %cst_41 : f32 to vector<2x16xf32>
    %117 = arith.addf %116, %115 : vector<2x16xf32>
    %118 = arith.divf %116, %117 : vector<2x16xf32>
    %119 = arith.mulf %110, %46 : vector<2x16xf32>
    %120 = arith.mulf %104, %112 : vector<2x16xf32>
    %121 = arith.addf %119, %120 : vector<2x16xf32>
    %122 = math.tanh %121 : vector<2x16xf32>
    %123 = arith.mulf %118, %122 : vector<2x16xf32>
    %124 = vector.shape_cast %123 : vector<2x16xf32> to vector<1x2x16xf32>
    %125 = arith.index_cast %c1_i32 : i32 to index
    %c0_42 = arith.constant 0 : index
    %c0_43 = arith.constant 0 : index
    %126 = vector.load %arg13[%125, %c0_42, %c0_43] : memref<8x2x16xf32, #tpu.memory_space<vmem>>, vector<1x2x16xf32>
    tpu.vector_store %arg13[%125, %c0_42, %c0_43], %124 {strides = array<i32>} : memref<8x2x16xf32, #tpu.memory_space<vmem>>, vector<1x2x16xf32>,
    %127 = arith.index_cast %93 : i32 to index
    %c0_44 = arith.constant 0 : index
    %c0_45 = arith.constant 0 : index
    %128 = vector.load %arg12[%127, %c0_44, %c0_45] : memref<8x2x64xf32, #tpu.memory_space<vmem>>, vector<1x2x64xf32>
    %129 = vector.shape_cast %128 : vector<1x2x64xf32> to vector<2x64xf32>
    %cst_46 = arith.constant dense<0.000000e+00> : vector<2x64xf32>
    %130 = tpu.matmul %86, %16, %cst_46 {dimension_numbers = #tpu.dot_dimension_numbers<[1], [0], [0], [1], [0, 0, 1, 1], [], []>} : vector<2x16xf32>, vector<16x64xf32>, vector<2x64xf32> -> vector<2x64xf32>
    %131 = arith.addf %129, %130 : vector<2x64xf32>
    %132 = vector.extract_strided_slice %131 {offsets = [0, 0], sizes = [2, 16], strides = [1, 1]} : vector<2x64xf32> to vector<2x16xf32>
    %133 = arith.negf %132 : vector<2x16xf32>
    %134 = math.exp %133 : vector<2x16xf32>
    %cst_47 = arith.constant 1.000000e+00 : f32
    %135 = vector.broadcast %cst_47 : f32 to vector<2x16xf32>
    %136 = arith.addf %135, %134 : vector<2x16xf32>
    %137 = arith.divf %135, %136 : vector<2x16xf32>
    %138 = vector.extract_strided_slice %131 {offsets = [0, 16], sizes = [2, 16], strides = [1, 1]} : vector<2x64xf32> to vector<2x16xf32>
    %139 = arith.negf %138 : vector<2x16xf32>
    %140 = math.exp %139 : vector<2x16xf32>
    %cst_48 = arith.constant 1.000000e+00 : f32
    %141 = vector.broadcast %cst_48 : f32 to vector<2x16xf32>
    %142 = arith.addf %141, %140 : vector<2x16xf32>
    %143 = arith.divf %141, %142 : vector<2x16xf32>
    %144 = vector.extract_strided_slice %131 {offsets = [0, 32], sizes = [2, 16], strides = [1, 1]} : vector<2x64xf32> to vector<2x16xf32>
    %145 = math.tanh %144 : vector<2x16xf32>
    %146 = vector.extract_strided_slice %131 {offsets = [0, 48], sizes = [2, 16], strides = [1, 1]} : vector<2x64xf32> to vector<2x16xf32>
    %147 = arith.negf %146 : vector<2x16xf32>
    %148 = math.exp %147 : vector<2x16xf32>
    %cst_49 = arith.constant 1.000000e+00 : f32
    %149 = vector.broadcast %cst_49 : f32 to vector<2x16xf32>
    %150 = arith.addf %149, %148 : vector<2x16xf32>
    %151 = arith.divf %149, %150 : vector<2x16xf32>
    %152 = arith.mulf %143, %89 : vector<2x16xf32>
    %153 = arith.mulf %137, %145 : vector<2x16xf32>
    %154 = arith.addf %152, %153 : vector<2x16xf32>
    %155 = math.tanh %154 : vector<2x16xf32>
    %156 = arith.mulf %151, %155 : vector<2x16xf32>
    %157 = vector.broadcast %93 : i32 to vector<2x1xi32>
    %158 = arith.cmpi slt, %157, %14 : vector<2x1xi32>
    %159 = vector.shape_cast %158 : vector<2x1xi1> to vector<2x1xi1>
    %160 = vector.broadcast %159 : vector<2x1xi1> to vector<2x16xi1>
    %161 = arith.select %160, %156, %86 : vector<2x16xi1>, vector<2x16xf32>
    %162 = vector.shape_cast %158 : vector<2x1xi1> to vector<2x1xi1>
    %163 = vector.broadcast %162 : vector<2x1xi1> to vector<2x16xi1>
    %164 = arith.select %163, %154, %89 : vector<2x16xi1>, vector<2x16xf32>
    %165 = vector.shape_cast %161 : vector<2x16xf32> to vector<1x2x16xf32>
    %166 = arith.index_cast %93 : i32 to index
    %c0_50 = arith.constant 0 : index
    %c0_51 = arith.constant 0 : index
    %167 = vector.load %arg14[%166, %c0_50, %c0_51] : memref<8x2x16xf32, #tpu.memory_space<vmem>>, vector<1x2x16xf32>
    tpu.vector_store %arg14[%166, %c0_50, %c0_51], %165 {strides = array<i32>} : memref<8x2x16xf32, #tpu.memory_space<vmem>>, vector<1x2x16xf32>,
    %c2_i32 = arith.constant 2 : i32
    %c7_i32_52 = arith.constant 7 : i32
    %168 = arith.subi %c7_i32_52, %c2_i32 : i32
    %169 = arith.index_cast %c2_i32 : i32 to index
    %c0_53 = arith.constant 0 : index
    %c0_54 = arith.constant 0 : index
    %170 = vector.load %arg11[%169, %c0_53, %c0_54] : memref<8x2x64xf32, #tpu.memory_space<vmem>>, vector<1x2x64xf32>
    %171 = vector.shape_cast %170 : vector<1x2x64xf32> to vector<2x64xf32>
    %cst_55 = arith.constant dense<0.000000e+00> : vector<2x64xf32>
    %172 = tpu.matmul %123, %15, %cst_55 {dimension_numbers = #tpu.dot_dimension_numbers<[1], [0], [0], [1], [0, 0, 1, 1], [], []>} : vector<2x16xf32>, vector<16x64xf32>, vector<2x64xf32> -> vector<2x64xf32>
    %173 = arith.addf %171, %172 : vector<2x64xf32>
    %174 = vector.extract_strided_slice %173 {offsets = [0, 0], sizes = [2, 16], strides = [1, 1]} : vector<2x64xf32> to vector<2x16xf32>
    %175 = arith.negf %174 : vector<2x16xf32>
    %176 = math.exp %175 : vector<2x16xf32>
    %cst_56 = arith.constant 1.000000e+00 : f32
    %177 = vector.broadcast %cst_56 : f32 to vector<2x16xf32>
    %178 = arith.addf %177, %176 : vector<2x16xf32>
    %179 = arith.divf %177, %178 : vector<2x16xf32>
    %180 = vector.extract_strided_slice %173 {offsets = [0, 16], sizes = [2, 16], strides = [1, 1]} : vector<2x64xf32> to vector<2x16xf32>
    %181 = arith.negf %180 : vector<2x16xf32>
    %182 = math.exp %181 : vector<2x16xf32>
    %cst_57 = arith.constant 1.000000e+00 : f32
    %183 = vector.broadcast %cst_57 : f32 to vector<2x16xf32>
    %184 = arith.addf %183, %182 : vector<2x16xf32>
    %185 = arith.divf %183, %184 : vector<2x16xf32>
    %186 = vector.extract_strided_slice %173 {offsets = [0, 32], sizes = [2, 16], strides = [1, 1]} : vector<2x64xf32> to vector<2x16xf32>
    %187 = math.tanh %186 : vector<2x16xf32>
    %188 = vector.extract_strided_slice %173 {offsets = [0, 48], sizes = [2, 16], strides = [1, 1]} : vector<2x64xf32> to vector<2x16xf32>
    %189 = arith.negf %188 : vector<2x16xf32>
    %190 = math.exp %189 : vector<2x16xf32>
    %cst_58 = arith.constant 1.000000e+00 : f32
    %191 = vector.broadcast %cst_58 : f32 to vector<2x16xf32>
    %192 = arith.addf %191, %190 : vector<2x16xf32>
    %193 = arith.divf %191, %192 : vector<2x16xf32>
    %194 = arith.mulf %185, %121 : vector<2x16xf32>
    %195 = arith.mulf %179, %187 : vector<2x16xf32>
    %196 = arith.addf %194, %195 : vector<2x16xf32>
    %197 = math.tanh %196 : vector<2x16xf32>
    %198 = arith.mulf %193, %197 : vector<2x16xf32>
    %199 = vector.shape_cast %198 : vector<2x16xf32> to vector<1x2x16xf32>
    %200 = arith.index_cast %c2_i32 : i32 to index
    %c0_59 = arith.constant 0 : index
    %c0_60 = arith.constant 0 : index
    %201 = vector.load %arg13[%200, %c0_59, %c0_60] : memref<8x2x16xf32, #tpu.memory_space<vmem>>, vector<1x2x16xf32>
    tpu.vector_store %arg13[%200, %c0_59, %c0_60], %199 {strides = array<i32>} : memref<8x2x16xf32, #tpu.memory_space<vmem>>, vector<1x2x16xf32>,
    %202 = arith.index_cast %168 : i32 to index
    %c0_61 = arith.constant 0 : index
    %c0_62 = arith.constant 0 : index
    %203 = vector.load %arg12[%202, %c0_61, %c0_62] : memref<8x2x64xf32, #tpu.memory_space<vmem>>, vector<1x2x64xf32>
    %204 = vector.shape_cast %203 : vector<1x2x64xf32> to vector<2x64xf32>
    %cst_63 = arith.constant dense<0.000000e+00> : vector<2x64xf32>
    %205 = tpu.matmul %161, %16, %cst_63 {dimension_numbers = #tpu.dot_dimension_numbers<[1], [0], [0], [1], [0, 0, 1, 1], [], []>} : vector<2x16xf32>, vector<16x64xf32>, vector<2x64xf32> -> vector<2x64xf32>
    %206 = arith.addf %204, %205 : vector<2x64xf32>
    %207 = vector.extract_strided_slice %206 {offsets = [0, 0], sizes = [2, 16], strides = [1, 1]} : vector<2x64xf32> to vector<2x16xf32>
    %208 = arith.negf %207 : vector<2x16xf32>
    %209 = math.exp %208 : vector<2x16xf32>
    %cst_64 = arith.constant 1.000000e+00 : f32
    %210 = vector.broadcast %cst_64 : f32 to vector<2x16xf32>
    %211 = arith.addf %210, %209 : vector<2x16xf32>
    %212 = arith.divf %210, %211 : vector<2x16xf32>
    %213 = vector.extract_strided_slice %206 {offsets = [0, 16], sizes = [2, 16], strides = [1, 1]} : vector<2x64xf32> to vector<2x16xf32>
    %214 = arith.negf %213 : vector<2x16xf32>
    %215 = math.exp %214 : vector<2x16xf32>
    %cst_65 = arith.constant 1.000000e+00 : f32
    %216 = vector.broadcast %cst_65 : f32 to vector<2x16xf32>
    %217 = arith.addf %216, %215 : vector<2x16xf32>
    %218 = arith.divf %216, %217 : vector<2x16xf32>
    %219 = vector.extract_strided_slice %206 {offsets = [0, 32], sizes = [2, 16], strides = [1, 1]} : vector<2x64xf32> to vector<2x16xf32>
    %220 = math.tanh %219 : vector<2x16xf32>
    %221 = vector.extract_strided_slice %206 {offsets = [0, 48], sizes = [2, 16], strides = [1, 1]} : vector<2x64xf32> to vector<2x16xf32>
    %222 = arith.negf %221 : vector<2x16xf32>
    %223 = math.exp %222 : vector<2x16xf32>
    %cst_66 = arith.constant 1.000000e+00 : f32
    %224 = vector.broadcast %cst_66 : f32 to vector<2x16xf32>
    %225 = arith.addf %224, %223 : vector<2x16xf32>
    %226 = arith.divf %224, %225 : vector<2x16xf32>
    %227 = arith.mulf %218, %164 : vector<2x16xf32>
    %228 = arith.mulf %212, %220 : vector<2x16xf32>
    %229 = arith.addf %227, %228 : vector<2x16xf32>
    %230 = math.tanh %229 : vector<2x16xf32>
    %231 = arith.mulf %226, %230 : vector<2x16xf32>
    %232 = vector.broadcast %168 : i32 to vector<2x1xi32>
    %233 = arith.cmpi slt, %232, %14 : vector<2x1xi32>
    %234 = vector.shape_cast %233 : vector<2x1xi1> to vector<2x1xi1>
    %235 = vector.broadcast %234 : vector<2x1xi1> to vector<2x16xi1>
    %236 = arith.select %235, %231, %161 : vector<2x16xi1>, vector<2x16xf32>
    %237 = vector.shape_cast %233 : vector<2x1xi1> to vector<2x1xi1>
    %238 = vector.broadcast %237 : vector<2x1xi1> to vector<2x16xi1>
    %239 = arith.select %238, %229, %164 : vector<2x16xi1>, vector<2x16xf32>
    %240 = vector.shape_cast %236 : vector<2x16xf32> to vector<1x2x16xf32>
    %241 = arith.index_cast %168 : i32 to index
    %c0_67 = arith.constant 0 : index
    %c0_68 = arith.constant 0 : index
    %242 = vector.load %arg14[%241, %c0_67, %c0_68] : memref<8x2x16xf32, #tpu.memory_space<vmem>>, vector<1x2x16xf32>
    tpu.vector_store %arg14[%241, %c0_67, %c0_68], %240 {strides = array<i32>} : memref<8x2x16xf32, #tpu.memory_space<vmem>>, vector<1x2x16xf32>,
    %c3_i32 = arith.constant 3 : i32
    %c7_i32_69 = arith.constant 7 : i32
    %243 = arith.subi %c7_i32_69, %c3_i32 : i32
    %244 = arith.index_cast %c3_i32 : i32 to index
    %c0_70 = arith.constant 0 : index
    %c0_71 = arith.constant 0 : index
    %245 = vector.load %arg11[%244, %c0_70, %c0_71] : memref<8x2x64xf32, #tpu.memory_space<vmem>>, vector<1x2x64xf32>
    %246 = vector.shape_cast %245 : vector<1x2x64xf32> to vector<2x64xf32>
    %cst_72 = arith.constant dense<0.000000e+00> : vector<2x64xf32>
    %247 = tpu.matmul %198, %15, %cst_72 {dimension_numbers = #tpu.dot_dimension_numbers<[1], [0], [0], [1], [0, 0, 1, 1], [], []>} : vector<2x16xf32>, vector<16x64xf32>, vector<2x64xf32> -> vector<2x64xf32>
    %248 = arith.addf %246, %247 : vector<2x64xf32>
    %249 = vector.extract_strided_slice %248 {offsets = [0, 0], sizes = [2, 16], strides = [1, 1]} : vector<2x64xf32> to vector<2x16xf32>
    %250 = arith.negf %249 : vector<2x16xf32>
    %251 = math.exp %250 : vector<2x16xf32>
    %cst_73 = arith.constant 1.000000e+00 : f32
    %252 = vector.broadcast %cst_73 : f32 to vector<2x16xf32>
    %253 = arith.addf %252, %251 : vector<2x16xf32>
    %254 = arith.divf %252, %253 : vector<2x16xf32>
    %255 = vector.extract_strided_slice %248 {offsets = [0, 16], sizes = [2, 16], strides = [1, 1]} : vector<2x64xf32> to vector<2x16xf32>
    %256 = arith.negf %255 : vector<2x16xf32>
    %257 = math.exp %256 : vector<2x16xf32>
    %cst_74 = arith.constant 1.000000e+00 : f32
    %258 = vector.broadcast %cst_74 : f32 to vector<2x16xf32>
    %259 = arith.addf %258, %257 : vector<2x16xf32>
    %260 = arith.divf %258, %259 : vector<2x16xf32>
    %261 = vector.extract_strided_slice %248 {offsets = [0, 32], sizes = [2, 16], strides = [1, 1]} : vector<2x64xf32> to vector<2x16xf32>
    %262 = math.tanh %261 : vector<2x16xf32>
    %263 = vector.extract_strided_slice %248 {offsets = [0, 48], sizes = [2, 16], strides = [1, 1]} : vector<2x64xf32> to vector<2x16xf32>
    %264 = arith.negf %263 : vector<2x16xf32>
    %265 = math.exp %264 : vector<2x16xf32>
    %cst_75 = arith.constant 1.000000e+00 : f32
    %266 = vector.broadcast %cst_75 : f32 to vector<2x16xf32>
    %267 = arith.addf %266, %265 : vector<2x16xf32>
    %268 = arith.divf %266, %267 : vector<2x16xf32>
    %269 = arith.mulf %260, %196 : vector<2x16xf32>
    %270 = arith.mulf %254, %262 : vector<2x16xf32>
    %271 = arith.addf %269, %270 : vector<2x16xf32>
    %272 = math.tanh %271 : vector<2x16xf32>
    %273 = arith.mulf %268, %272 : vector<2x16xf32>
    %274 = vector.shape_cast %273 : vector<2x16xf32> to vector<1x2x16xf32>
    %275 = arith.index_cast %c3_i32 : i32 to index
    %c0_76 = arith.constant 0 : index
    %c0_77 = arith.constant 0 : index
    %276 = vector.load %arg13[%275, %c0_76, %c0_77] : memref<8x2x16xf32, #tpu.memory_space<vmem>>, vector<1x2x16xf32>
    tpu.vector_store %arg13[%275, %c0_76, %c0_77], %274 {strides = array<i32>} : memref<8x2x16xf32, #tpu.memory_space<vmem>>, vector<1x2x16xf32>,
    %277 = arith.index_cast %243 : i32 to index
    %c0_78 = arith.constant 0 : index
    %c0_79 = arith.constant 0 : index
    %278 = vector.load %arg12[%277, %c0_78, %c0_79] : memref<8x2x64xf32, #tpu.memory_space<vmem>>, vector<1x2x64xf32>
    %279 = vector.shape_cast %278 : vector<1x2x64xf32> to vector<2x64xf32>
    %cst_80 = arith.constant dense<0.000000e+00> : vector<2x64xf32>
    %280 = tpu.matmul %236, %16, %cst_80 {dimension_numbers = #tpu.dot_dimension_numbers<[1], [0], [0], [1], [0, 0, 1, 1], [], []>} : vector<2x16xf32>, vector<16x64xf32>, vector<2x64xf32> -> vector<2x64xf32>
    %281 = arith.addf %279, %280 : vector<2x64xf32>
    %282 = vector.extract_strided_slice %281 {offsets = [0, 0], sizes = [2, 16], strides = [1, 1]} : vector<2x64xf32> to vector<2x16xf32>
    %283 = arith.negf %282 : vector<2x16xf32>
    %284 = math.exp %283 : vector<2x16xf32>
    %cst_81 = arith.constant 1.000000e+00 : f32
    %285 = vector.broadcast %cst_81 : f32 to vector<2x16xf32>
    %286 = arith.addf %285, %284 : vector<2x16xf32>
    %287 = arith.divf %285, %286 : vector<2x16xf32>
    %288 = vector.extract_strided_slice %281 {offsets = [0, 16], sizes = [2, 16], strides = [1, 1]} : vector<2x64xf32> to vector<2x16xf32>
    %289 = arith.negf %288 : vector<2x16xf32>
    %290 = math.exp %289 : vector<2x16xf32>
    %cst_82 = arith.constant 1.000000e+00 : f32
    %291 = vector.broadcast %cst_82 : f32 to vector<2x16xf32>
    %292 = arith.addf %291, %290 : vector<2x16xf32>
    %293 = arith.divf %291, %292 : vector<2x16xf32>
    %294 = vector.extract_strided_slice %281 {offsets = [0, 32], sizes = [2, 16], strides = [1, 1]} : vector<2x64xf32> to vector<2x16xf32>
    %295 = math.tanh %294 : vector<2x16xf32>
    %296 = vector.extract_strided_slice %281 {offsets = [0, 48], sizes = [2, 16], strides = [1, 1]} : vector<2x64xf32> to vector<2x16xf32>
    %297 = arith.negf %296 : vector<2x16xf32>
    %298 = math.exp %297 : vector<2x16xf32>
    %cst_83 = arith.constant 1.000000e+00 : f32
    %299 = vector.broadcast %cst_83 : f32 to vector<2x16xf32>
    %300 = arith.addf %299, %298 : vector<2x16xf32>
    %301 = arith.divf %299, %300 : vector<2x16xf32>
    %302 = arith.mulf %293, %239 : vector<2x16xf32>
    %303 = arith.mulf %287, %295 : vector<2x16xf32>
    %304 = arith.addf %302, %303 : vector<2x16xf32>
    %305 = math.tanh %304 : vector<2x16xf32>
    %306 = arith.mulf %301, %305 : vector<2x16xf32>
    %307 = vector.broadcast %243 : i32 to vector<2x1xi32>
    %308 = arith.cmpi slt, %307, %14 : vector<2x1xi32>
    %309 = vector.shape_cast %308 : vector<2x1xi1> to vector<2x1xi1>
    %310 = vector.broadcast %309 : vector<2x1xi1> to vector<2x16xi1>
    %311 = arith.select %310, %306, %236 : vector<2x16xi1>, vector<2x16xf32>
    %312 = vector.shape_cast %308 : vector<2x1xi1> to vector<2x1xi1>
    %313 = vector.broadcast %312 : vector<2x1xi1> to vector<2x16xi1>
    %314 = arith.select %313, %304, %239 : vector<2x16xi1>, vector<2x16xf32>
    %315 = vector.shape_cast %311 : vector<2x16xf32> to vector<1x2x16xf32>
    %316 = arith.index_cast %243 : i32 to index
    %c0_84 = arith.constant 0 : index
    %c0_85 = arith.constant 0 : index
    %317 = vector.load %arg14[%316, %c0_84, %c0_85] : memref<8x2x16xf32, #tpu.memory_space<vmem>>, vector<1x2x16xf32>
    tpu.vector_store %arg14[%316, %c0_84, %c0_85], %315 {strides = array<i32>} : memref<8x2x16xf32, #tpu.memory_space<vmem>>, vector<1x2x16xf32>,
    %c4_i32 = arith.constant 4 : i32
    %c7_i32_86 = arith.constant 7 : i32
    %318 = arith.subi %c7_i32_86, %c4_i32 : i32
    %319 = arith.index_cast %c4_i32 : i32 to index
    %c0_87 = arith.constant 0 : index
    %c0_88 = arith.constant 0 : index
    %320 = vector.load %arg11[%319, %c0_87, %c0_88] : memref<8x2x64xf32, #tpu.memory_space<vmem>>, vector<1x2x64xf32>
    %321 = vector.shape_cast %320 : vector<1x2x64xf32> to vector<2x64xf32>
    %cst_89 = arith.constant dense<0.000000e+00> : vector<2x64xf32>
    %322 = tpu.matmul %273, %15, %cst_89 {dimension_numbers = #tpu.dot_dimension_numbers<[1], [0], [0], [1], [0, 0, 1, 1], [], []>} : vector<2x16xf32>, vector<16x64xf32>, vector<2x64xf32> -> vector<2x64xf32>
    %323 = arith.addf %321, %322 : vector<2x64xf32>
    %324 = vector.extract_strided_slice %323 {offsets = [0, 0], sizes = [2, 16], strides = [1, 1]} : vector<2x64xf32> to vector<2x16xf32>
    %325 = arith.negf %324 : vector<2x16xf32>
    %326 = math.exp %325 : vector<2x16xf32>
    %cst_90 = arith.constant 1.000000e+00 : f32
    %327 = vector.broadcast %cst_90 : f32 to vector<2x16xf32>
    %328 = arith.addf %327, %326 : vector<2x16xf32>
    %329 = arith.divf %327, %328 : vector<2x16xf32>
    %330 = vector.extract_strided_slice %323 {offsets = [0, 16], sizes = [2, 16], strides = [1, 1]} : vector<2x64xf32> to vector<2x16xf32>
    %331 = arith.negf %330 : vector<2x16xf32>
    %332 = math.exp %331 : vector<2x16xf32>
    %cst_91 = arith.constant 1.000000e+00 : f32
    %333 = vector.broadcast %cst_91 : f32 to vector<2x16xf32>
    %334 = arith.addf %333, %332 : vector<2x16xf32>
    %335 = arith.divf %333, %334 : vector<2x16xf32>
    %336 = vector.extract_strided_slice %323 {offsets = [0, 32], sizes = [2, 16], strides = [1, 1]} : vector<2x64xf32> to vector<2x16xf32>
    %337 = math.tanh %336 : vector<2x16xf32>
    %338 = vector.extract_strided_slice %323 {offsets = [0, 48], sizes = [2, 16], strides = [1, 1]} : vector<2x64xf32> to vector<2x16xf32>
    %339 = arith.negf %338 : vector<2x16xf32>
    %340 = math.exp %339 : vector<2x16xf32>
    %cst_92 = arith.constant 1.000000e+00 : f32
    %341 = vector.broadcast %cst_92 : f32 to vector<2x16xf32>
    %342 = arith.addf %341, %340 : vector<2x16xf32>
    %343 = arith.divf %341, %342 : vector<2x16xf32>
    %344 = arith.mulf %335, %271 : vector<2x16xf32>
    %345 = arith.mulf %329, %337 : vector<2x16xf32>
    %346 = arith.addf %344, %345 : vector<2x16xf32>
    %347 = math.tanh %346 : vector<2x16xf32>
    %348 = arith.mulf %343, %347 : vector<2x16xf32>
    %349 = vector.shape_cast %348 : vector<2x16xf32> to vector<1x2x16xf32>
    %350 = arith.index_cast %c4_i32 : i32 to index
    %c0_93 = arith.constant 0 : index
    %c0_94 = arith.constant 0 : index
    %351 = vector.load %arg13[%350, %c0_93, %c0_94] : memref<8x2x16xf32, #tpu.memory_space<vmem>>, vector<1x2x16xf32>
    tpu.vector_store %arg13[%350, %c0_93, %c0_94], %349 {strides = array<i32>} : memref<8x2x16xf32, #tpu.memory_space<vmem>>, vector<1x2x16xf32>,
    %352 = arith.index_cast %318 : i32 to index
    %c0_95 = arith.constant 0 : index
    %c0_96 = arith.constant 0 : index
    %353 = vector.load %arg12[%352, %c0_95, %c0_96] : memref<8x2x64xf32, #tpu.memory_space<vmem>>, vector<1x2x64xf32>
    %354 = vector.shape_cast %353 : vector<1x2x64xf32> to vector<2x64xf32>
    %cst_97 = arith.constant dense<0.000000e+00> : vector<2x64xf32>
    %355 = tpu.matmul %311, %16, %cst_97 {dimension_numbers = #tpu.dot_dimension_numbers<[1], [0], [0], [1], [0, 0, 1, 1], [], []>} : vector<2x16xf32>, vector<16x64xf32>, vector<2x64xf32> -> vector<2x64xf32>
    %356 = arith.addf %354, %355 : vector<2x64xf32>
    %357 = vector.extract_strided_slice %356 {offsets = [0, 0], sizes = [2, 16], strides = [1, 1]} : vector<2x64xf32> to vector<2x16xf32>
    %358 = arith.negf %357 : vector<2x16xf32>
    %359 = math.exp %358 : vector<2x16xf32>
    %cst_98 = arith.constant 1.000000e+00 : f32
    %360 = vector.broadcast %cst_98 : f32 to vector<2x16xf32>
    %361 = arith.addf %360, %359 : vector<2x16xf32>
    %362 = arith.divf %360, %361 : vector<2x16xf32>
    %363 = vector.extract_strided_slice %356 {offsets = [0, 16], sizes = [2, 16], strides = [1, 1]} : vector<2x64xf32> to vector<2x16xf32>
    %364 = arith.negf %363 : vector<2x16xf32>
    %365 = math.exp %364 : vector<2x16xf32>
    %cst_99 = arith.constant 1.000000e+00 : f32
    %366 = vector.broadcast %cst_99 : f32 to vector<2x16xf32>
    %367 = arith.addf %366, %365 : vector<2x16xf32>
    %368 = arith.divf %366, %367 : vector<2x16xf32>
    %369 = vector.extract_strided_slice %356 {offsets = [0, 32], sizes = [2, 16], strides = [1, 1]} : vector<2x64xf32> to vector<2x16xf32>
    %370 = math.tanh %369 : vector<2x16xf32>
    %371 = vector.extract_strided_slice %356 {offsets = [0, 48], sizes = [2, 16], strides = [1, 1]} : vector<2x64xf32> to vector<2x16xf32>
    %372 = arith.negf %371 : vector<2x16xf32>
    %373 = math.exp %372 : vector<2x16xf32>
    %cst_100 = arith.constant 1.000000e+00 : f32
    %374 = vector.broadcast %cst_100 : f32 to vector<2x16xf32>
    %375 = arith.addf %374, %373 : vector<2x16xf32>
    %376 = arith.divf %374, %375 : vector<2x16xf32>
    %377 = arith.mulf %368, %314 : vector<2x16xf32>
    %378 = arith.mulf %362, %370 : vector<2x16xf32>
    %379 = arith.addf %377, %378 : vector<2x16xf32>
    %380 = math.tanh %379 : vector<2x16xf32>
    %381 = arith.mulf %376, %380 : vector<2x16xf32>
    %382 = vector.broadcast %318 : i32 to vector<2x1xi32>
    %383 = arith.cmpi slt, %382, %14 : vector<2x1xi32>
    %384 = vector.shape_cast %383 : vector<2x1xi1> to vector<2x1xi1>
    %385 = vector.broadcast %384 : vector<2x1xi1> to vector<2x16xi1>
    %386 = arith.select %385, %381, %311 : vector<2x16xi1>, vector<2x16xf32>
    %387 = vector.shape_cast %383 : vector<2x1xi1> to vector<2x1xi1>
    %388 = vector.broadcast %387 : vector<2x1xi1> to vector<2x16xi1>
    %389 = arith.select %388, %379, %314 : vector<2x16xi1>, vector<2x16xf32>
    %390 = vector.shape_cast %386 : vector<2x16xf32> to vector<1x2x16xf32>
    %391 = arith.index_cast %318 : i32 to index
    %c0_101 = arith.constant 0 : index
    %c0_102 = arith.constant 0 : index
    %392 = vector.load %arg14[%391, %c0_101, %c0_102] : memref<8x2x16xf32, #tpu.memory_space<vmem>>, vector<1x2x16xf32>
    tpu.vector_store %arg14[%391, %c0_101, %c0_102], %390 {strides = array<i32>} : memref<8x2x16xf32, #tpu.memory_space<vmem>>, vector<1x2x16xf32>,
    %c5_i32 = arith.constant 5 : i32
    %c7_i32_103 = arith.constant 7 : i32
    %393 = arith.subi %c7_i32_103, %c5_i32 : i32
    %394 = arith.index_cast %c5_i32 : i32 to index
    %c0_104 = arith.constant 0 : index
    %c0_105 = arith.constant 0 : index
    %395 = vector.load %arg11[%394, %c0_104, %c0_105] : memref<8x2x64xf32, #tpu.memory_space<vmem>>, vector<1x2x64xf32>
    %396 = vector.shape_cast %395 : vector<1x2x64xf32> to vector<2x64xf32>
    %cst_106 = arith.constant dense<0.000000e+00> : vector<2x64xf32>
    %397 = tpu.matmul %348, %15, %cst_106 {dimension_numbers = #tpu.dot_dimension_numbers<[1], [0], [0], [1], [0, 0, 1, 1], [], []>} : vector<2x16xf32>, vector<16x64xf32>, vector<2x64xf32> -> vector<2x64xf32>
    %398 = arith.addf %396, %397 : vector<2x64xf32>
    %399 = vector.extract_strided_slice %398 {offsets = [0, 0], sizes = [2, 16], strides = [1, 1]} : vector<2x64xf32> to vector<2x16xf32>
    %400 = arith.negf %399 : vector<2x16xf32>
    %401 = math.exp %400 : vector<2x16xf32>
    %cst_107 = arith.constant 1.000000e+00 : f32
    %402 = vector.broadcast %cst_107 : f32 to vector<2x16xf32>
    %403 = arith.addf %402, %401 : vector<2x16xf32>
    %404 = arith.divf %402, %403 : vector<2x16xf32>
    %405 = vector.extract_strided_slice %398 {offsets = [0, 16], sizes = [2, 16], strides = [1, 1]} : vector<2x64xf32> to vector<2x16xf32>
    %406 = arith.negf %405 : vector<2x16xf32>
    %407 = math.exp %406 : vector<2x16xf32>
    %cst_108 = arith.constant 1.000000e+00 : f32
    %408 = vector.broadcast %cst_108 : f32 to vector<2x16xf32>
    %409 = arith.addf %408, %407 : vector<2x16xf32>
    %410 = arith.divf %408, %409 : vector<2x16xf32>
    %411 = vector.extract_strided_slice %398 {offsets = [0, 32], sizes = [2, 16], strides = [1, 1]} : vector<2x64xf32> to vector<2x16xf32>
    %412 = math.tanh %411 : vector<2x16xf32>
    %413 = vector.extract_strided_slice %398 {offsets = [0, 48], sizes = [2, 16], strides = [1, 1]} : vector<2x64xf32> to vector<2x16xf32>
    %414 = arith.negf %413 : vector<2x16xf32>
    %415 = math.exp %414 : vector<2x16xf32>
    %cst_109 = arith.constant 1.000000e+00 : f32
    %416 = vector.broadcast %cst_109 : f32 to vector<2x16xf32>
    %417 = arith.addf %416, %415 : vector<2x16xf32>
    %418 = arith.divf %416, %417 : vector<2x16xf32>
    %419 = arith.mulf %410, %346 : vector<2x16xf32>
    %420 = arith.mulf %404, %412 : vector<2x16xf32>
    %421 = arith.addf %419, %420 : vector<2x16xf32>
    %422 = math.tanh %421 : vector<2x16xf32>
    %423 = arith.mulf %418, %422 : vector<2x16xf32>
    %424 = vector.shape_cast %423 : vector<2x16xf32> to vector<1x2x16xf32>
    %425 = arith.index_cast %c5_i32 : i32 to index
    %c0_110 = arith.constant 0 : index
    %c0_111 = arith.constant 0 : index
    %426 = vector.load %arg13[%425, %c0_110, %c0_111] : memref<8x2x16xf32, #tpu.memory_space<vmem>>, vector<1x2x16xf32>
    tpu.vector_store %arg13[%425, %c0_110, %c0_111], %424 {strides = array<i32>} : memref<8x2x16xf32, #tpu.memory_space<vmem>>, vector<1x2x16xf32>,
    %427 = arith.index_cast %393 : i32 to index
    %c0_112 = arith.constant 0 : index
    %c0_113 = arith.constant 0 : index
    %428 = vector.load %arg12[%427, %c0_112, %c0_113] : memref<8x2x64xf32, #tpu.memory_space<vmem>>, vector<1x2x64xf32>
    %429 = vector.shape_cast %428 : vector<1x2x64xf32> to vector<2x64xf32>
    %cst_114 = arith.constant dense<0.000000e+00> : vector<2x64xf32>
    %430 = tpu.matmul %386, %16, %cst_114 {dimension_numbers = #tpu.dot_dimension_numbers<[1], [0], [0], [1], [0, 0, 1, 1], [], []>} : vector<2x16xf32>, vector<16x64xf32>, vector<2x64xf32> -> vector<2x64xf32>
    %431 = arith.addf %429, %430 : vector<2x64xf32>
    %432 = vector.extract_strided_slice %431 {offsets = [0, 0], sizes = [2, 16], strides = [1, 1]} : vector<2x64xf32> to vector<2x16xf32>
    %433 = arith.negf %432 : vector<2x16xf32>
    %434 = math.exp %433 : vector<2x16xf32>
    %cst_115 = arith.constant 1.000000e+00 : f32
    %435 = vector.broadcast %cst_115 : f32 to vector<2x16xf32>
    %436 = arith.addf %435, %434 : vector<2x16xf32>
    %437 = arith.divf %435, %436 : vector<2x16xf32>
    %438 = vector.extract_strided_slice %431 {offsets = [0, 16], sizes = [2, 16], strides = [1, 1]} : vector<2x64xf32> to vector<2x16xf32>
    %439 = arith.negf %438 : vector<2x16xf32>
    %440 = math.exp %439 : vector<2x16xf32>
    %cst_116 = arith.constant 1.000000e+00 : f32
    %441 = vector.broadcast %cst_116 : f32 to vector<2x16xf32>
    %442 = arith.addf %441, %440 : vector<2x16xf32>
    %443 = arith.divf %441, %442 : vector<2x16xf32>
    %444 = vector.extract_strided_slice %431 {offsets = [0, 32], sizes = [2, 16], strides = [1, 1]} : vector<2x64xf32> to vector<2x16xf32>
    %445 = math.tanh %444 : vector<2x16xf32>
    %446 = vector.extract_strided_slice %431 {offsets = [0, 48], sizes = [2, 16], strides = [1, 1]} : vector<2x64xf32> to vector<2x16xf32>
    %447 = arith.negf %446 : vector<2x16xf32>
    %448 = math.exp %447 : vector<2x16xf32>
    %cst_117 = arith.constant 1.000000e+00 : f32
    %449 = vector.broadcast %cst_117 : f32 to vector<2x16xf32>
    %450 = arith.addf %449, %448 : vector<2x16xf32>
    %451 = arith.divf %449, %450 : vector<2x16xf32>
    %452 = arith.mulf %443, %389 : vector<2x16xf32>
    %453 = arith.mulf %437, %445 : vector<2x16xf32>
    %454 = arith.addf %452, %453 : vector<2x16xf32>
    %455 = math.tanh %454 : vector<2x16xf32>
    %456 = arith.mulf %451, %455 : vector<2x16xf32>
    %457 = vector.broadcast %393 : i32 to vector<2x1xi32>
    %458 = arith.cmpi slt, %457, %14 : vector<2x1xi32>
    %459 = vector.shape_cast %458 : vector<2x1xi1> to vector<2x1xi1>
    %460 = vector.broadcast %459 : vector<2x1xi1> to vector<2x16xi1>
    %461 = arith.select %460, %456, %386 : vector<2x16xi1>, vector<2x16xf32>
    %462 = vector.shape_cast %458 : vector<2x1xi1> to vector<2x1xi1>
    %463 = vector.broadcast %462 : vector<2x1xi1> to vector<2x16xi1>
    %464 = arith.select %463, %454, %389 : vector<2x16xi1>, vector<2x16xf32>
    %465 = vector.shape_cast %461 : vector<2x16xf32> to vector<1x2x16xf32>
    %466 = arith.index_cast %393 : i32 to index
    %c0_118 = arith.constant 0 : index
    %c0_119 = arith.constant 0 : index
    %467 = vector.load %arg14[%466, %c0_118, %c0_119] : memref<8x2x16xf32, #tpu.memory_space<vmem>>, vector<1x2x16xf32>
    tpu.vector_store %arg14[%466, %c0_118, %c0_119], %465 {strides = array<i32>} : memref<8x2x16xf32, #tpu.memory_space<vmem>>, vector<1x2x16xf32>,
    %c6_i32 = arith.constant 6 : i32
    %c7_i32_120 = arith.constant 7 : i32
    %468 = arith.subi %c7_i32_120, %c6_i32 : i32
    %469 = arith.index_cast %c6_i32 : i32 to index
    %c0_121 = arith.constant 0 : index
    %c0_122 = arith.constant 0 : index
    %470 = vector.load %arg11[%469, %c0_121, %c0_122] : memref<8x2x64xf32, #tpu.memory_space<vmem>>, vector<1x2x64xf32>
    %471 = vector.shape_cast %470 : vector<1x2x64xf32> to vector<2x64xf32>
    %cst_123 = arith.constant dense<0.000000e+00> : vector<2x64xf32>
    %472 = tpu.matmul %423, %15, %cst_123 {dimension_numbers = #tpu.dot_dimension_numbers<[1], [0], [0], [1], [0, 0, 1, 1], [], []>} : vector<2x16xf32>, vector<16x64xf32>, vector<2x64xf32> -> vector<2x64xf32>
    %473 = arith.addf %471, %472 : vector<2x64xf32>
    %474 = vector.extract_strided_slice %473 {offsets = [0, 0], sizes = [2, 16], strides = [1, 1]} : vector<2x64xf32> to vector<2x16xf32>
    %475 = arith.negf %474 : vector<2x16xf32>
    %476 = math.exp %475 : vector<2x16xf32>
    %cst_124 = arith.constant 1.000000e+00 : f32
    %477 = vector.broadcast %cst_124 : f32 to vector<2x16xf32>
    %478 = arith.addf %477, %476 : vector<2x16xf32>
    %479 = arith.divf %477, %478 : vector<2x16xf32>
    %480 = vector.extract_strided_slice %473 {offsets = [0, 16], sizes = [2, 16], strides = [1, 1]} : vector<2x64xf32> to vector<2x16xf32>
    %481 = arith.negf %480 : vector<2x16xf32>
    %482 = math.exp %481 : vector<2x16xf32>
    %cst_125 = arith.constant 1.000000e+00 : f32
    %483 = vector.broadcast %cst_125 : f32 to vector<2x16xf32>
    %484 = arith.addf %483, %482 : vector<2x16xf32>
    %485 = arith.divf %483, %484 : vector<2x16xf32>
    %486 = vector.extract_strided_slice %473 {offsets = [0, 32], sizes = [2, 16], strides = [1, 1]} : vector<2x64xf32> to vector<2x16xf32>
    %487 = math.tanh %486 : vector<2x16xf32>
    %488 = vector.extract_strided_slice %473 {offsets = [0, 48], sizes = [2, 16], strides = [1, 1]} : vector<2x64xf32> to vector<2x16xf32>
    %489 = arith.negf %488 : vector<2x16xf32>
    %490 = math.exp %489 : vector<2x16xf32>
    %cst_126 = arith.constant 1.000000e+00 : f32
    %491 = vector.broadcast %cst_126 : f32 to vector<2x16xf32>
    %492 = arith.addf %491, %490 : vector<2x16xf32>
    %493 = arith.divf %491, %492 : vector<2x16xf32>
    %494 = arith.mulf %485, %421 : vector<2x16xf32>
    %495 = arith.mulf %479, %487 : vector<2x16xf32>
    %496 = arith.addf %494, %495 : vector<2x16xf32>
    %497 = math.tanh %496 : vector<2x16xf32>
    %498 = arith.mulf %493, %497 : vector<2x16xf32>
    %499 = vector.shape_cast %498 : vector<2x16xf32> to vector<1x2x16xf32>
    %500 = arith.index_cast %c6_i32 : i32 to index
    %c0_127 = arith.constant 0 : index
    %c0_128 = arith.constant 0 : index
    %501 = vector.load %arg13[%500, %c0_127, %c0_128] : memref<8x2x16xf32, #tpu.memory_space<vmem>>, vector<1x2x16xf32>
    tpu.vector_store %arg13[%500, %c0_127, %c0_128], %499 {strides = array<i32>} : memref<8x2x16xf32, #tpu.memory_space<vmem>>, vector<1x2x16xf32>,
    %502 = arith.index_cast %468 : i32 to index
    %c0_129 = arith.constant 0 : index
    %c0_130 = arith.constant 0 : index
    %503 = vector.load %arg12[%502, %c0_129, %c0_130] : memref<8x2x64xf32, #tpu.memory_space<vmem>>, vector<1x2x64xf32>
    %504 = vector.shape_cast %503 : vector<1x2x64xf32> to vector<2x64xf32>
    %cst_131 = arith.constant dense<0.000000e+00> : vector<2x64xf32>
    %505 = tpu.matmul %461, %16, %cst_131 {dimension_numbers = #tpu.dot_dimension_numbers<[1], [0], [0], [1], [0, 0, 1, 1], [], []>} : vector<2x16xf32>, vector<16x64xf32>, vector<2x64xf32> -> vector<2x64xf32>
    %506 = arith.addf %504, %505 : vector<2x64xf32>
    %507 = vector.extract_strided_slice %506 {offsets = [0, 0], sizes = [2, 16], strides = [1, 1]} : vector<2x64xf32> to vector<2x16xf32>
    %508 = arith.negf %507 : vector<2x16xf32>
    %509 = math.exp %508 : vector<2x16xf32>
    %cst_132 = arith.constant 1.000000e+00 : f32
    %510 = vector.broadcast %cst_132 : f32 to vector<2x16xf32>
    %511 = arith.addf %510, %509 : vector<2x16xf32>
    %512 = arith.divf %510, %511 : vector<2x16xf32>
    %513 = vector.extract_strided_slice %506 {offsets = [0, 16], sizes = [2, 16], strides = [1, 1]} : vector<2x64xf32> to vector<2x16xf32>
    %514 = arith.negf %513 : vector<2x16xf32>
    %515 = math.exp %514 : vector<2x16xf32>
    %cst_133 = arith.constant 1.000000e+00 : f32
    %516 = vector.broadcast %cst_133 : f32 to vector<2x16xf32>
    %517 = arith.addf %516, %515 : vector<2x16xf32>
    %518 = arith.divf %516, %517 : vector<2x16xf32>
    %519 = vector.extract_strided_slice %506 {offsets = [0, 32], sizes = [2, 16], strides = [1, 1]} : vector<2x64xf32> to vector<2x16xf32>
    %520 = math.tanh %519 : vector<2x16xf32>
    %521 = vector.extract_strided_slice %506 {offsets = [0, 48], sizes = [2, 16], strides = [1, 1]} : vector<2x64xf32> to vector<2x16xf32>
    %522 = arith.negf %521 : vector<2x16xf32>
    %523 = math.exp %522 : vector<2x16xf32>
    %cst_134 = arith.constant 1.000000e+00 : f32
    %524 = vector.broadcast %cst_134 : f32 to vector<2x16xf32>
    %525 = arith.addf %524, %523 : vector<2x16xf32>
    %526 = arith.divf %524, %525 : vector<2x16xf32>
    %527 = arith.mulf %518, %464 : vector<2x16xf32>
    %528 = arith.mulf %512, %520 : vector<2x16xf32>
    %529 = arith.addf %527, %528 : vector<2x16xf32>
    %530 = math.tanh %529 : vector<2x16xf32>
    %531 = arith.mulf %526, %530 : vector<2x16xf32>
    %532 = vector.broadcast %468 : i32 to vector<2x1xi32>
    %533 = arith.cmpi slt, %532, %14 : vector<2x1xi32>
    %534 = vector.shape_cast %533 : vector<2x1xi1> to vector<2x1xi1>
    %535 = vector.broadcast %534 : vector<2x1xi1> to vector<2x16xi1>
    %536 = arith.select %535, %531, %461 : vector<2x16xi1>, vector<2x16xf32>
    %537 = vector.shape_cast %533 : vector<2x1xi1> to vector<2x1xi1>
    %538 = vector.broadcast %537 : vector<2x1xi1> to vector<2x16xi1>
    %539 = arith.select %538, %529, %464 : vector<2x16xi1>, vector<2x16xf32>
    %540 = vector.shape_cast %536 : vector<2x16xf32> to vector<1x2x16xf32>
    %541 = arith.index_cast %468 : i32 to index
    %c0_135 = arith.constant 0 : index
    %c0_136 = arith.constant 0 : index
    %542 = vector.load %arg14[%541, %c0_135, %c0_136] : memref<8x2x16xf32, #tpu.memory_space<vmem>>, vector<1x2x16xf32>
    tpu.vector_store %arg14[%541, %c0_135, %c0_136], %540 {strides = array<i32>} : memref<8x2x16xf32, #tpu.memory_space<vmem>>, vector<1x2x16xf32>,
    %c7_i32_137 = arith.constant 7 : i32
    %c7_i32_138 = arith.constant 7 : i32
    %543 = arith.subi %c7_i32_138, %c7_i32_137 : i32
    %544 = arith.index_cast %c7_i32_137 : i32 to index
    %c0_139 = arith.constant 0 : index
    %c0_140 = arith.constant 0 : index
    %545 = vector.load %arg11[%544, %c0_139, %c0_140] : memref<8x2x64xf32, #tpu.memory_space<vmem>>, vector<1x2x64xf32>
    %546 = vector.shape_cast %545 : vector<1x2x64xf32> to vector<2x64xf32>
    %cst_141 = arith.constant dense<0.000000e+00> : vector<2x64xf32>
    %547 = tpu.matmul %498, %15, %cst_141 {dimension_numbers = #tpu.dot_dimension_numbers<[1], [0], [0], [1], [0, 0, 1, 1], [], []>} : vector<2x16xf32>, vector<16x64xf32>, vector<2x64xf32> -> vector<2x64xf32>
    %548 = arith.addf %546, %547 : vector<2x64xf32>
    %549 = vector.extract_strided_slice %548 {offsets = [0, 0], sizes = [2, 16], strides = [1, 1]} : vector<2x64xf32> to vector<2x16xf32>
    %550 = arith.negf %549 : vector<2x16xf32>
    %551 = math.exp %550 : vector<2x16xf32>
    %cst_142 = arith.constant 1.000000e+00 : f32
    %552 = vector.broadcast %cst_142 : f32 to vector<2x16xf32>
    %553 = arith.addf %552, %551 : vector<2x16xf32>
    %554 = arith.divf %552, %553 : vector<2x16xf32>
    %555 = vector.extract_strided_slice %548 {offsets = [0, 16], sizes = [2, 16], strides = [1, 1]} : vector<2x64xf32> to vector<2x16xf32>
    %556 = arith.negf %555 : vector<2x16xf32>
    %557 = math.exp %556 : vector<2x16xf32>
    %cst_143 = arith.constant 1.000000e+00 : f32
    %558 = vector.broadcast %cst_143 : f32 to vector<2x16xf32>
    %559 = arith.addf %558, %557 : vector<2x16xf32>
    %560 = arith.divf %558, %559 : vector<2x16xf32>
    %561 = vector.extract_strided_slice %548 {offsets = [0, 32], sizes = [2, 16], strides = [1, 1]} : vector<2x64xf32> to vector<2x16xf32>
    %562 = math.tanh %561 : vector<2x16xf32>
    %563 = vector.extract_strided_slice %548 {offsets = [0, 48], sizes = [2, 16], strides = [1, 1]} : vector<2x64xf32> to vector<2x16xf32>
    %564 = arith.negf %563 : vector<2x16xf32>
    %565 = math.exp %564 : vector<2x16xf32>
    %cst_144 = arith.constant 1.000000e+00 : f32
    %566 = vector.broadcast %cst_144 : f32 to vector<2x16xf32>
    %567 = arith.addf %566, %565 : vector<2x16xf32>
    %568 = arith.divf %566, %567 : vector<2x16xf32>
    %569 = arith.mulf %560, %496 : vector<2x16xf32>
    %570 = arith.mulf %554, %562 : vector<2x16xf32>
    %571 = arith.addf %569, %570 : vector<2x16xf32>
    %572 = math.tanh %571 : vector<2x16xf32>
    %573 = arith.mulf %568, %572 : vector<2x16xf32>
    %574 = vector.shape_cast %573 : vector<2x16xf32> to vector<1x2x16xf32>
    %575 = arith.index_cast %c7_i32_137 : i32 to index
    %c0_145 = arith.constant 0 : index
    %c0_146 = arith.constant 0 : index
    %576 = vector.load %arg13[%575, %c0_145, %c0_146] : memref<8x2x16xf32, #tpu.memory_space<vmem>>, vector<1x2x16xf32>
    tpu.vector_store %arg13[%575, %c0_145, %c0_146], %574 {strides = array<i32>} : memref<8x2x16xf32, #tpu.memory_space<vmem>>, vector<1x2x16xf32>,
    %577 = arith.index_cast %543 : i32 to index
    %c0_147 = arith.constant 0 : index
    %c0_148 = arith.constant 0 : index
    %578 = vector.load %arg12[%577, %c0_147, %c0_148] : memref<8x2x64xf32, #tpu.memory_space<vmem>>, vector<1x2x64xf32>
    %579 = vector.shape_cast %578 : vector<1x2x64xf32> to vector<2x64xf32>
    %cst_149 = arith.constant dense<0.000000e+00> : vector<2x64xf32>
    %580 = tpu.matmul %536, %16, %cst_149 {dimension_numbers = #tpu.dot_dimension_numbers<[1], [0], [0], [1], [0, 0, 1, 1], [], []>} : vector<2x16xf32>, vector<16x64xf32>, vector<2x64xf32> -> vector<2x64xf32>
    %581 = arith.addf %579, %580 : vector<2x64xf32>
    %582 = vector.extract_strided_slice %581 {offsets = [0, 0], sizes = [2, 16], strides = [1, 1]} : vector<2x64xf32> to vector<2x16xf32>
    %583 = arith.negf %582 : vector<2x16xf32>
    %584 = math.exp %583 : vector<2x16xf32>
    %cst_150 = arith.constant 1.000000e+00 : f32
    %585 = vector.broadcast %cst_150 : f32 to vector<2x16xf32>
    %586 = arith.addf %585, %584 : vector<2x16xf32>
    %587 = arith.divf %585, %586 : vector<2x16xf32>
    %588 = vector.extract_strided_slice %581 {offsets = [0, 16], sizes = [2, 16], strides = [1, 1]} : vector<2x64xf32> to vector<2x16xf32>
    %589 = arith.negf %588 : vector<2x16xf32>
    %590 = math.exp %589 : vector<2x16xf32>
    %cst_151 = arith.constant 1.000000e+00 : f32
    %591 = vector.broadcast %cst_151 : f32 to vector<2x16xf32>
    %592 = arith.addf %591, %590 : vector<2x16xf32>
    %593 = arith.divf %591, %592 : vector<2x16xf32>
    %594 = vector.extract_strided_slice %581 {offsets = [0, 32], sizes = [2, 16], strides = [1, 1]} : vector<2x64xf32> to vector<2x16xf32>
    %595 = math.tanh %594 : vector<2x16xf32>
    %596 = vector.extract_strided_slice %581 {offsets = [0, 48], sizes = [2, 16], strides = [1, 1]} : vector<2x64xf32> to vector<2x16xf32>
    %597 = arith.negf %596 : vector<2x16xf32>
    %598 = math.exp %597 : vector<2x16xf32>
    %cst_152 = arith.constant 1.000000e+00 : f32
    %599 = vector.broadcast %cst_152 : f32 to vector<2x16xf32>
    %600 = arith.addf %599, %598 : vector<2x16xf32>
    %601 = arith.divf %599, %600 : vector<2x16xf32>
    %602 = arith.mulf %593, %539 : vector<2x16xf32>
    %603 = arith.mulf %587, %595 : vector<2x16xf32>
    %604 = arith.addf %602, %603 : vector<2x16xf32>
    %605 = math.tanh %604 : vector<2x16xf32>
    %606 = arith.mulf %601, %605 : vector<2x16xf32>
    %607 = vector.broadcast %543 : i32 to vector<2x1xi32>
    %608 = arith.cmpi slt, %607, %14 : vector<2x1xi32>
    %609 = vector.shape_cast %608 : vector<2x1xi1> to vector<2x1xi1>
    %610 = vector.broadcast %609 : vector<2x1xi1> to vector<2x16xi1>
    %611 = arith.select %610, %606, %536 : vector<2x16xi1>, vector<2x16xf32>
    %612 = vector.shape_cast %608 : vector<2x1xi1> to vector<2x1xi1>
    %613 = vector.broadcast %612 : vector<2x1xi1> to vector<2x16xi1>
    %614 = arith.select %613, %604, %539 : vector<2x16xi1>, vector<2x16xf32>
    %615 = vector.shape_cast %611 : vector<2x16xf32> to vector<1x2x16xf32>
    %616 = arith.index_cast %543 : i32 to index
    %c0_153 = arith.constant 0 : index
    %c0_154 = arith.constant 0 : index
    %617 = vector.load %arg14[%616, %c0_153, %c0_154] : memref<8x2x16xf32, #tpu.memory_space<vmem>>, vector<1x2x16xf32>
    tpu.vector_store %arg14[%616, %c0_153, %c0_154], %615 {strides = array<i32>} : memref<8x2x16xf32, #tpu.memory_space<vmem>>, vector<1x2x16xf32>,
    %c8_i32 = arith.constant 8 : i32
    %618 = tpu.iota {dimensions = array<i32: 0>} : vector<8x2x16xi32>
    %619 = vector.shape_cast %14 : vector<2x1xi32> to vector<1x2x1xi32>
    %620 = vector.broadcast %619 : vector<1x2x1xi32> to vector<8x2x16xi32>
    %621 = arith.cmpi slt, %618, %620 : vector<8x2x16xi32>
    %c0_155 = arith.constant 0 : index
    %c0_156 = arith.constant 0 : index
    %c0_157 = arith.constant 0 : index
    %622 = vector.load %arg13[%c0_155, %c0_156, %c0_157] : memref<8x2x16xf32, #tpu.memory_space<vmem>>, vector<8x2x16xf32>
    %cst_158 = arith.constant 0.000000e+00 : f32
    %623 = vector.broadcast %cst_158 : f32 to vector<8x2x16xf32>
    %624 = arith.select %621, %622, %623 : vector<8x2x16xi1>, vector<8x2x16xf32>
    %625 = vector.shape_cast %624 : vector<8x2x16xf32> to vector<16x16xf32>
    %c0_159 = arith.constant 0 : index
    %c0_160 = arith.constant 0 : index
    %c0_161 = arith.constant 0 : index
    %626 = vector.load %arg14[%c0_159, %c0_160, %c0_161] : memref<8x2x16xf32, #tpu.memory_space<vmem>>, vector<8x2x16xf32>
    %627 = vector.shape_cast %626 : vector<8x2x16xf32> to vector<16x16xf32>
    %628 = arith.truncf %625 : vector<16x16xf32> to vector<16x16xbf16>
    %c0_162 = arith.constant 0 : index
    %c0_163 = arith.constant 0 : index
    %629 = vector.load %arg7[%c0_162, %c0_163] : memref<16x16xf32, #tpu.memory_space<vmem>>, vector<16x16xf32>
    %630 = arith.truncf %629 : vector<16x16xf32> to vector<16x16xbf16>
    %cst_164 = arith.constant dense<0.000000e+00> : vector<16x16xf32>
    %631 = tpu.matmul %628, %630, %cst_164 {dimension_numbers = #tpu.dot_dimension_numbers<[1], [0], [0], [1], [0, 0, 1, 1], [], []>} : vector<16x16xbf16>, vector<16x16xbf16>, vector<16x16xf32> -> vector<16x16xf32>
    %632 = arith.truncf %627 : vector<16x16xf32> to vector<16x16xbf16>
    %c0_165 = arith.constant 0 : index
    %c0_166 = arith.constant 0 : index
    %633 = vector.load %arg8[%c0_165, %c0_166] : memref<16x16xf32, #tpu.memory_space<vmem>>, vector<16x16xf32>
    %634 = arith.truncf %633 : vector<16x16xf32> to vector<16x16xbf16>
    %cst_167 = arith.constant dense<0.000000e+00> : vector<16x16xf32>
    %635 = tpu.matmul %632, %634, %cst_167 {dimension_numbers = #tpu.dot_dimension_numbers<[1], [0], [0], [1], [0, 0, 1, 1], [], []>} : vector<16x16xbf16>, vector<16x16xbf16>, vector<16x16xf32> -> vector<16x16xf32>
    %636 = arith.addf %631, %635 : vector<16x16xf32>
    %c0_168 = arith.constant 0 : index
    %c0_169 = arith.constant 0 : index
    %637 = vector.load %arg9[%c0_168, %c0_169] : memref<1x16xf32, #tpu.memory_space<vmem>>, vector<1x16xf32>
    %638 = vector.broadcast %637 : vector<1x16xf32> to vector<16x16xf32>
    %639 = arith.addf %636, %638 : vector<16x16xf32>
    %640 = vector.shape_cast %639 : vector<16x16xf32> to vector<8x2x16xf32>
    %641 = tpu.iota {dimensions = array<i32: 0>} : vector<8x2x16xi32>
    %642 = vector.shape_cast %14 : vector<2x1xi32> to vector<1x2x1xi32>
    %643 = vector.broadcast %642 : vector<1x2x1xi32> to vector<8x2x16xi32>
    %644 = arith.cmpi slt, %641, %643 : vector<8x2x16xi32>
    %cst_170 = arith.constant 0.000000e+00 : f32
    %645 = vector.broadcast %cst_170 : f32 to vector<8x2x16xf32>
    %646 = arith.select %644, %640, %645 : vector<8x2x16xi1>, vector<8x2x16xf32>
    %c0_171 = arith.constant 0 : index
    %c0_172 = arith.constant 0 : index
    %c0_173 = arith.constant 0 : index
    %647 = vector.load %arg10[%c0_171, %c0_172, %c0_173] : memref<8x2x16xf32, #tpu.memory_space<vmem>>, vector<8x2x16xf32>
    tpu.vector_store %arg10[%c0_171, %c0_172, %c0_173], %646 {strides = array<i32>} : memref<8x2x16xf32, #tpu.memory_space<vmem>>, vector<8x2x16xf32>,
    return
  }
}

module attributes {stable_mosaic.version = 11 : i64} {
  func.func @_decoder_kernel(%arg0: memref<2x8x16xf32, #tpu.memory_space<vmem>>, %arg1: memref<2x8x16xf32, #tpu.memory_space<vmem>>, %arg2: memref<2x8xf32, #tpu.memory_space<vmem>>, %arg3: memref<5x2x16xf32, #tpu.memory_space<vmem>>, %arg4: memref<16x16xf32, #tpu.memory_space<vmem>>, %arg5: memref<1x16xf32, #tpu.memory_space<vmem>>, %arg6: memref<16x64xf32, #tpu.memory_space<vmem>>, %arg7: memref<16x64xf32, #tpu.memory_space<vmem>>, %arg8: memref<1x64xf32, #tpu.memory_space<vmem>>, %arg9: memref<16x64xf32, #tpu.memory_space<vmem>>, %arg10: memref<16x12xf32, #tpu.memory_space<vmem>>, %arg11: memref<1x12xf32, #tpu.memory_space<vmem>>, %arg12: memref<5x2x12xf32, #tpu.memory_space<vmem>>, %arg13: memref<5x2x64xf32, #tpu.memory_space<vmem>>, %arg14: memref<5x2x16xf32, #tpu.memory_space<vmem>>) attributes {dimension_semantics = [], scalar_prefetch = 0 : i64, scratch_operands = 2 : i64, tpu.core_type = #tpu.core_type<tc>} {
    %c0 = arith.constant 0 : index
    %c0_0 = arith.constant 0 : index
    %c0_1 = arith.constant 0 : index
    %0 = vector.load %arg0[%c0, %c0_0, %c0_1] : memref<2x8x16xf32, #tpu.memory_space<vmem>>, vector<2x8x16xf32>
    %c0_2 = arith.constant 0 : index
    %c0_3 = arith.constant 0 : index
    %c0_4 = arith.constant 0 : index
    %1 = vector.load %arg1[%c0_2, %c0_3, %c0_4] : memref<2x8x16xf32, #tpu.memory_space<vmem>>, vector<2x8x16xf32>
    %c0_5 = arith.constant 0 : index
    %c0_6 = arith.constant 0 : index
    %2 = vector.load %arg2[%c0_5, %c0_6] : memref<2x8xf32, #tpu.memory_space<vmem>>, vector<2x8xf32>
    %cst = arith.constant 0.000000e+00 : f32
    %3 = vector.broadcast %cst : f32 to vector<2x8xf32>
    %4 = arith.cmpf ogt, %2, %3 : vector<2x8xf32>
    %5 = vector.shape_cast %4 : vector<2x8xi1> to vector<2x1x8xi1>
    %c0_7 = arith.constant 0 : index
    %c0_8 = arith.constant 0 : index
    %6 = vector.load %arg4[%c0_7, %c0_8] : memref<16x16xf32, #tpu.memory_space<vmem>>, vector<16x16xf32>
    %c0_9 = arith.constant 0 : index
    %c0_10 = arith.constant 0 : index
    %7 = vector.load %arg5[%c0_9, %c0_10] : memref<1x16xf32, #tpu.memory_space<vmem>>, vector<1x16xf32>
    %c0_11 = arith.constant 0 : index
    %c0_12 = arith.constant 0 : index
    %8 = vector.load %arg7[%c0_11, %c0_12] : memref<16x64xf32, #tpu.memory_space<vmem>>, vector<16x64xf32>
    %c0_13 = arith.constant 0 : index
    %c0_14 = arith.constant 0 : index
    %9 = vector.load %arg9[%c0_13, %c0_14] : memref<16x64xf32, #tpu.memory_space<vmem>>, vector<16x64xf32>
    %c0_15 = arith.constant 0 : index
    %c0_16 = arith.constant 0 : index
    %c0_17 = arith.constant 0 : index
    %10 = vector.load %arg3[%c0_15, %c0_16, %c0_17] : memref<5x2x16xf32, #tpu.memory_space<vmem>>, vector<5x2x16xf32>
    %11 = vector.shape_cast %10 : vector<5x2x16xf32> to vector<10x16xf32>
    %12 = arith.truncf %11 : vector<10x16xf32> to vector<10x16xbf16>
    %c0_18 = arith.constant 0 : index
    %c0_19 = arith.constant 0 : index
    %13 = vector.load %arg6[%c0_18, %c0_19] : memref<16x64xf32, #tpu.memory_space<vmem>>, vector<16x64xf32>
    %14 = arith.truncf %13 : vector<16x64xf32> to vector<16x64xbf16>
    %cst_20 = arith.constant dense<0.000000e+00> : vector<10x64xf32>
    %15 = tpu.matmul %12, %14, %cst_20 {dimension_numbers = #tpu.dot_dimension_numbers<[1], [0], [0], [1], [0, 0, 1, 1], [], []>} : vector<10x16xbf16>, vector<16x64xbf16>, vector<10x64xf32> -> vector<10x64xf32>
    %c0_21 = arith.constant 0 : index
    %c0_22 = arith.constant 0 : index
    %16 = vector.load %arg8[%c0_21, %c0_22] : memref<1x64xf32, #tpu.memory_space<vmem>>, vector<1x64xf32>
    %17 = vector.broadcast %16 : vector<1x64xf32> to vector<10x64xf32>
    %18 = arith.addf %15, %17 : vector<10x64xf32>
    %19 = vector.shape_cast %18 : vector<10x64xf32> to vector<5x2x64xf32>
    %c0_23 = arith.constant 0 : index
    %c0_24 = arith.constant 0 : index
    %c0_25 = arith.constant 0 : index
    %20 = vector.load %arg13[%c0_23, %c0_24, %c0_25] : memref<5x2x64xf32, #tpu.memory_space<vmem>>, vector<5x2x64xf32>
    tpu.vector_store %arg13[%c0_23, %c0_24, %c0_25], %19 {strides = array<i32>} : memref<5x2x64xf32, #tpu.memory_space<vmem>>, vector<5x2x64xf32>,
    %cst_26 = arith.constant 0.000000e+00 : f32
    %21 = vector.broadcast %cst_26 : f32 to vector<2x16xf32>
    %cst_27 = arith.constant -1.000000e+30 : f32
    %c0_i32 = arith.constant 0 : i32
    %cst_28 = arith.constant dense<0.000000e+00> : vector<2x16xf32>
    %22 = tpu.matmul %21, %6, %cst_28 {dimension_numbers = #tpu.dot_dimension_numbers<[1], [0], [0], [1], [0, 0, 1, 1], [], []>} : vector<2x16xf32>, vector<16x16xf32>, vector<2x16xf32> -> vector<2x16xf32>
    %23 = vector.broadcast %7 : vector<1x16xf32> to vector<2x16xf32>
    %24 = arith.addf %22, %23 : vector<2x16xf32>
    %25 = math.tanh %24 : vector<2x16xf32>
    %26 = vector.shape_cast %25 : vector<2x16xf32> to vector<2x1x16xf32>
    "tpu.trace_start"() <{level = 10 : i32, message = "bqa,bta->bqt"}> : () -> ()
    %cst_29 = arith.constant dense<0.000000e+00> : vector<2x1x8xf32>
    %27 = tpu.matmul %26, %1, %cst_29 {dimension_numbers = #tpu.dot_dimension_numbers<[2], [2], [1], [1], [0, 0, 0, 1, 1, 1], [0], [0]>} : vector<2x1x16xf32>, vector<2x8x16xf32>, vector<2x1x8xf32> -> vector<2x1x8xf32>
    "tpu.trace_stop"() : () -> ()
    %cst_30 = arith.constant 2.000000e+00 : f32
    %28 = vector.broadcast %cst_30 : f32 to vector<2x1x8xf32>
    %29 = arith.mulf %28, %27 : vector<2x1x8xf32>
    %30 = vector.broadcast %cst_27 : f32 to vector<2x1x8xf32>
    %31 = arith.select %5, %29, %30 : vector<2x1x8xi1>, vector<2x1x8xf32>
    %cst_31 = arith.constant dense<0xFF800000> : vector<2x1xf32>
    %32 = vector.multi_reduction <maximumf>, %31, %cst_31 [2] : vector<2x1x8xf32> to vector<2x1xf32>
    %cst_32 = arith.constant 0xFF800000 : f32
    %33 = vector.broadcast %cst_32 : f32 to vector<2x1xf32>
    %34 = arith.maximumf %33, %32 : vector<2x1xf32>
    %35 = vector.shape_cast %34 : vector<2x1xf32> to vector<2x1x1xf32>
    %36 = vector.broadcast %35 : vector<2x1x1xf32> to vector<2x1x8xf32>
    %37 = arith.subf %31, %36 : vector<2x1x8xf32>
    %38 = math.exp %37 : vector<2x1x8xf32>
    %cst_33 = arith.constant dense<0.000000e+00> : vector<2x1xf32>
    %39 = vector.multi_reduction <add>, %38, %cst_33 [2] : vector<2x1x8xf32> to vector<2x1xf32>
    %40 = vector.shape_cast %39 : vector<2x1xf32> to vector<2x1x1xf32>
    %41 = vector.broadcast %40 : vector<2x1x1xf32> to vector<2x1x8xf32>
    %42 = arith.divf %38, %41 : vector<2x1x8xf32>
    "tpu.trace_start"() <{level = 10 : i32, message = "bqt,btp->bqp"}> : () -> ()
    %cst_34 = arith.constant dense<0.000000e+00> : vector<2x1x16xf32>
    %43 = tpu.matmul %42, %0, %cst_34 {dimension_numbers = #tpu.dot_dimension_numbers<[2], [1], [1], [2], [0, 0, 0, 1, 1, 2], [0], [0]>} : vector<2x1x8xf32>, vector<2x8x16xf32>, vector<2x1x16xf32> -> vector<2x1x16xf32>
    "tpu.trace_stop"() : () -> ()
    %44 = vector.shape_cast %43 : vector<2x1x16xf32> to vector<2x16xf32>
    %45 = arith.index_cast %c0_i32 : i32 to index
    %c0_35 = arith.constant 0 : index
    %c0_36 = arith.constant 0 : index
    %46 = vector.load %arg13[%45, %c0_35, %c0_36] : memref<5x2x64xf32, #tpu.memory_space<vmem>>, vector<1x2x64xf32>
    %47 = vector.shape_cast %46 : vector<1x2x64xf32> to vector<2x64xf32>
    %cst_37 = arith.constant dense<0.000000e+00> : vector<2x64xf32>
    %48 = tpu.matmul %44, %8, %cst_37 {dimension_numbers = #tpu.dot_dimension_numbers<[1], [0], [0], [1], [0, 0, 1, 1], [], []>} : vector<2x16xf32>, vector<16x64xf32>, vector<2x64xf32> -> vector<2x64xf32>
    %49 = arith.addf %47, %48 : vector<2x64xf32>
    %cst_38 = arith.constant dense<0.000000e+00> : vector<2x64xf32>
    %50 = tpu.matmul %21, %9, %cst_38 {dimension_numbers = #tpu.dot_dimension_numbers<[1], [0], [0], [1], [0, 0, 1, 1], [], []>} : vector<2x16xf32>, vector<16x64xf32>, vector<2x64xf32> -> vector<2x64xf32>
    %51 = arith.addf %49, %50 : vector<2x64xf32>
    %52 = vector.extract_strided_slice %51 {offsets = [0, 0], sizes = [2, 16], strides = [1, 1]} : vector<2x64xf32> to vector<2x16xf32>
    %53 = arith.negf %52 : vector<2x16xf32>
    %54 = math.exp %53 : vector<2x16xf32>
    %cst_39 = arith.constant 1.000000e+00 : f32
    %55 = vector.broadcast %cst_39 : f32 to vector<2x16xf32>
    %56 = arith.addf %55, %54 : vector<2x16xf32>
    %57 = arith.divf %55, %56 : vector<2x16xf32>
    %58 = vector.extract_strided_slice %51 {offsets = [0, 16], sizes = [2, 16], strides = [1, 1]} : vector<2x64xf32> to vector<2x16xf32>
    %59 = arith.negf %58 : vector<2x16xf32>
    %60 = math.exp %59 : vector<2x16xf32>
    %cst_40 = arith.constant 1.000000e+00 : f32
    %61 = vector.broadcast %cst_40 : f32 to vector<2x16xf32>
    %62 = arith.addf %61, %60 : vector<2x16xf32>
    %63 = arith.divf %61, %62 : vector<2x16xf32>
    %64 = vector.extract_strided_slice %51 {offsets = [0, 32], sizes = [2, 16], strides = [1, 1]} : vector<2x64xf32> to vector<2x16xf32>
    %65 = math.tanh %64 : vector<2x16xf32>
    %66 = vector.extract_strided_slice %51 {offsets = [0, 48], sizes = [2, 16], strides = [1, 1]} : vector<2x64xf32> to vector<2x16xf32>
    %67 = arith.negf %66 : vector<2x16xf32>
    %68 = math.exp %67 : vector<2x16xf32>
    %cst_41 = arith.constant 1.000000e+00 : f32
    %69 = vector.broadcast %cst_41 : f32 to vector<2x16xf32>
    %70 = arith.addf %69, %68 : vector<2x16xf32>
    %71 = arith.divf %69, %70 : vector<2x16xf32>
    %72 = arith.mulf %63, %21 : vector<2x16xf32>
    %73 = arith.mulf %57, %65 : vector<2x16xf32>
    %74 = arith.addf %72, %73 : vector<2x16xf32>
    %75 = math.tanh %74 : vector<2x16xf32>
    %76 = arith.mulf %71, %75 : vector<2x16xf32>
    %77 = vector.shape_cast %76 : vector<2x16xf32> to vector<1x2x16xf32>
    %78 = arith.index_cast %c0_i32 : i32 to index
    %c0_42 = arith.constant 0 : index
    %c0_43 = arith.constant 0 : index
    %79 = vector.load %arg14[%78, %c0_42, %c0_43] : memref<5x2x16xf32, #tpu.memory_space<vmem>>, vector<1x2x16xf32>
    tpu.vector_store %arg14[%78, %c0_42, %c0_43], %77 {strides = array<i32>} : memref<5x2x16xf32, #tpu.memory_space<vmem>>, vector<1x2x16xf32>,
    %c1_i32 = arith.constant 1 : i32
    %cst_44 = arith.constant dense<0.000000e+00> : vector<2x16xf32>
    %80 = tpu.matmul %76, %6, %cst_44 {dimension_numbers = #tpu.dot_dimension_numbers<[1], [0], [0], [1], [0, 0, 1, 1], [], []>} : vector<2x16xf32>, vector<16x16xf32>, vector<2x16xf32> -> vector<2x16xf32>
    %81 = vector.broadcast %7 : vector<1x16xf32> to vector<2x16xf32>
    %82 = arith.addf %80, %81 : vector<2x16xf32>
    %83 = math.tanh %82 : vector<2x16xf32>
    %84 = vector.shape_cast %83 : vector<2x16xf32> to vector<2x1x16xf32>
    "tpu.trace_start"() <{level = 10 : i32, message = "bqa,bta->bqt"}> : () -> ()
    %cst_45 = arith.constant dense<0.000000e+00> : vector<2x1x8xf32>
    %85 = tpu.matmul %84, %1, %cst_45 {dimension_numbers = #tpu.dot_dimension_numbers<[2], [2], [1], [1], [0, 0, 0, 1, 1, 1], [0], [0]>} : vector<2x1x16xf32>, vector<2x8x16xf32>, vector<2x1x8xf32> -> vector<2x1x8xf32>
    "tpu.trace_stop"() : () -> ()
    %cst_46 = arith.constant 2.000000e+00 : f32
    %86 = vector.broadcast %cst_46 : f32 to vector<2x1x8xf32>
    %87 = arith.mulf %86, %85 : vector<2x1x8xf32>
    %88 = vector.broadcast %cst_27 : f32 to vector<2x1x8xf32>
    %89 = arith.select %5, %87, %88 : vector<2x1x8xi1>, vector<2x1x8xf32>
    %cst_47 = arith.constant dense<0xFF800000> : vector<2x1xf32>
    %90 = vector.multi_reduction <maximumf>, %89, %cst_47 [2] : vector<2x1x8xf32> to vector<2x1xf32>
    %cst_48 = arith.constant 0xFF800000 : f32
    %91 = vector.broadcast %cst_48 : f32 to vector<2x1xf32>
    %92 = arith.maximumf %91, %90 : vector<2x1xf32>
    %93 = vector.shape_cast %92 : vector<2x1xf32> to vector<2x1x1xf32>
    %94 = vector.broadcast %93 : vector<2x1x1xf32> to vector<2x1x8xf32>
    %95 = arith.subf %89, %94 : vector<2x1x8xf32>
    %96 = math.exp %95 : vector<2x1x8xf32>
    %cst_49 = arith.constant dense<0.000000e+00> : vector<2x1xf32>
    %97 = vector.multi_reduction <add>, %96, %cst_49 [2] : vector<2x1x8xf32> to vector<2x1xf32>
    %98 = vector.shape_cast %97 : vector<2x1xf32> to vector<2x1x1xf32>
    %99 = vector.broadcast %98 : vector<2x1x1xf32> to vector<2x1x8xf32>
    %100 = arith.divf %96, %99 : vector<2x1x8xf32>
    "tpu.trace_start"() <{level = 10 : i32, message = "bqt,btp->bqp"}> : () -> ()
    %cst_50 = arith.constant dense<0.000000e+00> : vector<2x1x16xf32>
    %101 = tpu.matmul %100, %0, %cst_50 {dimension_numbers = #tpu.dot_dimension_numbers<[2], [1], [1], [2], [0, 0, 0, 1, 1, 2], [0], [0]>} : vector<2x1x8xf32>, vector<2x8x16xf32>, vector<2x1x16xf32> -> vector<2x1x16xf32>
    "tpu.trace_stop"() : () -> ()
    %102 = vector.shape_cast %101 : vector<2x1x16xf32> to vector<2x16xf32>
    %103 = arith.index_cast %c1_i32 : i32 to index
    %c0_51 = arith.constant 0 : index
    %c0_52 = arith.constant 0 : index
    %104 = vector.load %arg13[%103, %c0_51, %c0_52] : memref<5x2x64xf32, #tpu.memory_space<vmem>>, vector<1x2x64xf32>
    %105 = vector.shape_cast %104 : vector<1x2x64xf32> to vector<2x64xf32>
    %cst_53 = arith.constant dense<0.000000e+00> : vector<2x64xf32>
    %106 = tpu.matmul %102, %8, %cst_53 {dimension_numbers = #tpu.dot_dimension_numbers<[1], [0], [0], [1], [0, 0, 1, 1], [], []>} : vector<2x16xf32>, vector<16x64xf32>, vector<2x64xf32> -> vector<2x64xf32>
    %107 = arith.addf %105, %106 : vector<2x64xf32>
    %cst_54 = arith.constant dense<0.000000e+00> : vector<2x64xf32>
    %108 = tpu.matmul %76, %9, %cst_54 {dimension_numbers = #tpu.dot_dimension_numbers<[1], [0], [0], [1], [0, 0, 1, 1], [], []>} : vector<2x16xf32>, vector<16x64xf32>, vector<2x64xf32> -> vector<2x64xf32>
    %109 = arith.addf %107, %108 : vector<2x64xf32>
    %110 = vector.extract_strided_slice %109 {offsets = [0, 0], sizes = [2, 16], strides = [1, 1]} : vector<2x64xf32> to vector<2x16xf32>
    %111 = arith.negf %110 : vector<2x16xf32>
    %112 = math.exp %111 : vector<2x16xf32>
    %cst_55 = arith.constant 1.000000e+00 : f32
    %113 = vector.broadcast %cst_55 : f32 to vector<2x16xf32>
    %114 = arith.addf %113, %112 : vector<2x16xf32>
    %115 = arith.divf %113, %114 : vector<2x16xf32>
    %116 = vector.extract_strided_slice %109 {offsets = [0, 16], sizes = [2, 16], strides = [1, 1]} : vector<2x64xf32> to vector<2x16xf32>
    %117 = arith.negf %116 : vector<2x16xf32>
    %118 = math.exp %117 : vector<2x16xf32>
    %cst_56 = arith.constant 1.000000e+00 : f32
    %119 = vector.broadcast %cst_56 : f32 to vector<2x16xf32>
    %120 = arith.addf %119, %118 : vector<2x16xf32>
    %121 = arith.divf %119, %120 : vector<2x16xf32>
    %122 = vector.extract_strided_slice %109 {offsets = [0, 32], sizes = [2, 16], strides = [1, 1]} : vector<2x64xf32> to vector<2x16xf32>
    %123 = math.tanh %122 : vector<2x16xf32>
    %124 = vector.extract_strided_slice %109 {offsets = [0, 48], sizes = [2, 16], strides = [1, 1]} : vector<2x64xf32> to vector<2x16xf32>
    %125 = arith.negf %124 : vector<2x16xf32>
    %126 = math.exp %125 : vector<2x16xf32>
    %cst_57 = arith.constant 1.000000e+00 : f32
    %127 = vector.broadcast %cst_57 : f32 to vector<2x16xf32>
    %128 = arith.addf %127, %126 : vector<2x16xf32>
    %129 = arith.divf %127, %128 : vector<2x16xf32>
    %130 = arith.mulf %121, %74 : vector<2x16xf32>
    %131 = arith.mulf %115, %123 : vector<2x16xf32>
    %132 = arith.addf %130, %131 : vector<2x16xf32>
    %133 = math.tanh %132 : vector<2x16xf32>
    %134 = arith.mulf %129, %133 : vector<2x16xf32>
    %135 = vector.shape_cast %134 : vector<2x16xf32> to vector<1x2x16xf32>
    %136 = arith.index_cast %c1_i32 : i32 to index
    %c0_58 = arith.constant 0 : index
    %c0_59 = arith.constant 0 : index
    %137 = vector.load %arg14[%136, %c0_58, %c0_59] : memref<5x2x16xf32, #tpu.memory_space<vmem>>, vector<1x2x16xf32>
    tpu.vector_store %arg14[%136, %c0_58, %c0_59], %135 {strides = array<i32>} : memref<5x2x16xf32, #tpu.memory_space<vmem>>, vector<1x2x16xf32>,
    %c2_i32 = arith.constant 2 : i32
    %cst_60 = arith.constant dense<0.000000e+00> : vector<2x16xf32>
    %138 = tpu.matmul %134, %6, %cst_60 {dimension_numbers = #tpu.dot_dimension_numbers<[1], [0], [0], [1], [0, 0, 1, 1], [], []>} : vector<2x16xf32>, vector<16x16xf32>, vector<2x16xf32> -> vector<2x16xf32>
    %139 = vector.broadcast %7 : vector<1x16xf32> to vector<2x16xf32>
    %140 = arith.addf %138, %139 : vector<2x16xf32>
    %141 = math.tanh %140 : vector<2x16xf32>
    %142 = vector.shape_cast %141 : vector<2x16xf32> to vector<2x1x16xf32>
    "tpu.trace_start"() <{level = 10 : i32, message = "bqa,bta->bqt"}> : () -> ()
    %cst_61 = arith.constant dense<0.000000e+00> : vector<2x1x8xf32>
    %143 = tpu.matmul %142, %1, %cst_61 {dimension_numbers = #tpu.dot_dimension_numbers<[2], [2], [1], [1], [0, 0, 0, 1, 1, 1], [0], [0]>} : vector<2x1x16xf32>, vector<2x8x16xf32>, vector<2x1x8xf32> -> vector<2x1x8xf32>
    "tpu.trace_stop"() : () -> ()
    %cst_62 = arith.constant 2.000000e+00 : f32
    %144 = vector.broadcast %cst_62 : f32 to vector<2x1x8xf32>
    %145 = arith.mulf %144, %143 : vector<2x1x8xf32>
    %146 = vector.broadcast %cst_27 : f32 to vector<2x1x8xf32>
    %147 = arith.select %5, %145, %146 : vector<2x1x8xi1>, vector<2x1x8xf32>
    %cst_63 = arith.constant dense<0xFF800000> : vector<2x1xf32>
    %148 = vector.multi_reduction <maximumf>, %147, %cst_63 [2] : vector<2x1x8xf32> to vector<2x1xf32>
    %cst_64 = arith.constant 0xFF800000 : f32
    %149 = vector.broadcast %cst_64 : f32 to vector<2x1xf32>
    %150 = arith.maximumf %149, %148 : vector<2x1xf32>
    %151 = vector.shape_cast %150 : vector<2x1xf32> to vector<2x1x1xf32>
    %152 = vector.broadcast %151 : vector<2x1x1xf32> to vector<2x1x8xf32>
    %153 = arith.subf %147, %152 : vector<2x1x8xf32>
    %154 = math.exp %153 : vector<2x1x8xf32>
    %cst_65 = arith.constant dense<0.000000e+00> : vector<2x1xf32>
    %155 = vector.multi_reduction <add>, %154, %cst_65 [2] : vector<2x1x8xf32> to vector<2x1xf32>
    %156 = vector.shape_cast %155 : vector<2x1xf32> to vector<2x1x1xf32>
    %157 = vector.broadcast %156 : vector<2x1x1xf32> to vector<2x1x8xf32>
    %158 = arith.divf %154, %157 : vector<2x1x8xf32>
    "tpu.trace_start"() <{level = 10 : i32, message = "bqt,btp->bqp"}> : () -> ()
    %cst_66 = arith.constant dense<0.000000e+00> : vector<2x1x16xf32>
    %159 = tpu.matmul %158, %0, %cst_66 {dimension_numbers = #tpu.dot_dimension_numbers<[2], [1], [1], [2], [0, 0, 0, 1, 1, 2], [0], [0]>} : vector<2x1x8xf32>, vector<2x8x16xf32>, vector<2x1x16xf32> -> vector<2x1x16xf32>
    "tpu.trace_stop"() : () -> ()
    %160 = vector.shape_cast %159 : vector<2x1x16xf32> to vector<2x16xf32>
    %161 = arith.index_cast %c2_i32 : i32 to index
    %c0_67 = arith.constant 0 : index
    %c0_68 = arith.constant 0 : index
    %162 = vector.load %arg13[%161, %c0_67, %c0_68] : memref<5x2x64xf32, #tpu.memory_space<vmem>>, vector<1x2x64xf32>
    %163 = vector.shape_cast %162 : vector<1x2x64xf32> to vector<2x64xf32>
    %cst_69 = arith.constant dense<0.000000e+00> : vector<2x64xf32>
    %164 = tpu.matmul %160, %8, %cst_69 {dimension_numbers = #tpu.dot_dimension_numbers<[1], [0], [0], [1], [0, 0, 1, 1], [], []>} : vector<2x16xf32>, vector<16x64xf32>, vector<2x64xf32> -> vector<2x64xf32>
    %165 = arith.addf %163, %164 : vector<2x64xf32>
    %cst_70 = arith.constant dense<0.000000e+00> : vector<2x64xf32>
    %166 = tpu.matmul %134, %9, %cst_70 {dimension_numbers = #tpu.dot_dimension_numbers<[1], [0], [0], [1], [0, 0, 1, 1], [], []>} : vector<2x16xf32>, vector<16x64xf32>, vector<2x64xf32> -> vector<2x64xf32>
    %167 = arith.addf %165, %166 : vector<2x64xf32>
    %168 = vector.extract_strided_slice %167 {offsets = [0, 0], sizes = [2, 16], strides = [1, 1]} : vector<2x64xf32> to vector<2x16xf32>
    %169 = arith.negf %168 : vector<2x16xf32>
    %170 = math.exp %169 : vector<2x16xf32>
    %cst_71 = arith.constant 1.000000e+00 : f32
    %171 = vector.broadcast %cst_71 : f32 to vector<2x16xf32>
    %172 = arith.addf %171, %170 : vector<2x16xf32>
    %173 = arith.divf %171, %172 : vector<2x16xf32>
    %174 = vector.extract_strided_slice %167 {offsets = [0, 16], sizes = [2, 16], strides = [1, 1]} : vector<2x64xf32> to vector<2x16xf32>
    %175 = arith.negf %174 : vector<2x16xf32>
    %176 = math.exp %175 : vector<2x16xf32>
    %cst_72 = arith.constant 1.000000e+00 : f32
    %177 = vector.broadcast %cst_72 : f32 to vector<2x16xf32>
    %178 = arith.addf %177, %176 : vector<2x16xf32>
    %179 = arith.divf %177, %178 : vector<2x16xf32>
    %180 = vector.extract_strided_slice %167 {offsets = [0, 32], sizes = [2, 16], strides = [1, 1]} : vector<2x64xf32> to vector<2x16xf32>
    %181 = math.tanh %180 : vector<2x16xf32>
    %182 = vector.extract_strided_slice %167 {offsets = [0, 48], sizes = [2, 16], strides = [1, 1]} : vector<2x64xf32> to vector<2x16xf32>
    %183 = arith.negf %182 : vector<2x16xf32>
    %184 = math.exp %183 : vector<2x16xf32>
    %cst_73 = arith.constant 1.000000e+00 : f32
    %185 = vector.broadcast %cst_73 : f32 to vector<2x16xf32>
    %186 = arith.addf %185, %184 : vector<2x16xf32>
    %187 = arith.divf %185, %186 : vector<2x16xf32>
    %188 = arith.mulf %179, %132 : vector<2x16xf32>
    %189 = arith.mulf %173, %181 : vector<2x16xf32>
    %190 = arith.addf %188, %189 : vector<2x16xf32>
    %191 = math.tanh %190 : vector<2x16xf32>
    %192 = arith.mulf %187, %191 : vector<2x16xf32>
    %193 = vector.shape_cast %192 : vector<2x16xf32> to vector<1x2x16xf32>
    %194 = arith.index_cast %c2_i32 : i32 to index
    %c0_74 = arith.constant 0 : index
    %c0_75 = arith.constant 0 : index
    %195 = vector.load %arg14[%194, %c0_74, %c0_75] : memref<5x2x16xf32, #tpu.memory_space<vmem>>, vector<1x2x16xf32>
    tpu.vector_store %arg14[%194, %c0_74, %c0_75], %193 {strides = array<i32>} : memref<5x2x16xf32, #tpu.memory_space<vmem>>, vector<1x2x16xf32>,
    %c3_i32 = arith.constant 3 : i32
    %cst_76 = arith.constant dense<0.000000e+00> : vector<2x16xf32>
    %196 = tpu.matmul %192, %6, %cst_76 {dimension_numbers = #tpu.dot_dimension_numbers<[1], [0], [0], [1], [0, 0, 1, 1], [], []>} : vector<2x16xf32>, vector<16x16xf32>, vector<2x16xf32> -> vector<2x16xf32>
    %197 = vector.broadcast %7 : vector<1x16xf32> to vector<2x16xf32>
    %198 = arith.addf %196, %197 : vector<2x16xf32>
    %199 = math.tanh %198 : vector<2x16xf32>
    %200 = vector.shape_cast %199 : vector<2x16xf32> to vector<2x1x16xf32>
    "tpu.trace_start"() <{level = 10 : i32, message = "bqa,bta->bqt"}> : () -> ()
    %cst_77 = arith.constant dense<0.000000e+00> : vector<2x1x8xf32>
    %201 = tpu.matmul %200, %1, %cst_77 {dimension_numbers = #tpu.dot_dimension_numbers<[2], [2], [1], [1], [0, 0, 0, 1, 1, 1], [0], [0]>} : vector<2x1x16xf32>, vector<2x8x16xf32>, vector<2x1x8xf32> -> vector<2x1x8xf32>
    "tpu.trace_stop"() : () -> ()
    %cst_78 = arith.constant 2.000000e+00 : f32
    %202 = vector.broadcast %cst_78 : f32 to vector<2x1x8xf32>
    %203 = arith.mulf %202, %201 : vector<2x1x8xf32>
    %204 = vector.broadcast %cst_27 : f32 to vector<2x1x8xf32>
    %205 = arith.select %5, %203, %204 : vector<2x1x8xi1>, vector<2x1x8xf32>
    %cst_79 = arith.constant dense<0xFF800000> : vector<2x1xf32>
    %206 = vector.multi_reduction <maximumf>, %205, %cst_79 [2] : vector<2x1x8xf32> to vector<2x1xf32>
    %cst_80 = arith.constant 0xFF800000 : f32
    %207 = vector.broadcast %cst_80 : f32 to vector<2x1xf32>
    %208 = arith.maximumf %207, %206 : vector<2x1xf32>
    %209 = vector.shape_cast %208 : vector<2x1xf32> to vector<2x1x1xf32>
    %210 = vector.broadcast %209 : vector<2x1x1xf32> to vector<2x1x8xf32>
    %211 = arith.subf %205, %210 : vector<2x1x8xf32>
    %212 = math.exp %211 : vector<2x1x8xf32>
    %cst_81 = arith.constant dense<0.000000e+00> : vector<2x1xf32>
    %213 = vector.multi_reduction <add>, %212, %cst_81 [2] : vector<2x1x8xf32> to vector<2x1xf32>
    %214 = vector.shape_cast %213 : vector<2x1xf32> to vector<2x1x1xf32>
    %215 = vector.broadcast %214 : vector<2x1x1xf32> to vector<2x1x8xf32>
    %216 = arith.divf %212, %215 : vector<2x1x8xf32>
    "tpu.trace_start"() <{level = 10 : i32, message = "bqt,btp->bqp"}> : () -> ()
    %cst_82 = arith.constant dense<0.000000e+00> : vector<2x1x16xf32>
    %217 = tpu.matmul %216, %0, %cst_82 {dimension_numbers = #tpu.dot_dimension_numbers<[2], [1], [1], [2], [0, 0, 0, 1, 1, 2], [0], [0]>} : vector<2x1x8xf32>, vector<2x8x16xf32>, vector<2x1x16xf32> -> vector<2x1x16xf32>
    "tpu.trace_stop"() : () -> ()
    %218 = vector.shape_cast %217 : vector<2x1x16xf32> to vector<2x16xf32>
    %219 = arith.index_cast %c3_i32 : i32 to index
    %c0_83 = arith.constant 0 : index
    %c0_84 = arith.constant 0 : index
    %220 = vector.load %arg13[%219, %c0_83, %c0_84] : memref<5x2x64xf32, #tpu.memory_space<vmem>>, vector<1x2x64xf32>
    %221 = vector.shape_cast %220 : vector<1x2x64xf32> to vector<2x64xf32>
    %cst_85 = arith.constant dense<0.000000e+00> : vector<2x64xf32>
    %222 = tpu.matmul %218, %8, %cst_85 {dimension_numbers = #tpu.dot_dimension_numbers<[1], [0], [0], [1], [0, 0, 1, 1], [], []>} : vector<2x16xf32>, vector<16x64xf32>, vector<2x64xf32> -> vector<2x64xf32>
    %223 = arith.addf %221, %222 : vector<2x64xf32>
    %cst_86 = arith.constant dense<0.000000e+00> : vector<2x64xf32>
    %224 = tpu.matmul %192, %9, %cst_86 {dimension_numbers = #tpu.dot_dimension_numbers<[1], [0], [0], [1], [0, 0, 1, 1], [], []>} : vector<2x16xf32>, vector<16x64xf32>, vector<2x64xf32> -> vector<2x64xf32>
    %225 = arith.addf %223, %224 : vector<2x64xf32>
    %226 = vector.extract_strided_slice %225 {offsets = [0, 0], sizes = [2, 16], strides = [1, 1]} : vector<2x64xf32> to vector<2x16xf32>
    %227 = arith.negf %226 : vector<2x16xf32>
    %228 = math.exp %227 : vector<2x16xf32>
    %cst_87 = arith.constant 1.000000e+00 : f32
    %229 = vector.broadcast %cst_87 : f32 to vector<2x16xf32>
    %230 = arith.addf %229, %228 : vector<2x16xf32>
    %231 = arith.divf %229, %230 : vector<2x16xf32>
    %232 = vector.extract_strided_slice %225 {offsets = [0, 16], sizes = [2, 16], strides = [1, 1]} : vector<2x64xf32> to vector<2x16xf32>
    %233 = arith.negf %232 : vector<2x16xf32>
    %234 = math.exp %233 : vector<2x16xf32>
    %cst_88 = arith.constant 1.000000e+00 : f32
    %235 = vector.broadcast %cst_88 : f32 to vector<2x16xf32>
    %236 = arith.addf %235, %234 : vector<2x16xf32>
    %237 = arith.divf %235, %236 : vector<2x16xf32>
    %238 = vector.extract_strided_slice %225 {offsets = [0, 32], sizes = [2, 16], strides = [1, 1]} : vector<2x64xf32> to vector<2x16xf32>
    %239 = math.tanh %238 : vector<2x16xf32>
    %240 = vector.extract_strided_slice %225 {offsets = [0, 48], sizes = [2, 16], strides = [1, 1]} : vector<2x64xf32> to vector<2x16xf32>
    %241 = arith.negf %240 : vector<2x16xf32>
    %242 = math.exp %241 : vector<2x16xf32>
    %cst_89 = arith.constant 1.000000e+00 : f32
    %243 = vector.broadcast %cst_89 : f32 to vector<2x16xf32>
    %244 = arith.addf %243, %242 : vector<2x16xf32>
    %245 = arith.divf %243, %244 : vector<2x16xf32>
    %246 = arith.mulf %237, %190 : vector<2x16xf32>
    %247 = arith.mulf %231, %239 : vector<2x16xf32>
    %248 = arith.addf %246, %247 : vector<2x16xf32>
    %249 = math.tanh %248 : vector<2x16xf32>
    %250 = arith.mulf %245, %249 : vector<2x16xf32>
    %251 = vector.shape_cast %250 : vector<2x16xf32> to vector<1x2x16xf32>
    %252 = arith.index_cast %c3_i32 : i32 to index
    %c0_90 = arith.constant 0 : index
    %c0_91 = arith.constant 0 : index
    %253 = vector.load %arg14[%252, %c0_90, %c0_91] : memref<5x2x16xf32, #tpu.memory_space<vmem>>, vector<1x2x16xf32>
    tpu.vector_store %arg14[%252, %c0_90, %c0_91], %251 {strides = array<i32>} : memref<5x2x16xf32, #tpu.memory_space<vmem>>, vector<1x2x16xf32>,
    %c4_i32 = arith.constant 4 : i32
    %cst_92 = arith.constant dense<0.000000e+00> : vector<2x16xf32>
    %254 = tpu.matmul %250, %6, %cst_92 {dimension_numbers = #tpu.dot_dimension_numbers<[1], [0], [0], [1], [0, 0, 1, 1], [], []>} : vector<2x16xf32>, vector<16x16xf32>, vector<2x16xf32> -> vector<2x16xf32>
    %255 = vector.broadcast %7 : vector<1x16xf32> to vector<2x16xf32>
    %256 = arith.addf %254, %255 : vector<2x16xf32>
    %257 = math.tanh %256 : vector<2x16xf32>
    %258 = vector.shape_cast %257 : vector<2x16xf32> to vector<2x1x16xf32>
    "tpu.trace_start"() <{level = 10 : i32, message = "bqa,bta->bqt"}> : () -> ()
    %cst_93 = arith.constant dense<0.000000e+00> : vector<2x1x8xf32>
    %259 = tpu.matmul %258, %1, %cst_93 {dimension_numbers = #tpu.dot_dimension_numbers<[2], [2], [1], [1], [0, 0, 0, 1, 1, 1], [0], [0]>} : vector<2x1x16xf32>, vector<2x8x16xf32>, vector<2x1x8xf32> -> vector<2x1x8xf32>
    "tpu.trace_stop"() : () -> ()
    %cst_94 = arith.constant 2.000000e+00 : f32
    %260 = vector.broadcast %cst_94 : f32 to vector<2x1x8xf32>
    %261 = arith.mulf %260, %259 : vector<2x1x8xf32>
    %262 = vector.broadcast %cst_27 : f32 to vector<2x1x8xf32>
    %263 = arith.select %5, %261, %262 : vector<2x1x8xi1>, vector<2x1x8xf32>
    %cst_95 = arith.constant dense<0xFF800000> : vector<2x1xf32>
    %264 = vector.multi_reduction <maximumf>, %263, %cst_95 [2] : vector<2x1x8xf32> to vector<2x1xf32>
    %cst_96 = arith.constant 0xFF800000 : f32
    %265 = vector.broadcast %cst_96 : f32 to vector<2x1xf32>
    %266 = arith.maximumf %265, %264 : vector<2x1xf32>
    %267 = vector.shape_cast %266 : vector<2x1xf32> to vector<2x1x1xf32>
    %268 = vector.broadcast %267 : vector<2x1x1xf32> to vector<2x1x8xf32>
    %269 = arith.subf %263, %268 : vector<2x1x8xf32>
    %270 = math.exp %269 : vector<2x1x8xf32>
    %cst_97 = arith.constant dense<0.000000e+00> : vector<2x1xf32>
    %271 = vector.multi_reduction <add>, %270, %cst_97 [2] : vector<2x1x8xf32> to vector<2x1xf32>
    %272 = vector.shape_cast %271 : vector<2x1xf32> to vector<2x1x1xf32>
    %273 = vector.broadcast %272 : vector<2x1x1xf32> to vector<2x1x8xf32>
    %274 = arith.divf %270, %273 : vector<2x1x8xf32>
    "tpu.trace_start"() <{level = 10 : i32, message = "bqt,btp->bqp"}> : () -> ()
    %cst_98 = arith.constant dense<0.000000e+00> : vector<2x1x16xf32>
    %275 = tpu.matmul %274, %0, %cst_98 {dimension_numbers = #tpu.dot_dimension_numbers<[2], [1], [1], [2], [0, 0, 0, 1, 1, 2], [0], [0]>} : vector<2x1x8xf32>, vector<2x8x16xf32>, vector<2x1x16xf32> -> vector<2x1x16xf32>
    "tpu.trace_stop"() : () -> ()
    %276 = vector.shape_cast %275 : vector<2x1x16xf32> to vector<2x16xf32>
    %277 = arith.index_cast %c4_i32 : i32 to index
    %c0_99 = arith.constant 0 : index
    %c0_100 = arith.constant 0 : index
    %278 = vector.load %arg13[%277, %c0_99, %c0_100] : memref<5x2x64xf32, #tpu.memory_space<vmem>>, vector<1x2x64xf32>
    %279 = vector.shape_cast %278 : vector<1x2x64xf32> to vector<2x64xf32>
    %cst_101 = arith.constant dense<0.000000e+00> : vector<2x64xf32>
    %280 = tpu.matmul %276, %8, %cst_101 {dimension_numbers = #tpu.dot_dimension_numbers<[1], [0], [0], [1], [0, 0, 1, 1], [], []>} : vector<2x16xf32>, vector<16x64xf32>, vector<2x64xf32> -> vector<2x64xf32>
    %281 = arith.addf %279, %280 : vector<2x64xf32>
    %cst_102 = arith.constant dense<0.000000e+00> : vector<2x64xf32>
    %282 = tpu.matmul %250, %9, %cst_102 {dimension_numbers = #tpu.dot_dimension_numbers<[1], [0], [0], [1], [0, 0, 1, 1], [], []>} : vector<2x16xf32>, vector<16x64xf32>, vector<2x64xf32> -> vector<2x64xf32>
    %283 = arith.addf %281, %282 : vector<2x64xf32>
    %284 = vector.extract_strided_slice %283 {offsets = [0, 0], sizes = [2, 16], strides = [1, 1]} : vector<2x64xf32> to vector<2x16xf32>
    %285 = arith.negf %284 : vector<2x16xf32>
    %286 = math.exp %285 : vector<2x16xf32>
    %cst_103 = arith.constant 1.000000e+00 : f32
    %287 = vector.broadcast %cst_103 : f32 to vector<2x16xf32>
    %288 = arith.addf %287, %286 : vector<2x16xf32>
    %289 = arith.divf %287, %288 : vector<2x16xf32>
    %290 = vector.extract_strided_slice %283 {offsets = [0, 16], sizes = [2, 16], strides = [1, 1]} : vector<2x64xf32> to vector<2x16xf32>
    %291 = arith.negf %290 : vector<2x16xf32>
    %292 = math.exp %291 : vector<2x16xf32>
    %cst_104 = arith.constant 1.000000e+00 : f32
    %293 = vector.broadcast %cst_104 : f32 to vector<2x16xf32>
    %294 = arith.addf %293, %292 : vector<2x16xf32>
    %295 = arith.divf %293, %294 : vector<2x16xf32>
    %296 = vector.extract_strided_slice %283 {offsets = [0, 32], sizes = [2, 16], strides = [1, 1]} : vector<2x64xf32> to vector<2x16xf32>
    %297 = math.tanh %296 : vector<2x16xf32>
    %298 = vector.extract_strided_slice %283 {offsets = [0, 48], sizes = [2, 16], strides = [1, 1]} : vector<2x64xf32> to vector<2x16xf32>
    %299 = arith.negf %298 : vector<2x16xf32>
    %300 = math.exp %299 : vector<2x16xf32>
    %cst_105 = arith.constant 1.000000e+00 : f32
    %301 = vector.broadcast %cst_105 : f32 to vector<2x16xf32>
    %302 = arith.addf %301, %300 : vector<2x16xf32>
    %303 = arith.divf %301, %302 : vector<2x16xf32>
    %304 = arith.mulf %295, %248 : vector<2x16xf32>
    %305 = arith.mulf %289, %297 : vector<2x16xf32>
    %306 = arith.addf %304, %305 : vector<2x16xf32>
    %307 = math.tanh %306 : vector<2x16xf32>
    %308 = arith.mulf %303, %307 : vector<2x16xf32>
    %309 = vector.shape_cast %308 : vector<2x16xf32> to vector<1x2x16xf32>
    %310 = arith.index_cast %c4_i32 : i32 to index
    %c0_106 = arith.constant 0 : index
    %c0_107 = arith.constant 0 : index
    %311 = vector.load %arg14[%310, %c0_106, %c0_107] : memref<5x2x16xf32, #tpu.memory_space<vmem>>, vector<1x2x16xf32>
    tpu.vector_store %arg14[%310, %c0_106, %c0_107], %309 {strides = array<i32>} : memref<5x2x16xf32, #tpu.memory_space<vmem>>, vector<1x2x16xf32>,
    %c5_i32 = arith.constant 5 : i32
    %c0_108 = arith.constant 0 : index
    %c0_109 = arith.constant 0 : index
    %c0_110 = arith.constant 0 : index
    %312 = vector.load %arg14[%c0_108, %c0_109, %c0_110] : memref<5x2x16xf32, #tpu.memory_space<vmem>>, vector<5x2x16xf32>
    %313 = vector.shape_cast %312 : vector<5x2x16xf32> to vector<10x16xf32>
    %314 = arith.truncf %313 : vector<10x16xf32> to vector<10x16xbf16>
    %c0_111 = arith.constant 0 : index
    %c0_112 = arith.constant 0 : index
    %315 = vector.load %arg10[%c0_111, %c0_112] : memref<16x12xf32, #tpu.memory_space<vmem>>, vector<16x12xf32>
    %316 = arith.truncf %315 : vector<16x12xf32> to vector<16x12xbf16>
    %cst_113 = arith.constant dense<0.000000e+00> : vector<10x12xf32>
    %317 = tpu.matmul %314, %316, %cst_113 {dimension_numbers = #tpu.dot_dimension_numbers<[1], [0], [0], [1], [0, 0, 1, 1], [], []>} : vector<10x16xbf16>, vector<16x12xbf16>, vector<10x12xf32> -> vector<10x12xf32>
    %c0_114 = arith.constant 0 : index
    %c0_115 = arith.constant 0 : index
    %318 = vector.load %arg11[%c0_114, %c0_115] : memref<1x12xf32, #tpu.memory_space<vmem>>, vector<1x12xf32>
    %319 = vector.broadcast %318 : vector<1x12xf32> to vector<10x12xf32>
    %320 = arith.addf %317, %319 : vector<10x12xf32>
    %321 = vector.shape_cast %320 : vector<10x12xf32> to vector<5x2x12xf32>
    %c0_116 = arith.constant 0 : index
    %c0_117 = arith.constant 0 : index
    %c0_118 = arith.constant 0 : index
    %322 = vector.load %arg12[%c0_116, %c0_117, %c0_118] : memref<5x2x12xf32, #tpu.memory_space<vmem>>, vector<5x2x12xf32>
    tpu.vector_store %arg12[%c0_116, %c0_117, %c0_118], %321 {strides = array<i32>} : memref<5x2x12xf32, #tpu.memory_space<vmem>>, vector<5x2x12xf32>,
    return
  }
}

</mosaic_0001>

<llo_original>
// kernel: e2e_forward.6
$region0: #{e2e_forward.6}
  #allocation0 [shape = 'u32[]', space=smem, size = 0x4, offset = 0x4, fixed_abs, tag = 'smem constant byte address 0x4 - core index']
  #allocation1 [shape = 'u32[144,128]{1,0:T(1,128)}', space=vmem, size = 0x12000, scoped, tag = 'internal scratch']
  %s0 = inlined_call_operand.vmem [shape: f32[16,16], index: 0, kind: input, shape index: {}]
  %s1 = inlined_call_operand.vmem [shape: f32[16,28], index: 1, kind: input, shape index: {}]
  %s2 = inlined_call_operand.vmem [shape: f32[1,28], index: 2, kind: input, shape index: {}]
  %s3 = inlined_call_operand.vmem [shape: f32[16,12], index: 3, kind: output, shape index: {0}]
  %s4 = inlined_call_operand.vmem [shape: f32[16,16], index: 4, kind: output, shape index: {1}]
  %5 = xla_tuple %s3, %s4
  %s6 = sld [smem:[#allocation0]]
  $region30: #{e2e_forward.6} parent=0
    _
  %s8 = ssub.s32 1, %s6
  %s9 = scalar_select 0, %s8, %s6
  // Predicated region
  $region2: #{e2e_forward.6} parent=0 // pred_check
    _
  $region3: #{e2e_forward.6} parent=0 // pred_check_branch
    %11 = sbr.rel (0) target = $region5
  $region4: #{e2e_forward.6} parent=0 // pred_region
    _
  $region5: #{e2e_forward.6} parent=0 // pred_fallthru
    _
  // Predicated region
  $region6: #{e2e_forward.6} parent=0 // pred_check
    _
  $region7: #{e2e_forward.6} parent=0 // pred_check_branch
    %13 = sbr.rel (0) target = $region9
  $region8: #{e2e_forward.6} parent=0 // pred_region
    _
  $region9: #{e2e_forward.6} parent=0 // pred_fallthru
    _
  // Predicated region
  $region10: #{e2e_forward.6} parent=0 // pred_check
    _
  $region11: #{e2e_forward.6} parent=0 // pred_check_branch
    %15 = sbr.rel (0) target = $region13
  $region12: #{e2e_forward.6} parent=0 // pred_region
    _
  $region13: #{e2e_forward.6} parent=0 // pred_fallthru
    _
  %v17 = vld [vmem:[%s0] sm:$0xff]
  %v18 = vld [vmem:[%s0 + $0x8] sm:$0xff]
  %v19 = vpack.c.bf16 %v18, %v17
  %v20 = vld [vmem:[%s1] sm:$0xff]
  %v21 = vld [vmem:[%s1 + $0x8] sm:$0xff]
  %v22 = vpack.c.bf16 %v21, %v20
  %v23 = vld [vmem:[%s2] sm:$0x1]
  %v25 = vlaneseq
  %v26 = vshrl.u32 %v25, 7
  %v27 = vsub.s32 0, %v26
  %v28 = vrot.slane %v23, %v27
  %vm30 = vcmask 130048
  %v32 = vsel %vm30, %v19, 0
  %34 = vmatprep.subr.bf16.mxu0 0
  %35 = vmatpush1.bf16.msra.mxu0 %v22
  %36 = vmatprep.subr.bf16.mxu0 0
  %37 = vmatpush1.bf16.msra.mxu0 0
  %38 = vmatprep.subr.bf16.mxu0 0
  %39 = vmatpush1.bf16.msra.mxu0 0
  %40 = vmatprep.subr.bf16.mxu0 0
  %41 = vmatpush1.bf16.msra.mxu0 0
  %42 = vmatprep.subr.bf16.mxu0 0
  %43 = vmatpush1.bf16.msra.mxu0 0
  %44 = vmatprep.subr.bf16.mxu0 0
  %45 = vmatpush1.bf16.msra.mxu0 0
  %46 = vmatprep.subr.bf16.mxu0 0
  %47 = vmatpush1.bf16.msra.mxu0 0
  %48 = vmatprep.subr.bf16.mxu0 0
  %49 = vmatpush1.bf16.msra.mxu0 0
  %50 = vmatprep.subr.bf16.mxu0 0
  %51 = vmatpush1.bf16.msra.mxu0 0
  %52 = vmatprep.subr.bf16.mxu0 0
  %53 = vmatpush1.bf16.msra.mxu0 0
  %54 = vmatprep.subr.bf16.mxu0 0
  %55 = vmatpush1.bf16.msra.mxu0 0
  %56 = vmatprep.subr.bf16.mxu0 0
  %57 = vmatpush1.bf16.msra.mxu0 0
  %58 = vmatprep.subr.bf16.mxu0 0
  %59 = vmatpush1.bf16.msra.mxu0 0
  %60 = vmatprep.subr.bf16.mxu0 0
  %61 = vmatpush1.bf16.msra.mxu0 0
  %62 = vmatprep.subr.bf16.mxu0 0
  %63 = vmatpush1.bf16.msra.mxu0 0
  %64 = vmatprep.subr.bf16.mxu0 0
  %65 = vmatpush1.bf16.msra.mxu0 0
  %66 = vmatprep.mubr.bf16.mxu0 0
  %67 = vmatmul.mubr.bf16.gmra.mrb[0].mxu0 %v32
  %v68 = vpop.f32.mrb[0].mxu0
  %v69 = vadd.f32 %v28, %v68
  %v70 = vpop.f32.mrb[0].mxu0
  %v71 = vpop.f32.mrb[0].mxu0
  %v72 = vadd.f32 %v28, %v71
  %v73 = vpop.f32.mrb[0].mxu0
  %74 = vdwg.mxu0
  %vm75 = vcmask 97280
  %v76 = vsel %vm75, %v69, -inf
  %77 = vmax.xlane.f32.xlu0 %v76
  %v78 = vpop.xlane.xlu0 %77
  %v79 = vsel %vm75, %v72, -inf
  %80 = vmax.xlane.f32.xlu0 %v79
  %v81 = vpop.xlane.xlu0 %80
  %v82 = vsub.f32 %v69, %v78
  %v83 = vsub.f32 %v72, %v81
  %v84 = vmul.f32 %v82, 1.442695
  %v85 = vpow.pop %v84
  %v86 = vmul.f32 %v83, 1.442695
  %v87 = vpow.pop %v86
  %v88 = vsel %vm75, %v85, 0.0
  %89 = vadd.xlane.f32.xlu0 %v88
  %v90 = vpop.xlane.xlu0 %89
  %v91 = vsel %vm75, %v87, 0.0
  %92 = vadd.xlane.f32.xlu0 %v91
  %v93 = vpop.xlane.xlu0 %92
  %v94 = vlog2.pop %v90
  %v95 = vmul.f32 %v94, 0.6931472
  %v96 = vlog2.pop %v93
  %v97 = vmul.f32 %v96, 0.6931472
  %v98 = vadd.f32 %v95, %v78
  %v99 = vadd.f32 %v97, %v81
  %v100 = vsub.f32 %v69, %v98
  %v101 = vsub.f32 %v72, %v99
  %102 = vst.msk [vmem:[%s3] sm:$0xff] %vm75, %v100
  %103 = vst.msk [vmem:[%s3 + $0x8] sm:$0xff] %vm75, %v101
  %v104 = vtanh.pop %v69
  %v105 = vtanh.pop %v72
  %108 = vrot.lane.b32.xlu0 %v104, 116
  %v109 = vpop.permute.xlu0 %108
  %110 = vrot.lane.b32.xlu0 %v105, 116
  %v111 = vpop.permute.xlu0 %110
  %114 = vst.msk [vmem:[%s4] sm:$0xff] %vm30, %v109
  %115 = vst.msk [vmem:[%s4 + $0x8] sm:$0xff] %vm30, %v111
  // Predicated region
  $region14: #{e2e_forward.6} parent=0 // pred_check
    _
  $region15: #{e2e_forward.6} parent=0 // pred_check_branch
    %117 = sbr.rel (0) target = $region17
  $region16: #{e2e_forward.6} parent=0 // pred_region
    _
  $region17: #{e2e_forward.6} parent=0 // pred_fallthru
    _
  // Predicated region
  $region18: #{e2e_forward.6} parent=0 // pred_check
    _
  $region19: #{e2e_forward.6} parent=0 // pred_check_branch
    %119 = sbr.rel (0) target = $region21
  $region20: #{e2e_forward.6} parent=0 // pred_region
    _
  $region21: #{e2e_forward.6} parent=0 // pred_fallthru
    _
  // Predicated region
  $region22: #{e2e_forward.6} parent=0 // pred_check
    _
  $region23: #{e2e_forward.6} parent=0 // pred_check_branch
    %121 = sbr.rel (0) target = $region25
  $region24: #{e2e_forward.6} parent=0 // pred_region
    _
  $region25: #{e2e_forward.6} parent=0 // pred_fallthru
    _
  // Predicated region
  $region26: #{e2e_forward.6} parent=0 // pred_check
    _
  $region27: #{e2e_forward.6} parent=0 // pred_check_branch
    %123 = sbr.rel (0) target = $region29
  $region28: #{e2e_forward.6} parent=0 // pred_region
    _
  $region29: #{e2e_forward.6} parent=0 // pred_fallthru
    _

// kernel: sub.7
$region0: #{sub.7}
  %s0 = inlined_call_operand.vmem [shape: f32[2,5], index: 0, kind: input, shape index: {}]
  %s1 = inlined_call_operand.vmem [shape: f32[10], index: 1, kind: output, shape index: {}]
  $region1: #{sub.7} parent=0
    #allocation0 [shape = 'u8[4096]{0}', space=vmem, size = 0x1000, scoped, tag = 'scoped mem for output reshape']
    #allocation1 [shape = 'u8[4096]{0}', space=vmem, size = 0x1000, scoped, tag = 'scoped mem for input reshape']
    %s3 = sshllo.u32 0, 2
    %v4 = vld [vmem:[%s0] sm:%s3]
    %5 = vst [vmem:[#allocation1] sm:%s3] %v4
    %v6 = vld [vmem:[#allocation1] sm:$0x1]
    %vm7 = vcmask 39936
    %8 = vst.msk [vmem:[#allocation0] sm:$0x1] %vm7, %v6
    %s9 = scalar_lea.vmem [#allocation1], 1
    %v10 = vld [vmem:[%s9] sm:$0x1]
    %11 = vrot.lane.b32.xlu0 %v10, 5
    %v12 = vpop.permute.xlu0 %11
    %vm13 = vcmask 80936
    %14 = vst.msk [vmem:[#allocation0] sm:$0x1] %vm13, %v12
    %s16 = sshllo.u32 0, 1
    %v18 = vld [vmem:[#allocation0] sm:%s16]
    %s19 = sshllo.u32 0, 1
    %20 = vst [vmem:[%s1] sm:%s19] %v18

// kernel: e2e_forward.4
$region0: #{e2e_forward.4}
  #allocation0 [shape = 'u32[]', space=smem, size = 0x4, offset = 0x4, fixed_abs, tag = 'smem constant byte address 0x4 - core index']
  #allocation1 [shape = 'u32[144,128]{1,0:T(1,128)}', space=vmem, size = 0x12000, scoped, tag = 'internal scratch']
  #allocation2 [shape = 'f32[8,2,64]{2,1,0:T(2,128)}', space=vmem, size = 0x2000, scoped, tag = 'scratch operand']
  #allocation3 [shape = 'f32[8,2,64]{2,1,0:T(2,128)}', space=vmem, size = 0x2000, scoped, tag = 'scratch operand']
  #allocation4 [shape = 'f32[8,2,16]{2,1,0:T(2,128)}', space=vmem, size = 0x2000, scoped, tag = 'scratch operand']
  #allocation5 [shape = 'f32[8,2,16]{2,1,0:T(2,128)}', space=vmem, size = 0x2000, scoped, tag = 'scratch operand']
  %s0 = inlined_call_operand.vmem [shape: f32[8,2,8], index: 0, kind: input, shape index: {}]
  %s1 = inlined_call_operand.vmem [shape: s32[2,1], index: 1, kind: input, shape index: {}]
  %s2 = inlined_call_operand.vmem [shape: s32[1,2], index: 2, kind: input, shape index: {}]
  %s3 = inlined_call_operand.vmem [shape: f32[8,128], index: 3, kind: input, shape index: {}]
  %s4 = inlined_call_operand.vmem [shape: f32[1,128], index: 4, kind: input, shape index: {}]
  %s5 = inlined_call_operand.vmem [shape: f32[16,64], index: 5, kind: input, shape index: {}]
  %s6 = inlined_call_operand.vmem [shape: f32[16,64], index: 6, kind: input, shape index: {}]
  %s7 = inlined_call_operand.vmem [shape: f32[16,16], index: 7, kind: input, shape index: {}]
  %s8 = inlined_call_operand.vmem [shape: f32[16,16], index: 8, kind: input, shape index: {}]
  %s9 = inlined_call_operand.vmem [shape: f32[1,16], index: 9, kind: input, shape index: {}]
  %s10 = inlined_call_operand.vmem [shape: f32[8,2,16], index: 10, kind: output, shape index: {}]
  %s11 = sld [smem:[#allocation0]]
  $region50: #{e2e_forward.4} parent=0
    _
  %s13 = ssub.s32 1, %s11
  %s14 = scalar_select 0, %s13, %s11
  // Predicated region
  $region2: #{e2e_forward.4} parent=0 // pred_check
    _
  $region3: #{e2e_forward.4} parent=0 // pred_check_branch
    %16 = sbr.rel (0) target = $region5
  $region4: #{e2e_forward.4} parent=0 // pred_region
    _
  $region5: #{e2e_forward.4} parent=0 // pred_fallthru
    _
  // Predicated region
  $region6: #{e2e_forward.4} parent=0 // pred_check
    _
  $region7: #{e2e_forward.4} parent=0 // pred_check_branch
    %18 = sbr.rel (0) target = $region9
  $region8: #{e2e_forward.4} parent=0 // pred_region
    _
  $region9: #{e2e_forward.4} parent=0 // pred_fallthru
    _
  // Predicated region
  $region10: #{e2e_forward.4} parent=0 // pred_check
    _
  $region11: #{e2e_forward.4} parent=0 // pred_check_branch
    %20 = sbr.rel (0) target = $region13
  $region12: #{e2e_forward.4} parent=0 // pred_region
    _
  $region13: #{e2e_forward.4} parent=0 // pred_fallthru
    _
  // Predicated region
  $region14: #{e2e_forward.4} parent=0 // pred_check
    _
  $region15: #{e2e_forward.4} parent=0 // pred_check_branch
    %22 = sbr.rel (0) target = $region17
  $region16: #{e2e_forward.4} parent=0 // pred_region
    _
  $region17: #{e2e_forward.4} parent=0 // pred_fallthru
    _
  // Predicated region
  $region18: #{e2e_forward.4} parent=0 // pred_check
    _
  $region19: #{e2e_forward.4} parent=0 // pred_check_branch
    %24 = sbr.rel (0) target = $region21
  $region20: #{e2e_forward.4} parent=0 // pred_region
    _
  $region21: #{e2e_forward.4} parent=0 // pred_fallthru
    _
  // Predicated region
  $region22: #{e2e_forward.4} parent=0 // pred_check
    _
  $region23: #{e2e_forward.4} parent=0 // pred_check_branch
    %26 = sbr.rel (0) target = $region25
  $region24: #{e2e_forward.4} parent=0 // pred_region
    _
  $region25: #{e2e_forward.4} parent=0 // pred_fallthru
    _
  // Predicated region
  $region26: #{e2e_forward.4} parent=0 // pred_check
    _
  $region27: #{e2e_forward.4} parent=0 // pred_check_branch
    %28 = sbr.rel (0) target = $region29
  $region28: #{e2e_forward.4} parent=0 // pred_region
    _
  $region29: #{e2e_forward.4} parent=0 // pred_fallthru
    _
  // Predicated region
  $region30: #{e2e_forward.4} parent=0 // pred_check
    _
  $region31: #{e2e_forward.4} parent=0 // pred_check_branch
    %30 = sbr.rel (0) target = $region33
  $region32: #{e2e_forward.4} parent=0 // pred_region
    _
  $region33: #{e2e_forward.4} parent=0 // pred_fallthru
    _
  // Predicated region
  $region34: #{e2e_forward.4} parent=0 // pred_check
    _
  $region35: #{e2e_forward.4} parent=0 // pred_check_branch
    %32 = sbr.rel (0) target = $region37
  $region36: #{e2e_forward.4} parent=0 // pred_region
    _
  $region37: #{e2e_forward.4} parent=0 // pred_fallthru
    _
  // Predicated region
  $region38: #{e2e_forward.4} parent=0 // pred_check
    _
  $region39: #{e2e_forward.4} parent=0 // pred_check_branch
    %34 = sbr.rel (0) target = $region41
  $region40: #{e2e_forward.4} parent=0 // pred_region
    _
  $region41: #{e2e_forward.4} parent=0 // pred_fallthru
    _
  %v36 = vld [vmem:[%s0] sm:$0x3]
  %v37 = vld [vmem:[%s0 + $0x2] sm:$0x3]
  %v38 = vld [vmem:[%s0 + $0x4] sm:$0x3]
  %v39 = vld [vmem:[%s0 + $0x6] sm:$0x3]
  %v40 = vld [vmem:[%s0 + $0x8] sm:$0x3]
  %v41 = vld [vmem:[%s0 + $0xa] sm:$0x3]
  %v42 = vld [vmem:[%s0 + $0xc] sm:$0x3]
  %v43 = vld [vmem:[%s0 + $0xe] sm:$0x3]
  %v52 = vcombine.low %v36, %v37
  %v53 = vcombine.low %v38, %v39
  %v55 = vunpack.c.l.s4 1983009808
  %v56 = vunpack.c.0.s8 %v55
  %v57 = vlaneseq
  %v58 = vshrl.u32 %v57, 7
  %v59 = vsub.s32 %v56, %v58
  %v60 = vrot.slane %v52, %v59
  %v62 = vunpack.c.l.s4 1983009808
  %v63 = vunpack.c.0.s8 %v62
  %v64 = vlaneseq
  %v65 = vshrl.u32 %v64, 7
  %v66 = vsub.s32 %v63, %v65
  %v67 = vrot.slane %v53, %v66
  %v68 = vcombine.low %v60, %v67
  %v69 = vcombine.low %v40, %v41
  %v70 = vcombine.low %v42, %v43
  %v72 = vunpack.c.l.s4 1983009808
  %v73 = vunpack.c.0.s8 %v72
  %v74 = vlaneseq
  %v75 = vshrl.u32 %v74, 7
  %v76 = vsub.s32 %v73, %v75
  %v77 = vrot.slane %v69, %v76
  %v79 = vunpack.c.l.s4 1983009808
  %v80 = vunpack.c.0.s8 %v79
  %v81 = vlaneseq
  %v82 = vshrl.u32 %v81, 7
  %v83 = vsub.s32 %v80, %v82
  %v84 = vrot.slane %v70, %v83
  %v85 = vcombine.low %v77, %v84
  %v88 = vpack.c.bf16 %v85, %v68
  %v89 = vld [vmem:[%s3] sm:$0xff]
  %v90 = vpack.c.bf16 %v89, %v89
  %v91 = vld [vmem:[%s4] sm:$0x1]
  %v93 = vlaneseq
  %v94 = vshrl.u32 %v93, 7
  %v95 = vsub.s32 0, %v94
  %v96 = vrot.slane %v91, %v95
  %vm98 = vcmask 64512
  %v100 = vsel %vm98, %v88, 0
  %vm102 = vcmask 1043456
  %v104 = vsel %vm102, %v90, 0
  %106 = vmatprep.subr.bf16.mxu0 0
  %107 = vmatpush1.bf16.msra.mxu0 %v104
  %108 = vmatprep.subr.bf16.mxu0 0
  %109 = vmatpush1.bf16.msra.mxu0 0
  %110 = vmatprep.subr.bf16.mxu0 0
  %111 = vmatpush1.bf16.msra.mxu0 0
  %112 = vmatprep.subr.bf16.mxu0 0
  %113 = vmatpush1.bf16.msra.mxu0 0
  %114 = vmatprep.subr.bf16.mxu0 0
  %115 = vmatpush1.bf16.msra.mxu0 0
  %116 = vmatprep.subr.bf16.mxu0 0
  %117 = vmatpush1.bf16.msra.mxu0 0
  %118 = vmatprep.subr.bf16.mxu0 0
  %119 = vmatpush1.bf16.msra.mxu0 0
  %120 = vmatprep.subr.bf16.mxu0 0
  %121 = vmatpush1.bf16.msra.mxu0 0
  %122 = vmatprep.subr.bf16.mxu0 0
  %123 = vmatpush1.bf16.msra.mxu0 0
  %124 = vmatprep.subr.bf16.mxu0 0
  %125 = vmatpush1.bf16.msra.mxu0 0
  %126 = vmatprep.subr.bf16.mxu0 0
  %127 = vmatpush1.bf16.msra.mxu0 0
  %128 = vmatprep.subr.bf16.mxu0 0
  %129 = vmatpush1.bf16.msra.mxu0 0
  %130 = vmatprep.subr.bf16.mxu0 0
  %131 = vmatpush1.bf16.msra.mxu0 0
  %132 = vmatprep.subr.bf16.mxu0 0
  %133 = vmatpush1.bf16.msra.mxu0 0
  %134 = vmatprep.subr.bf16.mxu0 0
  %135 = vmatpush1.bf16.msra.mxu0 0
  %136 = vmatprep.subr.bf16.mxu0 0
  %137 = vmatpush1.bf16.msra.mxu0 0
  %138 = vmatprep.mubr.bf16.mxu0 0
  %139 = vmatmul.mubr.bf16.gmra.mrb[0].mxu0 %v100
  %v140 = vpop.f32.mrb[0].mxu0
  %v141 = vadd.f32 %v96, %v140
  %v142 = vpop.f32.mrb[0].mxu0
  %v143 = vpop.f32.mrb[0].mxu0
  %v144 = vadd.f32 %v96, %v143
  %v145 = vpop.f32.mrb[0].mxu0
  %146 = vdwg.mxu0
  %v149 = vcombine.high %v141, %v141
  %v151 = vunpack.c.l.s4 1983009808
  %v152 = vunpack.c.0.s8 %v151
  %v153 = vlaneseq
  %v154 = vshrl.u32 %v153, 7
  %v155 = vsub.s32 %v152, %v154
  %v156 = vrot.slane %v141, %v155
  %v158 = vunpack.c.l.s4 1983009808
  %v159 = vunpack.c.0.s8 %v158
  %v160 = vlaneseq
  %v161 = vshrl.u32 %v160, 7
  %v162 = vsub.s32 %v159, %v161
  %v163 = vrot.slane %v149, %v162
  %v164 = vcombine.high %v156, %v156
  %v165 = vcombine.high %v163, %v163
  %v166 = vcombine.high %v144, %v144
  %v168 = vunpack.c.l.s4 1983009808
  %v169 = vunpack.c.0.s8 %v168
  %v170 = vlaneseq
  %v171 = vshrl.u32 %v170, 7
  %v172 = vsub.s32 %v169, %v171
  %v173 = vrot.slane %v144, %v172
  %v175 = vunpack.c.l.s4 1983009808
  %v176 = vunpack.c.0.s8 %v175
  %v177 = vlaneseq
  %v178 = vshrl.u32 %v177, 7
  %v179 = vsub.s32 %v176, %v178
  %v180 = vrot.slane %v166, %v179
  %v181 = vcombine.high %v173, %v173
  %v182 = vcombine.high %v180, %v180
  %vm191 = vcmask 517120
  %192 = vst.msk [vmem:[#allocation2] sm:$0x3] %vm191, %v156
  %193 = vst.msk [vmem:[#allocation2 + $0x2] sm:$0x3] %vm191, %v164
  %194 = vst.msk [vmem:[#allocation2 + $0x4] sm:$0x3] %vm191, %v163
  %195 = vst.msk [vmem:[#allocation2 + $0x6] sm:$0x3] %vm191, %v165
  %196 = vst.msk [vmem:[#allocation2 + $0x8] sm:$0x3] %vm191, %v173
  %197 = vst.msk [vmem:[#allocation2 + $0xa] sm:$0x3] %vm191, %v181
  %198 = vst.msk [vmem:[#allocation2 + $0xc] sm:$0x3] %vm191, %v180
  %199 = vst.msk [vmem:[#allocation2 + $0xe] sm:$0x3] %vm191, %v182
  %v201 = vunpack.c.l.s4 1983009808
  %v202 = vunpack.c.0.s8 %v201
  %v203 = vlaneseq
  %v204 = vshrl.u32 %v203, 7
  %v205 = vsub.s32 %v202, %v204
  %v206 = vrot.slane %v156, %v205
  %v208 = vunpack.c.l.s4 1983009808
  %v209 = vunpack.c.0.s8 %v208
  %v210 = vlaneseq
  %v211 = vshrl.u32 %v210, 7
  %v212 = vsub.s32 %v209, %v211
  %v213 = vrot.slane %v164, %v212
  %v215 = vunpack.c.l.s4 1983009808
  %v216 = vunpack.c.0.s8 %v215
  %v217 = vlaneseq
  %v218 = vshrl.u32 %v217, 7
  %v219 = vsub.s32 %v216, %v218
  %v220 = vrot.slane %v163, %v219
  %v222 = vunpack.c.l.s4 1983009808
  %v223 = vunpack.c.0.s8 %v222
  %v224 = vlaneseq
  %v225 = vshrl.u32 %v224, 7
  %v226 = vsub.s32 %v223, %v225
  %v227 = vrot.slane %v165, %v226
  %v229 = vunpack.c.l.s4 1983009808
  %v230 = vunpack.c.0.s8 %v229
  %v231 = vlaneseq
  %v232 = vshrl.u32 %v231, 7
  %v233 = vsub.s32 %v230, %v232
  %v234 = vrot.slane %v173, %v233
  %v236 = vunpack.c.l.s4 1983009808
  %v237 = vunpack.c.0.s8 %v236
  %v238 = vlaneseq
  %v239 = vshrl.u32 %v238, 7
  %v240 = vsub.s32 %v237, %v239
  %v241 = vrot.slane %v181, %v240
  %v243 = vunpack.c.l.s4 1983009808
  %v244 = vunpack.c.0.s8 %v243
  %v245 = vlaneseq
  %v246 = vshrl.u32 %v245, 7
  %v247 = vsub.s32 %v244, %v246
  %v248 = vrot.slane %v180, %v247
  %v250 = vunpack.c.l.s4 1983009808
  %v251 = vunpack.c.0.s8 %v250
  %v252 = vlaneseq
  %v253 = vshrl.u32 %v252, 7
  %v254 = vsub.s32 %v251, %v253
  %v255 = vrot.slane %v182, %v254
  %256 = vrot.lane.b32.xlu0 %v206, 64
  %v257 = vpop.permute.xlu0 %256
  %258 = vrot.lane.b32.xlu0 %v213, 64
  %v259 = vpop.permute.xlu0 %258
  %260 = vrot.lane.b32.xlu0 %v220, 64
  %v261 = vpop.permute.xlu0 %260
  %262 = vrot.lane.b32.xlu0 %v227, 64
  %v263 = vpop.permute.xlu0 %262
  %264 = vrot.lane.b32.xlu0 %v234, 64
  %v265 = vpop.permute.xlu0 %264
  %266 = vrot.lane.b32.xlu0 %v241, 64
  %v267 = vpop.permute.xlu0 %266
  %268 = vrot.lane.b32.xlu0 %v248, 64
  %v269 = vpop.permute.xlu0 %268
  %270 = vrot.lane.b32.xlu0 %v255, 64
  %v271 = vpop.permute.xlu0 %270
  %280 = vst.msk [vmem:[#allocation3] sm:$0x3] %vm191, %v257
  %281 = vst.msk [vmem:[#allocation3 + $0x2] sm:$0x3] %vm191, %v259
  %282 = vst.msk [vmem:[#allocation3 + $0x4] sm:$0x3] %vm191, %v261
  %283 = vst.msk [vmem:[#allocation3 + $0x6] sm:$0x3] %vm191, %v263
  %284 = vst.msk [vmem:[#allocation3 + $0x8] sm:$0x3] %vm191, %v265
  %285 = vst.msk [vmem:[#allocation3 + $0xa] sm:$0x3] %vm191, %v267
  %286 = vst.msk [vmem:[#allocation3 + $0xc] sm:$0x3] %vm191, %v269
  %287 = vst.msk [vmem:[#allocation3 + $0xe] sm:$0x3] %vm191, %v271
  %v288 = vld [vmem:[%s1] sm:$0x3]
  %v289 = vld [vmem:[%s5] sm:$0xff]
  %v290 = vld [vmem:[%s5 + $0x8] sm:$0xff]
  %v291 = vld [vmem:[%s6] sm:$0xff]
  %v292 = vld [vmem:[%s6 + $0x8] sm:$0xff]
  %v293 = vld [vmem:[#allocation2] sm:$0x3]
  %vm294 = vcmask 130048
  %v296 = vsel %vm294, 0.0, 0
  %298 = vmatprep.subr.mxu0 0.0
  %299 = vmatpush1.msra.mxu0 %v289
  %300 = vmatprep.subr.mxu0 0.0
  %301 = vmatpush1.msra.mxu0 %v290
  %302 = vmatprep.subr.mxu0 0.0
  %303 = vmatpush1.msra.mxu0 0.0
  %304 = vmatprep.subr.mxu0 0.0
  %305 = vmatpush1.msra.mxu0 0.0
  %306 = vmatprep.subr.mxu0 0.0
  %307 = vmatpush1.msra.mxu0 0.0
  %308 = vmatprep.subr.mxu0 0.0
  %309 = vmatpush1.msra.mxu0 0.0
  %310 = vmatprep.subr.mxu0 0.0
  %311 = vmatpush1.msra.mxu0 0.0
  %312 = vmatprep.subr.mxu0 0.0
  %313 = vmatpush1.msra.mxu0 0.0
  %314 = vmatprep.subr.mxu0 0.0
  %315 = vmatpush1.msra.mxu0 0.0
  %316 = vmatprep.subr.mxu0 0.0
  %317 = vmatpush1.msra.mxu0 0.0
  %318 = vmatprep.subr.mxu0 0.0
  %319 = vmatpush1.msra.mxu0 0.0
  %320 = vmatprep.subr.mxu0 0.0
  %321 = vmatpush1.msra.mxu0 0.0
  %322 = vmatprep.subr.mxu0 0.0
  %323 = vmatpush1.msra.mxu0 0.0
  %324 = vmatprep.subr.mxu0 0.0
  %325 = vmatpush1.msra.mxu0 0.0
  %326 = vmatprep.subr.mxu0 0.0
  %327 = vmatpush1.msra.mxu0 0.0
  %328 = vmatprep.subr.mxu0 0.0
  %329 = vmatpush1.msra.mxu0 0.0
  %330 = vmatprep.subr.mxu0 0.0
  %331 = vmatpush1.msra.mxu0 0.0
  %332 = vmatprep.subr.mxu0 0.0
  %333 = vmatpush1.msra.mxu0 0.0
  %334 = vmatprep.subr.mxu0 0.0
  %335 = vmatpush1.msra.mxu0 0.0
  %336 = vmatprep.subr.mxu0 0.0
  %337 = vmatpush1.msra.mxu0 0.0
  %338 = vmatprep.subr.mxu0 0.0
  %339 = vmatpush1.msra.mxu0 0.0
  %340 = vmatprep.subr.mxu0 0.0
  %341 = vmatpush1.msra.mxu0 0.0
  %342 = vmatprep.subr.mxu0 0.0
  %343 = vmatpush1.msra.mxu0 0.0
  %344 = vmatprep.subr.mxu0 0.0
  %345 = vmatpush1.msra.mxu0 0.0
  %346 = vmatprep.subr.mxu0 0.0
  %347 = vmatpush1.msra.mxu0 0.0
  %348 = vmatprep.subr.mxu0 0.0
  %349 = vmatpush1.msra.mxu0 0.0
  %350 = vmatprep.subr.mxu0 0.0
  %351 = vmatpush1.msra.mxu0 0.0
  %352 = vmatprep.subr.mxu0 0.0
  %353 = vmatpush1.msra.mxu0 0.0
  %354 = vmatprep.subr.mxu0 0.0
  %355 = vmatpush1.msra.mxu0 0.0
  %356 = vmatprep.subr.mxu0 0.0
  %357 = vmatpush1.msra.mxu0 0.0
  %358 = vmatprep.subr.mxu0 0.0
  %359 = vmatpush1.msra.mxu0 0.0
  %360 = vmatprep.subr.mxu0 0.0
  %361 = vmatpush1.msra.mxu0 0.0
  %362 = vmatprep.mubr.f32.mxu0 0.0
  %363 = vmatmul.mubr.f32.gmra.mrb[0].mxu0 %v296
  %v364 = vpop.f32.mrb[0].mxu0
  %v365 = vadd.f32 0.0, %v364
  %v366 = vpop.f32.mrb[0].mxu0
  %367 = vdwg.mxu0
  %v368 = vadd.f32 %v293, %v365
  %v369 = vxor.u32 %v368, 2147483648
  %v370 = vmul.f32 %v369, 1.442695
  %v371 = vpow.pop %v370
  %v372 = vadd.f32 %v371, 1.0
  %v373 = vrcp.pop %v372
  %v374 = vmul.f32 1.0, %v373
  %v375 = vtanh.pop %v368
  %v376 = vmul.f32 %v374, 0.0
  %378 = vrot.lane.b32.xlu0 %v375, 96
  %v379 = vpop.permute.xlu0 %378
  %v381 = vmul.f32 %v374, %v379
  %383 = vrot.lane.b32.xlu0 %v381, 16
  %v384 = vpop.permute.xlu0 %383
  %v386 = vadd.f32 %v376, %v384
  %v387 = vtanh.pop %v386
  %389 = vrot.lane.b32.xlu0 %v387, 32
  %v390 = vpop.permute.xlu0 %389
  %v392 = vmul.f32 %v374, %v390
  %394 = vrot.lane.b32.xlu0 %v392, 80
  %v395 = vpop.permute.xlu0 %394
  %vm397 = vcmask 123904
  %398 = vst.msk [vmem:[#allocation4] sm:$0x3] %vm397, %v395
  %s399 = scalar_lea.vmem [#allocation3], 14
  %v400 = vld [vmem:[%s399] sm:$0x3]
  %401 = vmatprep.subr.mxu0 0.0
  %402 = vmatpush1.msra.mxu0 %v291
  %403 = vmatprep.subr.mxu0 0.0
  %404 = vmatpush1.msra.mxu0 %v292
  %405 = vmatprep.subr.mxu0 0.0
  %406 = vmatpush1.msra.mxu0 0.0
  %407 = vmatprep.subr.mxu0 0.0
  %408 = vmatpush1.msra.mxu0 0.0
  %409 = vmatprep.subr.mxu0 0.0
  %410 = vmatpush1.msra.mxu0 0.0
  %411 = vmatprep.subr.mxu0 0.0
  %412 = vmatpush1.msra.mxu0 0.0
  %413 = vmatprep.subr.mxu0 0.0
  %414 = vmatpush1.msra.mxu0 0.0
  %415 = vmatprep.subr.mxu0 0.0
  %416 = vmatpush1.msra.mxu0 0.0
  %417 = vmatprep.subr.mxu0 0.0
  %418 = vmatpush1.msra.mxu0 0.0
  %419 = vmatprep.subr.mxu0 0.0
  %420 = vmatpush1.msra.mxu0 0.0
  %421 = vmatprep.subr.mxu0 0.0
  %422 = vmatpush1.msra.mxu0 0.0
  %423 = vmatprep.subr.mxu0 0.0
  %424 = vmatpush1.msra.mxu0 0.0
  %425 = vmatprep.subr.mxu0 0.0
  %426 = vmatpush1.msra.mxu0 0.0
  %427 = vmatprep.subr.mxu0 0.0
  %428 = vmatpush1.msra.mxu0 0.0
  %429 = vmatprep.subr.mxu0 0.0
  %430 = vmatpush1.msra.mxu0 0.0
  %431 = vmatprep.subr.mxu0 0.0
  %432 = vmatpush1.msra.mxu0 0.0
  %433 = vmatprep.subr.mxu0 0.0
  %434 = vmatpush1.msra.mxu0 0.0
  %435 = vmatprep.subr.mxu0 0.0
  %436 = vmatpush1.msra.mxu0 0.0
  %437 = vmatprep.subr.mxu0 0.0
  %438 = vmatpush1.msra.mxu0 0.0
  %439 = vmatprep.subr.mxu0 0.0
  %440 = vmatpush1.msra.mxu0 0.0
  %441 = vmatprep.subr.mxu0 0.0
  %442 = vmatpush1.msra.mxu0 0.0
  %443 = vmatprep.subr.mxu0 0.0
  %444 = vmatpush1.msra.mxu0 0.0
  %445 = vmatprep.subr.mxu0 0.0
  %446 = vmatpush1.msra.mxu0 0.0
  %447 = vmatprep.subr.mxu0 0.0
  %448 = vmatpush1.msra.mxu0 0.0
  %449 = vmatprep.subr.mxu0 0.0
  %450 = vmatpush1.msra.mxu0 0.0
  %451 = vmatprep.subr.mxu0 0.0
  %452 = vmatpush1.msra.mxu0 0.0
  %453 = vmatprep.subr.mxu0 0.0
  %454 = vmatpush1.msra.mxu0 0.0
  %455 = vmatprep.subr.mxu0 0.0
  %456 = vmatpush1.msra.mxu0 0.0
  %457 = vmatprep.subr.mxu0 0.0
  %458 = vmatpush1.msra.mxu0 0.0
  %459 = vmatprep.subr.mxu0 0.0
  %460 = vmatpush1.msra.mxu0 0.0
  %461 = vmatprep.subr.mxu0 0.0
  %462 = vmatpush1.msra.mxu0 0.0
  %463 = vmatprep.subr.mxu0 0.0
  %464 = vmatpush1.msra.mxu0 0.0
  %465 = vmatprep.mubr.f32.mxu0 0.0
  %466 = vmatmul.mubr.f32.gmra.mrb[0].mxu0 %v296
  %v467 = vpop.f32.mrb[0].mxu0
  %v468 = vadd.f32 0.0, %v467
  %v469 = vpop.f32.mrb[0].mxu0
  %470 = vdwg.mxu0
  %v471 = vadd.f32 %v400, %v468
  %v472 = vxor.u32 %v471, 2147483648
  %v473 = vmul.f32 %v472, 1.442695
  %v474 = vpow.pop %v473
  %v475 = vadd.f32 %v474, 1.0
  %v476 = vrcp.pop %v475
  %v477 = vmul.f32 1.0, %v476
  %v478 = vtanh.pop %v471
  %v479 = vmul.f32 %v477, 0.0
  %481 = vrot.lane.b32.xlu0 %v478, 96
  %v482 = vpop.permute.xlu0 %481
  %v484 = vmul.f32 %v477, %v482
  %486 = vrot.lane.b32.xlu0 %v484, 16
  %v487 = vpop.permute.xlu0 %486
  %v489 = vadd.f32 %v479, %v487
  %v490 = vtanh.pop %v489
  %492 = vrot.lane.b32.xlu0 %v490, 32
  %v493 = vpop.permute.xlu0 %492
  %v495 = vmul.f32 %v477, %v493
  %vm496 = vcmp.gt.s32.totalorder %v288, 7
  %v497 = vsel %vm496, 1, 0
  %498 = vset.pattern.permute.xlu0 0
  %499 = vperm.xlu0 %498, %v497
  %v500 = vpop.permute.xlu0 %499
  %vm501 = vcmp.eq.s32.totalorder %v500, 1
  %v502 = vsel %vm501, %v495, 0.0
  %v503 = vsel %vm501, %v489, 0.0
  %505 = vrot.lane.b32.xlu0 %v502, 80
  %v506 = vpop.permute.xlu0 %505
  %s508 = scalar_lea.vmem [#allocation5], 14
  %509 = vst.msk [vmem:[%s508] sm:$0x3] %vm397, %v506
  %s510 = scalar_lea.vmem [#allocation2], 2
  %v511 = vld [vmem:[%s510] sm:$0x3]
  %v512 = vsel %vm294, %v395, 0
  %514 = vmatprep.subr.mxu0 0.0
  %515 = vmatpush1.msra.mxu0 %v289
  %516 = vmatprep.subr.mxu0 0.0
  %517 = vmatpush1.msra.mxu0 %v290
  %518 = vmatprep.subr.mxu0 0.0
  %519 = vmatpush1.msra.mxu0 0.0
  %520 = vmatprep.subr.mxu0 0.0
  %521 = vmatpush1.msra.mxu0 0.0
  %522 = vmatprep.subr.mxu0 0.0
  %523 = vmatpush1.msra.mxu0 0.0
  %524 = vmatprep.subr.mxu0 0.0
  %525 = vmatpush1.msra.mxu0 0.0
  %526 = vmatprep.subr.mxu0 0.0
  %527 = vmatpush1.msra.mxu0 0.0
  %528 = vmatprep.subr.mxu0 0.0
  %529 = vmatpush1.msra.mxu0 0.0
  %530 = vmatprep.subr.mxu0 0.0
  %531 = vmatpush1.msra.mxu0 0.0
  %532 = vmatprep.subr.mxu0 0.0
  %533 = vmatpush1.msra.mxu0 0.0
  %534 = vmatprep.subr.mxu0 0.0
  %535 = vmatpush1.msra.mxu0 0.0
  %536 = vmatprep.subr.mxu0 0.0
  %537 = vmatpush1.msra.mxu0 0.0
  %538 = vmatprep.subr.mxu0 0.0
  %539 = vmatpush1.msra.mxu0 0.0
  %540 = vmatprep.subr.mxu0 0.0
  %541 = vmatpush1.msra.mxu0 0.0
  %542 = vmatprep.subr.mxu0 0.0
  %543 = vmatpush1.msra.mxu0 0.0
  %544 = vmatprep.subr.mxu0 0.0
  %545 = vmatpush1.msra.mxu0 0.0
  %546 = vmatprep.subr.mxu0 0.0
  %547 = vmatpush1.msra.mxu0 0.0
  %548 = vmatprep.subr.mxu0 0.0
  %549 = vmatpush1.msra.mxu0 0.0
  %550 = vmatprep.subr.mxu0 0.0
  %551 = vmatpush1.msra.mxu0 0.0
  %552 = vmatprep.subr.mxu0 0.0
  %553 = vmatpush1.msra.mxu0 0.0
  %554 = vmatprep.subr.mxu0 0.0
  %555 = vmatpush1.msra.mxu0 0.0
  %556 = vmatprep.subr.mxu0 0.0
  %557 = vmatpush1.msra.mxu0 0.0
  %558 = vmatprep.subr.mxu0 0.0
  %559 = vmatpush1.msra.mxu0 0.0
  %560 = vmatprep.subr.mxu0 0.0
  %561 = vmatpush1.msra.mxu0 0.0
  %562 = vmatprep.subr.mxu0 0.0
  %563 = vmatpush1.msra.mxu0 0.0
  %564 = vmatprep.subr.mxu0 0.0
  %565 = vmatpush1.msra.mxu0 0.0
  %566 = vmatprep.subr.mxu0 0.0
  %567 = vmatpush1.msra.mxu0 0.0
  %568 = vmatprep.subr.mxu0 0.0
  %569 = vmatpush1.msra.mxu0 0.0
  %570 = vmatprep.subr.mxu0 0.0
  %571 = vmatpush1.msra.mxu0 0.0
  %572 = vmatprep.subr.mxu0 0.0
  %573 = vmatpush1.msra.mxu0 0.0
  %574 = vmatprep.subr.mxu0 0.0
  %575 = vmatpush1.msra.mxu0 0.0
  %576 = vmatprep.subr.mxu0 0.0
  %577 = vmatpush1.msra.mxu0 0.0
  %578 = vmatprep.mubr.f32.mxu0 0.0
  %579 = vmatmul.mubr.f32.gmra.mrb[0].mxu0 %v512
  %v580 = vpop.f32.mrb[0].mxu0
  %v581 = vadd.f32 0.0, %v580
  %v582 = vpop.f32.mrb[0].mxu0
  %583 = vdwg.mxu0
  %v584 = vadd.f32 %v511, %v581
  %v585 = vxor.u32 %v584, 2147483648
  %v586 = vmul.f32 %v585, 1.442695
  %v587 = vpow.pop %v586
  %v588 = vadd.f32 %v587, 1.0
  %v589 = vrcp.pop %v588
  %v590 = vmul.f32 1.0, %v589
  %v591 = vtanh.pop %v584
  %v592 = vmul.f32 %v590, %v386
  %594 = vrot.lane.b32.xlu0 %v591, 96
  %v595 = vpop.permute.xlu0 %594
  %v597 = vmul.f32 %v590, %v595
  %599 = vrot.lane.b32.xlu0 %v597, 16
  %v600 = vpop.permute.xlu0 %599
  %v602 = vadd.f32 %v592, %v600
  %v603 = vtanh.pop %v602
  %605 = vrot.lane.b32.xlu0 %v603, 32
  %v606 = vpop.permute.xlu0 %605
  %v608 = vmul.f32 %v590, %v606
  %610 = vrot.lane.b32.xlu0 %v608, 80
  %v611 = vpop.permute.xlu0 %610
  %s613 = scalar_lea.vmem [#allocation4], 2
  %614 = vst.msk [vmem:[%s613] sm:$0x3] %vm397, %v611
  %s615 = scalar_lea.vmem [#allocation3], 12
  %v616 = vld [vmem:[%s615] sm:$0x3]
  %v617 = vsel %vm294, %v506, 0
  %619 = vmatprep.subr.mxu0 0.0
  %620 = vmatpush1.msra.mxu0 %v291
  %621 = vmatprep.subr.mxu0 0.0
  %622 = vmatpush1.msra.mxu0 %v292
  %623 = vmatprep.subr.mxu0 0.0
  %624 = vmatpush1.msra.mxu0 0.0
  %625 = vmatprep.subr.mxu0 0.0
  %626 = vmatpush1.msra.mxu0 0.0
  %627 = vmatprep.subr.mxu0 0.0
  %628 = vmatpush1.msra.mxu0 0.0
  %629 = vmatprep.subr.mxu0 0.0
  %630 = vmatpush1.msra.mxu0 0.0
  %631 = vmatprep.subr.mxu0 0.0
  %632 = vmatpush1.msra.mxu0 0.0
  %633 = vmatprep.subr.mxu0 0.0
  %634 = vmatpush1.msra.mxu0 0.0
  %635 = vmatprep.subr.mxu0 0.0
  %636 = vmatpush1.msra.mxu0 0.0
  %637 = vmatprep.subr.mxu0 0.0
  %638 = vmatpush1.msra.mxu0 0.0
  %639 = vmatprep.subr.mxu0 0.0
  %640 = vmatpush1.msra.mxu0 0.0
  %641 = vmatprep.subr.mxu0 0.0
  %642 = vmatpush1.msra.mxu0 0.0
  %643 = vmatprep.subr.mxu0 0.0
  %644 = vmatpush1.msra.mxu0 0.0
  %645 = vmatprep.subr.mxu0 0.0
  %646 = vmatpush1.msra.mxu0 0.0
  %647 = vmatprep.subr.mxu0 0.0
  %648 = vmatpush1.msra.mxu0 0.0
  %649 = vmatprep.subr.mxu0 0.0
  %650 = vmatpush1.msra.mxu0 0.0
  %651 = vmatprep.subr.mxu0 0.0
  %652 = vmatpush1.msra.mxu0 0.0
  %653 = vmatprep.subr.mxu0 0.0
  %654 = vmatpush1.msra.mxu0 0.0
  %655 = vmatprep.subr.mxu0 0.0
  %656 = vmatpush1.msra.mxu0 0.0
  %657 = vmatprep.subr.mxu0 0.0
  %658 = vmatpush1.msra.mxu0 0.0
  %659 = vmatprep.subr.mxu0 0.0
  %660 = vmatpush1.msra.mxu0 0.0
  %661 = vmatprep.subr.mxu0 0.0
  %662 = vmatpush1.msra.mxu0 0.0
  %663 = vmatprep.subr.mxu0 0.0
  %664 = vmatpush1.msra.mxu0 0.0
  %665 = vmatprep.subr.mxu0 0.0
  %666 = vmatpush1.msra.mxu0 0.0
  %667 = vmatprep.subr.mxu0 0.0
  %668 = vmatpush1.msra.mxu0 0.0
  %669 = vmatprep.subr.mxu0 0.0
  %670 = vmatpush1.msra.mxu0 0.0
  %671 = vmatprep.subr.mxu0 0.0
  %672 = vmatpush1.msra.mxu0 0.0
  %673 = vmatprep.subr.mxu0 0.0
  %674 = vmatpush1.msra.mxu0 0.0
  %675 = vmatprep.subr.mxu0 0.0
  %676 = vmatpush1.msra.mxu0 0.0
  %677 = vmatprep.subr.mxu0 0.0
  %678 = vmatpush1.msra.mxu0 0.0
  %679 = vmatprep.subr.mxu0 0.0
  %680 = vmatpush1.msra.mxu0 0.0
  %681 = vmatprep.subr.mxu0 0.0
  %682 = vmatpush1.msra.mxu0 0.0
  %683 = vmatprep.mubr.f32.mxu0 0.0
  %684 = vmatmul.mubr.f32.gmra.mrb[0].mxu0 %v617
  %v685 = vpop.f32.mrb[0].mxu0
  %v686 = vadd.f32 0.0, %v685
  %v687 = vpop.f32.mrb[0].mxu0
  %688 = vdwg.mxu0
  %v689 = vadd.f32 %v616, %v686
  %v690 = vxor.u32 %v689, 2147483648
  %v691 = vmul.f32 %v690, 1.442695
  %v692 = vpow.pop %v691
  %v693 = vadd.f32 %v692, 1.0
  %v694 = vrcp.pop %v693
  %v695 = vmul.f32 1.0, %v694
  %v696 = vtanh.pop %v689
  %v697 = vmul.f32 %v695, %v503
  %699 = vrot.lane.b32.xlu0 %v696, 96
  %v700 = vpop.permute.xlu0 %699
  %v702 = vmul.f32 %v695, %v700
  %704 = vrot.lane.b32.xlu0 %v702, 16
  %v705 = vpop.permute.xlu0 %704
  %v707 = vadd.f32 %v697, %v705
  %v708 = vtanh.pop %v707
  %710 = vrot.lane.b32.xlu0 %v708, 32
  %v711 = vpop.permute.xlu0 %710
  %v713 = vmul.f32 %v695, %v711
  %vm714 = vcmp.gt.s32.totalorder %v288, 6
  %v715 = vsel %vm714, 1, 0
  %716 = vset.pattern.permute.xlu0 0
  %717 = vperm.xlu0 %716, %v715
  %v718 = vpop.permute.xlu0 %717
  %vm719 = vcmp.eq.s32.totalorder %v718, 1
  %v720 = vsel %vm719, %v713, %v502
  %v721 = vsel %vm719, %v707, %v503
  %723 = vrot.lane.b32.xlu0 %v720, 80
  %v724 = vpop.permute.xlu0 %723
  %s726 = scalar_lea.vmem [#allocation5], 12
  %727 = vst.msk [vmem:[%s726] sm:$0x3] %vm397, %v724
  %s728 = scalar_lea.vmem [#allocation2], 4
  %v729 = vld [vmem:[%s728] sm:$0x3]
  %v730 = vsel %vm294, %v611, 0
  %732 = vmatprep.subr.mxu0 0.0
  %733 = vmatpush1.msra.mxu0 %v289
  %734 = vmatprep.subr.mxu0 0.0
  %735 = vmatpush1.msra.mxu0 %v290
  %736 = vmatprep.subr.mxu0 0.0
  %737 = vmatpush1.msra.mxu0 0.0
  %738 = vmatprep.subr.mxu0 0.0
  %739 = vmatpush1.msra.mxu0 0.0
  %740 = vmatprep.subr.mxu0 0.0
  %741 = vmatpush1.msra.mxu0 0.0
  %742 = vmatprep.subr.mxu0 0.0
  %743 = vmatpush1.msra.mxu0 0.0
  %744 = vmatprep.subr.mxu0 0.0
  %745 = vmatpush1.msra.mxu0 0.0
  %746 = vmatprep.subr.mxu0 0.0
  %747 = vmatpush1.msra.mxu0 0.0
  %748 = vmatprep.subr.mxu0 0.0
  %749 = vmatpush1.msra.mxu0 0.0
  %750 = vmatprep.subr.mxu0 0.0
  %751 = vmatpush1.msra.mxu0 0.0
  %752 = vmatprep.subr.mxu0 0.0
  %753 = vmatpush1.msra.mxu0 0.0
  %754 = vmatprep.subr.mxu0 0.0
  %755 = vmatpush1.msra.mxu0 0.0
  %756 = vmatprep.subr.mxu0 0.0
  %757 = vmatpush1.msra.mxu0 0.0
  %758 = vmatprep.subr.mxu0 0.0
  %759 = vmatpush1.msra.mxu0 0.0
  %760 = vmatprep.subr.mxu0 0.0
  %761 = vmatpush1.msra.mxu0 0.0
  %762 = vmatprep.subr.mxu0 0.0
  %763 = vmatpush1.msra.mxu0 0.0
  %764 = vmatprep.subr.mxu0 0.0
  %765 = vmatpush1.msra.mxu0 0.0
  %766 = vmatprep.subr.mxu0 0.0
  %767 = vmatpush1.msra.mxu0 0.0
  %768 = vmatprep.subr.mxu0 0.0
  %769 = vmatpush1.msra.mxu0 0.0
  %770 = vmatprep.subr.mxu0 0.0
  %771 = vmatpush1.msra.mxu0 0.0
  %772 = vmatprep.subr.mxu0 0.0
  %773 = vmatpush1.msra.mxu0 0.0
  %774 = vmatprep.subr.mxu0 0.0
  %775 = vmatpush1.msra.mxu0 0.0
  %776 = vmatprep.subr.mxu0 0.0
  %777 = vmatpush1.msra.mxu0 0.0
  %778 = vmatprep.subr.mxu0 0.0
  %779 = vmatpush1.msra.mxu0 0.0
  %780 = vmatprep.subr.mxu0 0.0
  %781 = vmatpush1.msra.mxu0 0.0
  %782 = vmatprep.subr.mxu0 0.0
  %783 = vmatpush1.msra.mxu0 0.0
  %784 = vmatprep.subr.mxu0 0.0
  %785 = vmatpush1.msra.mxu0 0.0
  %786 = vmatprep.subr.mxu0 0.0
  %787 = vmatpush1.msra.mxu0 0.0
  %788 = vmatprep.subr.mxu0 0.0
  %789 = vmatpush1.msra.mxu0 0.0
  %790 = vmatprep.subr.mxu0 0.0
  %791 = vmatpush1.msra.mxu0 0.0
  %792 = vmatprep.subr.mxu0 0.0
  %793 = vmatpush1.msra.mxu0 0.0
  %794 = vmatprep.subr.mxu0 0.0
  %795 = vmatpush1.msra.mxu0 0.0
  %796 = vmatprep.mubr.f32.mxu0 0.0
  %797 = vmatmul.mubr.f32.gmra.mrb[0].mxu0 %v730
  %v798 = vpop.f32.mrb[0].mxu0
  %v799 = vadd.f32 0.0, %v798
  %v800 = vpop.f32.mrb[0].mxu0
  %801 = vdwg.mxu0
  %v802 = vadd.f32 %v729, %v799
  %v803 = vxor.u32 %v802, 2147483648
  %v804 = vmul.f32 %v803, 1.442695
  %v805 = vpow.pop %v804
  %v806 = vadd.f32 %v805, 1.0
  %v807 = vrcp.pop %v806
  %v808 = vmul.f32 1.0, %v807
  %v809 = vtanh.pop %v802
  %v810 = vmul.f32 %v808, %v602
  %812 = vrot.lane.b32.xlu0 %v809, 96
  %v813 = vpop.permute.xlu0 %812
  %v815 = vmul.f32 %v808, %v813
  %817 = vrot.lane.b32.xlu0 %v815, 16
  %v818 = vpop.permute.xlu0 %817
  %v820 = vadd.f32 %v810, %v818
  %v821 = vtanh.pop %v820
  %823 = vrot.lane.b32.xlu0 %v821, 32
  %v824 = vpop.permute.xlu0 %823
  %v826 = vmul.f32 %v808, %v824
  %828 = vrot.lane.b32.xlu0 %v826, 80
  %v829 = vpop.permute.xlu0 %828
  %s831 = scalar_lea.vmem [#allocation4], 4
  %832 = vst.msk [vmem:[%s831] sm:$0x3] %vm397, %v829
  %s833 = scalar_lea.vmem [#allocation3], 10
  %v834 = vld [vmem:[%s833] sm:$0x3]
  %v835 = vsel %vm294, %v724, 0
  %837 = vmatprep.subr.mxu0 0.0
  %838 = vmatpush1.msra.mxu0 %v291
  %839 = vmatprep.subr.mxu0 0.0
  %840 = vmatpush1.msra.mxu0 %v292
  %841 = vmatprep.subr.mxu0 0.0
  %842 = vmatpush1.msra.mxu0 0.0
  %843 = vmatprep.subr.mxu0 0.0
  %844 = vmatpush1.msra.mxu0 0.0
  %845 = vmatprep.subr.mxu0 0.0
  %846 = vmatpush1.msra.mxu0 0.0
  %847 = vmatprep.subr.mxu0 0.0
  %848 = vmatpush1.msra.mxu0 0.0
  %849 = vmatprep.subr.mxu0 0.0
  %850 = vmatpush1.msra.mxu0 0.0
  %851 = vmatprep.subr.mxu0 0.0
  %852 = vmatpush1.msra.mxu0 0.0
  %853 = vmatprep.subr.mxu0 0.0
  %854 = vmatpush1.msra.mxu0 0.0
  %855 = vmatprep.subr.mxu0 0.0
  %856 = vmatpush1.msra.mxu0 0.0
  %857 = vmatprep.subr.mxu0 0.0
  %858 = vmatpush1.msra.mxu0 0.0
  %859 = vmatprep.subr.mxu0 0.0
  %860 = vmatpush1.msra.mxu0 0.0
  %861 = vmatprep.subr.mxu0 0.0
  %862 = vmatpush1.msra.mxu0 0.0
  %863 = vmatprep.subr.mxu0 0.0
  %864 = vmatpush1.msra.mxu0 0.0
  %865 = vmatprep.subr.mxu0 0.0
  %866 = vmatpush1.msra.mxu0 0.0
  %867 = vmatprep.subr.mxu0 0.0
  %868 = vmatpush1.msra.mxu0 0.0
  %869 = vmatprep.subr.mxu0 0.0
  %870 = vmatpush1.msra.mxu0 0.0
  %871 = vmatprep.subr.mxu0 0.0
  %872 = vmatpush1.msra.mxu0 0.0
  %873 = vmatprep.subr.mxu0 0.0
  %874 = vmatpush1.msra.mxu0 0.0
  %875 = vmatprep.subr.mxu0 0.0
  %876 = vmatpush1.msra.mxu0 0.0
  %877 = vmatprep.subr.mxu0 0.0
  %878 = vmatpush1.msra.mxu0 0.0
  %879 = vmatprep.subr.mxu0 0.0
  %880 = vmatpush1.msra.mxu0 0.0
  %881 = vmatprep.subr.mxu0 0.0
  %882 = vmatpush1.msra.mxu0 0.0
  %883 = vmatprep.subr.mxu0 0.0
  %884 = vmatpush1.msra.mxu0 0.0
  %885 = vmatprep.subr.mxu0 0.0
  %886 = vmatpush1.msra.mxu0 0.0
  %887 = vmatprep.subr.mxu0 0.0
  %888 = vmatpush1.msra.mxu0 0.0
  %889 = vmatprep.subr.mxu0 0.0
  %890 = vmatpush1.msra.mxu0 0.0
  %891 = vmatprep.subr.mxu0 0.0
  %892 = vmatpush1.msra.mxu0 0.0
  %893 = vmatprep.subr.mxu0 0.0
  %894 = vmatpush1.msra.mxu0 0.0
  %895 = vmatprep.subr.mxu0 0.0
  %896 = vmatpush1.msra.mxu0 0.0
  %897 = vmatprep.subr.mxu0 0.0
  %898 = vmatpush1.msra.mxu0 0.0
  %899 = vmatprep.subr.mxu0 0.0
  %900 = vmatpush1.msra.mxu0 0.0
  %901 = vmatprep.mubr.f32.mxu0 0.0
  %902 = vmatmul.mubr.f32.gmra.mrb[0].mxu0 %v835
  %v903 = vpop.f32.mrb[0].mxu0
  %v904 = vadd.f32 0.0, %v903
  %v905 = vpop.f32.mrb[0].mxu0
  %906 = vdwg.mxu0
  %v907 = vadd.f32 %v834, %v904
  %v908 = vxor.u32 %v907, 2147483648
  %v909 = vmul.f32 %v908, 1.442695
  %v910 = vpow.pop %v909
  %v911 = vadd.f32 %v910, 1.0
  %v912 = vrcp.pop %v911
  %v913 = vmul.f32 1.0, %v912
  %v914 = vtanh.pop %v907
  %v915 = vmul.f32 %v913, %v721
  %917 = vrot.lane.b32.xlu0 %v914, 96
  %v918 = vpop.permute.xlu0 %917
  %v920 = vmul.f32 %v913, %v918
  %922 = vrot.lane.b32.xlu0 %v920, 16
  %v923 = vpop.permute.xlu0 %922
  %v925 = vadd.f32 %v915, %v923
  %v926 = vtanh.pop %v925
  %928 = vrot.lane.b32.xlu0 %v926, 32
  %v929 = vpop.permute.xlu0 %928
  %v931 = vmul.f32 %v913, %v929
  %vm932 = vcmp.gt.s32.totalorder %v288, 5
  %v933 = vsel %vm932, 1, 0
  %934 = vset.pattern.permute.xlu0 0
  %935 = vperm.xlu0 %934, %v933
  %v936 = vpop.permute.xlu0 %935
  %vm937 = vcmp.eq.s32.totalorder %v936, 1
  %v938 = vsel %vm937, %v931, %v720
  %v939 = vsel %vm937, %v925, %v721
  %941 = vrot.lane.b32.xlu0 %v938, 80
  %v942 = vpop.permute.xlu0 %941
  %s944 = scalar_lea.vmem [#allocation5], 10
  %945 = vst.msk [vmem:[%s944] sm:$0x3] %vm397, %v942
  %s946 = scalar_lea.vmem [#allocation2], 6
  %v947 = vld [vmem:[%s946] sm:$0x3]
  %v948 = vsel %vm294, %v829, 0
  %950 = vmatprep.subr.mxu0 0.0
  %951 = vmatpush1.msra.mxu0 %v289
  %952 = vmatprep.subr.mxu0 0.0
  %953 = vmatpush1.msra.mxu0 %v290
  %954 = vmatprep.subr.mxu0 0.0
  %955 = vmatpush1.msra.mxu0 0.0
  %956 = vmatprep.subr.mxu0 0.0
  %957 = vmatpush1.msra.mxu0 0.0
  %958 = vmatprep.subr.mxu0 0.0
  %959 = vmatpush1.msra.mxu0 0.0
  %960 = vmatprep.subr.mxu0 0.0
  %961 = vmatpush1.msra.mxu0 0.0
  %962 = vmatprep.subr.mxu0 0.0
  %963 = vmatpush1.msra.mxu0 0.0
  %964 = vmatprep.subr.mxu0 0.0
  %965 = vmatpush1.msra.mxu0 0.0
  %966 = vmatprep.subr.mxu0 0.0
  %967 = vmatpush1.msra.mxu0 0.0
  %968 = vmatprep.subr.mxu0 0.0
  %969 = vmatpush1.msra.mxu0 0.0
  %970 = vmatprep.subr.mxu0 0.0
  %971 = vmatpush1.msra.mxu0 0.0
  %972 = vmatprep.subr.mxu0 0.0
  %973 = vmatpush1.msra.mxu0 0.0
  %974 = vmatprep.subr.mxu0 0.0
  %975 = vmatpush1.msra.mxu0 0.0
  %976 = vmatprep.subr.mxu0 0.0
  %977 = vmatpush1.msra.mxu0 0.0
  %978 = vmatprep.subr.mxu0 0.0
  %979 = vmatpush1.msra.mxu0 0.0
  %980 = vmatprep.subr.mxu0 0.0
  %981 = vmatpush1.msra.mxu0 0.0
  %982 = vmatprep.subr.mxu0 0.0
  %983 = vmatpush1.msra.mxu0 0.0
  %984 = vmatprep.subr.mxu0 0.0
  %985 = vmatpush1.msra.mxu0 0.0
  %986 = vmatprep.subr.mxu0 0.0
  %987 = vmatpush1.msra.mxu0 0.0
  %988 = vmatprep.subr.mxu0 0.0
  %989 = vmatpush1.msra.mxu0 0.0
  %990 = vmatprep.subr.mxu0 0.0
  %991 = vmatpush1.msra.mxu0 0.0
  %992 = vmatprep.subr.mxu0 0.0
  %993 = vmatpush1.msra.mxu0 0.0
  %994 = vmatprep.subr.mxu0 0.0
  %995 = vmatpush1.msra.mxu0 0.0
  %996 = vmatprep.subr.mxu0 0.0
  %997 = vmatpush1.msra.mxu0 0.0
  %998 = vmatprep.subr.mxu0 0.0
  %999 = vmatpush1.msra.mxu0 0.0
  %1000 = vmatprep.subr.mxu0 0.0
  %1001 = vmatpush1.msra.mxu0 0.0
  %1002 = vmatprep.subr.mxu0 0.0
  %1003 = vmatpush1.msra.mxu0 0.0
  %1004 = vmatprep.subr.mxu0 0.0
  %1005 = vmatpush1.msra.mxu0 0.0
  %1006 = vmatprep.subr.mxu0 0.0
  %1007 = vmatpush1.msra.mxu0 0.0
  %1008 = vmatprep.subr.mxu0 0.0
  %1009 = vmatpush1.msra.mxu0 0.0
  %1010 = vmatprep.subr.mxu0 0.0
  %1011 = vmatpush1.msra.mxu0 0.0
  %1012 = vmatprep.subr.mxu0 0.0
  %1013 = vmatpush1.msra.mxu0 0.0
  %1014 = vmatprep.mubr.f32.mxu0 0.0
  %1015 = vmatmul.mubr.f32.gmra.mrb[0].mxu0 %v948
  %v1016 = vpop.f32.mrb[0].mxu0
  %v1017 = vadd.f32 0.0, %v1016
  %v1018 = vpop.f32.mrb[0].mxu0
  %1019 = vdwg.mxu0
  %v1020 = vadd.f32 %v947, %v1017
  %v1021 = vxor.u32 %v1020, 2147483648
  %v1022 = vmul.f32 %v1021, 1.442695
  %v1023 = vpow.pop %v1022
  %v1024 = vadd.f32 %v1023, 1.0
  %v1025 = vrcp.pop %v1024
  %v1026 = vmul.f32 1.0, %v1025
  %v1027 = vtanh.pop %v1020
  %v1028 = vmul.f32 %v1026, %v820
  %1030 = vrot.lane.b32.xlu0 %v1027, 96
  %v1031 = vpop.permute.xlu0 %1030
  %v1033 = vmul.f32 %v1026, %v1031
  %1035 = vrot.lane.b32.xlu0 %v1033, 16
  %v1036 = vpop.permute.xlu0 %1035
  %v1038 = vadd.f32 %v1028, %v1036
  %v1039 = vtanh.pop %v1038
  %1041 = vrot.lane.b32.xlu0 %v1039, 32
  %v1042 = vpop.permute.xlu0 %1041
  %v1044 = vmul.f32 %v1026, %v1042
  %1046 = vrot.lane.b32.xlu0 %v1044, 80
  %v1047 = vpop.permute.xlu0 %1046
  %s1049 = scalar_lea.vmem [#allocation4], 6
  %1050 = vst.msk [vmem:[%s1049] sm:$0x3] %vm397, %v1047
  %s1051 = scalar_lea.vmem [#allocation3], 8
  %v1052 = vld [vmem:[%s1051] sm:$0x3]
  %v1053 = vsel %vm294, %v942, 0
  %1055 = vmatprep.subr.mxu0 0.0
  %1056 = vmatpush1.msra.mxu0 %v291
  %1057 = vmatprep.subr.mxu0 0.0
  %1058 = vmatpush1.msra.mxu0 %v292
  %1059 = vmatprep.subr.mxu0 0.0
  %1060 = vmatpush1.msra.mxu0 0.0
  %1061 = vmatprep.subr.mxu0 0.0
  %1062 = vmatpush1.msra.mxu0 0.0
  %1063 = vmatprep.subr.mxu0 0.0
  %1064 = vmatpush1.msra.mxu0 0.0
  %1065 = vmatprep.subr.mxu0 0.0
  %1066 = vmatpush1.msra.mxu0 0.0
  %1067 = vmatprep.subr.mxu0 0.0
  %1068 = vmatpush1.msra.mxu0 0.0
  %1069 = vmatprep.subr.mxu0 0.0
  %1070 = vmatpush1.msra.mxu0 0.0
  %1071 = vmatprep.subr.mxu0 0.0
  %1072 = vmatpush1.msra.mxu0 0.0
  %1073 = vmatprep.subr.mxu0 0.0
  %1074 = vmatpush1.msra.mxu0 0.0
  %1075 = vmatprep.subr.mxu0 0.0
  %1076 = vmatpush1.msra.mxu0 0.0
  %1077 = vmatprep.subr.mxu0 0.0
  %1078 = vmatpush1.msra.mxu0 0.0
  %1079 = vmatprep.subr.mxu0 0.0
  %1080 = vmatpush1.msra.mxu0 0.0
  %1081 = vmatprep.subr.mxu0 0.0
  %1082 = vmatpush1.msra.mxu0 0.0
  %1083 = vmatprep.subr.mxu0 0.0
  %1084 = vmatpush1.msra.mxu0 0.0
  %1085 = vmatprep.subr.mxu0 0.0
  %1086 = vmatpush1.msra.mxu0 0.0
  %1087 = vmatprep.subr.mxu0 0.0
  %1088 = vmatpush1.msra.mxu0 0.0
  %1089 = vmatprep.subr.mxu0 0.0
  %1090 = vmatpush1.msra.mxu0 0.0
  %1091 = vmatprep.subr.mxu0 0.0
  %1092 = vmatpush1.msra.mxu0 0.0
  %1093 = vmatprep.subr.mxu0 0.0
  %1094 = vmatpush1.msra.mxu0 0.0
  %1095 = vmatprep.subr.mxu0 0.0
  %1096 = vmatpush1.msra.mxu0 0.0
  %1097 = vmatprep.subr.mxu0 0.0
  %1098 = vmatpush1.msra.mxu0 0.0
  %1099 = vmatprep.subr.mxu0 0.0
  %1100 = vmatpush1.msra.mxu0 0.0
  %1101 = vmatprep.subr.mxu0 0.0
  %1102 = vmatpush1.msra.mxu0 0.0
  %1103 = vmatprep.subr.mxu0 0.0
  %1104 = vmatpush1.msra.mxu0 0.0
  %1105 = vmatprep.subr.mxu0 0.0
  %1106 = vmatpush1.msra.mxu0 0.0
  %1107 = vmatprep.subr.mxu0 0.0
  %1108 = vmatpush1.msra.mxu0 0.0
  %1109 = vmatprep.subr.mxu0 0.0
  %1110 = vmatpush1.msra.mxu0 0.0
  %1111 = vmatprep.subr.mxu0 0.0
  %1112 = vmatpush1.msra.mxu0 0.0
  %1113 = vmatprep.subr.mxu0 0.0
  %1114 = vmatpush1.msra.mxu0 0.0
  %1115 = vmatprep.subr.mxu0 0.0
  %1116 = vmatpush1.msra.mxu0 0.0
  %1117 = vmatprep.subr.mxu0 0.0
  %1118 = vmatpush1.msra.mxu0 0.0
  %1119 = vmatprep.mubr.f32.mxu0 0.0
  %1120 = vmatmul.mubr.f32.gmra.mrb[0].mxu0 %v1053
  %v1121 = vpop.f32.mrb[0].mxu0
  %v1122 = vadd.f32 0.0, %v1121
  %v1123 = vpop.f32.mrb[0].mxu0
  %1124 = vdwg.mxu0
  %v1125 = vadd.f32 %v1052, %v1122
  %v1126 = vxor.u32 %v1125, 2147483648
  %v1127 = vmul.f32 %v1126, 1.442695
  %v1128 = vpow.pop %v1127
  %v1129 = vadd.f32 %v1128, 1.0
  %v1130 = vrcp.pop %v1129
  %v1131 = vmul.f32 1.0, %v1130
  %v1132 = vtanh.pop %v1125
  %v1133 = vmul.f32 %v1131, %v939
  %1135 = vrot.lane.b32.xlu0 %v1132, 96
  %v1136 = vpop.permute.xlu0 %1135
  %v1138 = vmul.f32 %v1131, %v1136
  %1140 = vrot.lane.b32.xlu0 %v1138, 16
  %v1141 = vpop.permute.xlu0 %1140
  %v1143 = vadd.f32 %v1133, %v1141
  %v1144 = vtanh.pop %v1143
  %1146 = vrot.lane.b32.xlu0 %v1144, 32
  %v1147 = vpop.permute.xlu0 %1146
  %v1149 = vmul.f32 %v1131, %v1147
  %vm1150 = vcmp.gt.s32.totalorder %v288, 4
  %v1151 = vsel %vm1150, 1, 0
  %1152 = vset.pattern.permute.xlu0 0
  %1153 = vperm.xlu0 %1152, %v1151
  %v1154 = vpop.permute.xlu0 %1153
  %vm1155 = vcmp.eq.s32.totalorder %v1154, 1
  %v1156 = vsel %vm1155, %v1149, %v938
  %v1157 = vsel %vm1155, %v1143, %v939
  %1159 = vrot.lane.b32.xlu0 %v1156, 80
  %v1160 = vpop.permute.xlu0 %1159
  %s1162 = scalar_lea.vmem [#allocation5], 8
  %1163 = vst.msk [vmem:[%s1162] sm:$0x3] %vm397, %v1160
  %s1164 = scalar_lea.vmem [#allocation2], 8
  %v1165 = vld [vmem:[%s1164] sm:$0x3]
  %v1166 = vsel %vm294, %v1047, 0
  %1168 = vmatprep.subr.mxu0 0.0
  %1169 = vmatpush1.msra.mxu0 %v289
  %1170 = vmatprep.subr.mxu0 0.0
  %1171 = vmatpush1.msra.mxu0 %v290
  %1172 = vmatprep.subr.mxu0 0.0
  %1173 = vmatpush1.msra.mxu0 0.0
  %1174 = vmatprep.subr.mxu0 0.0
  %1175 = vmatpush1.msra.mxu0 0.0
  %1176 = vmatprep.subr.mxu0 0.0
  %1177 = vmatpush1.msra.mxu0 0.0
  %1178 = vmatprep.subr.mxu0 0.0
  %1179 = vmatpush1.msra.mxu0 0.0
  %1180 = vmatprep.subr.mxu0 0.0
  %1181 = vmatpush1.msra.mxu0 0.0
  %1182 = vmatprep.subr.mxu0 0.0
  %1183 = vmatpush1.msra.mxu0 0.0
  %1184 = vmatprep.subr.mxu0 0.0
  %1185 = vmatpush1.msra.mxu0 0.0
  %1186 = vmatprep.subr.mxu0 0.0
  %1187 = vmatpush1.msra.mxu0 0.0
  %1188 = vmatprep.subr.mxu0 0.0
  %1189 = vmatpush1.msra.mxu0 0.0
  %1190 = vmatprep.subr.mxu0 0.0
  %1191 = vmatpush1.msra.mxu0 0.0
  %1192 = vmatprep.subr.mxu0 0.0
  %1193 = vmatpush1.msra.mxu0 0.0
  %1194 = vmatprep.subr.mxu0 0.0
  %1195 = vmatpush1.msra.mxu0 0.0
  %1196 = vmatprep.subr.mxu0 0.0
  %1197 = vmatpush1.msra.mxu0 0.0
  %1198 = vmatprep.subr.mxu0 0.0
  %1199 = vmatpush1.msra.mxu0 0.0
  %1200 = vmatprep.subr.mxu0 0.0
  %1201 = vmatpush1.msra.mxu0 0.0
  %1202 = vmatprep.subr.mxu0 0.0
  %1203 = vmatpush1.msra.mxu0 0.0
  %1204 = vmatprep.subr.mxu0 0.0
  %1205 = vmatpush1.msra.mxu0 0.0
  %1206 = vmatprep.subr.mxu0 0.0
  %1207 = vmatpush1.msra.mxu0 0.0
  %1208 = vmatprep.subr.mxu0 0.0
  %1209 = vmatpush1.msra.mxu0 0.0
  %1210 = vmatprep.subr.mxu0 0.0
  %1211 = vmatpush1.msra.mxu0 0.0
  %1212 = vmatprep.subr.mxu0 0.0
  %1213 = vmatpush1.msra.mxu0 0.0
  %1214 = vmatprep.subr.mxu0 0.0
  %1215 = vmatpush1.msra.mxu0 0.0
  %1216 = vmatprep.subr.mxu0 0.0
  %1217 = vmatpush1.msra.mxu0 0.0
  %1218 = vmatprep.subr.mxu0 0.0
  %1219 = vmatpush1.msra.mxu0 0.0
  %1220 = vmatprep.subr.mxu0 0.0
  %1221 = vmatpush1.msra.mxu0 0.0
  %1222 = vmatprep.subr.mxu0 0.0
  %1223 = vmatpush1.msra.mxu0 0.0
  %1224 = vmatprep.subr.mxu0 0.0
  %1225 = vmatpush1.msra.mxu0 0.0
  %1226 = vmatprep.subr.mxu0 0.0
  %1227 = vmatpush1.msra.mxu0 0.0
  %1228 = vmatprep.subr.mxu0 0.0
  %1229 = vmatpush1.msra.mxu0 0.0
  %1230 = vmatprep.subr.mxu0 0.0
  %1231 = vmatpush1.msra.mxu0 0.0
  %1232 = vmatprep.mubr.f32.mxu0 0.0
  %1233 = vmatmul.mubr.f32.gmra.mrb[0].mxu0 %v1166
  %v1234 = vpop.f32.mrb[0].mxu0
  %v1235 = vadd.f32 0.0, %v1234
  %v1236 = vpop.f32.mrb[0].mxu0
  %1237 = vdwg.mxu0
  %v1238 = vadd.f32 %v1165, %v1235
  %v1239 = vxor.u32 %v1238, 2147483648
  %v1240 = vmul.f32 %v1239, 1.442695
  %v1241 = vpow.pop %v1240
  %v1242 = vadd.f32 %v1241, 1.0
  %v1243 = vrcp.pop %v1242
  %v1244 = vmul.f32 1.0, %v1243
  %v1245 = vtanh.pop %v1238
  %v1246 = vmul.f32 %v1244, %v1038
  %1248 = vrot.lane.b32.xlu0 %v1245, 96
  %v1249 = vpop.permute.xlu0 %1248
  %v1251 = vmul.f32 %v1244, %v1249
  %1253 = vrot.lane.b32.xlu0 %v1251, 16
  %v1254 = vpop.permute.xlu0 %1253
  %v1256 = vadd.f32 %v1246, %v1254
  %v1257 = vtanh.pop %v1256
  %1259 = vrot.lane.b32.xlu0 %v1257, 32
  %v1260 = vpop.permute.xlu0 %1259
  %v1262 = vmul.f32 %v1244, %v1260
  %1264 = vrot.lane.b32.xlu0 %v1262, 80
  %v1265 = vpop.permute.xlu0 %1264
  %s1267 = scalar_lea.vmem [#allocation4], 8
  %1268 = vst.msk [vmem:[%s1267] sm:$0x3] %vm397, %v1265
  %s1269 = scalar_lea.vmem [#allocation3], 6
  %v1270 = vld [vmem:[%s1269] sm:$0x3]
  %v1271 = vsel %vm294, %v1160, 0
  %1273 = vmatprep.subr.mxu0 0.0
  %1274 = vmatpush1.msra.mxu0 %v291
  %1275 = vmatprep.subr.mxu0 0.0
  %1276 = vmatpush1.msra.mxu0 %v292
  %1277 = vmatprep.subr.mxu0 0.0
  %1278 = vmatpush1.msra.mxu0 0.0
  %1279 = vmatprep.subr.mxu0 0.0
  %1280 = vmatpush1.msra.mxu0 0.0
  %1281 = vmatprep.subr.mxu0 0.0
  %1282 = vmatpush1.msra.mxu0 0.0
  %1283 = vmatprep.subr.mxu0 0.0
  %1284 = vmatpush1.msra.mxu0 0.0
  %1285 = vmatprep.subr.mxu0 0.0
  %1286 = vmatpush1.msra.mxu0 0.0
  %1287 = vmatprep.subr.mxu0 0.0
  %1288 = vmatpush1.msra.mxu0 0.0
  %1289 = vmatprep.subr.mxu0 0.0
  %1290 = vmatpush1.msra.mxu0 0.0
  %1291 = vmatprep.subr.mxu0 0.0
  %1292 = vmatpush1.msra.mxu0 0.0
  %1293 = vmatprep.subr.mxu0 0.0
  %1294 = vmatpush1.msra.mxu0 0.0
  %1295 = vmatprep.subr.mxu0 0.0
  %1296 = vmatpush1.msra.mxu0 0.0
  %1297 = vmatprep.subr.mxu0 0.0
  %1298 = vmatpush1.msra.mxu0 0.0
  %1299 = vmatprep.subr.mxu0 0.0
  %1300 = vmatpush1.msra.mxu0 0.0
  %1301 = vmatprep.subr.mxu0 0.0
  %1302 = vmatpush1.msra.mxu0 0.0
  %1303 = vmatprep.subr.mxu0 0.0
  %1304 = vmatpush1.msra.mxu0 0.0
  %1305 = vmatprep.subr.mxu0 0.0
  %1306 = vmatpush1.msra.mxu0 0.0
  %1307 = vmatprep.subr.mxu0 0.0
  %1308 = vmatpush1.msra.mxu0 0.0
  %1309 = vmatprep.subr.mxu0 0.0
  %1310 = vmatpush1.msra.mxu0 0.0
  %1311 = vmatprep.subr.mxu0 0.0
  %1312 = vmatpush1.msra.mxu0 0.0
  %1313 = vmatprep.subr.mxu0 0.0
  %1314 = vmatpush1.msra.mxu0 0.0
  %1315 = vmatprep.subr.mxu0 0.0
  %1316 = vmatpush1.msra.mxu0 0.0
  %1317 = vmatprep.subr.mxu0 0.0
  %1318 = vmatpush1.msra.mxu0 0.0
  %1319 = vmatprep.subr.mxu0 0.0
  %1320 = vmatpush1.msra.mxu0 0.0
  %1321 = vmatprep.subr.mxu0 0.0
  %1322 = vmatpush1.msra.mxu0 0.0
  %1323 = vmatprep.subr.mxu0 0.0
  %1324 = vmatpush1.msra.mxu0 0.0
  %1325 = vmatprep.subr.mxu0 0.0
  %1326 = vmatpush1.msra.mxu0 0.0
  %1327 = vmatprep.subr.mxu0 0.0
  %1328 = vmatpush1.msra.mxu0 0.0
  %1329 = vmatprep.subr.mxu0 0.0
  %1330 = vmatpush1.msra.mxu0 0.0
  %1331 = vmatprep.subr.mxu0 0.0
  %1332 = vmatpush1.msra.mxu0 0.0
  %1333 = vmatprep.subr.mxu0 0.0
  %1334 = vmatpush1.msra.mxu0 0.0
  %1335 = vmatprep.subr.mxu0 0.0
  %1336 = vmatpush1.msra.mxu0 0.0
  %1337 = vmatprep.mubr.f32.mxu0 0.0
  %1338 = vmatmul.mubr.f32.gmra.mrb[0].mxu0 %v1271
  %v1339 = vpop.f32.mrb[0].mxu0
  %v1340 = vadd.f32 0.0, %v1339
  %v1341 = vpop.f32.mrb[0].mxu0
  %1342 = vdwg.mxu0
  %v1343 = vadd.f32 %v1270, %v1340
  %v1344 = vxor.u32 %v1343, 2147483648
  %v1345 = vmul.f32 %v1344, 1.442695
  %v1346 = vpow.pop %v1345
  %v1347 = vadd.f32 %v1346, 1.0
  %v1348 = vrcp.pop %v1347
  %v1349 = vmul.f32 1.0, %v1348
  %v1350 = vtanh.pop %v1343
  %v1351 = vmul.f32 %v1349, %v1157
  %1353 = vrot.lane.b32.xlu0 %v1350, 96
  %v1354 = vpop.permute.xlu0 %1353
  %v1356 = vmul.f32 %v1349, %v1354
  %1358 = vrot.lane.b32.xlu0 %v1356, 16
  %v1359 = vpop.permute.xlu0 %1358
  %v1361 = vadd.f32 %v1351, %v1359
  %v1362 = vtanh.pop %v1361
  %1364 = vrot.lane.b32.xlu0 %v1362, 32
  %v1365 = vpop.permute.xlu0 %1364
  %v1367 = vmul.f32 %v1349, %v1365
  %vm1368 = vcmp.gt.s32.totalorder %v288, 3
  %v1369 = vsel %vm1368, 1, 0
  %1370 = vset.pattern.permute.xlu0 0
  %1371 = vperm.xlu0 %1370, %v1369
  %v1372 = vpop.permute.xlu0 %1371
  %vm1373 = vcmp.eq.s32.totalorder %v1372, 1
  %v1374 = vsel %vm1373, %v1367, %v1156
  %v1375 = vsel %vm1373, %v1361, %v1157
  %1377 = vrot.lane.b32.xlu0 %v1374, 80
  %v1378 = vpop.permute.xlu0 %1377
  %s1380 = scalar_lea.vmem [#allocation5], 6
  %1381 = vst.msk [vmem:[%s1380] sm:$0x3] %vm397, %v1378
  %s1382 = scalar_lea.vmem [#allocation2], 10
  %v1383 = vld [vmem:[%s1382] sm:$0x3]
  %v1384 = vsel %vm294, %v1265, 0
  %1386 = vmatprep.subr.mxu0 0.0
  %1387 = vmatpush1.msra.mxu0 %v289
  %1388 = vmatprep.subr.mxu0 0.0
  %1389 = vmatpush1.msra.mxu0 %v290
  %1390 = vmatprep.subr.mxu0 0.0
  %1391 = vmatpush1.msra.mxu0 0.0
  %1392 = vmatprep.subr.mxu0 0.0
  %1393 = vmatpush1.msra.mxu0 0.0
  %1394 = vmatprep.subr.mxu0 0.0
  %1395 = vmatpush1.msra.mxu0 0.0
  %1396 = vmatprep.subr.mxu0 0.0
  %1397 = vmatpush1.msra.mxu0 0.0
  %1398 = vmatprep.subr.mxu0 0.0
  %1399 = vmatpush1.msra.mxu0 0.0
  %1400 = vmatprep.subr.mxu0 0.0
  %1401 = vmatpush1.msra.mxu0 0.0
  %1402 = vmatprep.subr.mxu0 0.0
  %1403 = vmatpush1.msra.mxu0 0.0
  %1404 = vmatprep.subr.mxu0 0.0
  %1405 = vmatpush1.msra.mxu0 0.0
  %1406 = vmatprep.subr.mxu0 0.0
  %1407 = vmatpush1.msra.mxu0 0.0
  %1408 = vmatprep.subr.mxu0 0.0
  %1409 = vmatpush1.msra.mxu0 0.0
  %1410 = vmatprep.subr.mxu0 0.0
  %1411 = vmatpush1.msra.mxu0 0.0
  %1412 = vmatprep.subr.mxu0 0.0
  %1413 = vmatpush1.msra.mxu0 0.0
  %1414 = vmatprep.subr.mxu0 0.0
  %1415 = vmatpush1.msra.mxu0 0.0
  %1416 = vmatprep.subr.mxu0 0.0
  %1417 = vmatpush1.msra.mxu0 0.0
  %1418 = vmatprep.subr.mxu0 0.0
  %1419 = vmatpush1.msra.mxu0 0.0
  %1420 = vmatprep.subr.mxu0 0.0
  %1421 = vmatpush1.msra.mxu0 0.0
  %1422 = vmatprep.subr.mxu0 0.0
  %1423 = vmatpush1.msra.mxu0 0.0
  %1424 = vmatprep.subr.mxu0 0.0
  %1425 = vmatpush1.msra.mxu0 0.0
  %1426 = vmatprep.subr.mxu0 0.0
  %1427 = vmatpush1.msra.mxu0 0.0
  %1428 = vmatprep.subr.mxu0 0.0
  %1429 = vmatpush1.msra.mxu0 0.0
  %1430 = vmatprep.subr.mxu0 0.0
  %1431 = vmatpush1.msra.mxu0 0.0
  %1432 = vmatprep.subr.mxu0 0.0
  %1433 = vmatpush1.msra.mxu0 0.0
  %1434 = vmatprep.subr.mxu0 0.0
  %1435 = vmatpush1.msra.mxu0 0.0
  %1436 = vmatprep.subr.mxu0 0.0
  %1437 = vmatpush1.msra.mxu0 0.0
  %1438 = vmatprep.subr.mxu0 0.0
  %1439 = vmatpush1.msra.mxu0 0.0
  %1440 = vmatprep.subr.mxu0 0.0
  %1441 = vmatpush1.msra.mxu0 0.0
  %1442 = vmatprep.subr.mxu0 0.0
  %1443 = vmatpush1.msra.mxu0 0.0
  %1444 = vmatprep.subr.mxu0 0.0
  %1445 = vmatpush1.msra.mxu0 0.0
  %1446 = vmatprep.subr.mxu0 0.0
  %1447 = vmatpush1.msra.mxu0 0.0
  %1448 = vmatprep.subr.mxu0 0.0
  %1449 = vmatpush1.msra.mxu0 0.0
  %1450 = vmatprep.mubr.f32.mxu0 0.0
  %1451 = vmatmul.mubr.f32.gmra.mrb[0].mxu0 %v1384
  %v1452 = vpop.f32.mrb[0].mxu0
  %v1453 = vadd.f32 0.0, %v1452
  %v1454 = vpop.f32.mrb[0].mxu0
  %1455 = vdwg.mxu0
  %v1456 = vadd.f32 %v1383, %v1453
  %v1457 = vxor.u32 %v1456, 2147483648
  %v1458 = vmul.f32 %v1457, 1.442695
  %v1459 = vpow.pop %v1458
  %v1460 = vadd.f32 %v1459, 1.0
  %v1461 = vrcp.pop %v1460
  %v1462 = vmul.f32 1.0, %v1461
  %v1463 = vtanh.pop %v1456
  %v1464 = vmul.f32 %v1462, %v1256
  %1466 = vrot.lane.b32.xlu0 %v1463, 96
  %v1467 = vpop.permute.xlu0 %1466
  %v1469 = vmul.f32 %v1462, %v1467
  %1471 = vrot.lane.b32.xlu0 %v1469, 16
  %v1472 = vpop.permute.xlu0 %1471
  %v1474 = vadd.f32 %v1464, %v1472
  %v1475 = vtanh.pop %v1474
  %1477 = vrot.lane.b32.xlu0 %v1475, 32
  %v1478 = vpop.permute.xlu0 %1477
  %v1480 = vmul.f32 %v1462, %v1478
  %1482 = vrot.lane.b32.xlu0 %v1480, 80
  %v1483 = vpop.permute.xlu0 %1482
  %s1485 = scalar_lea.vmem [#allocation4], 10
  %1486 = vst.msk [vmem:[%s1485] sm:$0x3] %vm397, %v1483
  %s1487 = scalar_lea.vmem [#allocation3], 4
  %v1488 = vld [vmem:[%s1487] sm:$0x3]
  %v1489 = vsel %vm294, %v1378, 0
  %1491 = vmatprep.subr.mxu0 0.0
  %1492 = vmatpush1.msra.mxu0 %v291
  %1493 = vmatprep.subr.mxu0 0.0
  %1494 = vmatpush1.msra.mxu0 %v292
  %1495 = vmatprep.subr.mxu0 0.0
  %1496 = vmatpush1.msra.mxu0 0.0
  %1497 = vmatprep.subr.mxu0 0.0
  %1498 = vmatpush1.msra.mxu0 0.0
  %1499 = vmatprep.subr.mxu0 0.0
  %1500 = vmatpush1.msra.mxu0 0.0
  %1501 = vmatprep.subr.mxu0 0.0
  %1502 = vmatpush1.msra.mxu0 0.0
  %1503 = vmatprep.subr.mxu0 0.0
  %1504 = vmatpush1.msra.mxu0 0.0
  %1505 = vmatprep.subr.mxu0 0.0
  %1506 = vmatpush1.msra.mxu0 0.0
  %1507 = vmatprep.subr.mxu0 0.0
  %1508 = vmatpush1.msra.mxu0 0.0
  %1509 = vmatprep.subr.mxu0 0.0
  %1510 = vmatpush1.msra.mxu0 0.0
  %1511 = vmatprep.subr.mxu0 0.0
  %1512 = vmatpush1.msra.mxu0 0.0
  %1513 = vmatprep.subr.mxu0 0.0
  %1514 = vmatpush1.msra.mxu0 0.0
  %1515 = vmatprep.subr.mxu0 0.0
  %1516 = vmatpush1.msra.mxu0 0.0
  %1517 = vmatprep.subr.mxu0 0.0
  %1518 = vmatpush1.msra.mxu0 0.0
  %1519 = vmatprep.subr.mxu0 0.0
  %1520 = vmatpush1.msra.mxu0 0.0
  %1521 = vmatprep.subr.mxu0 0.0
  %1522 = vmatpush1.msra.mxu0 0.0
  %1523 = vmatprep.subr.mxu0 0.0
  %1524 = vmatpush1.msra.mxu0 0.0
  %1525 = vmatprep.subr.mxu0 0.0
  %1526 = vmatpush1.msra.mxu0 0.0
  %1527 = vmatprep.subr.mxu0 0.0
  %1528 = vmatpush1.msra.mxu0 0.0
  %1529 = vmatprep.subr.mxu0 0.0
  %1530 = vmatpush1.msra.mxu0 0.0
  %1531 = vmatprep.subr.mxu0 0.0
  %1532 = vmatpush1.msra.mxu0 0.0
  %1533 = vmatprep.subr.mxu0 0.0
  %1534 = vmatpush1.msra.mxu0 0.0
  %1535 = vmatprep.subr.mxu0 0.0
  %1536 = vmatpush1.msra.mxu0 0.0
  %1537 = vmatprep.subr.mxu0 0.0
  %1538 = vmatpush1.msra.mxu0 0.0
  %1539 = vmatprep.subr.mxu0 0.0
  %1540 = vmatpush1.msra.mxu0 0.0
  %1541 = vmatprep.subr.mxu0 0.0
  %1542 = vmatpush1.msra.mxu0 0.0
  %1543 = vmatprep.subr.mxu0 0.0
  %1544 = vmatpush1.msra.mxu0 0.0
  %1545 = vmatprep.subr.mxu0 0.0
  %1546 = vmatpush1.msra.mxu0 0.0
  %1547 = vmatprep.subr.mxu0 0.0
  %1548 = vmatpush1.msra.mxu0 0.0
  %1549 = vmatprep.subr.mxu0 0.0
  %1550 = vmatpush1.msra.mxu0 0.0
  %1551 = vmatprep.subr.mxu0 0.0
  %1552 = vmatpush1.msra.mxu0 0.0
  %1553 = vmatprep.subr.mxu0 0.0
  %1554 = vmatpush1.msra.mxu0 0.0
  %1555 = vmatprep.mubr.f32.mxu0 0.0
  %1556 = vmatmul.mubr.f32.gmra.mrb[0].mxu0 %v1489
  %v1557 = vpop.f32.mrb[0].mxu0
  %v1558 = vadd.f32 0.0, %v1557
  %v1559 = vpop.f32.mrb[0].mxu0
  %1560 = vdwg.mxu0
  %v1561 = vadd.f32 %v1488, %v1558
  %v1562 = vxor.u32 %v1561, 2147483648
  %v1563 = vmul.f32 %v1562, 1.442695
  %v1564 = vpow.pop %v1563
  %v1565 = vadd.f32 %v1564, 1.0
  %v1566 = vrcp.pop %v1565
  %v1567 = vmul.f32 1.0, %v1566
  %v1568 = vtanh.pop %v1561
  %v1569 = vmul.f32 %v1567, %v1375
  %1571 = vrot.lane.b32.xlu0 %v1568, 96
  %v1572 = vpop.permute.xlu0 %1571
  %v1574 = vmul.f32 %v1567, %v1572
  %1576 = vrot.lane.b32.xlu0 %v1574, 16
  %v1577 = vpop.permute.xlu0 %1576
  %v1579 = vadd.f32 %v1569, %v1577
  %v1580 = vtanh.pop %v1579
  %1582 = vrot.lane.b32.xlu0 %v1580, 32
  %v1583 = vpop.permute.xlu0 %1582
  %v1585 = vmul.f32 %v1567, %v1583
  %vm1586 = vcmp.gt.s32.totalorder %v288, 2
  %v1587 = vsel %vm1586, 1, 0
  %1588 = vset.pattern.permute.xlu0 0
  %1589 = vperm.xlu0 %1588, %v1587
  %v1590 = vpop.permute.xlu0 %1589
  %vm1591 = vcmp.eq.s32.totalorder %v1590, 1
  %v1592 = vsel %vm1591, %v1585, %v1374
  %v1593 = vsel %vm1591, %v1579, %v1375
  %1595 = vrot.lane.b32.xlu0 %v1592, 80
  %v1596 = vpop.permute.xlu0 %1595
  %s1598 = scalar_lea.vmem [#allocation5], 4
  %1599 = vst.msk [vmem:[%s1598] sm:$0x3] %vm397, %v1596
  %s1600 = scalar_lea.vmem [#allocation2], 12
  %v1601 = vld [vmem:[%s1600] sm:$0x3]
  %v1602 = vsel %vm294, %v1483, 0
  %1604 = vmatprep.subr.mxu0 0.0
  %1605 = vmatpush1.msra.mxu0 %v289
  %1606 = vmatprep.subr.mxu0 0.0
  %1607 = vmatpush1.msra.mxu0 %v290
  %1608 = vmatprep.subr.mxu0 0.0
  %1609 = vmatpush1.msra.mxu0 0.0
  %1610 = vmatprep.subr.mxu0 0.0
  %1611 = vmatpush1.msra.mxu0 0.0
  %1612 = vmatprep.subr.mxu0 0.0
  %1613 = vmatpush1.msra.mxu0 0.0
  %1614 = vmatprep.subr.mxu0 0.0
  %1615 = vmatpush1.msra.mxu0 0.0
  %1616 = vmatprep.subr.mxu0 0.0
  %1617 = vmatpush1.msra.mxu0 0.0
  %1618 = vmatprep.subr.mxu0 0.0
  %1619 = vmatpush1.msra.mxu0 0.0
  %1620 = vmatprep.subr.mxu0 0.0
  %1621 = vmatpush1.msra.mxu0 0.0
  %1622 = vmatprep.subr.mxu0 0.0
  %1623 = vmatpush1.msra.mxu0 0.0
  %1624 = vmatprep.subr.mxu0 0.0
  %1625 = vmatpush1.msra.mxu0 0.0
  %1626 = vmatprep.subr.mxu0 0.0
  %1627 = vmatpush1.msra.mxu0 0.0
  %1628 = vmatprep.subr.mxu0 0.0
  %1629 = vmatpush1.msra.mxu0 0.0
  %1630 = vmatprep.subr.mxu0 0.0
  %1631 = vmatpush1.msra.mxu0 0.0
  %1632 = vmatprep.subr.mxu0 0.0
  %1633 = vmatpush1.msra.mxu0 0.0
  %1634 = vmatprep.subr.mxu0 0.0
  %1635 = vmatpush1.msra.mxu0 0.0
  %1636 = vmatprep.subr.mxu0 0.0
  %1637 = vmatpush1.msra.mxu0 0.0
  %1638 = vmatprep.subr.mxu0 0.0
  %1639 = vmatpush1.msra.mxu0 0.0
  %1640 = vmatprep.subr.mxu0 0.0
  %1641 = vmatpush1.msra.mxu0 0.0
  %1642 = vmatprep.subr.mxu0 0.0
  %1643 = vmatpush1.msra.mxu0 0.0
  %1644 = vmatprep.subr.mxu0 0.0
  %1645 = vmatpush1.msra.mxu0 0.0
  %1646 = vmatprep.subr.mxu0 0.0
  %1647 = vmatpush1.msra.mxu0 0.0
  %1648 = vmatprep.subr.mxu0 0.0
  %1649 = vmatpush1.msra.mxu0 0.0
  %1650 = vmatprep.subr.mxu0 0.0
  %1651 = vmatpush1.msra.mxu0 0.0
  %1652 = vmatprep.subr.mxu0 0.0
  %1653 = vmatpush1.msra.mxu0 0.0
  %1654 = vmatprep.subr.mxu0 0.0
  %1655 = vmatpush1.msra.mxu0 0.0
  %1656 = vmatprep.subr.mxu0 0.0
  %1657 = vmatpush1.msra.mxu0 0.0
  %1658 = vmatprep.subr.mxu0 0.0
  %1659 = vmatpush1.msra.mxu0 0.0
  %1660 = vmatprep.subr.mxu0 0.0
  %1661 = vmatpush1.msra.mxu0 0.0
  %1662 = vmatprep.subr.mxu0 0.0
  %1663 = vmatpush1.msra.mxu0 0.0
  %1664 = vmatprep.subr.mxu0 0.0
  %1665 = vmatpush1.msra.mxu0 0.0
  %1666 = vmatprep.subr.mxu0 0.0
  %1667 = vmatpush1.msra.mxu0 0.0
  %1668 = vmatprep.mubr.f32.mxu0 0.0
  %1669 = vmatmul.mubr.f32.gmra.mrb[0].mxu0 %v1602
  %v1670 = vpop.f32.mrb[0].mxu0
  %v1671 = vadd.f32 0.0, %v1670
  %v1672 = vpop.f32.mrb[0].mxu0
  %1673 = vdwg.mxu0
  %v1674 = vadd.f32 %v1601, %v1671
  %v1675 = vxor.u32 %v1674, 2147483648
  %v1676 = vmul.f32 %v1675, 1.442695
  %v1677 = vpow.pop %v1676
  %v1678 = vadd.f32 %v1677, 1.0
  %v1679 = vrcp.pop %v1678
  %v1680 = vmul.f32 1.0, %v1679
  %v1681 = vtanh.pop %v1674
  %v1682 = vmul.f32 %v1680, %v1474
  %1684 = vrot.lane.b32.xlu0 %v1681, 96
  %v1685 = vpop.permute.xlu0 %1684
  %v1687 = vmul.f32 %v1680, %v1685
  %1689 = vrot.lane.b32.xlu0 %v1687, 16
  %v1690 = vpop.permute.xlu0 %1689
  %v1692 = vadd.f32 %v1682, %v1690
  %v1693 = vtanh.pop %v1692
  %1695 = vrot.lane.b32.xlu0 %v1693, 32
  %v1696 = vpop.permute.xlu0 %1695
  %v1698 = vmul.f32 %v1680, %v1696
  %1700 = vrot.lane.b32.xlu0 %v1698, 80
  %v1701 = vpop.permute.xlu0 %1700
  %s1703 = scalar_lea.vmem [#allocation4], 12
  %1704 = vst.msk [vmem:[%s1703] sm:$0x3] %vm397, %v1701
  %s1705 = scalar_lea.vmem [#allocation3], 2
  %v1706 = vld [vmem:[%s1705] sm:$0x3]
  %v1707 = vsel %vm294, %v1596, 0
  %1709 = vmatprep.subr.mxu0 0.0
  %1710 = vmatpush1.msra.mxu0 %v291
  %1711 = vmatprep.subr.mxu0 0.0
  %1712 = vmatpush1.msra.mxu0 %v292
  %1713 = vmatprep.subr.mxu0 0.0
  %1714 = vmatpush1.msra.mxu0 0.0
  %1715 = vmatprep.subr.mxu0 0.0
  %1716 = vmatpush1.msra.mxu0 0.0
  %1717 = vmatprep.subr.mxu0 0.0
  %1718 = vmatpush1.msra.mxu0 0.0
  %1719 = vmatprep.subr.mxu0 0.0
  %1720 = vmatpush1.msra.mxu0 0.0
  %1721 = vmatprep.subr.mxu0 0.0
  %1722 = vmatpush1.msra.mxu0 0.0
  %1723 = vmatprep.subr.mxu0 0.0
  %1724 = vmatpush1.msra.mxu0 0.0
  %1725 = vmatprep.subr.mxu0 0.0
  %1726 = vmatpush1.msra.mxu0 0.0
  %1727 = vmatprep.subr.mxu0 0.0
  %1728 = vmatpush1.msra.mxu0 0.0
  %1729 = vmatprep.subr.mxu0 0.0
  %1730 = vmatpush1.msra.mxu0 0.0
  %1731 = vmatprep.subr.mxu0 0.0
  %1732 = vmatpush1.msra.mxu0 0.0
  %1733 = vmatprep.subr.mxu0 0.0
  %1734 = vmatpush1.msra.mxu0 0.0
  %1735 = vmatprep.subr.mxu0 0.0
  %1736 = vmatpush1.msra.mxu0 0.0
  %1737 = vmatprep.subr.mxu0 0.0
  %1738 = vmatpush1.msra.mxu0 0.0
  %1739 = vmatprep.subr.mxu0 0.0
  %1740 = vmatpush1.msra.mxu0 0.0
  %1741 = vmatprep.subr.mxu0 0.0
  %1742 = vmatpush1.msra.mxu0 0.0
  %1743 = vmatprep.subr.mxu0 0.0
  %1744 = vmatpush1.msra.mxu0 0.0
  %1745 = vmatprep.subr.mxu0 0.0
  %1746 = vmatpush1.msra.mxu0 0.0
  %1747 = vmatprep.subr.mxu0 0.0
  %1748 = vmatpush1.msra.mxu0 0.0
  %1749 = vmatprep.subr.mxu0 0.0
  %1750 = vmatpush1.msra.mxu0 0.0
  %1751 = vmatprep.subr.mxu0 0.0
  %1752 = vmatpush1.msra.mxu0 0.0
  %1753 = vmatprep.subr.mxu0 0.0
  %1754 = vmatpush1.msra.mxu0 0.0
  %1755 = vmatprep.subr.mxu0 0.0
  %1756 = vmatpush1.msra.mxu0 0.0
  %1757 = vmatprep.subr.mxu0 0.0
  %1758 = vmatpush1.msra.mxu0 0.0
  %1759 = vmatprep.subr.mxu0 0.0
  %1760 = vmatpush1.msra.mxu0 0.0
  %1761 = vmatprep.subr.mxu0 0.0
  %1762 = vmatpush1.msra.mxu0 0.0
  %1763 = vmatprep.subr.mxu0 0.0
  %1764 = vmatpush1.msra.mxu0 0.0
  %1765 = vmatprep.subr.mxu0 0.0
  %1766 = vmatpush1.msra.mxu0 0.0
  %1767 = vmatprep.subr.mxu0 0.0
  %1768 = vmatpush1.msra.mxu0 0.0
  %1769 = vmatprep.subr.mxu0 0.0
  %1770 = vmatpush1.msra.mxu0 0.0
  %1771 = vmatprep.subr.mxu0 0.0
  %1772 = vmatpush1.msra.mxu0 0.0
  %1773 = vmatprep.mubr.f32.mxu0 0.0
  %1774 = vmatmul.mubr.f32.gmra.mrb[0].mxu0 %v1707
  %v1775 = vpop.f32.mrb[0].mxu0
  %v1776 = vadd.f32 0.0, %v1775
  %v1777 = vpop.f32.mrb[0].mxu0
  %1778 = vdwg.mxu0
  %v1779 = vadd.f32 %v1706, %v1776
  %v1780 = vxor.u32 %v1779, 2147483648
  %v1781 = vmul.f32 %v1780, 1.442695
  %v1782 = vpow.pop %v1781
  %v1783 = vadd.f32 %v1782, 1.0
  %v1784 = vrcp.pop %v1783
  %v1785 = vmul.f32 1.0, %v1784
  %v1786 = vtanh.pop %v1779
  %v1787 = vmul.f32 %v1785, %v1593
  %1789 = vrot.lane.b32.xlu0 %v1786, 96
  %v1790 = vpop.permute.xlu0 %1789
  %v1792 = vmul.f32 %v1785, %v1790
  %1794 = vrot.lane.b32.xlu0 %v1792, 16
  %v1795 = vpop.permute.xlu0 %1794
  %v1797 = vadd.f32 %v1787, %v1795
  %v1798 = vtanh.pop %v1797
  %1800 = vrot.lane.b32.xlu0 %v1798, 32
  %v1801 = vpop.permute.xlu0 %1800
  %v1803 = vmul.f32 %v1785, %v1801
  %vm1804 = vcmp.gt.s32.totalorder %v288, 1
  %v1805 = vsel %vm1804, 1, 0
  %1806 = vset.pattern.permute.xlu0 0
  %1807 = vperm.xlu0 %1806, %v1805
  %v1808 = vpop.permute.xlu0 %1807
  %vm1809 = vcmp.eq.s32.totalorder %v1808, 1
  %v1810 = vsel %vm1809, %v1803, %v1592
  %v1811 = vsel %vm1809, %v1797, %v1593
  %1813 = vrot.lane.b32.xlu0 %v1810, 80
  %v1814 = vpop.permute.xlu0 %1813
  %s1816 = scalar_lea.vmem [#allocation5], 2
  %1817 = vst.msk [vmem:[%s1816] sm:$0x3] %vm397, %v1814
  %s1818 = scalar_lea.vmem [#allocation2], 14
  %v1819 = vld [vmem:[%s1818] sm:$0x3]
  %v1820 = vsel %vm294, %v1701, 0
  %1822 = vmatprep.subr.mxu0 0.0
  %1823 = vmatpush1.msra.mxu0 %v289
  %1824 = vmatprep.subr.mxu0 0.0
  %1825 = vmatpush1.msra.mxu0 %v290
  %1826 = vmatprep.subr.mxu0 0.0
  %1827 = vmatpush1.msra.mxu0 0.0
  %1828 = vmatprep.subr.mxu0 0.0
  %1829 = vmatpush1.msra.mxu0 0.0
  %1830 = vmatprep.subr.mxu0 0.0
  %1831 = vmatpush1.msra.mxu0 0.0
  %1832 = vmatprep.subr.mxu0 0.0
  %1833 = vmatpush1.msra.mxu0 0.0
  %1834 = vmatprep.subr.mxu0 0.0
  %1835 = vmatpush1.msra.mxu0 0.0
  %1836 = vmatprep.subr.mxu0 0.0
  %1837 = vmatpush1.msra.mxu0 0.0
  %1838 = vmatprep.subr.mxu0 0.0
  %1839 = vmatpush1.msra.mxu0 0.0
  %1840 = vmatprep.subr.mxu0 0.0
  %1841 = vmatpush1.msra.mxu0 0.0
  %1842 = vmatprep.subr.mxu0 0.0
  %1843 = vmatpush1.msra.mxu0 0.0
  %1844 = vmatprep.subr.mxu0 0.0
  %1845 = vmatpush1.msra.mxu0 0.0
  %1846 = vmatprep.subr.mxu0 0.0
  %1847 = vmatpush1.msra.mxu0 0.0
  %1848 = vmatprep.subr.mxu0 0.0
  %1849 = vmatpush1.msra.mxu0 0.0
  %1850 = vmatprep.subr.mxu0 0.0
  %1851 = vmatpush1.msra.mxu0 0.0
  %1852 = vmatprep.subr.mxu0 0.0
  %1853 = vmatpush1.msra.mxu0 0.0
  %1854 = vmatprep.subr.mxu0 0.0
  %1855 = vmatpush1.msra.mxu0 0.0
  %1856 = vmatprep.subr.mxu0 0.0
  %1857 = vmatpush1.msra.mxu0 0.0
  %1858 = vmatprep.subr.mxu0 0.0
  %1859 = vmatpush1.msra.mxu0 0.0
  %1860 = vmatprep.subr.mxu0 0.0
  %1861 = vmatpush1.msra.mxu0 0.0
  %1862 = vmatprep.subr.mxu0 0.0
  %1863 = vmatpush1.msra.mxu0 0.0
  %1864 = vmatprep.subr.mxu0 0.0
  %1865 = vmatpush1.msra.mxu0 0.0
  %1866 = vmatprep.subr.mxu0 0.0
  %1867 = vmatpush1.msra.mxu0 0.0
  %1868 = vmatprep.subr.mxu0 0.0
  %1869 = vmatpush1.msra.mxu0 0.0
  %1870 = vmatprep.subr.mxu0 0.0
  %1871 = vmatpush1.msra.mxu0 0.0
  %1872 = vmatprep.subr.mxu0 0.0
  %1873 = vmatpush1.msra.mxu0 0.0
  %1874 = vmatprep.subr.mxu0 0.0
  %1875 = vmatpush1.msra.mxu0 0.0
  %1876 = vmatprep.subr.mxu0 0.0
  %1877 = vmatpush1.msra.mxu0 0.0
  %1878 = vmatprep.subr.mxu0 0.0
  %1879 = vmatpush1.msra.mxu0 0.0
  %1880 = vmatprep.subr.mxu0 0.0
  %1881 = vmatpush1.msra.mxu0 0.0
  %1882 = vmatprep.subr.mxu0 0.0
  %1883 = vmatpush1.msra.mxu0 0.0
  %1884 = vmatprep.subr.mxu0 0.0
  %1885 = vmatpush1.msra.mxu0 0.0
  %1886 = vmatprep.mubr.f32.mxu0 0.0
  %1887 = vmatmul.mubr.f32.gmra.mrb[0].mxu0 %v1820
  %v1888 = vpop.f32.mrb[0].mxu0
  %v1889 = vadd.f32 0.0, %v1888
  %v1890 = vpop.f32.mrb[0].mxu0
  %1891 = vdwg.mxu0
  %v1892 = vadd.f32 %v1819, %v1889
  %v1893 = vxor.u32 %v1892, 2147483648
  %v1894 = vmul.f32 %v1893, 1.442695
  %v1895 = vpow.pop %v1894
  %v1896 = vadd.f32 %v1895, 1.0
  %v1897 = vrcp.pop %v1896
  %v1898 = vmul.f32 1.0, %v1897
  %v1899 = vtanh.pop %v1892
  %v1900 = vmul.f32 %v1898, %v1692
  %1902 = vrot.lane.b32.xlu0 %v1899, 96
  %v1903 = vpop.permute.xlu0 %1902
  %v1905 = vmul.f32 %v1898, %v1903
  %1907 = vrot.lane.b32.xlu0 %v1905, 16
  %v1908 = vpop.permute.xlu0 %1907
  %v1910 = vadd.f32 %v1900, %v1908
  %v1911 = vtanh.pop %v1910
  %1913 = vrot.lane.b32.xlu0 %v1911, 32
  %v1914 = vpop.permute.xlu0 %1913
  %v1916 = vmul.f32 %v1898, %v1914
  %1918 = vrot.lane.b32.xlu0 %v1916, 80
  %v1919 = vpop.permute.xlu0 %1918
  %s1921 = scalar_lea.vmem [#allocation4], 14
  %1922 = vst.msk [vmem:[%s1921] sm:$0x3] %vm397, %v1919
  %v1923 = vld [vmem:[#allocation3] sm:$0x3]
  %v1924 = vsel %vm294, %v1814, 0
  %1926 = vmatprep.subr.mxu0 0.0
  %1927 = vmatpush1.msra.mxu0 %v291
  %1928 = vmatprep.subr.mxu0 0.0
  %1929 = vmatpush1.msra.mxu0 %v292
  %1930 = vmatprep.subr.mxu0 0.0
  %1931 = vmatpush1.msra.mxu0 0.0
  %1932 = vmatprep.subr.mxu0 0.0
  %1933 = vmatpush1.msra.mxu0 0.0
  %1934 = vmatprep.subr.mxu0 0.0
  %1935 = vmatpush1.msra.mxu0 0.0
  %1936 = vmatprep.subr.mxu0 0.0
  %1937 = vmatpush1.msra.mxu0 0.0
  %1938 = vmatprep.subr.mxu0 0.0
  %1939 = vmatpush1.msra.mxu0 0.0
  %1940 = vmatprep.subr.mxu0 0.0
  %1941 = vmatpush1.msra.mxu0 0.0
  %1942 = vmatprep.subr.mxu0 0.0
  %1943 = vmatpush1.msra.mxu0 0.0
  %1944 = vmatprep.subr.mxu0 0.0
  %1945 = vmatpush1.msra.mxu0 0.0
  %1946 = vmatprep.subr.mxu0 0.0
  %1947 = vmatpush1.msra.mxu0 0.0
  %1948 = vmatprep.subr.mxu0 0.0
  %1949 = vmatpush1.msra.mxu0 0.0
  %1950 = vmatprep.subr.mxu0 0.0
  %1951 = vmatpush1.msra.mxu0 0.0
  %1952 = vmatprep.subr.mxu0 0.0
  %1953 = vmatpush1.msra.mxu0 0.0
  %1954 = vmatprep.subr.mxu0 0.0
  %1955 = vmatpush1.msra.mxu0 0.0
  %1956 = vmatprep.subr.mxu0 0.0
  %1957 = vmatpush1.msra.mxu0 0.0
  %1958 = vmatprep.subr.mxu0 0.0
  %1959 = vmatpush1.msra.mxu0 0.0
  %1960 = vmatprep.subr.mxu0 0.0
  %1961 = vmatpush1.msra.mxu0 0.0
  %1962 = vmatprep.subr.mxu0 0.0
  %1963 = vmatpush1.msra.mxu0 0.0
  %1964 = vmatprep.subr.mxu0 0.0
  %1965 = vmatpush1.msra.mxu0 0.0
  %1966 = vmatprep.subr.mxu0 0.0
  %1967 = vmatpush1.msra.mxu0 0.0
  %1968 = vmatprep.subr.mxu0 0.0
  %1969 = vmatpush1.msra.mxu0 0.0
  %1970 = vmatprep.subr.mxu0 0.0
  %1971 = vmatpush1.msra.mxu0 0.0
  %1972 = vmatprep.subr.mxu0 0.0
  %1973 = vmatpush1.msra.mxu0 0.0
  %1974 = vmatprep.subr.mxu0 0.0
  %1975 = vmatpush1.msra.mxu0 0.0
  %1976 = vmatprep.subr.mxu0 0.0
  %1977 = vmatpush1.msra.mxu0 0.0
  %1978 = vmatprep.subr.mxu0 0.0
  %1979 = vmatpush1.msra.mxu0 0.0
  %1980 = vmatprep.subr.mxu0 0.0
  %1981 = vmatpush1.msra.mxu0 0.0
  %1982 = vmatprep.subr.mxu0 0.0
  %1983 = vmatpush1.msra.mxu0 0.0
  %1984 = vmatprep.subr.mxu0 0.0
  %1985 = vmatpush1.msra.mxu0 0.0
  %1986 = vmatprep.subr.mxu0 0.0
  %1987 = vmatpush1.msra.mxu0 0.0
  %1988 = vmatprep.subr.mxu0 0.0
  %1989 = vmatpush1.msra.mxu0 0.0
  %1990 = vmatprep.mubr.f32.mxu0 0.0
  %1991 = vmatmul.mubr.f32.gmra.mrb[0].mxu0 %v1924
  %v1992 = vpop.f32.mrb[0].mxu0
  %v1993 = vadd.f32 0.0, %v1992
  %v1994 = vpop.f32.mrb[0].mxu0
  %1995 = vdwg.mxu0
  %v1996 = vadd.f32 %v1923, %v1993
  %v1997 = vxor.u32 %v1996, 2147483648
  %v1998 = vmul.f32 %v1997, 1.442695
  %v1999 = vpow.pop %v1998
  %v2000 = vadd.f32 %v1999, 1.0
  %v2001 = vrcp.pop %v2000
  %v2002 = vmul.f32 1.0, %v2001
  %v2003 = vtanh.pop %v1996
  %v2004 = vmul.f32 %v2002, %v1811
  %2006 = vrot.lane.b32.xlu0 %v2003, 96
  %v2007 = vpop.permute.xlu0 %2006
  %v2009 = vmul.f32 %v2002, %v2007
  %2011 = vrot.lane.b32.xlu0 %v2009, 16
  %v2012 = vpop.permute.xlu0 %2011
  %v2014 = vadd.f32 %v2004, %v2012
  %v2015 = vtanh.pop %v2014
  %2017 = vrot.lane.b32.xlu0 %v2015, 32
  %v2018 = vpop.permute.xlu0 %2017
  %v2020 = vmul.f32 %v2002, %v2018
  %vm2021 = vcmp.gt.s32.totalorder %v288, 0
  %v2022 = vsel %vm2021, 1, 0
  %2023 = vset.pattern.permute.xlu0 0
  %2024 = vperm.xlu0 %2023, %v2022
  %v2025 = vpop.permute.xlu0 %2024
  %vm2026 = vcmp.eq.s32.totalorder %v2025, 1
  %v2027 = vsel %vm2026, %v2020, %v1810
  %2029 = vrot.lane.b32.xlu0 %v2027, 80
  %v2030 = vpop.permute.xlu0 %2029
  %2032 = vst.msk [vmem:[#allocation5] sm:$0x3] %vm397, %v2030
  %2033 = vset.pattern.permute.xlu0 0
  %2034 = vperm.xlu0 %2033, %v288
  %v2035 = vpop.permute.xlu0 %2034
  %vm2036 = vcmp.gt.s32.totalorder %v2035, 0
  %vm2037 = vcmp.gt.s32.totalorder %v2035, 1
  %vm2038 = vcmp.gt.s32.totalorder %v2035, 2
  %vm2039 = vcmp.gt.s32.totalorder %v2035, 3
  %vm2040 = vcmp.gt.s32.totalorder %v2035, 4
  %vm2041 = vcmp.gt.s32.totalorder %v2035, 5
  %vm2042 = vcmp.gt.s32.totalorder %v2035, 6
  %vm2043 = vcmp.gt.s32.totalorder %v2035, 7
  %v2044 = vld [vmem:[#allocation4] sm:$0x3]
  %v2045 = vld [vmem:[#allocation4 + $0x2] sm:$0x3]
  %v2046 = vld [vmem:[#allocation4 + $0x4] sm:$0x3]
  %v2047 = vld [vmem:[#allocation4 + $0x6] sm:$0x3]
  %v2048 = vld [vmem:[#allocation4 + $0x8] sm:$0x3]
  %v2049 = vld [vmem:[#allocation4 + $0xa] sm:$0x3]
  %v2050 = vld [vmem:[#allocation4 + $0xc] sm:$0x3]
  %v2051 = vld [vmem:[#allocation4 + $0xe] sm:$0x3]
  %v2052 = vsel %vm2036, %v2044, 0.0
  %v2053 = vsel %vm2037, %v2045, 0.0
  %v2054 = vsel %vm2038, %v2046, 0.0
  %v2055 = vsel %vm2039, %v2047, 0.0
  %v2056 = vsel %vm2040, %v2048, 0.0
  %v2057 = vsel %vm2041, %v2049, 0.0
  %v2058 = vsel %vm2042, %v2050, 0.0
  %v2059 = vsel %vm2043, %v2051, 0.0
  %v2060 = vld [vmem:[#allocation5] sm:$0x3]
  %v2061 = vld [vmem:[#allocation5 + $0x2] sm:$0x3]
  %v2062 = vld [vmem:[#allocation5 + $0x4] sm:$0x3]
  %v2063 = vld [vmem:[#allocation5 + $0x6] sm:$0x3]
  %v2064 = vld [vmem:[#allocation5 + $0x8] sm:$0x3]
  %v2065 = vld [vmem:[#allocation5 + $0xa] sm:$0x3]
  %v2066 = vld [vmem:[#allocation5 + $0xc] sm:$0x3]
  %v2067 = vld [vmem:[#allocation5 + $0xe] sm:$0x3]
  %v2076 = vcombine.low %v2052, %v2053
  %v2077 = vcombine.low %v2054, %v2055
  %v2079 = vunpack.c.l.s4 1983009808
  %v2080 = vunpack.c.0.s8 %v2079
  %v2081 = vlaneseq
  %v2082 = vshrl.u32 %v2081, 7
  %v2083 = vsub.s32 %v2080, %v2082
  %v2084 = vrot.slane %v2076, %v2083
  %v2086 = vunpack.c.l.s4 1983009808
  %v2087 = vunpack.c.0.s8 %v2086
  %v2088 = vlaneseq
  %v2089 = vshrl.u32 %v2088, 7
  %v2090 = vsub.s32 %v2087, %v2089
  %v2091 = vrot.slane %v2077, %v2090
  %v2092 = vcombine.low %v2084, %v2091
  %v2093 = vcombine.low %v2056, %v2057
  %v2094 = vcombine.low %v2058, %v2059
  %v2096 = vunpack.c.l.s4 1983009808
  %v2097 = vunpack.c.0.s8 %v2096
  %v2098 = vlaneseq
  %v2099 = vshrl.u32 %v2098, 7
  %v2100 = vsub.s32 %v2097, %v2099
  %v2101 = vrot.slane %v2093, %v2100
  %v2103 = vunpack.c.l.s4 1983009808
  %v2104 = vunpack.c.0.s8 %v2103
  %v2105 = vlaneseq
  %v2106 = vshrl.u32 %v2105, 7
  %v2107 = vsub.s32 %v2104, %v2106
  %v2108 = vrot.slane %v2094, %v2107
  %v2109 = vcombine.low %v2101, %v2108
  %v2112 = vpack.c.bf16 %v2109, %v2092
  %v2113 = vld [vmem:[%s7] sm:$0xff]
  %v2114 = vld [vmem:[%s7 + $0x8] sm:$0xff]
  %v2115 = vpack.c.bf16 %v2114, %v2113
  %v2124 = vcombine.low %v2060, %v2061
  %v2125 = vcombine.low %v2062, %v2063
  %v2127 = vunpack.c.l.s4 1983009808
  %v2128 = vunpack.c.0.s8 %v2127
  %v2129 = vlaneseq
  %v2130 = vshrl.u32 %v2129, 7
  %v2131 = vsub.s32 %v2128, %v2130
  %v2132 = vrot.slane %v2124, %v2131
  %v2134 = vunpack.c.l.s4 1983009808
  %v2135 = vunpack.c.0.s8 %v2134
  %v2136 = vlaneseq
  %v2137 = vshrl.u32 %v2136, 7
  %v2138 = vsub.s32 %v2135, %v2137
  %v2139 = vrot.slane %v2125, %v2138
  %v2140 = vcombine.low %v2132, %v2139
  %v2141 = vcombine.low %v2064, %v2065
  %v2142 = vcombine.low %v2066, %v2067
  %v2144 = vunpack.c.l.s4 1983009808
  %v2145 = vunpack.c.0.s8 %v2144
  %v2146 = vlaneseq
  %v2147 = vshrl.u32 %v2146, 7
  %v2148 = vsub.s32 %v2145, %v2147
  %v2149 = vrot.slane %v2141, %v2148
  %v2151 = vunpack.c.l.s4 1983009808
  %v2152 = vunpack.c.0.s8 %v2151
  %v2153 = vlaneseq
  %v2154 = vshrl.u32 %v2153, 7
  %v2155 = vsub.s32 %v2152, %v2154
  %v2156 = vrot.slane %v2142, %v2155
  %v2157 = vcombine.low %v2149, %v2156
  %v2160 = vpack.c.bf16 %v2157, %v2140
  %v2161 = vld [vmem:[%s8] sm:$0xff]
  %v2162 = vld [vmem:[%s8 + $0x8] sm:$0xff]
  %v2163 = vpack.c.bf16 %v2162, %v2161
  %v2165 = vsel %vm294, %v2160, 0
  %2167 = vmatprep.subr.bf16.mxu0 0
  %2168 = vmatpush1.bf16.msra.mxu0 %v2163
  %2169 = vmatprep.subr.bf16.mxu0 0
  %2170 = vmatpush1.bf16.msra.mxu0 0
  %2171 = vmatprep.subr.bf16.mxu0 0
  %2172 = vmatpush1.bf16.msra.mxu0 0
  %2173 = vmatprep.subr.bf16.mxu0 0
  %2174 = vmatpush1.bf16.msra.mxu0 0
  %2175 = vmatprep.subr.bf16.mxu0 0
  %2176 = vmatpush1.bf16.msra.mxu0 0
  %2177 = vmatprep.subr.bf16.mxu0 0
  %2178 = vmatpush1.bf16.msra.mxu0 0
  %2179 = vmatprep.subr.bf16.mxu0 0
  %2180 = vmatpush1.bf16.msra.mxu0 0
  %2181 = vmatprep.subr.bf16.mxu0 0
  %2182 = vmatpush1.bf16.msra.mxu0 0
  %2183 = vmatprep.subr.bf16.mxu0 0
  %2184 = vmatpush1.bf16.msra.mxu0 0
  %2185 = vmatprep.subr.bf16.mxu0 0
  %2186 = vmatpush1.bf16.msra.mxu0 0
  %2187 = vmatprep.subr.bf16.mxu0 0
  %2188 = vmatpush1.bf16.msra.mxu0 0
  %2189 = vmatprep.subr.bf16.mxu0 0
  %2190 = vmatpush1.bf16.msra.mxu0 0
  %2191 = vmatprep.subr.bf16.mxu0 0
  %2192 = vmatpush1.bf16.msra.mxu0 0
  %2193 = vmatprep.subr.bf16.mxu0 0
  %2194 = vmatpush1.bf16.msra.mxu0 0
  %2195 = vmatprep.subr.bf16.mxu0 0
  %2196 = vmatpush1.bf16.msra.mxu0 0
  %2197 = vmatprep.subr.bf16.mxu0 0
  %2198 = vmatpush1.bf16.msra.mxu0 0
  %2199 = vmatprep.mubr.bf16.mxu0 0
  %2200 = vmatmul.mubr.bf16.gmra.mrb[0].mxu0 %v2165
  %v2201 = vpop.f32.mrb[0].mxu0
  %v2202 = vadd.f32 0.0, %v2201
  %v2203 = vpop.f32.mrb[0].mxu0
  %v2204 = vpop.f32.mrb[0].mxu0
  %v2205 = vadd.f32 0.0, %v2204
  %v2206 = vpop.f32.mrb[0].mxu0
  %2207 = vdwg.mxu0
  %v2209 = vsel %vm294, %v2112, 0
  %2211 = vmatprep.subr.bf16.mxu0 0
  %2212 = vmatpush1.bf16.msra.mxu0 %v2115
  %2213 = vmatprep.subr.bf16.mxu0 0
  %2214 = vmatpush1.bf16.msra.mxu0 0
  %2215 = vmatprep.subr.bf16.mxu0 0
  %2216 = vmatpush1.bf16.msra.mxu0 0
  %2217 = vmatprep.subr.bf16.mxu0 0
  %2218 = vmatpush1.bf16.msra.mxu0 0
  %2219 = vmatprep.subr.bf16.mxu0 0
  %2220 = vmatpush1.bf16.msra.mxu0 0
  %2221 = vmatprep.subr.bf16.mxu0 0
  %2222 = vmatpush1.bf16.msra.mxu0 0
  %2223 = vmatprep.subr.bf16.mxu0 0
  %2224 = vmatpush1.bf16.msra.mxu0 0
  %2225 = vmatprep.subr.bf16.mxu0 0
  %2226 = vmatpush1.bf16.msra.mxu0 0
  %2227 = vmatprep.subr.bf16.mxu0 0
  %2228 = vmatpush1.bf16.msra.mxu0 0
  %2229 = vmatprep.subr.bf16.mxu0 0
  %2230 = vmatpush1.bf16.msra.mxu0 0
  %2231 = vmatprep.subr.bf16.mxu0 0
  %2232 = vmatpush1.bf16.msra.mxu0 0
  %2233 = vmatprep.subr.bf16.mxu0 0
  %2234 = vmatpush1.bf16.msra.mxu0 0
  %2235 = vmatprep.subr.bf16.mxu0 0
  %2236 = vmatpush1.bf16.msra.mxu0 0
  %2237 = vmatprep.subr.bf16.mxu0 0
  %2238 = vmatpush1.bf16.msra.mxu0 0
  %2239 = vmatprep.subr.bf16.mxu0 0
  %2240 = vmatpush1.bf16.msra.mxu0 0
  %2241 = vmatprep.subr.bf16.mxu0 0
  %2242 = vmatpush1.bf16.msra.mxu0 0
  %2243 = vmatprep.mubr.bf16.mxu0 0
  %2244 = vmatmul.mubr.bf16.gmra.mrb[0].mxu0 %v2209
  %v2245 = vpop.f32.mrb[0].mxu0
  %v2246 = vadd.f32 %v2202, %v2245
  %v2247 = vpop.f32.mrb[0].mxu0
  %v2248 = vpop.f32.mrb[0].mxu0
  %v2249 = vadd.f32 %v2205, %v2248
  %v2250 = vpop.f32.mrb[0].mxu0
  %2251 = vdwg.mxu0
  %v2252 = vld [vmem:[%s9] sm:$0x1]
  %v2254 = vlaneseq
  %v2255 = vshrl.u32 %v2254, 7
  %v2256 = vsub.s32 0, %v2255
  %v2257 = vrot.slane %v2252, %v2256
  %v2259 = vadd.f32 %v2246, %v2257
  %v2260 = vadd.f32 %v2249, %v2257
  %v2263 = vcombine.high %v2259, %v2259
  %v2265 = vunpack.c.l.s4 1983009808
  %v2266 = vunpack.c.0.s8 %v2265
  %v2267 = vlaneseq
  %v2268 = vshrl.u32 %v2267, 7
  %v2269 = vsub.s32 %v2266, %v2268
  %v2270 = vrot.slane %v2259, %v2269
  %v2272 = vunpack.c.l.s4 1983009808
  %v2273 = vunpack.c.0.s8 %v2272
  %v2274 = vlaneseq
  %v2275 = vshrl.u32 %v2274, 7
  %v2276 = vsub.s32 %v2273, %v2275
  %v2277 = vrot.slane %v2263, %v2276
  %v2278 = vcombine.high %v2270, %v2270
  %v2279 = vcombine.high %v2277, %v2277
  %v2280 = vcombine.high %v2260, %v2260
  %v2282 = vunpack.c.l.s4 1983009808
  %v2283 = vunpack.c.0.s8 %v2282
  %v2284 = vlaneseq
  %v2285 = vshrl.u32 %v2284, 7
  %v2286 = vsub.s32 %v2283, %v2285
  %v2287 = vrot.slane %v2260, %v2286
  %v2289 = vunpack.c.l.s4 1983009808
  %v2290 = vunpack.c.0.s8 %v2289
  %v2291 = vlaneseq
  %v2292 = vshrl.u32 %v2291, 7
  %v2293 = vsub.s32 %v2290, %v2292
  %v2294 = vrot.slane %v2280, %v2293
  %v2295 = vcombine.high %v2287, %v2287
  %v2296 = vcombine.high %v2294, %v2294
  %v2305 = vtanh.pop %v2270
  %v2306 = vtanh.pop %v2278
  %v2307 = vtanh.pop %v2277
  %v2308 = vtanh.pop %v2279
  %v2309 = vtanh.pop %v2287
  %v2310 = vtanh.pop %v2295
  %v2311 = vtanh.pop %v2294
  %v2312 = vtanh.pop %v2296
  %2313 = vst.msk [vmem:[%s10] sm:$0x3] %vm397, %v2305
  %2314 = vst.msk [vmem:[%s10 + $0x2] sm:$0x3] %vm397, %v2306
  %2315 = vst.msk [vmem:[%s10 + $0x4] sm:$0x3] %vm397, %v2307
  %2316 = vst.msk [vmem:[%s10 + $0x6] sm:$0x3] %vm397, %v2308
  %2317 = vst.msk [vmem:[%s10 + $0x8] sm:$0x3] %vm397, %v2309
  %2318 = vst.msk [vmem:[%s10 + $0xa] sm:$0x3] %vm397, %v2310
  %2319 = vst.msk [vmem:[%s10 + $0xc] sm:$0x3] %vm397, %v2311
  %2320 = vst.msk [vmem:[%s10 + $0xe] sm:$0x3] %vm397, %v2312
  // Predicated region
  $region42: #{e2e_forward.4} parent=0 // pred_check
    _
  $region43: #{e2e_forward.4} parent=0 // pred_check_branch
    %2322 = sbr.rel (0) target = $region45
  $region44: #{e2e_forward.4} parent=0 // pred_region
    _
  $region45: #{e2e_forward.4} parent=0 // pred_fallthru
    _
  // Predicated region
  $region46: #{e2e_forward.4} parent=0 // pred_check
    _
  $region47: #{e2e_forward.4} parent=0 // pred_check_branch
    %2324 = sbr.rel (0) target = $region49
  $region48: #{e2e_forward.4} parent=0 // pred_region
    _
  $region49: #{e2e_forward.4} parent=0 // pred_fallthru
    _

// kernel: e2e_forward.5
$region0: #{e2e_forward.5}
  #allocation0 [shape = 'u32[]', space=smem, size = 0x4, offset = 0x4, fixed_abs, tag = 'smem constant byte address 0x4 - core index']
  #allocation1 [shape = 'u32[144,128]{1,0:T(1,128)}', space=vmem, size = 0x12000, scoped, tag = 'internal scratch']
  #allocation2 [shape = 'f32[8,2,64]{2,1,0:T(2,128)}', space=vmem, size = 0x2000, scoped, tag = 'scratch operand']
  #allocation3 [shape = 'f32[8,2,64]{2,1,0:T(2,128)}', space=vmem, size = 0x2000, scoped, tag = 'scratch operand']
  #allocation4 [shape = 'f32[8,2,16]{2,1,0:T(2,128)}', space=vmem, size = 0x2000, scoped, tag = 'scratch operand']
  #allocation5 [shape = 'f32[8,2,16]{2,1,0:T(2,128)}', space=vmem, size = 0x2000, scoped, tag = 'scratch operand']
  %s0 = inlined_call_operand.vmem [shape: f32[8,2,16], index: 0, kind: input, shape index: {}]
  %s1 = inlined_call_operand.vmem [shape: s32[2,1], index: 1, kind: input, shape index: {}]
  %s2 = inlined_call_operand.vmem [shape: s32[1,2], index: 2, kind: input, shape index: {}]
  %s3 = inlined_call_operand.vmem [shape: f32[16,128], index: 3, kind: input, shape index: {}]
  %s4 = inlined_call_operand.vmem [shape: f32[1,128], index: 4, kind: input, shape index: {}]
  %s5 = inlined_call_operand.vmem [shape: f32[16,64], index: 5, kind: input, shape index: {}]
  %s6 = inlined_call_operand.vmem [shape: f32[16,64], index: 6, kind: input, shape index: {}]
  %s7 = inlined_call_operand.vmem [shape: f32[16,16], index: 7, kind: input, shape index: {}]
  %s8 = inlined_call_operand.vmem [shape: f32[16,16], index: 8, kind: input, shape index: {}]
  %s9 = inlined_call_operand.vmem [shape: f32[1,16], index: 9, kind: input, shape index: {}]
  %s10 = inlined_call_operand.vmem [shape: f32[8,2,16], index: 10, kind: output, shape index: {}]
  %s11 = sld [smem:[#allocation0]]
  $region50: #{e2e_forward.5} parent=0
    _
  %s13 = ssub.s32 1, %s11
  %s14 = scalar_select 0, %s13, %s11
  // Predicated region
  $region2: #{e2e_forward.5} parent=0 // pred_check
    _
  $region3: #{e2e_forward.5} parent=0 // pred_check_branch
    %16 = sbr.rel (0) target = $region5
  $region4: #{e2e_forward.5} parent=0 // pred_region
    _
  $region5: #{e2e_forward.5} parent=0 // pred_fallthru
    _
  // Predicated region
  $region6: #{e2e_forward.5} parent=0 // pred_check
    _
  $region7: #{e2e_forward.5} parent=0 // pred_check_branch
    %18 = sbr.rel (0) target = $region9
  $region8: #{e2e_forward.5} parent=0 // pred_region
    _
  $region9: #{e2e_forward.5} parent=0 // pred_fallthru
    _
  // Predicated region
  $region10: #{e2e_forward.5} parent=0 // pred_check
    _
  $region11: #{e2e_forward.5} parent=0 // pred_check_branch
    %20 = sbr.rel (0) target = $region13
  $region12: #{e2e_forward.5} parent=0 // pred_region
    _
  $region13: #{e2e_forward.5} parent=0 // pred_fallthru
    _
  // Predicated region
  $region14: #{e2e_forward.5} parent=0 // pred_check
    _
  $region15: #{e2e_forward.5} parent=0 // pred_check_branch
    %22 = sbr.rel (0) target = $region17
  $region16: #{e2e_forward.5} parent=0 // pred_region
    _
  $region17: #{e2e_forward.5} parent=0 // pred_fallthru
    _
  // Predicated region
  $region18: #{e2e_forward.5} parent=0 // pred_check
    _
  $region19: #{e2e_forward.5} parent=0 // pred_check_branch
    %24 = sbr.rel (0) target = $region21
  $region20: #{e2e_forward.5} parent=0 // pred_region
    _
  $region21: #{e2e_forward.5} parent=0 // pred_fallthru
    _
  // Predicated region
  $region22: #{e2e_forward.5} parent=0 // pred_check
    _
  $region23: #{e2e_forward.5} parent=0 // pred_check_branch
    %26 = sbr.rel (0) target = $region25
  $region24: #{e2e_forward.5} parent=0 // pred_region
    _
  $region25: #{e2e_forward.5} parent=0 // pred_fallthru
    _
  // Predicated region
  $region26: #{e2e_forward.5} parent=0 // pred_check
    _
  $region27: #{e2e_forward.5} parent=0 // pred_check_branch
    %28 = sbr.rel (0) target = $region29
  $region28: #{e2e_forward.5} parent=0 // pred_region
    _
  $region29: #{e2e_forward.5} parent=0 // pred_fallthru
    _
  // Predicated region
  $region30: #{e2e_forward.5} parent=0 // pred_check
    _
  $region31: #{e2e_forward.5} parent=0 // pred_check_branch
    %30 = sbr.rel (0) target = $region33
  $region32: #{e2e_forward.5} parent=0 // pred_region
    _
  $region33: #{e2e_forward.5} parent=0 // pred_fallthru
    _
  // Predicated region
  $region34: #{e2e_forward.5} parent=0 // pred_check
    _
  $region35: #{e2e_forward.5} parent=0 // pred_check_branch
    %32 = sbr.rel (0) target = $region37
  $region36: #{e2e_forward.5} parent=0 // pred_region
    _
  $region37: #{e2e_forward.5} parent=0 // pred_fallthru
    _
  // Predicated region
  $region38: #{e2e_forward.5} parent=0 // pred_check
    _
  $region39: #{e2e_forward.5} parent=0 // pred_check_branch
    %34 = sbr.rel (0) target = $region41
  $region40: #{e2e_forward.5} parent=0 // pred_region
    _
  $region41: #{e2e_forward.5} parent=0 // pred_fallthru
    _
  %v36 = vld [vmem:[%s0] sm:$0x3]
  %v37 = vld [vmem:[%s0 + $0x2] sm:$0x3]
  %v38 = vld [vmem:[%s0 + $0x4] sm:$0x3]
  %v39 = vld [vmem:[%s0 + $0x6] sm:$0x3]
  %v40 = vld [vmem:[%s0 + $0x8] sm:$0x3]
  %v41 = vld [vmem:[%s0 + $0xa] sm:$0x3]
  %v42 = vld [vmem:[%s0 + $0xc] sm:$0x3]
  %v43 = vld [vmem:[%s0 + $0xe] sm:$0x3]
  %v52 = vcombine.low %v36, %v37
  %v53 = vcombine.low %v38, %v39
  %v55 = vunpack.c.l.s4 1983009808
  %v56 = vunpack.c.0.s8 %v55
  %v57 = vlaneseq
  %v58 = vshrl.u32 %v57, 7
  %v59 = vsub.s32 %v56, %v58
  %v60 = vrot.slane %v52, %v59
  %v62 = vunpack.c.l.s4 1983009808
  %v63 = vunpack.c.0.s8 %v62
  %v64 = vlaneseq
  %v65 = vshrl.u32 %v64, 7
  %v66 = vsub.s32 %v63, %v65
  %v67 = vrot.slane %v53, %v66
  %v68 = vcombine.low %v60, %v67
  %v69 = vcombine.low %v40, %v41
  %v70 = vcombine.low %v42, %v43
  %v72 = vunpack.c.l.s4 1983009808
  %v73 = vunpack.c.0.s8 %v72
  %v74 = vlaneseq
  %v75 = vshrl.u32 %v74, 7
  %v76 = vsub.s32 %v73, %v75
  %v77 = vrot.slane %v69, %v76
  %v79 = vunpack.c.l.s4 1983009808
  %v80 = vunpack.c.0.s8 %v79
  %v81 = vlaneseq
  %v82 = vshrl.u32 %v81, 7
  %v83 = vsub.s32 %v80, %v82
  %v84 = vrot.slane %v70, %v83
  %v85 = vcombine.low %v77, %v84
  %v88 = vpack.c.bf16 %v85, %v68
  %v89 = vld [vmem:[%s3] sm:$0xff]
  %v90 = vld [vmem:[%s3 + $0x8] sm:$0xff]
  %v91 = vpack.c.bf16 %v90, %v89
  %v92 = vld [vmem:[%s4] sm:$0x1]
  %v94 = vlaneseq
  %v95 = vshrl.u32 %v94, 7
  %v96 = vsub.s32 0, %v95
  %v97 = vrot.slane %v92, %v96
  %vm99 = vcmask 130048
  %v101 = vsel %vm99, %v88, 0
  %103 = vmatprep.subr.bf16.mxu0 0
  %104 = vmatpush1.bf16.msra.mxu0 %v91
  %105 = vmatprep.subr.bf16.mxu0 0
  %106 = vmatpush1.bf16.msra.mxu0 0
  %107 = vmatprep.subr.bf16.mxu0 0
  %108 = vmatpush1.bf16.msra.mxu0 0
  %109 = vmatprep.subr.bf16.mxu0 0
  %110 = vmatpush1.bf16.msra.mxu0 0
  %111 = vmatprep.subr.bf16.mxu0 0
  %112 = vmatpush1.bf16.msra.mxu0 0
  %113 = vmatprep.subr.bf16.mxu0 0
  %114 = vmatpush1.bf16.msra.mxu0 0
  %115 = vmatprep.subr.bf16.mxu0 0
  %116 = vmatpush1.bf16.msra.mxu0 0
  %117 = vmatprep.subr.bf16.mxu0 0
  %118 = vmatpush1.bf16.msra.mxu0 0
  %119 = vmatprep.subr.bf16.mxu0 0
  %120 = vmatpush1.bf16.msra.mxu0 0
  %121 = vmatprep.subr.bf16.mxu0 0
  %122 = vmatpush1.bf16.msra.mxu0 0
  %123 = vmatprep.subr.bf16.mxu0 0
  %124 = vmatpush1.bf16.msra.mxu0 0
  %125 = vmatprep.subr.bf16.mxu0 0
  %126 = vmatpush1.bf16.msra.mxu0 0
  %127 = vmatprep.subr.bf16.mxu0 0
  %128 = vmatpush1.bf16.msra.mxu0 0
  %129 = vmatprep.subr.bf16.mxu0 0
  %130 = vmatpush1.bf16.msra.mxu0 0
  %131 = vmatprep.subr.bf16.mxu0 0
  %132 = vmatpush1.bf16.msra.mxu0 0
  %133 = vmatprep.subr.bf16.mxu0 0
  %134 = vmatpush1.bf16.msra.mxu0 0
  %135 = vmatprep.mubr.bf16.mxu0 0
  %136 = vmatmul.mubr.bf16.gmra.mrb[0].mxu0 %v101
  %v137 = vpop.f32.mrb[0].mxu0
  %v138 = vadd.f32 %v97, %v137
  %v139 = vpop.f32.mrb[0].mxu0
  %v140 = vpop.f32.mrb[0].mxu0
  %v141 = vadd.f32 %v97, %v140
  %v142 = vpop.f32.mrb[0].mxu0
  %143 = vdwg.mxu0
  %v146 = vcombine.high %v138, %v138
  %v148 = vunpack.c.l.s4 1983009808
  %v149 = vunpack.c.0.s8 %v148
  %v150 = vlaneseq
  %v151 = vshrl.u32 %v150, 7
  %v152 = vsub.s32 %v149, %v151
  %v153 = vrot.slane %v138, %v152
  %v155 = vunpack.c.l.s4 1983009808
  %v156 = vunpack.c.0.s8 %v155
  %v157 = vlaneseq
  %v158 = vshrl.u32 %v157, 7
  %v159 = vsub.s32 %v156, %v158
  %v160 = vrot.slane %v146, %v159
  %v161 = vcombine.high %v153, %v153
  %v162 = vcombine.high %v160, %v160
  %v163 = vcombine.high %v141, %v141
  %v165 = vunpack.c.l.s4 1983009808
  %v166 = vunpack.c.0.s8 %v165
  %v167 = vlaneseq
  %v168 = vshrl.u32 %v167, 7
  %v169 = vsub.s32 %v166, %v168
  %v170 = vrot.slane %v141, %v169
  %v172 = vunpack.c.l.s4 1983009808
  %v173 = vunpack.c.0.s8 %v172
  %v174 = vlaneseq
  %v175 = vshrl.u32 %v174, 7
  %v176 = vsub.s32 %v173, %v175
  %v177 = vrot.slane %v163, %v176
  %v178 = vcombine.high %v170, %v170
  %v179 = vcombine.high %v177, %v177
  %vm188 = vcmask 517120
  %189 = vst.msk [vmem:[#allocation2] sm:$0x3] %vm188, %v153
  %190 = vst.msk [vmem:[#allocation2 + $0x2] sm:$0x3] %vm188, %v161
  %191 = vst.msk [vmem:[#allocation2 + $0x4] sm:$0x3] %vm188, %v160
  %192 = vst.msk [vmem:[#allocation2 + $0x6] sm:$0x3] %vm188, %v162
  %193 = vst.msk [vmem:[#allocation2 + $0x8] sm:$0x3] %vm188, %v170
  %194 = vst.msk [vmem:[#allocation2 + $0xa] sm:$0x3] %vm188, %v178
  %195 = vst.msk [vmem:[#allocation2 + $0xc] sm:$0x3] %vm188, %v177
  %196 = vst.msk [vmem:[#allocation2 + $0xe] sm:$0x3] %vm188, %v179
  %v198 = vunpack.c.l.s4 1983009808
  %v199 = vunpack.c.0.s8 %v198
  %v200 = vlaneseq
  %v201 = vshrl.u32 %v200, 7
  %v202 = vsub.s32 %v199, %v201
  %v203 = vrot.slane %v153, %v202
  %v205 = vunpack.c.l.s4 1983009808
  %v206 = vunpack.c.0.s8 %v205
  %v207 = vlaneseq
  %v208 = vshrl.u32 %v207, 7
  %v209 = vsub.s32 %v206, %v208
  %v210 = vrot.slane %v161, %v209
  %v212 = vunpack.c.l.s4 1983009808
  %v213 = vunpack.c.0.s8 %v212
  %v214 = vlaneseq
  %v215 = vshrl.u32 %v214, 7
  %v216 = vsub.s32 %v213, %v215
  %v217 = vrot.slane %v160, %v216
  %v219 = vunpack.c.l.s4 1983009808
  %v220 = vunpack.c.0.s8 %v219
  %v221 = vlaneseq
  %v222 = vshrl.u32 %v221, 7
  %v223 = vsub.s32 %v220, %v222
  %v224 = vrot.slane %v162, %v223
  %v226 = vunpack.c.l.s4 1983009808
  %v227 = vunpack.c.0.s8 %v226
  %v228 = vlaneseq
  %v229 = vshrl.u32 %v228, 7
  %v230 = vsub.s32 %v227, %v229
  %v231 = vrot.slane %v170, %v230
  %v233 = vunpack.c.l.s4 1983009808
  %v234 = vunpack.c.0.s8 %v233
  %v235 = vlaneseq
  %v236 = vshrl.u32 %v235, 7
  %v237 = vsub.s32 %v234, %v236
  %v238 = vrot.slane %v178, %v237
  %v240 = vunpack.c.l.s4 1983009808
  %v241 = vunpack.c.0.s8 %v240
  %v242 = vlaneseq
  %v243 = vshrl.u32 %v242, 7
  %v244 = vsub.s32 %v241, %v243
  %v245 = vrot.slane %v177, %v244
  %v247 = vunpack.c.l.s4 1983009808
  %v248 = vunpack.c.0.s8 %v247
  %v249 = vlaneseq
  %v250 = vshrl.u32 %v249, 7
  %v251 = vsub.s32 %v248, %v250
  %v252 = vrot.slane %v179, %v251
  %253 = vrot.lane.b32.xlu0 %v203, 64
  %v254 = vpop.permute.xlu0 %253
  %255 = vrot.lane.b32.xlu0 %v210, 64
  %v256 = vpop.permute.xlu0 %255
  %257 = vrot.lane.b32.xlu0 %v217, 64
  %v258 = vpop.permute.xlu0 %257
  %259 = vrot.lane.b32.xlu0 %v224, 64
  %v260 = vpop.permute.xlu0 %259
  %261 = vrot.lane.b32.xlu0 %v231, 64
  %v262 = vpop.permute.xlu0 %261
  %263 = vrot.lane.b32.xlu0 %v238, 64
  %v264 = vpop.permute.xlu0 %263
  %265 = vrot.lane.b32.xlu0 %v245, 64
  %v266 = vpop.permute.xlu0 %265
  %267 = vrot.lane.b32.xlu0 %v252, 64
  %v268 = vpop.permute.xlu0 %267
  %277 = vst.msk [vmem:[#allocation3] sm:$0x3] %vm188, %v254
  %278 = vst.msk [vmem:[#allocation3 + $0x2] sm:$0x3] %vm188, %v256
  %279 = vst.msk [vmem:[#allocation3 + $0x4] sm:$0x3] %vm188, %v258
  %280 = vst.msk [vmem:[#allocation3 + $0x6] sm:$0x3] %vm188, %v260
  %281 = vst.msk [vmem:[#allocation3 + $0x8] sm:$0x3] %vm188, %v262
  %282 = vst.msk [vmem:[#allocation3 + $0xa] sm:$0x3] %vm188, %v264
  %283 = vst.msk [vmem:[#allocation3 + $0xc] sm:$0x3] %vm188, %v266
  %284 = vst.msk [vmem:[#allocation3 + $0xe] sm:$0x3] %vm188, %v268
  %v285 = vld [vmem:[%s1] sm:$0x3]
  %v286 = vld [vmem:[%s5] sm:$0xff]
  %v287 = vld [vmem:[%s5 + $0x8] sm:$0xff]
  %v288 = vld [vmem:[%s6] sm:$0xff]
  %v289 = vld [vmem:[%s6 + $0x8] sm:$0xff]
  %v290 = vld [vmem:[#allocation2] sm:$0x3]
  %v292 = vsel %vm99, 0.0, 0
  %294 = vmatprep.subr.mxu0 0.0
  %295 = vmatpush1.msra.mxu0 %v286
  %296 = vmatprep.subr.mxu0 0.0
  %297 = vmatpush1.msra.mxu0 %v287
  %298 = vmatprep.subr.mxu0 0.0
  %299 = vmatpush1.msra.mxu0 0.0
  %300 = vmatprep.subr.mxu0 0.0
  %301 = vmatpush1.msra.mxu0 0.0
  %302 = vmatprep.subr.mxu0 0.0
  %303 = vmatpush1.msra.mxu0 0.0
  %304 = vmatprep.subr.mxu0 0.0
  %305 = vmatpush1.msra.mxu0 0.0
  %306 = vmatprep.subr.mxu0 0.0
  %307 = vmatpush1.msra.mxu0 0.0
  %308 = vmatprep.subr.mxu0 0.0
  %309 = vmatpush1.msra.mxu0 0.0
  %310 = vmatprep.subr.mxu0 0.0
  %311 = vmatpush1.msra.mxu0 0.0
  %312 = vmatprep.subr.mxu0 0.0
  %313 = vmatpush1.msra.mxu0 0.0
  %314 = vmatprep.subr.mxu0 0.0
  %315 = vmatpush1.msra.mxu0 0.0
  %316 = vmatprep.subr.mxu0 0.0
  %317 = vmatpush1.msra.mxu0 0.0
  %318 = vmatprep.subr.mxu0 0.0
  %319 = vmatpush1.msra.mxu0 0.0
  %320 = vmatprep.subr.mxu0 0.0
  %321 = vmatpush1.msra.mxu0 0.0
  %322 = vmatprep.subr.mxu0 0.0
  %323 = vmatpush1.msra.mxu0 0.0
  %324 = vmatprep.subr.mxu0 0.0
  %325 = vmatpush1.msra.mxu0 0.0
  %326 = vmatprep.subr.mxu0 0.0
  %327 = vmatpush1.msra.mxu0 0.0
  %328 = vmatprep.subr.mxu0 0.0
  %329 = vmatpush1.msra.mxu0 0.0
  %330 = vmatprep.subr.mxu0 0.0
  %331 = vmatpush1.msra.mxu0 0.0
  %332 = vmatprep.subr.mxu0 0.0
  %333 = vmatpush1.msra.mxu0 0.0
  %334 = vmatprep.subr.mxu0 0.0
  %335 = vmatpush1.msra.mxu0 0.0
  %336 = vmatprep.subr.mxu0 0.0
  %337 = vmatpush1.msra.mxu0 0.0
  %338 = vmatprep.subr.mxu0 0.0
  %339 = vmatpush1.msra.mxu0 0.0
  %340 = vmatprep.subr.mxu0 0.0
  %341 = vmatpush1.msra.mxu0 0.0
  %342 = vmatprep.subr.mxu0 0.0
  %343 = vmatpush1.msra.mxu0 0.0
  %344 = vmatprep.subr.mxu0 0.0
  %345 = vmatpush1.msra.mxu0 0.0
  %346 = vmatprep.subr.mxu0 0.0
  %347 = vmatpush1.msra.mxu0 0.0
  %348 = vmatprep.subr.mxu0 0.0
  %349 = vmatpush1.msra.mxu0 0.0
  %350 = vmatprep.subr.mxu0 0.0
  %351 = vmatpush1.msra.mxu0 0.0
  %352 = vmatprep.subr.mxu0 0.0
  %353 = vmatpush1.msra.mxu0 0.0
  %354 = vmatprep.subr.mxu0 0.0
  %355 = vmatpush1.msra.mxu0 0.0
  %356 = vmatprep.subr.mxu0 0.0
  %357 = vmatpush1.msra.mxu0 0.0
  %358 = vmatprep.mubr.f32.mxu0 0.0
  %359 = vmatmul.mubr.f32.gmra.mrb[0].mxu0 %v292
  %v360 = vpop.f32.mrb[0].mxu0
  %v361 = vadd.f32 0.0, %v360
  %v362 = vpop.f32.mrb[0].mxu0
  %363 = vdwg.mxu0
  %v364 = vadd.f32 %v290, %v361
  %v365 = vxor.u32 %v364, 2147483648
  %v366 = vmul.f32 %v365, 1.442695
  %v367 = vpow.pop %v366
  %v368 = vadd.f32 %v367, 1.0
  %v369 = vrcp.pop %v368
  %v370 = vmul.f32 1.0, %v369
  %v371 = vtanh.pop %v364
  %v372 = vmul.f32 %v370, 0.0
  %374 = vrot.lane.b32.xlu0 %v371, 96
  %v375 = vpop.permute.xlu0 %374
  %v377 = vmul.f32 %v370, %v375
  %379 = vrot.lane.b32.xlu0 %v377, 16
  %v380 = vpop.permute.xlu0 %379
  %v382 = vadd.f32 %v372, %v380
  %v383 = vtanh.pop %v382
  %385 = vrot.lane.b32.xlu0 %v383, 32
  %v386 = vpop.permute.xlu0 %385
  %v388 = vmul.f32 %v370, %v386
  %390 = vrot.lane.b32.xlu0 %v388, 80
  %v391 = vpop.permute.xlu0 %390
  %vm393 = vcmask 123904
  %394 = vst.msk [vmem:[#allocation4] sm:$0x3] %vm393, %v391
  %s395 = scalar_lea.vmem [#allocation3], 14
  %v396 = vld [vmem:[%s395] sm:$0x3]
  %397 = vmatprep.subr.mxu0 0.0
  %398 = vmatpush1.msra.mxu0 %v288
  %399 = vmatprep.subr.mxu0 0.0
  %400 = vmatpush1.msra.mxu0 %v289
  %401 = vmatprep.subr.mxu0 0.0
  %402 = vmatpush1.msra.mxu0 0.0
  %403 = vmatprep.subr.mxu0 0.0
  %404 = vmatpush1.msra.mxu0 0.0
  %405 = vmatprep.subr.mxu0 0.0
  %406 = vmatpush1.msra.mxu0 0.0
  %407 = vmatprep.subr.mxu0 0.0
  %408 = vmatpush1.msra.mxu0 0.0
  %409 = vmatprep.subr.mxu0 0.0
  %410 = vmatpush1.msra.mxu0 0.0
  %411 = vmatprep.subr.mxu0 0.0
  %412 = vmatpush1.msra.mxu0 0.0
  %413 = vmatprep.subr.mxu0 0.0
  %414 = vmatpush1.msra.mxu0 0.0
  %415 = vmatprep.subr.mxu0 0.0
  %416 = vmatpush1.msra.mxu0 0.0
  %417 = vmatprep.subr.mxu0 0.0
  %418 = vmatpush1.msra.mxu0 0.0
  %419 = vmatprep.subr.mxu0 0.0
  %420 = vmatpush1.msra.mxu0 0.0
  %421 = vmatprep.subr.mxu0 0.0
  %422 = vmatpush1.msra.mxu0 0.0
  %423 = vmatprep.subr.mxu0 0.0
  %424 = vmatpush1.msra.mxu0 0.0
  %425 = vmatprep.subr.mxu0 0.0
  %426 = vmatpush1.msra.mxu0 0.0
  %427 = vmatprep.subr.mxu0 0.0
  %428 = vmatpush1.msra.mxu0 0.0
  %429 = vmatprep.subr.mxu0 0.0
  %430 = vmatpush1.msra.mxu0 0.0
  %431 = vmatprep.subr.mxu0 0.0
  %432 = vmatpush1.msra.mxu0 0.0
  %433 = vmatprep.subr.mxu0 0.0
  %434 = vmatpush1.msra.mxu0 0.0
  %435 = vmatprep.subr.mxu0 0.0
  %436 = vmatpush1.msra.mxu0 0.0
  %437 = vmatprep.subr.mxu0 0.0
  %438 = vmatpush1.msra.mxu0 0.0
  %439 = vmatprep.subr.mxu0 0.0
  %440 = vmatpush1.msra.mxu0 0.0
  %441 = vmatprep.subr.mxu0 0.0
  %442 = vmatpush1.msra.mxu0 0.0
  %443 = vmatprep.subr.mxu0 0.0
  %444 = vmatpush1.msra.mxu0 0.0
  %445 = vmatprep.subr.mxu0 0.0
  %446 = vmatpush1.msra.mxu0 0.0
  %447 = vmatprep.subr.mxu0 0.0
  %448 = vmatpush1.msra.mxu0 0.0
  %449 = vmatprep.subr.mxu0 0.0
  %450 = vmatpush1.msra.mxu0 0.0
  %451 = vmatprep.subr.mxu0 0.0
  %452 = vmatpush1.msra.mxu0 0.0
  %453 = vmatprep.subr.mxu0 0.0
  %454 = vmatpush1.msra.mxu0 0.0
  %455 = vmatprep.subr.mxu0 0.0
  %456 = vmatpush1.msra.mxu0 0.0
  %457 = vmatprep.subr.mxu0 0.0
  %458 = vmatpush1.msra.mxu0 0.0
  %459 = vmatprep.subr.mxu0 0.0
  %460 = vmatpush1.msra.mxu0 0.0
  %461 = vmatprep.mubr.f32.mxu0 0.0
  %462 = vmatmul.mubr.f32.gmra.mrb[0].mxu0 %v292
  %v463 = vpop.f32.mrb[0].mxu0
  %v464 = vadd.f32 0.0, %v463
  %v465 = vpop.f32.mrb[0].mxu0
  %466 = vdwg.mxu0
  %v467 = vadd.f32 %v396, %v464
  %v468 = vxor.u32 %v467, 2147483648
  %v469 = vmul.f32 %v468, 1.442695
  %v470 = vpow.pop %v469
  %v471 = vadd.f32 %v470, 1.0
  %v472 = vrcp.pop %v471
  %v473 = vmul.f32 1.0, %v472
  %v474 = vtanh.pop %v467
  %v475 = vmul.f32 %v473, 0.0
  %477 = vrot.lane.b32.xlu0 %v474, 96
  %v478 = vpop.permute.xlu0 %477
  %v480 = vmul.f32 %v473, %v478
  %482 = vrot.lane.b32.xlu0 %v480, 16
  %v483 = vpop.permute.xlu0 %482
  %v485 = vadd.f32 %v475, %v483
  %v486 = vtanh.pop %v485
  %488 = vrot.lane.b32.xlu0 %v486, 32
  %v489 = vpop.permute.xlu0 %488
  %v491 = vmul.f32 %v473, %v489
  %vm492 = vcmp.gt.s32.totalorder %v285, 7
  %v493 = vsel %vm492, 1, 0
  %494 = vset.pattern.permute.xlu0 0
  %495 = vperm.xlu0 %494, %v493
  %v496 = vpop.permute.xlu0 %495
  %vm497 = vcmp.eq.s32.totalorder %v496, 1
  %v498 = vsel %vm497, %v491, 0.0
  %v499 = vsel %vm497, %v485, 0.0
  %501 = vrot.lane.b32.xlu0 %v498, 80
  %v502 = vpop.permute.xlu0 %501
  %s504 = scalar_lea.vmem [#allocation5], 14
  %505 = vst.msk [vmem:[%s504] sm:$0x3] %vm393, %v502
  %s506 = scalar_lea.vmem [#allocation2], 2
  %v507 = vld [vmem:[%s506] sm:$0x3]
  %v508 = vsel %vm99, %v391, 0
  %510 = vmatprep.subr.mxu0 0.0
  %511 = vmatpush1.msra.mxu0 %v286
  %512 = vmatprep.subr.mxu0 0.0
  %513 = vmatpush1.msra.mxu0 %v287
  %514 = vmatprep.subr.mxu0 0.0
  %515 = vmatpush1.msra.mxu0 0.0
  %516 = vmatprep.subr.mxu0 0.0
  %517 = vmatpush1.msra.mxu0 0.0
  %518 = vmatprep.subr.mxu0 0.0
  %519 = vmatpush1.msra.mxu0 0.0
  %520 = vmatprep.subr.mxu0 0.0
  %521 = vmatpush1.msra.mxu0 0.0
  %522 = vmatprep.subr.mxu0 0.0
  %523 = vmatpush1.msra.mxu0 0.0
  %524 = vmatprep.subr.mxu0 0.0
  %525 = vmatpush1.msra.mxu0 0.0
  %526 = vmatprep.subr.mxu0 0.0
  %527 = vmatpush1.msra.mxu0 0.0
  %528 = vmatprep.subr.mxu0 0.0
  %529 = vmatpush1.msra.mxu0 0.0
  %530 = vmatprep.subr.mxu0 0.0
  %531 = vmatpush1.msra.mxu0 0.0
  %532 = vmatprep.subr.mxu0 0.0
  %533 = vmatpush1.msra.mxu0 0.0
  %534 = vmatprep.subr.mxu0 0.0
  %535 = vmatpush1.msra.mxu0 0.0
  %536 = vmatprep.subr.mxu0 0.0
  %537 = vmatpush1.msra.mxu0 0.0
  %538 = vmatprep.subr.mxu0 0.0
  %539 = vmatpush1.msra.mxu0 0.0
  %540 = vmatprep.subr.mxu0 0.0
  %541 = vmatpush1.msra.mxu0 0.0
  %542 = vmatprep.subr.mxu0 0.0
  %543 = vmatpush1.msra.mxu0 0.0
  %544 = vmatprep.subr.mxu0 0.0
  %545 = vmatpush1.msra.mxu0 0.0
  %546 = vmatprep.subr.mxu0 0.0
  %547 = vmatpush1.msra.mxu0 0.0
  %548 = vmatprep.subr.mxu0 0.0
  %549 = vmatpush1.msra.mxu0 0.0
  %550 = vmatprep.subr.mxu0 0.0
  %551 = vmatpush1.msra.mxu0 0.0
  %552 = vmatprep.subr.mxu0 0.0
  %553 = vmatpush1.msra.mxu0 0.0
  %554 = vmatprep.subr.mxu0 0.0
  %555 = vmatpush1.msra.mxu0 0.0
  %556 = vmatprep.subr.mxu0 0.0
  %557 = vmatpush1.msra.mxu0 0.0
  %558 = vmatprep.subr.mxu0 0.0
  %559 = vmatpush1.msra.mxu0 0.0
  %560 = vmatprep.subr.mxu0 0.0
  %561 = vmatpush1.msra.mxu0 0.0
  %562 = vmatprep.subr.mxu0 0.0
  %563 = vmatpush1.msra.mxu0 0.0
  %564 = vmatprep.subr.mxu0 0.0
  %565 = vmatpush1.msra.mxu0 0.0
  %566 = vmatprep.subr.mxu0 0.0
  %567 = vmatpush1.msra.mxu0 0.0
  %568 = vmatprep.subr.mxu0 0.0
  %569 = vmatpush1.msra.mxu0 0.0
  %570 = vmatprep.subr.mxu0 0.0
  %571 = vmatpush1.msra.mxu0 0.0
  %572 = vmatprep.subr.mxu0 0.0
  %573 = vmatpush1.msra.mxu0 0.0
  %574 = vmatprep.mubr.f32.mxu0 0.0
  %575 = vmatmul.mubr.f32.gmra.mrb[0].mxu0 %v508
  %v576 = vpop.f32.mrb[0].mxu0
  %v577 = vadd.f32 0.0, %v576
  %v578 = vpop.f32.mrb[0].mxu0
  %579 = vdwg.mxu0
  %v580 = vadd.f32 %v507, %v577
  %v581 = vxor.u32 %v580, 2147483648
  %v582 = vmul.f32 %v581, 1.442695
  %v583 = vpow.pop %v582
  %v584 = vadd.f32 %v583, 1.0
  %v585 = vrcp.pop %v584
  %v586 = vmul.f32 1.0, %v585
  %v587 = vtanh.pop %v580
  %v588 = vmul.f32 %v586, %v382
  %590 = vrot.lane.b32.xlu0 %v587, 96
  %v591 = vpop.permute.xlu0 %590
  %v593 = vmul.f32 %v586, %v591
  %595 = vrot.lane.b32.xlu0 %v593, 16
  %v596 = vpop.permute.xlu0 %595
  %v598 = vadd.f32 %v588, %v596
  %v599 = vtanh.pop %v598
  %601 = vrot.lane.b32.xlu0 %v599, 32
  %v602 = vpop.permute.xlu0 %601
  %v604 = vmul.f32 %v586, %v602
  %606 = vrot.lane.b32.xlu0 %v604, 80
  %v607 = vpop.permute.xlu0 %606
  %s609 = scalar_lea.vmem [#allocation4], 2
  %610 = vst.msk [vmem:[%s609] sm:$0x3] %vm393, %v607
  %s611 = scalar_lea.vmem [#allocation3], 12
  %v612 = vld [vmem:[%s611] sm:$0x3]
  %v613 = vsel %vm99, %v502, 0
  %615 = vmatprep.subr.mxu0 0.0
  %616 = vmatpush1.msra.mxu0 %v288
  %617 = vmatprep.subr.mxu0 0.0
  %618 = vmatpush1.msra.mxu0 %v289
  %619 = vmatprep.subr.mxu0 0.0
  %620 = vmatpush1.msra.mxu0 0.0
  %621 = vmatprep.subr.mxu0 0.0
  %622 = vmatpush1.msra.mxu0 0.0
  %623 = vmatprep.subr.mxu0 0.0
  %624 = vmatpush1.msra.mxu0 0.0
  %625 = vmatprep.subr.mxu0 0.0
  %626 = vmatpush1.msra.mxu0 0.0
  %627 = vmatprep.subr.mxu0 0.0
  %628 = vmatpush1.msra.mxu0 0.0
  %629 = vmatprep.subr.mxu0 0.0
  %630 = vmatpush1.msra.mxu0 0.0
  %631 = vmatprep.subr.mxu0 0.0
  %632 = vmatpush1.msra.mxu0 0.0
  %633 = vmatprep.subr.mxu0 0.0
  %634 = vmatpush1.msra.mxu0 0.0
  %635 = vmatprep.subr.mxu0 0.0
  %636 = vmatpush1.msra.mxu0 0.0
  %637 = vmatprep.subr.mxu0 0.0
  %638 = vmatpush1.msra.mxu0 0.0
  %639 = vmatprep.subr.mxu0 0.0
  %640 = vmatpush1.msra.mxu0 0.0
  %641 = vmatprep.subr.mxu0 0.0
  %642 = vmatpush1.msra.mxu0 0.0
  %643 = vmatprep.subr.mxu0 0.0
  %644 = vmatpush1.msra.mxu0 0.0
  %645 = vmatprep.subr.mxu0 0.0
  %646 = vmatpush1.msra.mxu0 0.0
  %647 = vmatprep.subr.mxu0 0.0
  %648 = vmatpush1.msra.mxu0 0.0
  %649 = vmatprep.subr.mxu0 0.0
  %650 = vmatpush1.msra.mxu0 0.0
  %651 = vmatprep.subr.mxu0 0.0
  %652 = vmatpush1.msra.mxu0 0.0
  %653 = vmatprep.subr.mxu0 0.0
  %654 = vmatpush1.msra.mxu0 0.0
  %655 = vmatprep.subr.mxu0 0.0
  %656 = vmatpush1.msra.mxu0 0.0
  %657 = vmatprep.subr.mxu0 0.0
  %658 = vmatpush1.msra.mxu0 0.0
  %659 = vmatprep.subr.mxu0 0.0
  %660 = vmatpush1.msra.mxu0 0.0
  %661 = vmatprep.subr.mxu0 0.0
  %662 = vmatpush1.msra.mxu0 0.0
  %663 = vmatprep.subr.mxu0 0.0
  %664 = vmatpush1.msra.mxu0 0.0
  %665 = vmatprep.subr.mxu0 0.0
  %666 = vmatpush1.msra.mxu0 0.0
  %667 = vmatprep.subr.mxu0 0.0
  %668 = vmatpush1.msra.mxu0 0.0
  %669 = vmatprep.subr.mxu0 0.0
  %670 = vmatpush1.msra.mxu0 0.0
  %671 = vmatprep.subr.mxu0 0.0
  %672 = vmatpush1.msra.mxu0 0.0
  %673 = vmatprep.subr.mxu0 0.0
  %674 = vmatpush1.msra.mxu0 0.0
  %675 = vmatprep.subr.mxu0 0.0
  %676 = vmatpush1.msra.mxu0 0.0
  %677 = vmatprep.subr.mxu0 0.0
  %678 = vmatpush1.msra.mxu0 0.0
  %679 = vmatprep.mubr.f32.mxu0 0.0
  %680 = vmatmul.mubr.f32.gmra.mrb[0].mxu0 %v613
  %v681 = vpop.f32.mrb[0].mxu0
  %v682 = vadd.f32 0.0, %v681
  %v683 = vpop.f32.mrb[0].mxu0
  %684 = vdwg.mxu0
  %v685 = vadd.f32 %v612, %v682
  %v686 = vxor.u32 %v685, 2147483648
  %v687 = vmul.f32 %v686, 1.442695
  %v688 = vpow.pop %v687
  %v689 = vadd.f32 %v688, 1.0
  %v690 = vrcp.pop %v689
  %v691 = vmul.f32 1.0, %v690
  %v692 = vtanh.pop %v685
  %v693 = vmul.f32 %v691, %v499
  %695 = vrot.lane.b32.xlu0 %v692, 96
  %v696 = vpop.permute.xlu0 %695
  %v698 = vmul.f32 %v691, %v696
  %700 = vrot.lane.b32.xlu0 %v698, 16
  %v701 = vpop.permute.xlu0 %700
  %v703 = vadd.f32 %v693, %v701
  %v704 = vtanh.pop %v703
  %706 = vrot.lane.b32.xlu0 %v704, 32
  %v707 = vpop.permute.xlu0 %706
  %v709 = vmul.f32 %v691, %v707
  %vm710 = vcmp.gt.s32.totalorder %v285, 6
  %v711 = vsel %vm710, 1, 0
  %712 = vset.pattern.permute.xlu0 0
  %713 = vperm.xlu0 %712, %v711
  %v714 = vpop.permute.xlu0 %713
  %vm715 = vcmp.eq.s32.totalorder %v714, 1
  %v716 = vsel %vm715, %v709, %v498
  %v717 = vsel %vm715, %v703, %v499
  %719 = vrot.lane.b32.xlu0 %v716, 80
  %v720 = vpop.permute.xlu0 %719
  %s722 = scalar_lea.vmem [#allocation5], 12
  %723 = vst.msk [vmem:[%s722] sm:$0x3] %vm393, %v720
  %s724 = scalar_lea.vmem [#allocation2], 4
  %v725 = vld [vmem:[%s724] sm:$0x3]
  %v726 = vsel %vm99, %v607, 0
  %728 = vmatprep.subr.mxu0 0.0
  %729 = vmatpush1.msra.mxu0 %v286
  %730 = vmatprep.subr.mxu0 0.0
  %731 = vmatpush1.msra.mxu0 %v287
  %732 = vmatprep.subr.mxu0 0.0
  %733 = vmatpush1.msra.mxu0 0.0
  %734 = vmatprep.subr.mxu0 0.0
  %735 = vmatpush1.msra.mxu0 0.0
  %736 = vmatprep.subr.mxu0 0.0
  %737 = vmatpush1.msra.mxu0 0.0
  %738 = vmatprep.subr.mxu0 0.0
  %739 = vmatpush1.msra.mxu0 0.0
  %740 = vmatprep.subr.mxu0 0.0
  %741 = vmatpush1.msra.mxu0 0.0
  %742 = vmatprep.subr.mxu0 0.0
  %743 = vmatpush1.msra.mxu0 0.0
  %744 = vmatprep.subr.mxu0 0.0
  %745 = vmatpush1.msra.mxu0 0.0
  %746 = vmatprep.subr.mxu0 0.0
  %747 = vmatpush1.msra.mxu0 0.0
  %748 = vmatprep.subr.mxu0 0.0
  %749 = vmatpush1.msra.mxu0 0.0
  %750 = vmatprep.subr.mxu0 0.0
  %751 = vmatpush1.msra.mxu0 0.0
  %752 = vmatprep.subr.mxu0 0.0
  %753 = vmatpush1.msra.mxu0 0.0
  %754 = vmatprep.subr.mxu0 0.0
  %755 = vmatpush1.msra.mxu0 0.0
  %756 = vmatprep.subr.mxu0 0.0
  %757 = vmatpush1.msra.mxu0 0.0
  %758 = vmatprep.subr.mxu0 0.0
  %759 = vmatpush1.msra.mxu0 0.0
  %760 = vmatprep.subr.mxu0 0.0
  %761 = vmatpush1.msra.mxu0 0.0
  %762 = vmatprep.subr.mxu0 0.0
  %763 = vmatpush1.msra.mxu0 0.0
  %764 = vmatprep.subr.mxu0 0.0
  %765 = vmatpush1.msra.mxu0 0.0
  %766 = vmatprep.subr.mxu0 0.0
  %767 = vmatpush1.msra.mxu0 0.0
  %768 = vmatprep.subr.mxu0 0.0
  %769 = vmatpush1.msra.mxu0 0.0
  %770 = vmatprep.subr.mxu0 0.0
  %771 = vmatpush1.msra.mxu0 0.0
  %772 = vmatprep.subr.mxu0 0.0
  %773 = vmatpush1.msra.mxu0 0.0
  %774 = vmatprep.subr.mxu0 0.0
  %775 = vmatpush1.msra.mxu0 0.0
  %776 = vmatprep.subr.mxu0 0.0
  %777 = vmatpush1.msra.mxu0 0.0
  %778 = vmatprep.subr.mxu0 0.0
  %779 = vmatpush1.msra.mxu0 0.0
  %780 = vmatprep.subr.mxu0 0.0
  %781 = vmatpush1.msra.mxu0 0.0
  %782 = vmatprep.subr.mxu0 0.0
  %783 = vmatpush1.msra.mxu0 0.0
  %784 = vmatprep.subr.mxu0 0.0
  %785 = vmatpush1.msra.mxu0 0.0
  %786 = vmatprep.subr.mxu0 0.0
  %787 = vmatpush1.msra.mxu0 0.0
  %788 = vmatprep.subr.mxu0 0.0
  %789 = vmatpush1.msra.mxu0 0.0
  %790 = vmatprep.subr.mxu0 0.0
  %791 = vmatpush1.msra.mxu0 0.0
  %792 = vmatprep.mubr.f32.mxu0 0.0
  %793 = vmatmul.mubr.f32.gmra.mrb[0].mxu0 %v726
  %v794 = vpop.f32.mrb[0].mxu0
  %v795 = vadd.f32 0.0, %v794
  %v796 = vpop.f32.mrb[0].mxu0
  %797 = vdwg.mxu0
  %v798 = vadd.f32 %v725, %v795
  %v799 = vxor.u32 %v798, 2147483648
  %v800 = vmul.f32 %v799, 1.442695
  %v801 = vpow.pop %v800
  %v802 = vadd.f32 %v801, 1.0
  %v803 = vrcp.pop %v802
  %v804 = vmul.f32 1.0, %v803
  %v805 = vtanh.pop %v798
  %v806 = vmul.f32 %v804, %v598
  %808 = vrot.lane.b32.xlu0 %v805, 96
  %v809 = vpop.permute.xlu0 %808
  %v811 = vmul.f32 %v804, %v809
  %813 = vrot.lane.b32.xlu0 %v811, 16
  %v814 = vpop.permute.xlu0 %813
  %v816 = vadd.f32 %v806, %v814
  %v817 = vtanh.pop %v816
  %819 = vrot.lane.b32.xlu0 %v817, 32
  %v820 = vpop.permute.xlu0 %819
  %v822 = vmul.f32 %v804, %v820
  %824 = vrot.lane.b32.xlu0 %v822, 80
  %v825 = vpop.permute.xlu0 %824
  %s827 = scalar_lea.vmem [#allocation4], 4
  %828 = vst.msk [vmem:[%s827] sm:$0x3] %vm393, %v825
  %s829 = scalar_lea.vmem [#allocation3], 10
  %v830 = vld [vmem:[%s829] sm:$0x3]
  %v831 = vsel %vm99, %v720, 0
  %833 = vmatprep.subr.mxu0 0.0
  %834 = vmatpush1.msra.mxu0 %v288
  %835 = vmatprep.subr.mxu0 0.0
  %836 = vmatpush1.msra.mxu0 %v289
  %837 = vmatprep.subr.mxu0 0.0
  %838 = vmatpush1.msra.mxu0 0.0
  %839 = vmatprep.subr.mxu0 0.0
  %840 = vmatpush1.msra.mxu0 0.0
  %841 = vmatprep.subr.mxu0 0.0
  %842 = vmatpush1.msra.mxu0 0.0
  %843 = vmatprep.subr.mxu0 0.0
  %844 = vmatpush1.msra.mxu0 0.0
  %845 = vmatprep.subr.mxu0 0.0
  %846 = vmatpush1.msra.mxu0 0.0
  %847 = vmatprep.subr.mxu0 0.0
  %848 = vmatpush1.msra.mxu0 0.0
  %849 = vmatprep.subr.mxu0 0.0
  %850 = vmatpush1.msra.mxu0 0.0
  %851 = vmatprep.subr.mxu0 0.0
  %852 = vmatpush1.msra.mxu0 0.0
  %853 = vmatprep.subr.mxu0 0.0
  %854 = vmatpush1.msra.mxu0 0.0
  %855 = vmatprep.subr.mxu0 0.0
  %856 = vmatpush1.msra.mxu0 0.0
  %857 = vmatprep.subr.mxu0 0.0
  %858 = vmatpush1.msra.mxu0 0.0
  %859 = vmatprep.subr.mxu0 0.0
  %860 = vmatpush1.msra.mxu0 0.0
  %861 = vmatprep.subr.mxu0 0.0
  %862 = vmatpush1.msra.mxu0 0.0
  %863 = vmatprep.subr.mxu0 0.0
  %864 = vmatpush1.msra.mxu0 0.0
  %865 = vmatprep.subr.mxu0 0.0
  %866 = vmatpush1.msra.mxu0 0.0
  %867 = vmatprep.subr.mxu0 0.0
  %868 = vmatpush1.msra.mxu0 0.0
  %869 = vmatprep.subr.mxu0 0.0
  %870 = vmatpush1.msra.mxu0 0.0
  %871 = vmatprep.subr.mxu0 0.0
  %872 = vmatpush1.msra.mxu0 0.0
  %873 = vmatprep.subr.mxu0 0.0
  %874 = vmatpush1.msra.mxu0 0.0
  %875 = vmatprep.subr.mxu0 0.0
  %876 = vmatpush1.msra.mxu0 0.0
  %877 = vmatprep.subr.mxu0 0.0
  %878 = vmatpush1.msra.mxu0 0.0
  %879 = vmatprep.subr.mxu0 0.0
  %880 = vmatpush1.msra.mxu0 0.0
  %881 = vmatprep.subr.mxu0 0.0
  %882 = vmatpush1.msra.mxu0 0.0
  %883 = vmatprep.subr.mxu0 0.0
  %884 = vmatpush1.msra.mxu0 0.0
  %885 = vmatprep.subr.mxu0 0.0
  %886 = vmatpush1.msra.mxu0 0.0
  %887 = vmatprep.subr.mxu0 0.0
  %888 = vmatpush1.msra.mxu0 0.0
  %889 = vmatprep.subr.mxu0 0.0
  %890 = vmatpush1.msra.mxu0 0.0
  %891 = vmatprep.subr.mxu0 0.0
  %892 = vmatpush1.msra.mxu0 0.0
  %893 = vmatprep.subr.mxu0 0.0
  %894 = vmatpush1.msra.mxu0 0.0
  %895 = vmatprep.subr.mxu0 0.0
  %896 = vmatpush1.msra.mxu0 0.0
  %897 = vmatprep.mubr.f32.mxu0 0.0
  %898 = vmatmul.mubr.f32.gmra.mrb[0].mxu0 %v831
  %v899 = vpop.f32.mrb[0].mxu0
  %v900 = vadd.f32 0.0, %v899
  %v901 = vpop.f32.mrb[0].mxu0
  %902 = vdwg.mxu0
  %v903 = vadd.f32 %v830, %v900
  %v904 = vxor.u32 %v903, 2147483648
  %v905 = vmul.f32 %v904, 1.442695
  %v906 = vpow.pop %v905
  %v907 = vadd.f32 %v906, 1.0
  %v908 = vrcp.pop %v907
  %v909 = vmul.f32 1.0, %v908
  %v910 = vtanh.pop %v903
  %v911 = vmul.f32 %v909, %v717
  %913 = vrot.lane.b32.xlu0 %v910, 96
  %v914 = vpop.permute.xlu0 %913
  %v916 = vmul.f32 %v909, %v914
  %918 = vrot.lane.b32.xlu0 %v916, 16
  %v919 = vpop.permute.xlu0 %918
  %v921 = vadd.f32 %v911, %v919
  %v922 = vtanh.pop %v921
  %924 = vrot.lane.b32.xlu0 %v922, 32
  %v925 = vpop.permute.xlu0 %924
  %v927 = vmul.f32 %v909, %v925
  %vm928 = vcmp.gt.s32.totalorder %v285, 5
  %v929 = vsel %vm928, 1, 0
  %930 = vset.pattern.permute.xlu0 0
  %931 = vperm.xlu0 %930, %v929
  %v932 = vpop.permute.xlu0 %931
  %vm933 = vcmp.eq.s32.totalorder %v932, 1
  %v934 = vsel %vm933, %v927, %v716
  %v935 = vsel %vm933, %v921, %v717
  %937 = vrot.lane.b32.xlu0 %v934, 80
  %v938 = vpop.permute.xlu0 %937
  %s940 = scalar_lea.vmem [#allocation5], 10
  %941 = vst.msk [vmem:[%s940] sm:$0x3] %vm393, %v938
  %s942 = scalar_lea.vmem [#allocation2], 6
  %v943 = vld [vmem:[%s942] sm:$0x3]
  %v944 = vsel %vm99, %v825, 0
  %946 = vmatprep.subr.mxu0 0.0
  %947 = vmatpush1.msra.mxu0 %v286
  %948 = vmatprep.subr.mxu0 0.0
  %949 = vmatpush1.msra.mxu0 %v287
  %950 = vmatprep.subr.mxu0 0.0
  %951 = vmatpush1.msra.mxu0 0.0
  %952 = vmatprep.subr.mxu0 0.0
  %953 = vmatpush1.msra.mxu0 0.0
  %954 = vmatprep.subr.mxu0 0.0
  %955 = vmatpush1.msra.mxu0 0.0
  %956 = vmatprep.subr.mxu0 0.0
  %957 = vmatpush1.msra.mxu0 0.0
  %958 = vmatprep.subr.mxu0 0.0
  %959 = vmatpush1.msra.mxu0 0.0
  %960 = vmatprep.subr.mxu0 0.0
  %961 = vmatpush1.msra.mxu0 0.0
  %962 = vmatprep.subr.mxu0 0.0
  %963 = vmatpush1.msra.mxu0 0.0
  %964 = vmatprep.subr.mxu0 0.0
  %965 = vmatpush1.msra.mxu0 0.0
  %966 = vmatprep.subr.mxu0 0.0
  %967 = vmatpush1.msra.mxu0 0.0
  %968 = vmatprep.subr.mxu0 0.0
  %969 = vmatpush1.msra.mxu0 0.0
  %970 = vmatprep.subr.mxu0 0.0
  %971 = vmatpush1.msra.mxu0 0.0
  %972 = vmatprep.subr.mxu0 0.0
  %973 = vmatpush1.msra.mxu0 0.0
  %974 = vmatprep.subr.mxu0 0.0
  %975 = vmatpush1.msra.mxu0 0.0
  %976 = vmatprep.subr.mxu0 0.0
  %977 = vmatpush1.msra.mxu0 0.0
  %978 = vmatprep.subr.mxu0 0.0
  %979 = vmatpush1.msra.mxu0 0.0
  %980 = vmatprep.subr.mxu0 0.0
  %981 = vmatpush1.msra.mxu0 0.0
  %982 = vmatprep.subr.mxu0 0.0
  %983 = vmatpush1.msra.mxu0 0.0
  %984 = vmatprep.subr.mxu0 0.0
  %985 = vmatpush1.msra.mxu0 0.0
  %986 = vmatprep.subr.mxu0 0.0
  %987 = vmatpush1.msra.mxu0 0.0
  %988 = vmatprep.subr.mxu0 0.0
  %989 = vmatpush1.msra.mxu0 0.0
  %990 = vmatprep.subr.mxu0 0.0
  %991 = vmatpush1.msra.mxu0 0.0
  %992 = vmatprep.subr.mxu0 0.0
  %993 = vmatpush1.msra.mxu0 0.0
  %994 = vmatprep.subr.mxu0 0.0
  %995 = vmatpush1.msra.mxu0 0.0
  %996 = vmatprep.subr.mxu0 0.0
  %997 = vmatpush1.msra.mxu0 0.0
  %998 = vmatprep.subr.mxu0 0.0
  %999 = vmatpush1.msra.mxu0 0.0
  %1000 = vmatprep.subr.mxu0 0.0
  %1001 = vmatpush1.msra.mxu0 0.0
  %1002 = vmatprep.subr.mxu0 0.0
  %1003 = vmatpush1.msra.mxu0 0.0
  %1004 = vmatprep.subr.mxu0 0.0
  %1005 = vmatpush1.msra.mxu0 0.0
  %1006 = vmatprep.subr.mxu0 0.0
  %1007 = vmatpush1.msra.mxu0 0.0
  %1008 = vmatprep.subr.mxu0 0.0
  %1009 = vmatpush1.msra.mxu0 0.0
  %1010 = vmatprep.mubr.f32.mxu0 0.0
  %1011 = vmatmul.mubr.f32.gmra.mrb[0].mxu0 %v944
  %v1012 = vpop.f32.mrb[0].mxu0
  %v1013 = vadd.f32 0.0, %v1012
  %v1014 = vpop.f32.mrb[0].mxu0
  %1015 = vdwg.mxu0
  %v1016 = vadd.f32 %v943, %v1013
  %v1017 = vxor.u32 %v1016, 2147483648
  %v1018 = vmul.f32 %v1017, 1.442695
  %v1019 = vpow.pop %v1018
  %v1020 = vadd.f32 %v1019, 1.0
  %v1021 = vrcp.pop %v1020
  %v1022 = vmul.f32 1.0, %v1021
  %v1023 = vtanh.pop %v1016
  %v1024 = vmul.f32 %v1022, %v816
  %1026 = vrot.lane.b32.xlu0 %v1023, 96
  %v1027 = vpop.permute.xlu0 %1026
  %v1029 = vmul.f32 %v1022, %v1027
  %1031 = vrot.lane.b32.xlu0 %v1029, 16
  %v1032 = vpop.permute.xlu0 %1031
  %v1034 = vadd.f32 %v1024, %v1032
  %v1035 = vtanh.pop %v1034
  %1037 = vrot.lane.b32.xlu0 %v1035, 32
  %v1038 = vpop.permute.xlu0 %1037
  %v1040 = vmul.f32 %v1022, %v1038
  %1042 = vrot.lane.b32.xlu0 %v1040, 80
  %v1043 = vpop.permute.xlu0 %1042
  %s1045 = scalar_lea.vmem [#allocation4], 6
  %1046 = vst.msk [vmem:[%s1045] sm:$0x3] %vm393, %v1043
  %s1047 = scalar_lea.vmem [#allocation3], 8
  %v1048 = vld [vmem:[%s1047] sm:$0x3]
  %v1049 = vsel %vm99, %v938, 0
  %1051 = vmatprep.subr.mxu0 0.0
  %1052 = vmatpush1.msra.mxu0 %v288
  %1053 = vmatprep.subr.mxu0 0.0
  %1054 = vmatpush1.msra.mxu0 %v289
  %1055 = vmatprep.subr.mxu0 0.0
  %1056 = vmatpush1.msra.mxu0 0.0
  %1057 = vmatprep.subr.mxu0 0.0
  %1058 = vmatpush1.msra.mxu0 0.0
  %1059 = vmatprep.subr.mxu0 0.0
  %1060 = vmatpush1.msra.mxu0 0.0
  %1061 = vmatprep.subr.mxu0 0.0
  %1062 = vmatpush1.msra.mxu0 0.0
  %1063 = vmatprep.subr.mxu0 0.0
  %1064 = vmatpush1.msra.mxu0 0.0
  %1065 = vmatprep.subr.mxu0 0.0
  %1066 = vmatpush1.msra.mxu0 0.0
  %1067 = vmatprep.subr.mxu0 0.0
  %1068 = vmatpush1.msra.mxu0 0.0
  %1069 = vmatprep.subr.mxu0 0.0
  %1070 = vmatpush1.msra.mxu0 0.0
  %1071 = vmatprep.subr.mxu0 0.0
  %1072 = vmatpush1.msra.mxu0 0.0
  %1073 = vmatprep.subr.mxu0 0.0
  %1074 = vmatpush1.msra.mxu0 0.0
  %1075 = vmatprep.subr.mxu0 0.0
  %1076 = vmatpush1.msra.mxu0 0.0
  %1077 = vmatprep.subr.mxu0 0.0
  %1078 = vmatpush1.msra.mxu0 0.0
  %1079 = vmatprep.subr.mxu0 0.0
  %1080 = vmatpush1.msra.mxu0 0.0
  %1081 = vmatprep.subr.mxu0 0.0
  %1082 = vmatpush1.msra.mxu0 0.0
  %1083 = vmatprep.subr.mxu0 0.0
  %1084 = vmatpush1.msra.mxu0 0.0
  %1085 = vmatprep.subr.mxu0 0.0
  %1086 = vmatpush1.msra.mxu0 0.0
  %1087 = vmatprep.subr.mxu0 0.0
  %1088 = vmatpush1.msra.mxu0 0.0
  %1089 = vmatprep.subr.mxu0 0.0
  %1090 = vmatpush1.msra.mxu0 0.0
  %1091 = vmatprep.subr.mxu0 0.0
  %1092 = vmatpush1.msra.mxu0 0.0
  %1093 = vmatprep.subr.mxu0 0.0
  %1094 = vmatpush1.msra.mxu0 0.0
  %1095 = vmatprep.subr.mxu0 0.0
  %1096 = vmatpush1.msra.mxu0 0.0
  %1097 = vmatprep.subr.mxu0 0.0
  %1098 = vmatpush1.msra.mxu0 0.0
  %1099 = vmatprep.subr.mxu0 0.0
  %1100 = vmatpush1.msra.mxu0 0.0
  %1101 = vmatprep.subr.mxu0 0.0
  %1102 = vmatpush1.msra.mxu0 0.0
  %1103 = vmatprep.subr.mxu0 0.0
  %1104 = vmatpush1.msra.mxu0 0.0
  %1105 = vmatprep.subr.mxu0 0.0
  %1106 = vmatpush1.msra.mxu0 0.0
  %1107 = vmatprep.subr.mxu0 0.0
  %1108 = vmatpush1.msra.mxu0 0.0
  %1109 = vmatprep.subr.mxu0 0.0
  %1110 = vmatpush1.msra.mxu0 0.0
  %1111 = vmatprep.subr.mxu0 0.0
  %1112 = vmatpush1.msra.mxu0 0.0
  %1113 = vmatprep.subr.mxu0 0.0
  %1114 = vmatpush1.msra.mxu0 0.0
  %1115 = vmatprep.mubr.f32.mxu0 0.0
  %1116 = vmatmul.mubr.f32.gmra.mrb[0].mxu0 %v1049
  %v1117 = vpop.f32.mrb[0].mxu0
  %v1118 = vadd.f32 0.0, %v1117
  %v1119 = vpop.f32.mrb[0].mxu0
  %1120 = vdwg.mxu0
  %v1121 = vadd.f32 %v1048, %v1118
  %v1122 = vxor.u32 %v1121, 2147483648
  %v1123 = vmul.f32 %v1122, 1.442695
  %v1124 = vpow.pop %v1123
  %v1125 = vadd.f32 %v1124, 1.0
  %v1126 = vrcp.pop %v1125
  %v1127 = vmul.f32 1.0, %v1126
  %v1128 = vtanh.pop %v1121
  %v1129 = vmul.f32 %v1127, %v935
  %1131 = vrot.lane.b32.xlu0 %v1128, 96
  %v1132 = vpop.permute.xlu0 %1131
  %v1134 = vmul.f32 %v1127, %v1132
  %1136 = vrot.lane.b32.xlu0 %v1134, 16
  %v1137 = vpop.permute.xlu0 %1136
  %v1139 = vadd.f32 %v1129, %v1137
  %v1140 = vtanh.pop %v1139
  %1142 = vrot.lane.b32.xlu0 %v1140, 32
  %v1143 = vpop.permute.xlu0 %1142
  %v1145 = vmul.f32 %v1127, %v1143
  %vm1146 = vcmp.gt.s32.totalorder %v285, 4
  %v1147 = vsel %vm1146, 1, 0
  %1148 = vset.pattern.permute.xlu0 0
  %1149 = vperm.xlu0 %1148, %v1147
  %v1150 = vpop.permute.xlu0 %1149
  %vm1151 = vcmp.eq.s32.totalorder %v1150, 1
  %v1152 = vsel %vm1151, %v1145, %v934
  %v1153 = vsel %vm1151, %v1139, %v935
  %1155 = vrot.lane.b32.xlu0 %v1152, 80
  %v1156 = vpop.permute.xlu0 %1155
  %s1158 = scalar_lea.vmem [#allocation5], 8
  %1159 = vst.msk [vmem:[%s1158] sm:$0x3] %vm393, %v1156
  %s1160 = scalar_lea.vmem [#allocation2], 8
  %v1161 = vld [vmem:[%s1160] sm:$0x3]
  %v1162 = vsel %vm99, %v1043, 0
  %1164 = vmatprep.subr.mxu0 0.0
  %1165 = vmatpush1.msra.mxu0 %v286
  %1166 = vmatprep.subr.mxu0 0.0
  %1167 = vmatpush1.msra.mxu0 %v287
  %1168 = vmatprep.subr.mxu0 0.0
  %1169 = vmatpush1.msra.mxu0 0.0
  %1170 = vmatprep.subr.mxu0 0.0
  %1171 = vmatpush1.msra.mxu0 0.0
  %1172 = vmatprep.subr.mxu0 0.0
  %1173 = vmatpush1.msra.mxu0 0.0
  %1174 = vmatprep.subr.mxu0 0.0
  %1175 = vmatpush1.msra.mxu0 0.0
  %1176 = vmatprep.subr.mxu0 0.0
  %1177 = vmatpush1.msra.mxu0 0.0
  %1178 = vmatprep.subr.mxu0 0.0
  %1179 = vmatpush1.msra.mxu0 0.0
  %1180 = vmatprep.subr.mxu0 0.0
  %1181 = vmatpush1.msra.mxu0 0.0
  %1182 = vmatprep.subr.mxu0 0.0
  %1183 = vmatpush1.msra.mxu0 0.0
  %1184 = vmatprep.subr.mxu0 0.0
  %1185 = vmatpush1.msra.mxu0 0.0
  %1186 = vmatprep.subr.mxu0 0.0
  %1187 = vmatpush1.msra.mxu0 0.0
  %1188 = vmatprep.subr.mxu0 0.0
  %1189 = vmatpush1.msra.mxu0 0.0
  %1190 = vmatprep.subr.mxu0 0.0
  %1191 = vmatpush1.msra.mxu0 0.0
  %1192 = vmatprep.subr.mxu0 0.0
  %1193 = vmatpush1.msra.mxu0 0.0
  %1194 = vmatprep.subr.mxu0 0.0
  %1195 = vmatpush1.msra.mxu0 0.0
  %1196 = vmatprep.subr.mxu0 0.0
  %1197 = vmatpush1.msra.mxu0 0.0
  %1198 = vmatprep.subr.mxu0 0.0
  %1199 = vmatpush1.msra.mxu0 0.0
  %1200 = vmatprep.subr.mxu0 0.0
  %1201 = vmatpush1.msra.mxu0 0.0
  %1202 = vmatprep.subr.mxu0 0.0
  %1203 = vmatpush1.msra.mxu0 0.0
  %1204 = vmatprep.subr.mxu0 0.0
  %1205 = vmatpush1.msra.mxu0 0.0
  %1206 = vmatprep.subr.mxu0 0.0
  %1207 = vmatpush1.msra.mxu0 0.0
  %1208 = vmatprep.subr.mxu0 0.0
  %1209 = vmatpush1.msra.mxu0 0.0
  %1210 = vmatprep.subr.mxu0 0.0
  %1211 = vmatpush1.msra.mxu0 0.0
  %1212 = vmatprep.subr.mxu0 0.0
  %1213 = vmatpush1.msra.mxu0 0.0
  %1214 = vmatprep.subr.mxu0 0.0
  %1215 = vmatpush1.msra.mxu0 0.0
  %1216 = vmatprep.subr.mxu0 0.0
  %1217 = vmatpush1.msra.mxu0 0.0
  %1218 = vmatprep.subr.mxu0 0.0
  %1219 = vmatpush1.msra.mxu0 0.0
  %1220 = vmatprep.subr.mxu0 0.0
  %1221 = vmatpush1.msra.mxu0 0.0
  %1222 = vmatprep.subr.mxu0 0.0
  %1223 = vmatpush1.msra.mxu0 0.0
  %1224 = vmatprep.subr.mxu0 0.0
  %1225 = vmatpush1.msra.mxu0 0.0
  %1226 = vmatprep.subr.mxu0 0.0
  %1227 = vmatpush1.msra.mxu0 0.0
  %1228 = vmatprep.mubr.f32.mxu0 0.0
  %1229 = vmatmul.mubr.f32.gmra.mrb[0].mxu0 %v1162
  %v1230 = vpop.f32.mrb[0].mxu0
  %v1231 = vadd.f32 0.0, %v1230
  %v1232 = vpop.f32.mrb[0].mxu0
  %1233 = vdwg.mxu0
  %v1234 = vadd.f32 %v1161, %v1231
  %v1235 = vxor.u32 %v1234, 2147483648
  %v1236 = vmul.f32 %v1235, 1.442695
  %v1237 = vpow.pop %v1236
  %v1238 = vadd.f32 %v1237, 1.0
  %v1239 = vrcp.pop %v1238
  %v1240 = vmul.f32 1.0, %v1239
  %v1241 = vtanh.pop %v1234
  %v1242 = vmul.f32 %v1240, %v1034
  %1244 = vrot.lane.b32.xlu0 %v1241, 96
  %v1245 = vpop.permute.xlu0 %1244
  %v1247 = vmul.f32 %v1240, %v1245
  %1249 = vrot.lane.b32.xlu0 %v1247, 16
  %v1250 = vpop.permute.xlu0 %1249
  %v1252 = vadd.f32 %v1242, %v1250
  %v1253 = vtanh.pop %v1252
  %1255 = vrot.lane.b32.xlu0 %v1253, 32
  %v1256 = vpop.permute.xlu0 %1255
  %v1258 = vmul.f32 %v1240, %v1256
  %1260 = vrot.lane.b32.xlu0 %v1258, 80
  %v1261 = vpop.permute.xlu0 %1260
  %s1263 = scalar_lea.vmem [#allocation4], 8
  %1264 = vst.msk [vmem:[%s1263] sm:$0x3] %vm393, %v1261
  %s1265 = scalar_lea.vmem [#allocation3], 6
  %v1266 = vld [vmem:[%s1265] sm:$0x3]
  %v1267 = vsel %vm99, %v1156, 0
  %1269 = vmatprep.subr.mxu0 0.0
  %1270 = vmatpush1.msra.mxu0 %v288
  %1271 = vmatprep.subr.mxu0 0.0
  %1272 = vmatpush1.msra.mxu0 %v289
  %1273 = vmatprep.subr.mxu0 0.0
  %1274 = vmatpush1.msra.mxu0 0.0
  %1275 = vmatprep.subr.mxu0 0.0
  %1276 = vmatpush1.msra.mxu0 0.0
  %1277 = vmatprep.subr.mxu0 0.0
  %1278 = vmatpush1.msra.mxu0 0.0
  %1279 = vmatprep.subr.mxu0 0.0
  %1280 = vmatpush1.msra.mxu0 0.0
  %1281 = vmatprep.subr.mxu0 0.0
  %1282 = vmatpush1.msra.mxu0 0.0
  %1283 = vmatprep.subr.mxu0 0.0
  %1284 = vmatpush1.msra.mxu0 0.0
  %1285 = vmatprep.subr.mxu0 0.0
  %1286 = vmatpush1.msra.mxu0 0.0
  %1287 = vmatprep.subr.mxu0 0.0
  %1288 = vmatpush1.msra.mxu0 0.0
  %1289 = vmatprep.subr.mxu0 0.0
  %1290 = vmatpush1.msra.mxu0 0.0
  %1291 = vmatprep.subr.mxu0 0.0
  %1292 = vmatpush1.msra.mxu0 0.0
  %1293 = vmatprep.subr.mxu0 0.0
  %1294 = vmatpush1.msra.mxu0 0.0
  %1295 = vmatprep.subr.mxu0 0.0
  %1296 = vmatpush1.msra.mxu0 0.0
  %1297 = vmatprep.subr.mxu0 0.0
  %1298 = vmatpush1.msra.mxu0 0.0
  %1299 = vmatprep.subr.mxu0 0.0
  %1300 = vmatpush1.msra.mxu0 0.0
  %1301 = vmatprep.subr.mxu0 0.0
  %1302 = vmatpush1.msra.mxu0 0.0
  %1303 = vmatprep.subr.mxu0 0.0
  %1304 = vmatpush1.msra.mxu0 0.0
  %1305 = vmatprep.subr.mxu0 0.0
  %1306 = vmatpush1.msra.mxu0 0.0
  %1307 = vmatprep.subr.mxu0 0.0
  %1308 = vmatpush1.msra.mxu0 0.0
  %1309 = vmatprep.subr.mxu0 0.0
  %1310 = vmatpush1.msra.mxu0 0.0
  %1311 = vmatprep.subr.mxu0 0.0
  %1312 = vmatpush1.msra.mxu0 0.0
  %1313 = vmatprep.subr.mxu0 0.0
  %1314 = vmatpush1.msra.mxu0 0.0
  %1315 = vmatprep.subr.mxu0 0.0
  %1316 = vmatpush1.msra.mxu0 0.0
  %1317 = vmatprep.subr.mxu0 0.0
  %1318 = vmatpush1.msra.mxu0 0.0
  %1319 = vmatprep.subr.mxu0 0.0
  %1320 = vmatpush1.msra.mxu0 0.0
  %1321 = vmatprep.subr.mxu0 0.0
  %1322 = vmatpush1.msra.mxu0 0.0
  %1323 = vmatprep.subr.mxu0 0.0
  %1324 = vmatpush1.msra.mxu0 0.0
  %1325 = vmatprep.subr.mxu0 0.0
  %1326 = vmatpush1.msra.mxu0 0.0
  %1327 = vmatprep.subr.mxu0 0.0
  %1328 = vmatpush1.msra.mxu0 0.0
  %1329 = vmatprep.subr.mxu0 0.0
  %1330 = vmatpush1.msra.mxu0 0.0
  %1331 = vmatprep.subr.mxu0 0.0
  %1332 = vmatpush1.msra.mxu0 0.0
  %1333 = vmatprep.mubr.f32.mxu0 0.0
  %1334 = vmatmul.mubr.f32.gmra.mrb[0].mxu0 %v1267
  %v1335 = vpop.f32.mrb[0].mxu0
  %v1336 = vadd.f32 0.0, %v1335
  %v1337 = vpop.f32.mrb[0].mxu0
  %1338 = vdwg.mxu0
  %v1339 = vadd.f32 %v1266, %v1336
  %v1340 = vxor.u32 %v1339, 2147483648
  %v1341 = vmul.f32 %v1340, 1.442695
  %v1342 = vpow.pop %v1341
  %v1343 = vadd.f32 %v1342, 1.0
  %v1344 = vrcp.pop %v1343
  %v1345 = vmul.f32 1.0, %v1344
  %v1346 = vtanh.pop %v1339
  %v1347 = vmul.f32 %v1345, %v1153
  %1349 = vrot.lane.b32.xlu0 %v1346, 96
  %v1350 = vpop.permute.xlu0 %1349
  %v1352 = vmul.f32 %v1345, %v1350
  %1354 = vrot.lane.b32.xlu0 %v1352, 16
  %v1355 = vpop.permute.xlu0 %1354
  %v1357 = vadd.f32 %v1347, %v1355
  %v1358 = vtanh.pop %v1357
  %1360 = vrot.lane.b32.xlu0 %v1358, 32
  %v1361 = vpop.permute.xlu0 %1360
  %v1363 = vmul.f32 %v1345, %v1361
  %vm1364 = vcmp.gt.s32.totalorder %v285, 3
  %v1365 = vsel %vm1364, 1, 0
  %1366 = vset.pattern.permute.xlu0 0
  %1367 = vperm.xlu0 %1366, %v1365
  %v1368 = vpop.permute.xlu0 %1367
  %vm1369 = vcmp.eq.s32.totalorder %v1368, 1
  %v1370 = vsel %vm1369, %v1363, %v1152
  %v1371 = vsel %vm1369, %v1357, %v1153
  %1373 = vrot.lane.b32.xlu0 %v1370, 80
  %v1374 = vpop.permute.xlu0 %1373
  %s1376 = scalar_lea.vmem [#allocation5], 6
  %1377 = vst.msk [vmem:[%s1376] sm:$0x3] %vm393, %v1374
  %s1378 = scalar_lea.vmem [#allocation2], 10
  %v1379 = vld [vmem:[%s1378] sm:$0x3]
  %v1380 = vsel %vm99, %v1261, 0
  %1382 = vmatprep.subr.mxu0 0.0
  %1383 = vmatpush1.msra.mxu0 %v286
  %1384 = vmatprep.subr.mxu0 0.0
  %1385 = vmatpush1.msra.mxu0 %v287
  %1386 = vmatprep.subr.mxu0 0.0
  %1387 = vmatpush1.msra.mxu0 0.0
  %1388 = vmatprep.subr.mxu0 0.0
  %1389 = vmatpush1.msra.mxu0 0.0
  %1390 = vmatprep.subr.mxu0 0.0
  %1391 = vmatpush1.msra.mxu0 0.0
  %1392 = vmatprep.subr.mxu0 0.0
  %1393 = vmatpush1.msra.mxu0 0.0
  %1394 = vmatprep.subr.mxu0 0.0
  %1395 = vmatpush1.msra.mxu0 0.0
  %1396 = vmatprep.subr.mxu0 0.0
  %1397 = vmatpush1.msra.mxu0 0.0
  %1398 = vmatprep.subr.mxu0 0.0
  %1399 = vmatpush1.msra.mxu0 0.0
  %1400 = vmatprep.subr.mxu0 0.0
  %1401 = vmatpush1.msra.mxu0 0.0
  %1402 = vmatprep.subr.mxu0 0.0
  %1403 = vmatpush1.msra.mxu0 0.0
  %1404 = vmatprep.subr.mxu0 0.0
  %1405 = vmatpush1.msra.mxu0 0.0
  %1406 = vmatprep.subr.mxu0 0.0
  %1407 = vmatpush1.msra.mxu0 0.0
  %1408 = vmatprep.subr.mxu0 0.0
  %1409 = vmatpush1.msra.mxu0 0.0
  %1410 = vmatprep.subr.mxu0 0.0
  %1411 = vmatpush1.msra.mxu0 0.0
  %1412 = vmatprep.subr.mxu0 0.0
  %1413 = vmatpush1.msra.mxu0 0.0
  %1414 = vmatprep.subr.mxu0 0.0
  %1415 = vmatpush1.msra.mxu0 0.0
  %1416 = vmatprep.subr.mxu0 0.0
  %1417 = vmatpush1.msra.mxu0 0.0
  %1418 = vmatprep.subr.mxu0 0.0
  %1419 = vmatpush1.msra.mxu0 0.0
  %1420 = vmatprep.subr.mxu0 0.0
  %1421 = vmatpush1.msra.mxu0 0.0
  %1422 = vmatprep.subr.mxu0 0.0
  %1423 = vmatpush1.msra.mxu0 0.0
  %1424 = vmatprep.subr.mxu0 0.0
  %1425 = vmatpush1.msra.mxu0 0.0
  %1426 = vmatprep.subr.mxu0 0.0
  %1427 = vmatpush1.msra.mxu0 0.0
  %1428 = vmatprep.subr.mxu0 0.0
  %1429 = vmatpush1.msra.mxu0 0.0
  %1430 = vmatprep.subr.mxu0 0.0
  %1431 = vmatpush1.msra.mxu0 0.0
  %1432 = vmatprep.subr.mxu0 0.0
  %1433 = vmatpush1.msra.mxu0 0.0
  %1434 = vmatprep.subr.mxu0 0.0
  %1435 = vmatpush1.msra.mxu0 0.0
  %1436 = vmatprep.subr.mxu0 0.0
  %1437 = vmatpush1.msra.mxu0 0.0
  %1438 = vmatprep.subr.mxu0 0.0
  %1439 = vmatpush1.msra.mxu0 0.0
  %1440 = vmatprep.subr.mxu0 0.0
  %1441 = vmatpush1.msra.mxu0 0.0
  %1442 = vmatprep.subr.mxu0 0.0
  %1443 = vmatpush1.msra.mxu0 0.0
  %1444 = vmatprep.subr.mxu0 0.0
  %1445 = vmatpush1.msra.mxu0 0.0
  %1446 = vmatprep.mubr.f32.mxu0 0.0
  %1447 = vmatmul.mubr.f32.gmra.mrb[0].mxu0 %v1380
  %v1448 = vpop.f32.mrb[0].mxu0
  %v1449 = vadd.f32 0.0, %v1448
  %v1450 = vpop.f32.mrb[0].mxu0
  %1451 = vdwg.mxu0
  %v1452 = vadd.f32 %v1379, %v1449
  %v1453 = vxor.u32 %v1452, 2147483648
  %v1454 = vmul.f32 %v1453, 1.442695
  %v1455 = vpow.pop %v1454
  %v1456 = vadd.f32 %v1455, 1.0
  %v1457 = vrcp.pop %v1456
  %v1458 = vmul.f32 1.0, %v1457
  %v1459 = vtanh.pop %v1452
  %v1460 = vmul.f32 %v1458, %v1252
  %1462 = vrot.lane.b32.xlu0 %v1459, 96
  %v1463 = vpop.permute.xlu0 %1462
  %v1465 = vmul.f32 %v1458, %v1463
  %1467 = vrot.lane.b32.xlu0 %v1465, 16
  %v1468 = vpop.permute.xlu0 %1467
  %v1470 = vadd.f32 %v1460, %v1468
  %v1471 = vtanh.pop %v1470
  %1473 = vrot.lane.b32.xlu0 %v1471, 32
  %v1474 = vpop.permute.xlu0 %1473
  %v1476 = vmul.f32 %v1458, %v1474
  %1478 = vrot.lane.b32.xlu0 %v1476, 80
  %v1479 = vpop.permute.xlu0 %1478
  %s1481 = scalar_lea.vmem [#allocation4], 10
  %1482 = vst.msk [vmem:[%s1481] sm:$0x3] %vm393, %v1479
  %s1483 = scalar_lea.vmem [#allocation3], 4
  %v1484 = vld [vmem:[%s1483] sm:$0x3]
  %v1485 = vsel %vm99, %v1374, 0
  %1487 = vmatprep.subr.mxu0 0.0
  %1488 = vmatpush1.msra.mxu0 %v288
  %1489 = vmatprep.subr.mxu0 0.0
  %1490 = vmatpush1.msra.mxu0 %v289
  %1491 = vmatprep.subr.mxu0 0.0
  %1492 = vmatpush1.msra.mxu0 0.0
  %1493 = vmatprep.subr.mxu0 0.0
  %1494 = vmatpush1.msra.mxu0 0.0
  %1495 = vmatprep.subr.mxu0 0.0
  %1496 = vmatpush1.msra.mxu0 0.0
  %1497 = vmatprep.subr.mxu0 0.0
  %1498 = vmatpush1.msra.mxu0 0.0
  %1499 = vmatprep.subr.mxu0 0.0
  %1500 = vmatpush1.msra.mxu0 0.0
  %1501 = vmatprep.subr.mxu0 0.0
  %1502 = vmatpush1.msra.mxu0 0.0
  %1503 = vmatprep.subr.mxu0 0.0
  %1504 = vmatpush1.msra.mxu0 0.0
  %1505 = vmatprep.subr.mxu0 0.0
  %1506 = vmatpush1.msra.mxu0 0.0
  %1507 = vmatprep.subr.mxu0 0.0
  %1508 = vmatpush1.msra.mxu0 0.0
  %1509 = vmatprep.subr.mxu0 0.0
  %1510 = vmatpush1.msra.mxu0 0.0
  %1511 = vmatprep.subr.mxu0 0.0
  %1512 = vmatpush1.msra.mxu0 0.0
  %1513 = vmatprep.subr.mxu0 0.0
  %1514 = vmatpush1.msra.mxu0 0.0
  %1515 = vmatprep.subr.mxu0 0.0
  %1516 = vmatpush1.msra.mxu0 0.0
  %1517 = vmatprep.subr.mxu0 0.0
  %1518 = vmatpush1.msra.mxu0 0.0
  %1519 = vmatprep.subr.mxu0 0.0
  %1520 = vmatpush1.msra.mxu0 0.0
  %1521 = vmatprep.subr.mxu0 0.0
  %1522 = vmatpush1.msra.mxu0 0.0
  %1523 = vmatprep.subr.mxu0 0.0
  %1524 = vmatpush1.msra.mxu0 0.0
  %1525 = vmatprep.subr.mxu0 0.0
  %1526 = vmatpush1.msra.mxu0 0.0
  %1527 = vmatprep.subr.mxu0 0.0
  %1528 = vmatpush1.msra.mxu0 0.0
  %1529 = vmatprep.subr.mxu0 0.0
  %1530 = vmatpush1.msra.mxu0 0.0
  %1531 = vmatprep.subr.mxu0 0.0
  %1532 = vmatpush1.msra.mxu0 0.0
  %1533 = vmatprep.subr.mxu0 0.0
  %1534 = vmatpush1.msra.mxu0 0.0
  %1535 = vmatprep.subr.mxu0 0.0
  %1536 = vmatpush1.msra.mxu0 0.0
  %1537 = vmatprep.subr.mxu0 0.0
  %1538 = vmatpush1.msra.mxu0 0.0
  %1539 = vmatprep.subr.mxu0 0.0
  %1540 = vmatpush1.msra.mxu0 0.0
  %1541 = vmatprep.subr.mxu0 0.0
  %1542 = vmatpush1.msra.mxu0 0.0
  %1543 = vmatprep.subr.mxu0 0.0
  %1544 = vmatpush1.msra.mxu0 0.0
  %1545 = vmatprep.subr.mxu0 0.0
  %1546 = vmatpush1.msra.mxu0 0.0
  %1547 = vmatprep.subr.mxu0 0.0
  %1548 = vmatpush1.msra.mxu0 0.0
  %1549 = vmatprep.subr.mxu0 0.0
  %1550 = vmatpush1.msra.mxu0 0.0
  %1551 = vmatprep.mubr.f32.mxu0 0.0
  %1552 = vmatmul.mubr.f32.gmra.mrb[0].mxu0 %v1485
  %v1553 = vpop.f32.mrb[0].mxu0
  %v1554 = vadd.f32 0.0, %v1553
  %v1555 = vpop.f32.mrb[0].mxu0
  %1556 = vdwg.mxu0
  %v1557 = vadd.f32 %v1484, %v1554
  %v1558 = vxor.u32 %v1557, 2147483648
  %v1559 = vmul.f32 %v1558, 1.442695
  %v1560 = vpow.pop %v1559
  %v1561 = vadd.f32 %v1560, 1.0
  %v1562 = vrcp.pop %v1561
  %v1563 = vmul.f32 1.0, %v1562
  %v1564 = vtanh.pop %v1557
  %v1565 = vmul.f32 %v1563, %v1371
  %1567 = vrot.lane.b32.xlu0 %v1564, 96
  %v1568 = vpop.permute.xlu0 %1567
  %v1570 = vmul.f32 %v1563, %v1568
  %1572 = vrot.lane.b32.xlu0 %v1570, 16
  %v1573 = vpop.permute.xlu0 %1572
  %v1575 = vadd.f32 %v1565, %v1573
  %v1576 = vtanh.pop %v1575
  %1578 = vrot.lane.b32.xlu0 %v1576, 32
  %v1579 = vpop.permute.xlu0 %1578
  %v1581 = vmul.f32 %v1563, %v1579
  %vm1582 = vcmp.gt.s32.totalorder %v285, 2
  %v1583 = vsel %vm1582, 1, 0
  %1584 = vset.pattern.permute.xlu0 0
  %1585 = vperm.xlu0 %1584, %v1583
  %v1586 = vpop.permute.xlu0 %1585
  %vm1587 = vcmp.eq.s32.totalorder %v1586, 1
  %v1588 = vsel %vm1587, %v1581, %v1370
  %v1589 = vsel %vm1587, %v1575, %v1371
  %1591 = vrot.lane.b32.xlu0 %v1588, 80
  %v1592 = vpop.permute.xlu0 %1591
  %s1594 = scalar_lea.vmem [#allocation5], 4
  %1595 = vst.msk [vmem:[%s1594] sm:$0x3] %vm393, %v1592
  %s1596 = scalar_lea.vmem [#allocation2], 12
  %v1597 = vld [vmem:[%s1596] sm:$0x3]
  %v1598 = vsel %vm99, %v1479, 0
  %1600 = vmatprep.subr.mxu0 0.0
  %1601 = vmatpush1.msra.mxu0 %v286
  %1602 = vmatprep.subr.mxu0 0.0
  %1603 = vmatpush1.msra.mxu0 %v287
  %1604 = vmatprep.subr.mxu0 0.0
  %1605 = vmatpush1.msra.mxu0 0.0
  %1606 = vmatprep.subr.mxu0 0.0
  %1607 = vmatpush1.msra.mxu0 0.0
  %1608 = vmatprep.subr.mxu0 0.0
  %1609 = vmatpush1.msra.mxu0 0.0
  %1610 = vmatprep.subr.mxu0 0.0
  %1611 = vmatpush1.msra.mxu0 0.0
  %1612 = vmatprep.subr.mxu0 0.0
  %1613 = vmatpush1.msra.mxu0 0.0
  %1614 = vmatprep.subr.mxu0 0.0
  %1615 = vmatpush1.msra.mxu0 0.0
  %1616 = vmatprep.subr.mxu0 0.0
  %1617 = vmatpush1.msra.mxu0 0.0
  %1618 = vmatprep.subr.mxu0 0.0
  %1619 = vmatpush1.msra.mxu0 0.0
  %1620 = vmatprep.subr.mxu0 0.0
  %1621 = vmatpush1.msra.mxu0 0.0
  %1622 = vmatprep.subr.mxu0 0.0
  %1623 = vmatpush1.msra.mxu0 0.0
  %1624 = vmatprep.subr.mxu0 0.0
  %1625 = vmatpush1.msra.mxu0 0.0
  %1626 = vmatprep.subr.mxu0 0.0
  %1627 = vmatpush1.msra.mxu0 0.0
  %1628 = vmatprep.subr.mxu0 0.0
  %1629 = vmatpush1.msra.mxu0 0.0
  %1630 = vmatprep.subr.mxu0 0.0
  %1631 = vmatpush1.msra.mxu0 0.0
  %1632 = vmatprep.subr.mxu0 0.0
  %1633 = vmatpush1.msra.mxu0 0.0
  %1634 = vmatprep.subr.mxu0 0.0
  %1635 = vmatpush1.msra.mxu0 0.0
  %1636 = vmatprep.subr.mxu0 0.0
  %1637 = vmatpush1.msra.mxu0 0.0
  %1638 = vmatprep.subr.mxu0 0.0
  %1639 = vmatpush1.msra.mxu0 0.0
  %1640 = vmatprep.subr.mxu0 0.0
  %1641 = vmatpush1.msra.mxu0 0.0
  %1642 = vmatprep.subr.mxu0 0.0
  %1643 = vmatpush1.msra.mxu0 0.0
  %1644 = vmatprep.subr.mxu0 0.0
  %1645 = vmatpush1.msra.mxu0 0.0
  %1646 = vmatprep.subr.mxu0 0.0
  %1647 = vmatpush1.msra.mxu0 0.0
  %1648 = vmatprep.subr.mxu0 0.0
  %1649 = vmatpush1.msra.mxu0 0.0
  %1650 = vmatprep.subr.mxu0 0.0
  %1651 = vmatpush1.msra.mxu0 0.0
  %1652 = vmatprep.subr.mxu0 0.0
  %1653 = vmatpush1.msra.mxu0 0.0
  %1654 = vmatprep.subr.mxu0 0.0
  %1655 = vmatpush1.msra.mxu0 0.0
  %1656 = vmatprep.subr.mxu0 0.0
  %1657 = vmatpush1.msra.mxu0 0.0
  %1658 = vmatprep.subr.mxu0 0.0
  %1659 = vmatpush1.msra.mxu0 0.0
  %1660 = vmatprep.subr.mxu0 0.0
  %1661 = vmatpush1.msra.mxu0 0.0
  %1662 = vmatprep.subr.mxu0 0.0
  %1663 = vmatpush1.msra.mxu0 0.0
  %1664 = vmatprep.mubr.f32.mxu0 0.0
  %1665 = vmatmul.mubr.f32.gmra.mrb[0].mxu0 %v1598
  %v1666 = vpop.f32.mrb[0].mxu0
  %v1667 = vadd.f32 0.0, %v1666
  %v1668 = vpop.f32.mrb[0].mxu0
  %1669 = vdwg.mxu0
  %v1670 = vadd.f32 %v1597, %v1667
  %v1671 = vxor.u32 %v1670, 2147483648
  %v1672 = vmul.f32 %v1671, 1.442695
  %v1673 = vpow.pop %v1672
  %v1674 = vadd.f32 %v1673, 1.0
  %v1675 = vrcp.pop %v1674
  %v1676 = vmul.f32 1.0, %v1675
  %v1677 = vtanh.pop %v1670
  %v1678 = vmul.f32 %v1676, %v1470
  %1680 = vrot.lane.b32.xlu0 %v1677, 96
  %v1681 = vpop.permute.xlu0 %1680
  %v1683 = vmul.f32 %v1676, %v1681
  %1685 = vrot.lane.b32.xlu0 %v1683, 16
  %v1686 = vpop.permute.xlu0 %1685
  %v1688 = vadd.f32 %v1678, %v1686
  %v1689 = vtanh.pop %v1688
  %1691 = vrot.lane.b32.xlu0 %v1689, 32
  %v1692 = vpop.permute.xlu0 %1691
  %v1694 = vmul.f32 %v1676, %v1692
  %1696 = vrot.lane.b32.xlu0 %v1694, 80
  %v1697 = vpop.permute.xlu0 %1696
  %s1699 = scalar_lea.vmem [#allocation4], 12
  %1700 = vst.msk [vmem:[%s1699] sm:$0x3] %vm393, %v1697
  %s1701 = scalar_lea.vmem [#allocation3], 2
  %v1702 = vld [vmem:[%s1701] sm:$0x3]
  %v1703 = vsel %vm99, %v1592, 0
  %1705 = vmatprep.subr.mxu0 0.0
  %1706 = vmatpush1.msra.mxu0 %v288
  %1707 = vmatprep.subr.mxu0 0.0
  %1708 = vmatpush1.msra.mxu0 %v289
  %1709 = vmatprep.subr.mxu0 0.0
  %1710 = vmatpush1.msra.mxu0 0.0
  %1711 = vmatprep.subr.mxu0 0.0
  %1712 = vmatpush1.msra.mxu0 0.0
  %1713 = vmatprep.subr.mxu0 0.0
  %1714 = vmatpush1.msra.mxu0 0.0
  %1715 = vmatprep.subr.mxu0 0.0
  %1716 = vmatpush1.msra.mxu0 0.0
  %1717 = vmatprep.subr.mxu0 0.0
  %1718 = vmatpush1.msra.mxu0 0.0
  %1719 = vmatprep.subr.mxu0 0.0
  %1720 = vmatpush1.msra.mxu0 0.0
  %1721 = vmatprep.subr.mxu0 0.0
  %1722 = vmatpush1.msra.mxu0 0.0
  %1723 = vmatprep.subr.mxu0 0.0
  %1724 = vmatpush1.msra.mxu0 0.0
  %1725 = vmatprep.subr.mxu0 0.0
  %1726 = vmatpush1.msra.mxu0 0.0
  %1727 = vmatprep.subr.mxu0 0.0
  %1728 = vmatpush1.msra.mxu0 0.0
  %1729 = vmatprep.subr.mxu0 0.0
  %1730 = vmatpush1.msra.mxu0 0.0
  %1731 = vmatprep.subr.mxu0 0.0
  %1732 = vmatpush1.msra.mxu0 0.0
  %1733 = vmatprep.subr.mxu0 0.0
  %1734 = vmatpush1.msra.mxu0 0.0
  %1735 = vmatprep.subr.mxu0 0.0
  %1736 = vmatpush1.msra.mxu0 0.0
  %1737 = vmatprep.subr.mxu0 0.0
  %1738 = vmatpush1.msra.mxu0 0.0
  %1739 = vmatprep.subr.mxu0 0.0
  %1740 = vmatpush1.msra.mxu0 0.0
  %1741 = vmatprep.subr.mxu0 0.0
  %1742 = vmatpush1.msra.mxu0 0.0
  %1743 = vmatprep.subr.mxu0 0.0
  %1744 = vmatpush1.msra.mxu0 0.0
  %1745 = vmatprep.subr.mxu0 0.0
  %1746 = vmatpush1.msra.mxu0 0.0
  %1747 = vmatprep.subr.mxu0 0.0
  %1748 = vmatpush1.msra.mxu0 0.0
  %1749 = vmatprep.subr.mxu0 0.0
  %1750 = vmatpush1.msra.mxu0 0.0
  %1751 = vmatprep.subr.mxu0 0.0
  %1752 = vmatpush1.msra.mxu0 0.0
  %1753 = vmatprep.subr.mxu0 0.0
  %1754 = vmatpush1.msra.mxu0 0.0
  %1755 = vmatprep.subr.mxu0 0.0
  %1756 = vmatpush1.msra.mxu0 0.0
  %1757 = vmatprep.subr.mxu0 0.0
  %1758 = vmatpush1.msra.mxu0 0.0
  %1759 = vmatprep.subr.mxu0 0.0
  %1760 = vmatpush1.msra.mxu0 0.0
  %1761 = vmatprep.subr.mxu0 0.0
  %1762 = vmatpush1.msra.mxu0 0.0
  %1763 = vmatprep.subr.mxu0 0.0
  %1764 = vmatpush1.msra.mxu0 0.0
  %1765 = vmatprep.subr.mxu0 0.0
  %1766 = vmatpush1.msra.mxu0 0.0
  %1767 = vmatprep.subr.mxu0 0.0
  %1768 = vmatpush1.msra.mxu0 0.0
  %1769 = vmatprep.mubr.f32.mxu0 0.0
  %1770 = vmatmul.mubr.f32.gmra.mrb[0].mxu0 %v1703
  %v1771 = vpop.f32.mrb[0].mxu0
  %v1772 = vadd.f32 0.0, %v1771
  %v1773 = vpop.f32.mrb[0].mxu0
  %1774 = vdwg.mxu0
  %v1775 = vadd.f32 %v1702, %v1772
  %v1776 = vxor.u32 %v1775, 2147483648
  %v1777 = vmul.f32 %v1776, 1.442695
  %v1778 = vpow.pop %v1777
  %v1779 = vadd.f32 %v1778, 1.0
  %v1780 = vrcp.pop %v1779
  %v1781 = vmul.f32 1.0, %v1780
  %v1782 = vtanh.pop %v1775
  %v1783 = vmul.f32 %v1781, %v1589
  %1785 = vrot.lane.b32.xlu0 %v1782, 96
  %v1786 = vpop.permute.xlu0 %1785
  %v1788 = vmul.f32 %v1781, %v1786
  %1790 = vrot.lane.b32.xlu0 %v1788, 16
  %v1791 = vpop.permute.xlu0 %1790
  %v1793 = vadd.f32 %v1783, %v1791
  %v1794 = vtanh.pop %v1793
  %1796 = vrot.lane.b32.xlu0 %v1794, 32
  %v1797 = vpop.permute.xlu0 %1796
  %v1799 = vmul.f32 %v1781, %v1797
  %vm1800 = vcmp.gt.s32.totalorder %v285, 1
  %v1801 = vsel %vm1800, 1, 0
  %1802 = vset.pattern.permute.xlu0 0
  %1803 = vperm.xlu0 %1802, %v1801
  %v1804 = vpop.permute.xlu0 %1803
  %vm1805 = vcmp.eq.s32.totalorder %v1804, 1
  %v1806 = vsel %vm1805, %v1799, %v1588
  %v1807 = vsel %vm1805, %v1793, %v1589
  %1809 = vrot.lane.b32.xlu0 %v1806, 80
  %v1810 = vpop.permute.xlu0 %1809
  %s1812 = scalar_lea.vmem [#allocation5], 2
  %1813 = vst.msk [vmem:[%s1812] sm:$0x3] %vm393, %v1810
  %s1814 = scalar_lea.vmem [#allocation2], 14
  %v1815 = vld [vmem:[%s1814] sm:$0x3]
  %v1816 = vsel %vm99, %v1697, 0
  %1818 = vmatprep.subr.mxu0 0.0
  %1819 = vmatpush1.msra.mxu0 %v286
  %1820 = vmatprep.subr.mxu0 0.0
  %1821 = vmatpush1.msra.mxu0 %v287
  %1822 = vmatprep.subr.mxu0 0.0
  %1823 = vmatpush1.msra.mxu0 0.0
  %1824 = vmatprep.subr.mxu0 0.0
  %1825 = vmatpush1.msra.mxu0 0.0
  %1826 = vmatprep.subr.mxu0 0.0
  %1827 = vmatpush1.msra.mxu0 0.0
  %1828 = vmatprep.subr.mxu0 0.0
  %1829 = vmatpush1.msra.mxu0 0.0
  %1830 = vmatprep.subr.mxu0 0.0
  %1831 = vmatpush1.msra.mxu0 0.0
  %1832 = vmatprep.subr.mxu0 0.0
  %1833 = vmatpush1.msra.mxu0 0.0
  %1834 = vmatprep.subr.mxu0 0.0
  %1835 = vmatpush1.msra.mxu0 0.0
  %1836 = vmatprep.subr.mxu0 0.0
  %1837 = vmatpush1.msra.mxu0 0.0
  %1838 = vmatprep.subr.mxu0 0.0
  %1839 = vmatpush1.msra.mxu0 0.0
  %1840 = vmatprep.subr.mxu0 0.0
  %1841 = vmatpush1.msra.mxu0 0.0
  %1842 = vmatprep.subr.mxu0 0.0
  %1843 = vmatpush1.msra.mxu0 0.0
  %1844 = vmatprep.subr.mxu0 0.0
  %1845 = vmatpush1.msra.mxu0 0.0
  %1846 = vmatprep.subr.mxu0 0.0
  %1847 = vmatpush1.msra.mxu0 0.0
  %1848 = vmatprep.subr.mxu0 0.0
  %1849 = vmatpush1.msra.mxu0 0.0
  %1850 = vmatprep.subr.mxu0 0.0
  %1851 = vmatpush1.msra.mxu0 0.0
  %1852 = vmatprep.subr.mxu0 0.0
  %1853 = vmatpush1.msra.mxu0 0.0
  %1854 = vmatprep.subr.mxu0 0.0
  %1855 = vmatpush1.msra.mxu0 0.0
  %1856 = vmatprep.subr.mxu0 0.0
  %1857 = vmatpush1.msra.mxu0 0.0
  %1858 = vmatprep.subr.mxu0 0.0
  %1859 = vmatpush1.msra.mxu0 0.0
  %1860 = vmatprep.subr.mxu0 0.0
  %1861 = vmatpush1.msra.mxu0 0.0
  %1862 = vmatprep.subr.mxu0 0.0
  %1863 = vmatpush1.msra.mxu0 0.0
  %1864 = vmatprep.subr.mxu0 0.0
  %1865 = vmatpush1.msra.mxu0 0.0
  %1866 = vmatprep.subr.mxu0 0.0
  %1867 = vmatpush1.msra.mxu0 0.0
  %1868 = vmatprep.subr.mxu0 0.0
  %1869 = vmatpush1.msra.mxu0 0.0
  %1870 = vmatprep.subr.mxu0 0.0
  %1871 = vmatpush1.msra.mxu0 0.0
  %1872 = vmatprep.subr.mxu0 0.0
  %1873 = vmatpush1.msra.mxu0 0.0
  %1874 = vmatprep.subr.mxu0 0.0
  %1875 = vmatpush1.msra.mxu0 0.0
  %1876 = vmatprep.subr.mxu0 0.0
  %1877 = vmatpush1.msra.mxu0 0.0
  %1878 = vmatprep.subr.mxu0 0.0
  %1879 = vmatpush1.msra.mxu0 0.0
  %1880 = vmatprep.subr.mxu0 0.0
  %1881 = vmatpush1.msra.mxu0 0.0
  %1882 = vmatprep.mubr.f32.mxu0 0.0
  %1883 = vmatmul.mubr.f32.gmra.mrb[0].mxu0 %v1816
  %v1884 = vpop.f32.mrb[0].mxu0
  %v1885 = vadd.f32 0.0, %v1884
  %v1886 = vpop.f32.mrb[0].mxu0
  %1887 = vdwg.mxu0
  %v1888 = vadd.f32 %v1815, %v1885
  %v1889 = vxor.u32 %v1888, 2147483648
  %v1890 = vmul.f32 %v1889, 1.442695
  %v1891 = vpow.pop %v1890
  %v1892 = vadd.f32 %v1891, 1.0
  %v1893 = vrcp.pop %v1892
  %v1894 = vmul.f32 1.0, %v1893
  %v1895 = vtanh.pop %v1888
  %v1896 = vmul.f32 %v1894, %v1688
  %1898 = vrot.lane.b32.xlu0 %v1895, 96
  %v1899 = vpop.permute.xlu0 %1898
  %v1901 = vmul.f32 %v1894, %v1899
  %1903 = vrot.lane.b32.xlu0 %v1901, 16
  %v1904 = vpop.permute.xlu0 %1903
  %v1906 = vadd.f32 %v1896, %v1904
  %v1907 = vtanh.pop %v1906
  %1909 = vrot.lane.b32.xlu0 %v1907, 32
  %v1910 = vpop.permute.xlu0 %1909
  %v1912 = vmul.f32 %v1894, %v1910
  %1914 = vrot.lane.b32.xlu0 %v1912, 80
  %v1915 = vpop.permute.xlu0 %1914
  %s1917 = scalar_lea.vmem [#allocation4], 14
  %1918 = vst.msk [vmem:[%s1917] sm:$0x3] %vm393, %v1915
  %v1919 = vld [vmem:[#allocation3] sm:$0x3]
  %v1920 = vsel %vm99, %v1810, 0
  %1922 = vmatprep.subr.mxu0 0.0
  %1923 = vmatpush1.msra.mxu0 %v288
  %1924 = vmatprep.subr.mxu0 0.0
  %1925 = vmatpush1.msra.mxu0 %v289
  %1926 = vmatprep.subr.mxu0 0.0
  %1927 = vmatpush1.msra.mxu0 0.0
  %1928 = vmatprep.subr.mxu0 0.0
  %1929 = vmatpush1.msra.mxu0 0.0
  %1930 = vmatprep.subr.mxu0 0.0
  %1931 = vmatpush1.msra.mxu0 0.0
  %1932 = vmatprep.subr.mxu0 0.0
  %1933 = vmatpush1.msra.mxu0 0.0
  %1934 = vmatprep.subr.mxu0 0.0
  %1935 = vmatpush1.msra.mxu0 0.0
  %1936 = vmatprep.subr.mxu0 0.0
  %1937 = vmatpush1.msra.mxu0 0.0
  %1938 = vmatprep.subr.mxu0 0.0
  %1939 = vmatpush1.msra.mxu0 0.0
  %1940 = vmatprep.subr.mxu0 0.0
  %1941 = vmatpush1.msra.mxu0 0.0
  %1942 = vmatprep.subr.mxu0 0.0
  %1943 = vmatpush1.msra.mxu0 0.0
  %1944 = vmatprep.subr.mxu0 0.0
  %1945 = vmatpush1.msra.mxu0 0.0
  %1946 = vmatprep.subr.mxu0 0.0
  %1947 = vmatpush1.msra.mxu0 0.0
  %1948 = vmatprep.subr.mxu0 0.0
  %1949 = vmatpush1.msra.mxu0 0.0
  %1950 = vmatprep.subr.mxu0 0.0
  %1951 = vmatpush1.msra.mxu0 0.0
  %1952 = vmatprep.subr.mxu0 0.0
  %1953 = vmatpush1.msra.mxu0 0.0
  %1954 = vmatprep.subr.mxu0 0.0
  %1955 = vmatpush1.msra.mxu0 0.0
  %1956 = vmatprep.subr.mxu0 0.0
  %1957 = vmatpush1.msra.mxu0 0.0
  %1958 = vmatprep.subr.mxu0 0.0
  %1959 = vmatpush1.msra.mxu0 0.0
  %1960 = vmatprep.subr.mxu0 0.0
  %1961 = vmatpush1.msra.mxu0 0.0
  %1962 = vmatprep.subr.mxu0 0.0
  %1963 = vmatpush1.msra.mxu0 0.0
  %1964 = vmatprep.subr.mxu0 0.0
  %1965 = vmatpush1.msra.mxu0 0.0
  %1966 = vmatprep.subr.mxu0 0.0
  %1967 = vmatpush1.msra.mxu0 0.0
  %1968 = vmatprep.subr.mxu0 0.0
  %1969 = vmatpush1.msra.mxu0 0.0
  %1970 = vmatprep.subr.mxu0 0.0
  %1971 = vmatpush1.msra.mxu0 0.0
  %1972 = vmatprep.subr.mxu0 0.0
  %1973 = vmatpush1.msra.mxu0 0.0
  %1974 = vmatprep.subr.mxu0 0.0
  %1975 = vmatpush1.msra.mxu0 0.0
  %1976 = vmatprep.subr.mxu0 0.0
  %1977 = vmatpush1.msra.mxu0 0.0
  %1978 = vmatprep.subr.mxu0 0.0
  %1979 = vmatpush1.msra.mxu0 0.0
  %1980 = vmatprep.subr.mxu0 0.0
  %1981 = vmatpush1.msra.mxu0 0.0
  %1982 = vmatprep.subr.mxu0 0.0
  %1983 = vmatpush1.msra.mxu0 0.0
  %1984 = vmatprep.subr.mxu0 0.0
  %1985 = vmatpush1.msra.mxu0 0.0
  %1986 = vmatprep.mubr.f32.mxu0 0.0
  %1987 = vmatmul.mubr.f32.gmra.mrb[0].mxu0 %v1920
  %v1988 = vpop.f32.mrb[0].mxu0
  %v1989 = vadd.f32 0.0, %v1988
  %v1990 = vpop.f32.mrb[0].mxu0
  %1991 = vdwg.mxu0
  %v1992 = vadd.f32 %v1919, %v1989
  %v1993 = vxor.u32 %v1992, 2147483648
  %v1994 = vmul.f32 %v1993, 1.442695
  %v1995 = vpow.pop %v1994
  %v1996 = vadd.f32 %v1995, 1.0
  %v1997 = vrcp.pop %v1996
  %v1998 = vmul.f32 1.0, %v1997
  %v1999 = vtanh.pop %v1992
  %v2000 = vmul.f32 %v1998, %v1807
  %2002 = vrot.lane.b32.xlu0 %v1999, 96
  %v2003 = vpop.permute.xlu0 %2002
  %v2005 = vmul.f32 %v1998, %v2003
  %2007 = vrot.lane.b32.xlu0 %v2005, 16
  %v2008 = vpop.permute.xlu0 %2007
  %v2010 = vadd.f32 %v2000, %v2008
  %v2011 = vtanh.pop %v2010
  %2013 = vrot.lane.b32.xlu0 %v2011, 32
  %v2014 = vpop.permute.xlu0 %2013
  %v2016 = vmul.f32 %v1998, %v2014
  %vm2017 = vcmp.gt.s32.totalorder %v285, 0
  %v2018 = vsel %vm2017, 1, 0
  %2019 = vset.pattern.permute.xlu0 0
  %2020 = vperm.xlu0 %2019, %v2018
  %v2021 = vpop.permute.xlu0 %2020
  %vm2022 = vcmp.eq.s32.totalorder %v2021, 1
  %v2023 = vsel %vm2022, %v2016, %v1806
  %2025 = vrot.lane.b32.xlu0 %v2023, 80
  %v2026 = vpop.permute.xlu0 %2025
  %2028 = vst.msk [vmem:[#allocation5] sm:$0x3] %vm393, %v2026
  %2029 = vset.pattern.permute.xlu0 0
  %2030 = vperm.xlu0 %2029, %v285
  %v2031 = vpop.permute.xlu0 %2030
  %vm2032 = vcmp.gt.s32.totalorder %v2031, 0
  %vm2033 = vcmp.gt.s32.totalorder %v2031, 1
  %vm2034 = vcmp.gt.s32.totalorder %v2031, 2
  %vm2035 = vcmp.gt.s32.totalorder %v2031, 3
  %vm2036 = vcmp.gt.s32.totalorder %v2031, 4
  %vm2037 = vcmp.gt.s32.totalorder %v2031, 5
  %vm2038 = vcmp.gt.s32.totalorder %v2031, 6
  %vm2039 = vcmp.gt.s32.totalorder %v2031, 7
  %v2040 = vld [vmem:[#allocation4] sm:$0x3]
  %v2041 = vld [vmem:[#allocation4 + $0x2] sm:$0x3]
  %v2042 = vld [vmem:[#allocation4 + $0x4] sm:$0x3]
  %v2043 = vld [vmem:[#allocation4 + $0x6] sm:$0x3]
  %v2044 = vld [vmem:[#allocation4 + $0x8] sm:$0x3]
  %v2045 = vld [vmem:[#allocation4 + $0xa] sm:$0x3]
  %v2046 = vld [vmem:[#allocation4 + $0xc] sm:$0x3]
  %v2047 = vld [vmem:[#allocation4 + $0xe] sm:$0x3]
  %v2048 = vsel %vm2032, %v2040, 0.0
  %v2049 = vsel %vm2033, %v2041, 0.0
  %v2050 = vsel %vm2034, %v2042, 0.0
  %v2051 = vsel %vm2035, %v2043, 0.0
  %v2052 = vsel %vm2036, %v2044, 0.0
  %v2053 = vsel %vm2037, %v2045, 0.0
  %v2054 = vsel %vm2038, %v2046, 0.0
  %v2055 = vsel %vm2039, %v2047, 0.0
  %v2056 = vld [vmem:[#allocation5] sm:$0x3]
  %v2057 = vld [vmem:[#allocation5 + $0x2] sm:$0x3]
  %v2058 = vld [vmem:[#allocation5 + $0x4] sm:$0x3]
  %v2059 = vld [vmem:[#allocation5 + $0x6] sm:$0x3]
  %v2060 = vld [vmem:[#allocation5 + $0x8] sm:$0x3]
  %v2061 = vld [vmem:[#allocation5 + $0xa] sm:$0x3]
  %v2062 = vld [vmem:[#allocation5 + $0xc] sm:$0x3]
  %v2063 = vld [vmem:[#allocation5 + $0xe] sm:$0x3]
  %v2072 = vcombine.low %v2048, %v2049
  %v2073 = vcombine.low %v2050, %v2051
  %v2075 = vunpack.c.l.s4 1983009808
  %v2076 = vunpack.c.0.s8 %v2075
  %v2077 = vlaneseq
  %v2078 = vshrl.u32 %v2077, 7
  %v2079 = vsub.s32 %v2076, %v2078
  %v2080 = vrot.slane %v2072, %v2079
  %v2082 = vunpack.c.l.s4 1983009808
  %v2083 = vunpack.c.0.s8 %v2082
  %v2084 = vlaneseq
  %v2085 = vshrl.u32 %v2084, 7
  %v2086 = vsub.s32 %v2083, %v2085
  %v2087 = vrot.slane %v2073, %v2086
  %v2088 = vcombine.low %v2080, %v2087
  %v2089 = vcombine.low %v2052, %v2053
  %v2090 = vcombine.low %v2054, %v2055
  %v2092 = vunpack.c.l.s4 1983009808
  %v2093 = vunpack.c.0.s8 %v2092
  %v2094 = vlaneseq
  %v2095 = vshrl.u32 %v2094, 7
  %v2096 = vsub.s32 %v2093, %v2095
  %v2097 = vrot.slane %v2089, %v2096
  %v2099 = vunpack.c.l.s4 1983009808
  %v2100 = vunpack.c.0.s8 %v2099
  %v2101 = vlaneseq
  %v2102 = vshrl.u32 %v2101, 7
  %v2103 = vsub.s32 %v2100, %v2102
  %v2104 = vrot.slane %v2090, %v2103
  %v2105 = vcombine.low %v2097, %v2104
  %v2108 = vpack.c.bf16 %v2105, %v2088
  %v2109 = vld [vmem:[%s7] sm:$0xff]
  %v2110 = vld [vmem:[%s7 + $0x8] sm:$0xff]
  %v2111 = vpack.c.bf16 %v2110, %v2109
  %v2120 = vcombine.low %v2056, %v2057
  %v2121 = vcombine.low %v2058, %v2059
  %v2123 = vunpack.c.l.s4 1983009808
  %v2124 = vunpack.c.0.s8 %v2123
  %v2125 = vlaneseq
  %v2126 = vshrl.u32 %v2125, 7
  %v2127 = vsub.s32 %v2124, %v2126
  %v2128 = vrot.slane %v2120, %v2127
  %v2130 = vunpack.c.l.s4 1983009808
  %v2131 = vunpack.c.0.s8 %v2130
  %v2132 = vlaneseq
  %v2133 = vshrl.u32 %v2132, 7
  %v2134 = vsub.s32 %v2131, %v2133
  %v2135 = vrot.slane %v2121, %v2134
  %v2136 = vcombine.low %v2128, %v2135
  %v2137 = vcombine.low %v2060, %v2061
  %v2138 = vcombine.low %v2062, %v2063
  %v2140 = vunpack.c.l.s4 1983009808
  %v2141 = vunpack.c.0.s8 %v2140
  %v2142 = vlaneseq
  %v2143 = vshrl.u32 %v2142, 7
  %v2144 = vsub.s32 %v2141, %v2143
  %v2145 = vrot.slane %v2137, %v2144
  %v2147 = vunpack.c.l.s4 1983009808
  %v2148 = vunpack.c.0.s8 %v2147
  %v2149 = vlaneseq
  %v2150 = vshrl.u32 %v2149, 7
  %v2151 = vsub.s32 %v2148, %v2150
  %v2152 = vrot.slane %v2138, %v2151
  %v2153 = vcombine.low %v2145, %v2152
  %v2156 = vpack.c.bf16 %v2153, %v2136
  %v2157 = vld [vmem:[%s8] sm:$0xff]
  %v2158 = vld [vmem:[%s8 + $0x8] sm:$0xff]
  %v2159 = vpack.c.bf16 %v2158, %v2157
  %v2161 = vsel %vm99, %v2156, 0
  %2163 = vmatprep.subr.bf16.mxu0 0
  %2164 = vmatpush1.bf16.msra.mxu0 %v2159
  %2165 = vmatprep.subr.bf16.mxu0 0
  %2166 = vmatpush1.bf16.msra.mxu0 0
  %2167 = vmatprep.subr.bf16.mxu0 0
  %2168 = vmatpush1.bf16.msra.mxu0 0
  %2169 = vmatprep.subr.bf16.mxu0 0
  %2170 = vmatpush1.bf16.msra.mxu0 0
  %2171 = vmatprep.subr.bf16.mxu0 0
  %2172 = vmatpush1.bf16.msra.mxu0 0
  %2173 = vmatprep.subr.bf16.mxu0 0
  %2174 = vmatpush1.bf16.msra.mxu0 0
  %2175 = vmatprep.subr.bf16.mxu0 0
  %2176 = vmatpush1.bf16.msra.mxu0 0
  %2177 = vmatprep.subr.bf16.mxu0 0
  %2178 = vmatpush1.bf16.msra.mxu0 0
  %2179 = vmatprep.subr.bf16.mxu0 0
  %2180 = vmatpush1.bf16.msra.mxu0 0
  %2181 = vmatprep.subr.bf16.mxu0 0
  %2182 = vmatpush1.bf16.msra.mxu0 0
  %2183 = vmatprep.subr.bf16.mxu0 0
  %2184 = vmatpush1.bf16.msra.mxu0 0
  %2185 = vmatprep.subr.bf16.mxu0 0
  %2186 = vmatpush1.bf16.msra.mxu0 0
  %2187 = vmatprep.subr.bf16.mxu0 0
  %2188 = vmatpush1.bf16.msra.mxu0 0
  %2189 = vmatprep.subr.bf16.mxu0 0
  %2190 = vmatpush1.bf16.msra.mxu0 0
  %2191 = vmatprep.subr.bf16.mxu0 0
  %2192 = vmatpush1.bf16.msra.mxu0 0
  %2193 = vmatprep.subr.bf16.mxu0 0
  %2194 = vmatpush1.bf16.msra.mxu0 0
  %2195 = vmatprep.mubr.bf16.mxu0 0
  %2196 = vmatmul.mubr.bf16.gmra.mrb[0].mxu0 %v2161
  %v2197 = vpop.f32.mrb[0].mxu0
  %v2198 = vadd.f32 0.0, %v2197
  %v2199 = vpop.f32.mrb[0].mxu0
  %v2200 = vpop.f32.mrb[0].mxu0
  %v2201 = vadd.f32 0.0, %v2200
  %v2202 = vpop.f32.mrb[0].mxu0
  %2203 = vdwg.mxu0
  %v2205 = vsel %vm99, %v2108, 0
  %2207 = vmatprep.subr.bf16.mxu0 0
  %2208 = vmatpush1.bf16.msra.mxu0 %v2111
  %2209 = vmatprep.subr.bf16.mxu0 0
  %2210 = vmatpush1.bf16.msra.mxu0 0
  %2211 = vmatprep.subr.bf16.mxu0 0
  %2212 = vmatpush1.bf16.msra.mxu0 0
  %2213 = vmatprep.subr.bf16.mxu0 0
  %2214 = vmatpush1.bf16.msra.mxu0 0
  %2215 = vmatprep.subr.bf16.mxu0 0
  %2216 = vmatpush1.bf16.msra.mxu0 0
  %2217 = vmatprep.subr.bf16.mxu0 0
  %2218 = vmatpush1.bf16.msra.mxu0 0
  %2219 = vmatprep.subr.bf16.mxu0 0
  %2220 = vmatpush1.bf16.msra.mxu0 0
  %2221 = vmatprep.subr.bf16.mxu0 0
  %2222 = vmatpush1.bf16.msra.mxu0 0
  %2223 = vmatprep.subr.bf16.mxu0 0
  %2224 = vmatpush1.bf16.msra.mxu0 0
  %2225 = vmatprep.subr.bf16.mxu0 0
  %2226 = vmatpush1.bf16.msra.mxu0 0
  %2227 = vmatprep.subr.bf16.mxu0 0
  %2228 = vmatpush1.bf16.msra.mxu0 0
  %2229 = vmatprep.subr.bf16.mxu0 0
  %2230 = vmatpush1.bf16.msra.mxu0 0
  %2231 = vmatprep.subr.bf16.mxu0 0
  %2232 = vmatpush1.bf16.msra.mxu0 0
  %2233 = vmatprep.subr.bf16.mxu0 0
  %2234 = vmatpush1.bf16.msra.mxu0 0
  %2235 = vmatprep.subr.bf16.mxu0 0
  %2236 = vmatpush1.bf16.msra.mxu0 0
  %2237 = vmatprep.subr.bf16.mxu0 0
  %2238 = vmatpush1.bf16.msra.mxu0 0
  %2239 = vmatprep.mubr.bf16.mxu0 0
  %2240 = vmatmul.mubr.bf16.gmra.mrb[0].mxu0 %v2205
  %v2241 = vpop.f32.mrb[0].mxu0
  %v2242 = vadd.f32 %v2198, %v2241
  %v2243 = vpop.f32.mrb[0].mxu0
  %v2244 = vpop.f32.mrb[0].mxu0
  %v2245 = vadd.f32 %v2201, %v2244
  %v2246 = vpop.f32.mrb[0].mxu0
  %2247 = vdwg.mxu0
  %v2248 = vld [vmem:[%s9] sm:$0x1]
  %v2250 = vlaneseq
  %v2251 = vshrl.u32 %v2250, 7
  %v2252 = vsub.s32 0, %v2251
  %v2253 = vrot.slane %v2248, %v2252
  %v2255 = vadd.f32 %v2242, %v2253
  %v2256 = vadd.f32 %v2245, %v2253
  %v2259 = vcombine.high %v2255, %v2255
  %v2261 = vunpack.c.l.s4 1983009808
  %v2262 = vunpack.c.0.s8 %v2261
  %v2263 = vlaneseq
  %v2264 = vshrl.u32 %v2263, 7
  %v2265 = vsub.s32 %v2262, %v2264
  %v2266 = vrot.slane %v2255, %v2265
  %v2268 = vunpack.c.l.s4 1983009808
  %v2269 = vunpack.c.0.s8 %v2268
  %v2270 = vlaneseq
  %v2271 = vshrl.u32 %v2270, 7
  %v2272 = vsub.s32 %v2269, %v2271
  %v2273 = vrot.slane %v2259, %v2272
  %v2274 = vcombine.high %v2266, %v2266
  %v2275 = vcombine.high %v2273, %v2273
  %v2276 = vcombine.high %v2256, %v2256
  %v2278 = vunpack.c.l.s4 1983009808
  %v2279 = vunpack.c.0.s8 %v2278
  %v2280 = vlaneseq
  %v2281 = vshrl.u32 %v2280, 7
  %v2282 = vsub.s32 %v2279, %v2281
  %v2283 = vrot.slane %v2256, %v2282
  %v2285 = vunpack.c.l.s4 1983009808
  %v2286 = vunpack.c.0.s8 %v2285
  %v2287 = vlaneseq
  %v2288 = vshrl.u32 %v2287, 7
  %v2289 = vsub.s32 %v2286, %v2288
  %v2290 = vrot.slane %v2276, %v2289
  %v2291 = vcombine.high %v2283, %v2283
  %v2292 = vcombine.high %v2290, %v2290
  %v2301 = vsel %vm2032, %v2266, 0.0
  %v2302 = vsel %vm2033, %v2274, 0.0
  %v2303 = vsel %vm2034, %v2273, 0.0
  %v2304 = vsel %vm2035, %v2275, 0.0
  %v2305 = vsel %vm2036, %v2283, 0.0
  %v2306 = vsel %vm2037, %v2291, 0.0
  %v2307 = vsel %vm2038, %v2290, 0.0
  %v2308 = vsel %vm2039, %v2292, 0.0
  %2309 = vst.msk [vmem:[%s10] sm:$0x3] %vm393, %v2301
  %2310 = vst.msk [vmem:[%s10 + $0x2] sm:$0x3] %vm393, %v2302
  %2311 = vst.msk [vmem:[%s10 + $0x4] sm:$0x3] %vm393, %v2303
  %2312 = vst.msk [vmem:[%s10 + $0x6] sm:$0x3] %vm393, %v2304
  %2313 = vst.msk [vmem:[%s10 + $0x8] sm:$0x3] %vm393, %v2305
  %2314 = vst.msk [vmem:[%s10 + $0xa] sm:$0x3] %vm393, %v2306
  %2315 = vst.msk [vmem:[%s10 + $0xc] sm:$0x3] %vm393, %v2307
  %2316 = vst.msk [vmem:[%s10 + $0xe] sm:$0x3] %vm393, %v2308
  // Predicated region
  $region42: #{e2e_forward.5} parent=0 // pred_check
    _
  $region43: #{e2e_forward.5} parent=0 // pred_check_branch
    %2318 = sbr.rel (0) target = $region45
  $region44: #{e2e_forward.5} parent=0 // pred_region
    _
  $region45: #{e2e_forward.5} parent=0 // pred_fallthru
    _
  // Predicated region
  $region46: #{e2e_forward.5} parent=0 // pred_check
    _
  $region47: #{e2e_forward.5} parent=0 // pred_check_branch
    %2320 = sbr.rel (0) target = $region49
  $region48: #{e2e_forward.5} parent=0 // pred_region
    _
  $region49: #{e2e_forward.5} parent=0 // pred_fallthru
    _

// kernel: e2e_forward.7
$region0: #{e2e_forward.7}
  #allocation0 [shape = 'u32[]', space=smem, size = 0x4, offset = 0x4, fixed_abs, tag = 'smem constant byte address 0x4 - core index']
  #allocation1 [shape = 'u32[144,128]{1,0:T(1,128)}', space=vmem, size = 0x12000, scoped, tag = 'internal scratch']
  #allocation2 [shape = 'f32[5,2,64]{2,1,0:T(2,128)}', space=vmem, size = 0x1400, scoped, tag = 'scratch operand']
  #allocation3 [shape = 'f32[5,2,16]{2,1,0:T(2,128)}', space=vmem, size = 0x1400, scoped, tag = 'scratch operand']
  %s0 = inlined_call_operand.vmem [shape: f32[2,8,16], index: 0, kind: input, shape index: {}]
  %s1 = inlined_call_operand.vmem [shape: f32[2,8,16], index: 1, kind: input, shape index: {}]
  %s2 = inlined_call_operand.vmem [shape: f32[2,8], index: 2, kind: input, shape index: {}]
  %s3 = inlined_call_operand.vmem [shape: f32[5,2,16], index: 3, kind: input, shape index: {}]
  %s4 = inlined_call_operand.vmem [shape: f32[16,16], index: 4, kind: input, shape index: {}]
  %s5 = inlined_call_operand.vmem [shape: f32[1,16], index: 5, kind: input, shape index: {}]
  %s6 = inlined_call_operand.vmem [shape: f32[16,64], index: 6, kind: input, shape index: {}]
  %s7 = inlined_call_operand.vmem [shape: f32[16,64], index: 7, kind: input, shape index: {}]
  %s8 = inlined_call_operand.vmem [shape: f32[1,64], index: 8, kind: input, shape index: {}]
  %s9 = inlined_call_operand.vmem [shape: f32[16,64], index: 9, kind: input, shape index: {}]
  %s10 = inlined_call_operand.vmem [shape: f32[16,12], index: 10, kind: input, shape index: {}]
  %s11 = inlined_call_operand.vmem [shape: f32[1,12], index: 11, kind: input, shape index: {}]
  %s12 = inlined_call_operand.vmem [shape: f32[5,2,12], index: 12, kind: output, shape index: {}]
  %s13 = sld [smem:[#allocation0]]
  $region58: #{e2e_forward.7} parent=0
    _
  %s15 = ssub.s32 1, %s13
  %s16 = scalar_select 0, %s15, %s13
  // Predicated region
  $region2: #{e2e_forward.7} parent=0 // pred_check
    _
  $region3: #{e2e_forward.7} parent=0 // pred_check_branch
    %18 = sbr.rel (0) target = $region5
  $region4: #{e2e_forward.7} parent=0 // pred_region
    _
  $region5: #{e2e_forward.7} parent=0 // pred_fallthru
    _
  // Predicated region
  $region6: #{e2e_forward.7} parent=0 // pred_check
    _
  $region7: #{e2e_forward.7} parent=0 // pred_check_branch
    %20 = sbr.rel (0) target = $region9
  $region8: #{e2e_forward.7} parent=0 // pred_region
    _
  $region9: #{e2e_forward.7} parent=0 // pred_fallthru
    _
  // Predicated region
  $region10: #{e2e_forward.7} parent=0 // pred_check
    _
  $region11: #{e2e_forward.7} parent=0 // pred_check_branch
    %22 = sbr.rel (0) target = $region13
  $region12: #{e2e_forward.7} parent=0 // pred_region
    _
  $region13: #{e2e_forward.7} parent=0 // pred_fallthru
    _
  // Predicated region
  $region14: #{e2e_forward.7} parent=0 // pred_check
    _
  $region15: #{e2e_forward.7} parent=0 // pred_check_branch
    %24 = sbr.rel (0) target = $region17
  $region16: #{e2e_forward.7} parent=0 // pred_region
    _
  $region17: #{e2e_forward.7} parent=0 // pred_fallthru
    _
  // Predicated region
  $region18: #{e2e_forward.7} parent=0 // pred_check
    _
  $region19: #{e2e_forward.7} parent=0 // pred_check_branch
    %26 = sbr.rel (0) target = $region21
  $region20: #{e2e_forward.7} parent=0 // pred_region
    _
  $region21: #{e2e_forward.7} parent=0 // pred_fallthru
    _
  // Predicated region
  $region22: #{e2e_forward.7} parent=0 // pred_check
    _
  $region23: #{e2e_forward.7} parent=0 // pred_check_branch
    %28 = sbr.rel (0) target = $region25
  $region24: #{e2e_forward.7} parent=0 // pred_region
    _
  $region25: #{e2e_forward.7} parent=0 // pred_fallthru
    _
  // Predicated region
  $region26: #{e2e_forward.7} parent=0 // pred_check
    _
  $region27: #{e2e_forward.7} parent=0 // pred_check_branch
    %30 = sbr.rel (0) target = $region29
  $region28: #{e2e_forward.7} parent=0 // pred_region
    _
  $region29: #{e2e_forward.7} parent=0 // pred_fallthru
    _
  // Predicated region
  $region30: #{e2e_forward.7} parent=0 // pred_check
    _
  $region31: #{e2e_forward.7} parent=0 // pred_check_branch
    %32 = sbr.rel (0) target = $region33
  $region32: #{e2e_forward.7} parent=0 // pred_region
    _
  $region33: #{e2e_forward.7} parent=0 // pred_fallthru
    _
  // Predicated region
  $region34: #{e2e_forward.7} parent=0 // pred_check
    _
  $region35: #{e2e_forward.7} parent=0 // pred_check_branch
    %34 = sbr.rel (0) target = $region37
  $region36: #{e2e_forward.7} parent=0 // pred_region
    _
  $region37: #{e2e_forward.7} parent=0 // pred_fallthru
    _
  // Predicated region
  $region38: #{e2e_forward.7} parent=0 // pred_check
    _
  $region39: #{e2e_forward.7} parent=0 // pred_check_branch
    %36 = sbr.rel (0) target = $region41
  $region40: #{e2e_forward.7} parent=0 // pred_region
    _
  $region41: #{e2e_forward.7} parent=0 // pred_fallthru
    _
  // Predicated region
  $region42: #{e2e_forward.7} parent=0 // pred_check
    _
  $region43: #{e2e_forward.7} parent=0 // pred_check_branch
    %38 = sbr.rel (0) target = $region45
  $region44: #{e2e_forward.7} parent=0 // pred_region
    _
  $region45: #{e2e_forward.7} parent=0 // pred_fallthru
    _
  // Predicated region
  $region46: #{e2e_forward.7} parent=0 // pred_check
    _
  $region47: #{e2e_forward.7} parent=0 // pred_check_branch
    %40 = sbr.rel (0) target = $region49
  $region48: #{e2e_forward.7} parent=0 // pred_region
    _
  $region49: #{e2e_forward.7} parent=0 // pred_fallthru
    _
  %v42 = vld [vmem:[%s0] sm:$0xff]
  %v43 = vld [vmem:[%s0 + $0x8] sm:$0xff]
  %v44 = vld [vmem:[%s1] sm:$0xff]
  %v45 = vld [vmem:[%s1 + $0x8] sm:$0xff]
  %v46 = vld [vmem:[%s2] sm:$0x3]
  %vm47 = vcmp.gt.f32.partialorder %v46, 0.0
  %v48 = vsel %vm47, 1, 0
  %v50 = vunpack.c.l.s4 1966171168
  %v51 = vunpack.c.0.s8 %v50
  %v52 = vlaneseq
  %v53 = vshrl.u32 %v52, 7
  %v54 = vsub.s32 %v51, %v53
  %v55 = vrot.slane %v48, %v54
  %v56 = vcombine.high %v55, %v55
  %v58 = vunpack.c.l.s4 1966171168
  %v59 = vunpack.c.0.s8 %v58
  %v60 = vlaneseq
  %v61 = vshrl.u32 %v60, 7
  %v62 = vsub.s32 %v59, %v61
  %v63 = vrot.slane %v55, %v62
  %v65 = vunpack.c.l.s4 1966171168
  %v66 = vunpack.c.0.s8 %v65
  %v67 = vlaneseq
  %v68 = vshrl.u32 %v67, 7
  %v69 = vsub.s32 %v66, %v68
  %v70 = vrot.slane %v56, %v69
  %vm71 = vcmp.ne.s32.totalorder %v63, 0
  %vm72 = vcmp.ne.s32.totalorder %v70, 0
  %v73 = vld [vmem:[%s4] sm:$0xff]
  %v74 = vld [vmem:[%s4 + $0x8] sm:$0xff]
  %v75 = vld [vmem:[%s5] sm:$0x1]
  %v76 = vld [vmem:[%s7] sm:$0xff]
  %v77 = vld [vmem:[%s7 + $0x8] sm:$0xff]
  %v78 = vld [vmem:[%s9] sm:$0xff]
  %v79 = vld [vmem:[%s9 + $0x8] sm:$0xff]
  %v80 = vld [vmem:[%s3] sm:$0x3]
  %v81 = vld [vmem:[%s3 + $0x2] sm:$0x3]
  %v82 = vld [vmem:[%s3 + $0x4] sm:$0x3]
  %v83 = vld [vmem:[%s3 + $0x6] sm:$0x3]
  %v84 = vld [vmem:[%s3 + $0x8] sm:$0x3]
  %v90 = vcombine.low %v80, %v81
  %v91 = vcombine.low %v82, %v83
  %v93 = vunpack.c.l.s4 1983009808
  %v94 = vunpack.c.0.s8 %v93
  %v95 = vlaneseq
  %v96 = vshrl.u32 %v95, 7
  %v97 = vsub.s32 %v94, %v96
  %v98 = vrot.slane %v90, %v97
  %v100 = vunpack.c.l.s4 1983009808
  %v101 = vunpack.c.0.s8 %v100
  %v102 = vlaneseq
  %v103 = vshrl.u32 %v102, 7
  %v104 = vsub.s32 %v101, %v103
  %v105 = vrot.slane %v91, %v104
  %v106 = vcombine.low %v98, %v105
  %v108 = vunpack.c.l.s4 1983009808
  %v109 = vunpack.c.0.s8 %v108
  %v110 = vlaneseq
  %v111 = vshrl.u32 %v110, 7
  %v112 = vsub.s32 %v109, %v111
  %v113 = vrot.slane %v84, %v112
  %v116 = vpack.c.bf16 %v113, %v106
  %v117 = vld [vmem:[%s6] sm:$0xff]
  %v118 = vld [vmem:[%s6 + $0x8] sm:$0xff]
  %v119 = vpack.c.bf16 %v118, %v117
  %v120 = vld [vmem:[%s8] sm:$0x1]
  %v122 = vlaneseq
  %v123 = vshrl.u32 %v122, 7
  %v124 = vsub.s32 0, %v123
  %v125 = vrot.slane %v120, %v124
  %vm127 = vcmask 130048
  %v129 = vsel %vm127, %v116, 0
  %131 = vmatprep.subr.bf16.mxu0 0
  %132 = vmatpush1.bf16.msra.mxu0 %v119
  %133 = vmatprep.subr.bf16.mxu0 0
  %134 = vmatpush1.bf16.msra.mxu0 0
  %135 = vmatprep.subr.bf16.mxu0 0
  %136 = vmatpush1.bf16.msra.mxu0 0
  %137 = vmatprep.subr.bf16.mxu0 0
  %138 = vmatpush1.bf16.msra.mxu0 0
  %139 = vmatprep.subr.bf16.mxu0 0
  %140 = vmatpush1.bf16.msra.mxu0 0
  %141 = vmatprep.subr.bf16.mxu0 0
  %142 = vmatpush1.bf16.msra.mxu0 0
  %143 = vmatprep.subr.bf16.mxu0 0
  %144 = vmatpush1.bf16.msra.mxu0 0
  %145 = vmatprep.subr.bf16.mxu0 0
  %146 = vmatpush1.bf16.msra.mxu0 0
  %147 = vmatprep.subr.bf16.mxu0 0
  %148 = vmatpush1.bf16.msra.mxu0 0
  %149 = vmatprep.subr.bf16.mxu0 0
  %150 = vmatpush1.bf16.msra.mxu0 0
  %151 = vmatprep.subr.bf16.mxu0 0
  %152 = vmatpush1.bf16.msra.mxu0 0
  %153 = vmatprep.subr.bf16.mxu0 0
  %154 = vmatpush1.bf16.msra.mxu0 0
  %155 = vmatprep.subr.bf16.mxu0 0
  %156 = vmatpush1.bf16.msra.mxu0 0
  %157 = vmatprep.subr.bf16.mxu0 0
  %158 = vmatpush1.bf16.msra.mxu0 0
  %159 = vmatprep.subr.bf16.mxu0 0
  %160 = vmatpush1.bf16.msra.mxu0 0
  %161 = vmatprep.subr.bf16.mxu0 0
  %162 = vmatpush1.bf16.msra.mxu0 0
  %163 = vmatprep.mubr.bf16.mxu0 0
  %164 = vmatmul.mubr.bf16.gmra.mrb[0].mxu0 %v129
  %v165 = vpop.f32.mrb[0].mxu0
  %v166 = vadd.f32 %v125, %v165
  %v167 = vpop.f32.mrb[0].mxu0
  %v168 = vpop.f32.mrb[0].mxu0
  %v169 = vadd.f32 %v125, %v168
  %v170 = vpop.f32.mrb[0].mxu0
  %171 = vdwg.mxu0
  %v174 = vcombine.high %v166, %v166
  %v176 = vunpack.c.l.s4 1983009808
  %v177 = vunpack.c.0.s8 %v176
  %v178 = vlaneseq
  %v179 = vshrl.u32 %v178, 7
  %v180 = vsub.s32 %v177, %v179
  %v181 = vrot.slane %v166, %v180
  %v183 = vunpack.c.l.s4 1983009808
  %v184 = vunpack.c.0.s8 %v183
  %v185 = vlaneseq
  %v186 = vshrl.u32 %v185, 7
  %v187 = vsub.s32 %v184, %v186
  %v188 = vrot.slane %v174, %v187
  %v189 = vcombine.high %v181, %v181
  %v190 = vcombine.high %v188, %v188
  %v192 = vunpack.c.l.s4 1983009808
  %v193 = vunpack.c.0.s8 %v192
  %v194 = vlaneseq
  %v195 = vshrl.u32 %v194, 7
  %v196 = vsub.s32 %v193, %v195
  %v197 = vrot.slane %v169, %v196
  %vm203 = vcmask 517120
  %204 = vst.msk [vmem:[#allocation2] sm:$0x3] %vm203, %v181
  %205 = vst.msk [vmem:[#allocation2 + $0x2] sm:$0x3] %vm203, %v189
  %206 = vst.msk [vmem:[#allocation2 + $0x4] sm:$0x3] %vm203, %v188
  %207 = vst.msk [vmem:[#allocation2 + $0x6] sm:$0x3] %vm203, %v190
  %208 = vst.msk [vmem:[#allocation2 + $0x8] sm:$0x3] %vm203, %v197
  %v210 = vlaneseq
  %v211 = vshrl.u32 %v210, 7
  %v212 = vsub.s32 0, %v211
  %v213 = vrot.slane %v75, %v212
  %v216 = vsel %vm127, 0.0, 0
  %218 = vmatprep.subr.mxu0 0.0
  %219 = vmatpush1.msra.mxu0 %v73
  %220 = vmatprep.subr.mxu0 0.0
  %221 = vmatpush1.msra.mxu0 %v74
  %222 = vmatprep.subr.mxu0 0.0
  %223 = vmatpush1.msra.mxu0 0.0
  %224 = vmatprep.subr.mxu0 0.0
  %225 = vmatpush1.msra.mxu0 0.0
  %226 = vmatprep.subr.mxu0 0.0
  %227 = vmatpush1.msra.mxu0 0.0
  %228 = vmatprep.subr.mxu0 0.0
  %229 = vmatpush1.msra.mxu0 0.0
  %230 = vmatprep.subr.mxu0 0.0
  %231 = vmatpush1.msra.mxu0 0.0
  %232 = vmatprep.subr.mxu0 0.0
  %233 = vmatpush1.msra.mxu0 0.0
  %234 = vmatprep.subr.mxu0 0.0
  %235 = vmatpush1.msra.mxu0 0.0
  %236 = vmatprep.subr.mxu0 0.0
  %237 = vmatpush1.msra.mxu0 0.0
  %238 = vmatprep.subr.mxu0 0.0
  %239 = vmatpush1.msra.mxu0 0.0
  %240 = vmatprep.subr.mxu0 0.0
  %241 = vmatpush1.msra.mxu0 0.0
  %242 = vmatprep.subr.mxu0 0.0
  %243 = vmatpush1.msra.mxu0 0.0
  %244 = vmatprep.subr.mxu0 0.0
  %245 = vmatpush1.msra.mxu0 0.0
  %246 = vmatprep.subr.mxu0 0.0
  %247 = vmatpush1.msra.mxu0 0.0
  %248 = vmatprep.subr.mxu0 0.0
  %249 = vmatpush1.msra.mxu0 0.0
  %250 = vmatprep.subr.mxu0 0.0
  %251 = vmatpush1.msra.mxu0 0.0
  %252 = vmatprep.subr.mxu0 0.0
  %253 = vmatpush1.msra.mxu0 0.0
  %254 = vmatprep.subr.mxu0 0.0
  %255 = vmatpush1.msra.mxu0 0.0
  %256 = vmatprep.subr.mxu0 0.0
  %257 = vmatpush1.msra.mxu0 0.0
  %258 = vmatprep.subr.mxu0 0.0
  %259 = vmatpush1.msra.mxu0 0.0
  %260 = vmatprep.subr.mxu0 0.0
  %261 = vmatpush1.msra.mxu0 0.0
  %262 = vmatprep.subr.mxu0 0.0
  %263 = vmatpush1.msra.mxu0 0.0
  %264 = vmatprep.subr.mxu0 0.0
  %265 = vmatpush1.msra.mxu0 0.0
  %266 = vmatprep.subr.mxu0 0.0
  %267 = vmatpush1.msra.mxu0 0.0
  %268 = vmatprep.subr.mxu0 0.0
  %269 = vmatpush1.msra.mxu0 0.0
  %270 = vmatprep.subr.mxu0 0.0
  %271 = vmatpush1.msra.mxu0 0.0
  %272 = vmatprep.subr.mxu0 0.0
  %273 = vmatpush1.msra.mxu0 0.0
  %274 = vmatprep.subr.mxu0 0.0
  %275 = vmatpush1.msra.mxu0 0.0
  %276 = vmatprep.subr.mxu0 0.0
  %277 = vmatpush1.msra.mxu0 0.0
  %278 = vmatprep.subr.mxu0 0.0
  %279 = vmatpush1.msra.mxu0 0.0
  %280 = vmatprep.subr.mxu0 0.0
  %281 = vmatpush1.msra.mxu0 0.0
  %282 = vmatprep.mubr.f32.mxu0 0.0
  %283 = vmatmul.mubr.f32.gmra.mrb[0].mxu0 %v216
  %v284 = vpop.f32.mrb[0].mxu0
  %v285 = vadd.f32 %v213, %v284
  %v286 = vpop.f32.mrb[0].mxu0
  %287 = vdwg.mxu0
  %v288 = vtanh.pop %v285
  %v291 = vunpack.c.l.s4 1966171168
  %v292 = vunpack.c.0.s8 %v291
  %v293 = vlaneseq
  %v294 = vshrl.u32 %v293, 7
  %v295 = vsub.s32 %v292, %v294
  %v296 = vrot.slane %v288, %v295
  %v297 = vcombine.high %v296, %v296
  %v299 = vunpack.c.l.s4 1966171168
  %v300 = vunpack.c.0.s8 %v299
  %v301 = vlaneseq
  %v302 = vshrl.u32 %v301, 7
  %v303 = vsub.s32 %v300, %v302
  %v304 = vrot.slane %v296, %v303
  %v306 = vunpack.c.l.s4 1966171168
  %v307 = vunpack.c.0.s8 %v306
  %v308 = vlaneseq
  %v309 = vshrl.u32 %v308, 7
  %v310 = vsub.s32 %v307, %v309
  %v311 = vrot.slane %v297, %v310
  %v312 = vsel %vm127, %v304, 0
  %v315 = vsel %vm127, %v44, 0
  %317 = vmatprep.subr.mxu0 0.0
  %318 = vmatpush1.xpose.msra.mxu0 %v315
  %319 = vmatprep.subr.mxu0 0.0
  %320 = vmatpush1.xpose.msra.mxu0 0.0
  %321 = vmatprep.subr.mxu0 0.0
  %322 = vmatpush1.xpose.msra.mxu0 0.0
  %323 = vmatprep.subr.mxu0 0.0
  %324 = vmatpush1.xpose.msra.mxu0 0.0
  %325 = vmatprep.subr.mxu0 0.0
  %326 = vmatpush1.xpose.msra.mxu0 0.0
  %327 = vmatprep.subr.mxu0 0.0
  %328 = vmatpush1.xpose.msra.mxu0 0.0
  %329 = vmatprep.subr.mxu0 0.0
  %330 = vmatpush1.xpose.msra.mxu0 0.0
  %331 = vmatprep.subr.mxu0 0.0
  %332 = vmatpush1.xpose.msra.mxu0 0.0
  %333 = vmatprep.subr.mxu0 0.0
  %334 = vmatpush1.xpose.msra.mxu0 0.0
  %335 = vmatprep.subr.mxu0 0.0
  %336 = vmatpush1.xpose.msra.mxu0 0.0
  %337 = vmatprep.subr.mxu0 0.0
  %338 = vmatpush1.xpose.msra.mxu0 0.0
  %339 = vmatprep.subr.mxu0 0.0
  %340 = vmatpush1.xpose.msra.mxu0 0.0
  %341 = vmatprep.subr.mxu0 0.0
  %342 = vmatpush1.xpose.msra.mxu0 0.0
  %343 = vmatprep.subr.mxu0 0.0
  %344 = vmatpush1.xpose.msra.mxu0 0.0
  %345 = vmatprep.subr.mxu0 0.0
  %346 = vmatpush1.xpose.msra.mxu0 0.0
  %347 = vmatprep.subr.mxu0 0.0
  %348 = vmatpush1.xpose.msra.mxu0 0.0
  %349 = vmatprep.subr.mxu0 0.0
  %350 = vmatpush1.xpose.msra.mxu0 0.0
  %351 = vmatprep.subr.mxu0 0.0
  %352 = vmatpush1.xpose.msra.mxu0 0.0
  %353 = vmatprep.subr.mxu0 0.0
  %354 = vmatpush1.xpose.msra.mxu0 0.0
  %355 = vmatprep.subr.mxu0 0.0
  %356 = vmatpush1.xpose.msra.mxu0 0.0
  %357 = vmatprep.subr.mxu0 0.0
  %358 = vmatpush1.xpose.msra.mxu0 0.0
  %359 = vmatprep.subr.mxu0 0.0
  %360 = vmatpush1.xpose.msra.mxu0 0.0
  %361 = vmatprep.subr.mxu0 0.0
  %362 = vmatpush1.xpose.msra.mxu0 0.0
  %363 = vmatprep.subr.mxu0 0.0
  %364 = vmatpush1.xpose.msra.mxu0 0.0
  %365 = vmatprep.subr.mxu0 0.0
  %366 = vmatpush1.xpose.msra.mxu0 0.0
  %367 = vmatprep.subr.mxu0 0.0
  %368 = vmatpush1.xpose.msra.mxu0 0.0
  %369 = vmatprep.subr.mxu0 0.0
  %370 = vmatpush1.xpose.msra.mxu0 0.0
  %371 = vmatprep.subr.mxu0 0.0
  %372 = vmatpush1.xpose.msra.mxu0 0.0
  %373 = vmatprep.subr.mxu0 0.0
  %374 = vmatpush1.xpose.msra.mxu0 0.0
  %375 = vmatprep.subr.mxu0 0.0
  %376 = vmatpush1.xpose.msra.mxu0 0.0
  %377 = vmatprep.subr.mxu0 0.0
  %378 = vmatpush1.xpose.msra.mxu0 0.0
  %379 = vmatprep.subr.mxu0 0.0
  %380 = vmatpush1.xpose.msra.mxu0 0.0
  %381 = vmatprep.mubr.f32.mxu0 0.0
  %382 = vmatmul.mubr.f32.gmra.mrb[0].mxu0 %v312
  %v383 = vpop.f32.mrb[0].mxu0
  %v384 = vadd.f32 0.0, %v383
  %v385 = vpop.f32.mrb[0].mxu0
  %386 = vdwg.mxu0
  %v387 = vsel %vm127, %v311, 0
  %v390 = vsel %vm127, %v45, 0
  %392 = vmatprep.subr.mxu0 0.0
  %393 = vmatpush1.xpose.msra.mxu0 %v390
  %394 = vmatprep.subr.mxu0 0.0
  %395 = vmatpush1.xpose.msra.mxu0 0.0
  %396 = vmatprep.subr.mxu0 0.0
  %397 = vmatpush1.xpose.msra.mxu0 0.0
  %398 = vmatprep.subr.mxu0 0.0
  %399 = vmatpush1.xpose.msra.mxu0 0.0
  %400 = vmatprep.subr.mxu0 0.0
  %401 = vmatpush1.xpose.msra.mxu0 0.0
  %402 = vmatprep.subr.mxu0 0.0
  %403 = vmatpush1.xpose.msra.mxu0 0.0
  %404 = vmatprep.subr.mxu0 0.0
  %405 = vmatpush1.xpose.msra.mxu0 0.0
  %406 = vmatprep.subr.mxu0 0.0
  %407 = vmatpush1.xpose.msra.mxu0 0.0
  %408 = vmatprep.subr.mxu0 0.0
  %409 = vmatpush1.xpose.msra.mxu0 0.0
  %410 = vmatprep.subr.mxu0 0.0
  %411 = vmatpush1.xpose.msra.mxu0 0.0
  %412 = vmatprep.subr.mxu0 0.0
  %413 = vmatpush1.xpose.msra.mxu0 0.0
  %414 = vmatprep.subr.mxu0 0.0
  %415 = vmatpush1.xpose.msra.mxu0 0.0
  %416 = vmatprep.subr.mxu0 0.0
  %417 = vmatpush1.xpose.msra.mxu0 0.0
  %418 = vmatprep.subr.mxu0 0.0
  %419 = vmatpush1.xpose.msra.mxu0 0.0
  %420 = vmatprep.subr.mxu0 0.0
  %421 = vmatpush1.xpose.msra.mxu0 0.0
  %422 = vmatprep.subr.mxu0 0.0
  %423 = vmatpush1.xpose.msra.mxu0 0.0
  %424 = vmatprep.subr.mxu0 0.0
  %425 = vmatpush1.xpose.msra.mxu0 0.0
  %426 = vmatprep.subr.mxu0 0.0
  %427 = vmatpush1.xpose.msra.mxu0 0.0
  %428 = vmatprep.subr.mxu0 0.0
  %429 = vmatpush1.xpose.msra.mxu0 0.0
  %430 = vmatprep.subr.mxu0 0.0
  %431 = vmatpush1.xpose.msra.mxu0 0.0
  %432 = vmatprep.subr.mxu0 0.0
  %433 = vmatpush1.xpose.msra.mxu0 0.0
  %434 = vmatprep.subr.mxu0 0.0
  %435 = vmatpush1.xpose.msra.mxu0 0.0
  %436 = vmatprep.subr.mxu0 0.0
  %437 = vmatpush1.xpose.msra.mxu0 0.0
  %438 = vmatprep.subr.mxu0 0.0
  %439 = vmatpush1.xpose.msra.mxu0 0.0
  %440 = vmatprep.subr.mxu0 0.0
  %441 = vmatpush1.xpose.msra.mxu0 0.0
  %442 = vmatprep.subr.mxu0 0.0
  %443 = vmatpush1.xpose.msra.mxu0 0.0
  %444 = vmatprep.subr.mxu0 0.0
  %445 = vmatpush1.xpose.msra.mxu0 0.0
  %446 = vmatprep.subr.mxu0 0.0
  %447 = vmatpush1.xpose.msra.mxu0 0.0
  %448 = vmatprep.subr.mxu0 0.0
  %449 = vmatpush1.xpose.msra.mxu0 0.0
  %450 = vmatprep.subr.mxu0 0.0
  %451 = vmatpush1.xpose.msra.mxu0 0.0
  %452 = vmatprep.subr.mxu0 0.0
  %453 = vmatpush1.xpose.msra.mxu0 0.0
  %454 = vmatprep.subr.mxu0 0.0
  %455 = vmatpush1.xpose.msra.mxu0 0.0
  %456 = vmatprep.mubr.f32.mxu0 0.0
  %457 = vmatmul.mubr.f32.gmra.mrb[0].mxu0 %v387
  %v458 = vpop.f32.mrb[0].mxu0
  %v459 = vadd.f32 0.0, %v458
  %v460 = vpop.f32.mrb[0].mxu0
  %461 = vdwg.mxu0
  %v462 = vmul.f32 %v384, 2.0
  %v463 = vmul.f32 %v459, 2.0
  %v464 = vsel %vm71, %v462, -1e+30
  %v465 = vsel %vm72, %v463, -1e+30
  %vm466 = vcmask 57344
  %v467 = vsel %vm466, %v464, -inf
  %468 = vmax.xlane.f32.xlu0 %v467
  %v469 = vpop.xlane.xlu0 %468
  %v470 = vsel %vm466, %v465, -inf
  %471 = vmax.xlane.f32.xlu0 %v470
  %v472 = vpop.xlane.xlu0 %471
  %v473 = vsub.f32 %v464, %v469
  %v474 = vsub.f32 %v465, %v472
  %v475 = vmul.f32 %v473, 1.442695
  %v476 = vpow.pop %v475
  %v477 = vmul.f32 %v474, 1.442695
  %v478 = vpow.pop %v477
  %v479 = vsel %vm466, %v476, 0.0
  %480 = vadd.xlane.f32.xlu0 %v479
  %v481 = vpop.xlane.xlu0 %480
  %v482 = vsel %vm466, %v478, 0.0
  %483 = vadd.xlane.f32.xlu0 %v482
  %v484 = vpop.xlane.xlu0 %483
  %v485 = vrcp.pop %v481
  %v486 = vmul.f32 %v476, %v485
  %v487 = vrcp.pop %v484
  %v488 = vmul.f32 %v478, %v487
  %vm489 = vcmask 64512
  %v491 = vsel %vm489, %v486, 0
  %493 = vmatprep.subr.mxu0 0.0
  %494 = vmatpush1.msra.mxu0 %v42
  %495 = vmatprep.subr.mxu0 0.0
  %496 = vmatpush1.msra.mxu0 0.0
  %497 = vmatprep.subr.mxu0 0.0
  %498 = vmatpush1.msra.mxu0 0.0
  %499 = vmatprep.subr.mxu0 0.0
  %500 = vmatpush1.msra.mxu0 0.0
  %501 = vmatprep.subr.mxu0 0.0
  %502 = vmatpush1.msra.mxu0 0.0
  %503 = vmatprep.subr.mxu0 0.0
  %504 = vmatpush1.msra.mxu0 0.0
  %505 = vmatprep.subr.mxu0 0.0
  %506 = vmatpush1.msra.mxu0 0.0
  %507 = vmatprep.subr.mxu0 0.0
  %508 = vmatpush1.msra.mxu0 0.0
  %509 = vmatprep.subr.mxu0 0.0
  %510 = vmatpush1.msra.mxu0 0.0
  %511 = vmatprep.subr.mxu0 0.0
  %512 = vmatpush1.msra.mxu0 0.0
  %513 = vmatprep.subr.mxu0 0.0
  %514 = vmatpush1.msra.mxu0 0.0
  %515 = vmatprep.subr.mxu0 0.0
  %516 = vmatpush1.msra.mxu0 0.0
  %517 = vmatprep.subr.mxu0 0.0
  %518 = vmatpush1.msra.mxu0 0.0
  %519 = vmatprep.subr.mxu0 0.0
  %520 = vmatpush1.msra.mxu0 0.0
  %521 = vmatprep.subr.mxu0 0.0
  %522 = vmatpush1.msra.mxu0 0.0
  %523 = vmatprep.subr.mxu0 0.0
  %524 = vmatpush1.msra.mxu0 0.0
  %525 = vmatprep.subr.mxu0 0.0
  %526 = vmatpush1.msra.mxu0 0.0
  %527 = vmatprep.subr.mxu0 0.0
  %528 = vmatpush1.msra.mxu0 0.0
  %529 = vmatprep.subr.mxu0 0.0
  %530 = vmatpush1.msra.mxu0 0.0
  %531 = vmatprep.subr.mxu0 0.0
  %532 = vmatpush1.msra.mxu0 0.0
  %533 = vmatprep.subr.mxu0 0.0
  %534 = vmatpush1.msra.mxu0 0.0
  %535 = vmatprep.subr.mxu0 0.0
  %536 = vmatpush1.msra.mxu0 0.0
  %537 = vmatprep.subr.mxu0 0.0
  %538 = vmatpush1.msra.mxu0 0.0
  %539 = vmatprep.subr.mxu0 0.0
  %540 = vmatpush1.msra.mxu0 0.0
  %541 = vmatprep.subr.mxu0 0.0
  %542 = vmatpush1.msra.mxu0 0.0
  %543 = vmatprep.subr.mxu0 0.0
  %544 = vmatpush1.msra.mxu0 0.0
  %545 = vmatprep.subr.mxu0 0.0
  %546 = vmatpush1.msra.mxu0 0.0
  %547 = vmatprep.subr.mxu0 0.0
  %548 = vmatpush1.msra.mxu0 0.0
  %549 = vmatprep.subr.mxu0 0.0
  %550 = vmatpush1.msra.mxu0 0.0
  %551 = vmatprep.subr.mxu0 0.0
  %552 = vmatpush1.msra.mxu0 0.0
  %553 = vmatprep.subr.mxu0 0.0
  %554 = vmatpush1.msra.mxu0 0.0
  %555 = vmatprep.subr.mxu0 0.0
  %556 = vmatpush1.msra.mxu0 0.0
  %557 = vmatprep.mubr.f32.mxu0 0.0
  %558 = vmatmul.mubr.f32.gmra.mrb[0].mxu0 %v491
  %v559 = vpop.f32.mrb[0].mxu0
  %v560 = vadd.f32 0.0, %v559
  %v561 = vpop.f32.mrb[0].mxu0
  %562 = vdwg.mxu0
  %v564 = vsel %vm489, %v488, 0
  %566 = vmatprep.subr.mxu0 0.0
  %567 = vmatpush1.msra.mxu0 %v43
  %568 = vmatprep.subr.mxu0 0.0
  %569 = vmatpush1.msra.mxu0 0.0
  %570 = vmatprep.subr.mxu0 0.0
  %571 = vmatpush1.msra.mxu0 0.0
  %572 = vmatprep.subr.mxu0 0.0
  %573 = vmatpush1.msra.mxu0 0.0
  %574 = vmatprep.subr.mxu0 0.0
  %575 = vmatpush1.msra.mxu0 0.0
  %576 = vmatprep.subr.mxu0 0.0
  %577 = vmatpush1.msra.mxu0 0.0
  %578 = vmatprep.subr.mxu0 0.0
  %579 = vmatpush1.msra.mxu0 0.0
  %580 = vmatprep.subr.mxu0 0.0
  %581 = vmatpush1.msra.mxu0 0.0
  %582 = vmatprep.subr.mxu0 0.0
  %583 = vmatpush1.msra.mxu0 0.0
  %584 = vmatprep.subr.mxu0 0.0
  %585 = vmatpush1.msra.mxu0 0.0
  %586 = vmatprep.subr.mxu0 0.0
  %587 = vmatpush1.msra.mxu0 0.0
  %588 = vmatprep.subr.mxu0 0.0
  %589 = vmatpush1.msra.mxu0 0.0
  %590 = vmatprep.subr.mxu0 0.0
  %591 = vmatpush1.msra.mxu0 0.0
  %592 = vmatprep.subr.mxu0 0.0
  %593 = vmatpush1.msra.mxu0 0.0
  %594 = vmatprep.subr.mxu0 0.0
  %595 = vmatpush1.msra.mxu0 0.0
  %596 = vmatprep.subr.mxu0 0.0
  %597 = vmatpush1.msra.mxu0 0.0
  %598 = vmatprep.subr.mxu0 0.0
  %599 = vmatpush1.msra.mxu0 0.0
  %600 = vmatprep.subr.mxu0 0.0
  %601 = vmatpush1.msra.mxu0 0.0
  %602 = vmatprep.subr.mxu0 0.0
  %603 = vmatpush1.msra.mxu0 0.0
  %604 = vmatprep.subr.mxu0 0.0
  %605 = vmatpush1.msra.mxu0 0.0
  %606 = vmatprep.subr.mxu0 0.0
  %607 = vmatpush1.msra.mxu0 0.0
  %608 = vmatprep.subr.mxu0 0.0
  %609 = vmatpush1.msra.mxu0 0.0
  %610 = vmatprep.subr.mxu0 0.0
  %611 = vmatpush1.msra.mxu0 0.0
  %612 = vmatprep.subr.mxu0 0.0
  %613 = vmatpush1.msra.mxu0 0.0
  %614 = vmatprep.subr.mxu0 0.0
  %615 = vmatpush1.msra.mxu0 0.0
  %616 = vmatprep.subr.mxu0 0.0
  %617 = vmatpush1.msra.mxu0 0.0
  %618 = vmatprep.subr.mxu0 0.0
  %619 = vmatpush1.msra.mxu0 0.0
  %620 = vmatprep.subr.mxu0 0.0
  %621 = vmatpush1.msra.mxu0 0.0
  %622 = vmatprep.subr.mxu0 0.0
  %623 = vmatpush1.msra.mxu0 0.0
  %624 = vmatprep.subr.mxu0 0.0
  %625 = vmatpush1.msra.mxu0 0.0
  %626 = vmatprep.subr.mxu0 0.0
  %627 = vmatpush1.msra.mxu0 0.0
  %628 = vmatprep.subr.mxu0 0.0
  %629 = vmatpush1.msra.mxu0 0.0
  %630 = vmatprep.mubr.f32.mxu0 0.0
  %631 = vmatmul.mubr.f32.gmra.mrb[0].mxu0 %v564
  %v632 = vpop.f32.mrb[0].mxu0
  %v633 = vadd.f32 0.0, %v632
  %v634 = vpop.f32.mrb[0].mxu0
  %635 = vdwg.mxu0
  %v636 = vld [vmem:[#allocation2] sm:$0x3]
  %v639 = vrot.slane %v633, 7
  %vm640 = vcmask 1041409
  %v641 = vsel %vm640, %v639, %v560
  %v642 = vsel %vm127, %v641, 0
  %644 = vmatprep.subr.mxu0 0.0
  %645 = vmatpush1.msra.mxu0 %v76
  %646 = vmatprep.subr.mxu0 0.0
  %647 = vmatpush1.msra.mxu0 %v77
  %648 = vmatprep.subr.mxu0 0.0
  %649 = vmatpush1.msra.mxu0 0.0
  %650 = vmatprep.subr.mxu0 0.0
  %651 = vmatpush1.msra.mxu0 0.0
  %652 = vmatprep.subr.mxu0 0.0
  %653 = vmatpush1.msra.mxu0 0.0
  %654 = vmatprep.subr.mxu0 0.0
  %655 = vmatpush1.msra.mxu0 0.0
  %656 = vmatprep.subr.mxu0 0.0
  %657 = vmatpush1.msra.mxu0 0.0
  %658 = vmatprep.subr.mxu0 0.0
  %659 = vmatpush1.msra.mxu0 0.0
  %660 = vmatprep.subr.mxu0 0.0
  %661 = vmatpush1.msra.mxu0 0.0
  %662 = vmatprep.subr.mxu0 0.0
  %663 = vmatpush1.msra.mxu0 0.0
  %664 = vmatprep.subr.mxu0 0.0
  %665 = vmatpush1.msra.mxu0 0.0
  %666 = vmatprep.subr.mxu0 0.0
  %667 = vmatpush1.msra.mxu0 0.0
  %668 = vmatprep.subr.mxu0 0.0
  %669 = vmatpush1.msra.mxu0 0.0
  %670 = vmatprep.subr.mxu0 0.0
  %671 = vmatpush1.msra.mxu0 0.0
  %672 = vmatprep.subr.mxu0 0.0
  %673 = vmatpush1.msra.mxu0 0.0
  %674 = vmatprep.subr.mxu0 0.0
  %675 = vmatpush1.msra.mxu0 0.0
  %676 = vmatprep.subr.mxu0 0.0
  %677 = vmatpush1.msra.mxu0 0.0
  %678 = vmatprep.subr.mxu0 0.0
  %679 = vmatpush1.msra.mxu0 0.0
  %680 = vmatprep.subr.mxu0 0.0
  %681 = vmatpush1.msra.mxu0 0.0
  %682 = vmatprep.subr.mxu0 0.0
  %683 = vmatpush1.msra.mxu0 0.0
  %684 = vmatprep.subr.mxu0 0.0
  %685 = vmatpush1.msra.mxu0 0.0
  %686 = vmatprep.subr.mxu0 0.0
  %687 = vmatpush1.msra.mxu0 0.0
  %688 = vmatprep.subr.mxu0 0.0
  %689 = vmatpush1.msra.mxu0 0.0
  %690 = vmatprep.subr.mxu0 0.0
  %691 = vmatpush1.msra.mxu0 0.0
  %692 = vmatprep.subr.mxu0 0.0
  %693 = vmatpush1.msra.mxu0 0.0
  %694 = vmatprep.subr.mxu0 0.0
  %695 = vmatpush1.msra.mxu0 0.0
  %696 = vmatprep.subr.mxu0 0.0
  %697 = vmatpush1.msra.mxu0 0.0
  %698 = vmatprep.subr.mxu0 0.0
  %699 = vmatpush1.msra.mxu0 0.0
  %700 = vmatprep.subr.mxu0 0.0
  %701 = vmatpush1.msra.mxu0 0.0
  %702 = vmatprep.subr.mxu0 0.0
  %703 = vmatpush1.msra.mxu0 0.0
  %704 = vmatprep.subr.mxu0 0.0
  %705 = vmatpush1.msra.mxu0 0.0
  %706 = vmatprep.subr.mxu0 0.0
  %707 = vmatpush1.msra.mxu0 0.0
  %708 = vmatprep.mubr.f32.mxu0 0.0
  %709 = vmatmul.mubr.f32.gmra.mrb[0].mxu0 %v642
  %v710 = vpop.f32.mrb[0].mxu0
  %v711 = vadd.f32 0.0, %v710
  %v712 = vpop.f32.mrb[0].mxu0
  %713 = vdwg.mxu0
  %v714 = vadd.f32 %v636, %v711
  %715 = vmatprep.subr.mxu0 0.0
  %716 = vmatpush1.msra.mxu0 %v78
  %717 = vmatprep.subr.mxu0 0.0
  %718 = vmatpush1.msra.mxu0 %v79
  %719 = vmatprep.subr.mxu0 0.0
  %720 = vmatpush1.msra.mxu0 0.0
  %721 = vmatprep.subr.mxu0 0.0
  %722 = vmatpush1.msra.mxu0 0.0
  %723 = vmatprep.subr.mxu0 0.0
  %724 = vmatpush1.msra.mxu0 0.0
  %725 = vmatprep.subr.mxu0 0.0
  %726 = vmatpush1.msra.mxu0 0.0
  %727 = vmatprep.subr.mxu0 0.0
  %728 = vmatpush1.msra.mxu0 0.0
  %729 = vmatprep.subr.mxu0 0.0
  %730 = vmatpush1.msra.mxu0 0.0
  %731 = vmatprep.subr.mxu0 0.0
  %732 = vmatpush1.msra.mxu0 0.0
  %733 = vmatprep.subr.mxu0 0.0
  %734 = vmatpush1.msra.mxu0 0.0
  %735 = vmatprep.subr.mxu0 0.0
  %736 = vmatpush1.msra.mxu0 0.0
  %737 = vmatprep.subr.mxu0 0.0
  %738 = vmatpush1.msra.mxu0 0.0
  %739 = vmatprep.subr.mxu0 0.0
  %740 = vmatpush1.msra.mxu0 0.0
  %741 = vmatprep.subr.mxu0 0.0
  %742 = vmatpush1.msra.mxu0 0.0
  %743 = vmatprep.subr.mxu0 0.0
  %744 = vmatpush1.msra.mxu0 0.0
  %745 = vmatprep.subr.mxu0 0.0
  %746 = vmatpush1.msra.mxu0 0.0
  %747 = vmatprep.subr.mxu0 0.0
  %748 = vmatpush1.msra.mxu0 0.0
  %749 = vmatprep.subr.mxu0 0.0
  %750 = vmatpush1.msra.mxu0 0.0
  %751 = vmatprep.subr.mxu0 0.0
  %752 = vmatpush1.msra.mxu0 0.0
  %753 = vmatprep.subr.mxu0 0.0
  %754 = vmatpush1.msra.mxu0 0.0
  %755 = vmatprep.subr.mxu0 0.0
  %756 = vmatpush1.msra.mxu0 0.0
  %757 = vmatprep.subr.mxu0 0.0
  %758 = vmatpush1.msra.mxu0 0.0
  %759 = vmatprep.subr.mxu0 0.0
  %760 = vmatpush1.msra.mxu0 0.0
  %761 = vmatprep.subr.mxu0 0.0
  %762 = vmatpush1.msra.mxu0 0.0
  %763 = vmatprep.subr.mxu0 0.0
  %764 = vmatpush1.msra.mxu0 0.0
  %765 = vmatprep.subr.mxu0 0.0
  %766 = vmatpush1.msra.mxu0 0.0
  %767 = vmatprep.subr.mxu0 0.0
  %768 = vmatpush1.msra.mxu0 0.0
  %769 = vmatprep.subr.mxu0 0.0
  %770 = vmatpush1.msra.mxu0 0.0
  %771 = vmatprep.subr.mxu0 0.0
  %772 = vmatpush1.msra.mxu0 0.0
  %773 = vmatprep.subr.mxu0 0.0
  %774 = vmatpush1.msra.mxu0 0.0
  %775 = vmatprep.subr.mxu0 0.0
  %776 = vmatpush1.msra.mxu0 0.0
  %777 = vmatprep.subr.mxu0 0.0
  %778 = vmatpush1.msra.mxu0 0.0
  %779 = vmatprep.mubr.f32.mxu0 0.0
  %780 = vmatmul.mubr.f32.gmra.mrb[0].mxu0 %v216
  %v781 = vpop.f32.mrb[0].mxu0
  %v782 = vadd.f32 0.0, %v781
  %v783 = vpop.f32.mrb[0].mxu0
  %784 = vdwg.mxu0
  %v785 = vadd.f32 %v714, %v782
  %v786 = vxor.u32 %v785, 2147483648
  %v787 = vmul.f32 %v786, 1.442695
  %v788 = vpow.pop %v787
  %v789 = vadd.f32 %v788, 1.0
  %v790 = vrcp.pop %v789
  %v791 = vmul.f32 1.0, %v790
  %v792 = vtanh.pop %v785
  %v793 = vmul.f32 %v791, 0.0
  %795 = vrot.lane.b32.xlu0 %v792, 96
  %v796 = vpop.permute.xlu0 %795
  %v798 = vmul.f32 %v791, %v796
  %800 = vrot.lane.b32.xlu0 %v798, 16
  %v801 = vpop.permute.xlu0 %800
  %v803 = vadd.f32 %v793, %v801
  %v804 = vtanh.pop %v803
  %806 = vrot.lane.b32.xlu0 %v804, 32
  %v807 = vpop.permute.xlu0 %806
  %v809 = vmul.f32 %v791, %v807
  %811 = vrot.lane.b32.xlu0 %v809, 80
  %v812 = vpop.permute.xlu0 %811
  %vm814 = vcmask 123904
  %815 = vst.msk [vmem:[#allocation3] sm:$0x3] %vm814, %v812
  %v816 = vsel %vm127, %v812, 0
  %818 = vmatprep.subr.mxu0 0.0
  %819 = vmatpush1.msra.mxu0 %v73
  %820 = vmatprep.subr.mxu0 0.0
  %821 = vmatpush1.msra.mxu0 %v74
  %822 = vmatprep.subr.mxu0 0.0
  %823 = vmatpush1.msra.mxu0 0.0
  %824 = vmatprep.subr.mxu0 0.0
  %825 = vmatpush1.msra.mxu0 0.0
  %826 = vmatprep.subr.mxu0 0.0
  %827 = vmatpush1.msra.mxu0 0.0
  %828 = vmatprep.subr.mxu0 0.0
  %829 = vmatpush1.msra.mxu0 0.0
  %830 = vmatprep.subr.mxu0 0.0
  %831 = vmatpush1.msra.mxu0 0.0
  %832 = vmatprep.subr.mxu0 0.0
  %833 = vmatpush1.msra.mxu0 0.0
  %834 = vmatprep.subr.mxu0 0.0
  %835 = vmatpush1.msra.mxu0 0.0
  %836 = vmatprep.subr.mxu0 0.0
  %837 = vmatpush1.msra.mxu0 0.0
  %838 = vmatprep.subr.mxu0 0.0
  %839 = vmatpush1.msra.mxu0 0.0
  %840 = vmatprep.subr.mxu0 0.0
  %841 = vmatpush1.msra.mxu0 0.0
  %842 = vmatprep.subr.mxu0 0.0
  %843 = vmatpush1.msra.mxu0 0.0
  %844 = vmatprep.subr.mxu0 0.0
  %845 = vmatpush1.msra.mxu0 0.0
  %846 = vmatprep.subr.mxu0 0.0
  %847 = vmatpush1.msra.mxu0 0.0
  %848 = vmatprep.subr.mxu0 0.0
  %849 = vmatpush1.msra.mxu0 0.0
  %850 = vmatprep.subr.mxu0 0.0
  %851 = vmatpush1.msra.mxu0 0.0
  %852 = vmatprep.subr.mxu0 0.0
  %853 = vmatpush1.msra.mxu0 0.0
  %854 = vmatprep.subr.mxu0 0.0
  %855 = vmatpush1.msra.mxu0 0.0
  %856 = vmatprep.subr.mxu0 0.0
  %857 = vmatpush1.msra.mxu0 0.0
  %858 = vmatprep.subr.mxu0 0.0
  %859 = vmatpush1.msra.mxu0 0.0
  %860 = vmatprep.subr.mxu0 0.0
  %861 = vmatpush1.msra.mxu0 0.0
  %862 = vmatprep.subr.mxu0 0.0
  %863 = vmatpush1.msra.mxu0 0.0
  %864 = vmatprep.subr.mxu0 0.0
  %865 = vmatpush1.msra.mxu0 0.0
  %866 = vmatprep.subr.mxu0 0.0
  %867 = vmatpush1.msra.mxu0 0.0
  %868 = vmatprep.subr.mxu0 0.0
  %869 = vmatpush1.msra.mxu0 0.0
  %870 = vmatprep.subr.mxu0 0.0
  %871 = vmatpush1.msra.mxu0 0.0
  %872 = vmatprep.subr.mxu0 0.0
  %873 = vmatpush1.msra.mxu0 0.0
  %874 = vmatprep.subr.mxu0 0.0
  %875 = vmatpush1.msra.mxu0 0.0
  %876 = vmatprep.subr.mxu0 0.0
  %877 = vmatpush1.msra.mxu0 0.0
  %878 = vmatprep.subr.mxu0 0.0
  %879 = vmatpush1.msra.mxu0 0.0
  %880 = vmatprep.subr.mxu0 0.0
  %881 = vmatpush1.msra.mxu0 0.0
  %882 = vmatprep.mubr.f32.mxu0 0.0
  %883 = vmatmul.mubr.f32.gmra.mrb[0].mxu0 %v816
  %v884 = vpop.f32.mrb[0].mxu0
  %v885 = vadd.f32 %v213, %v884
  %v886 = vpop.f32.mrb[0].mxu0
  %887 = vdwg.mxu0
  %v888 = vtanh.pop %v885
  %v891 = vunpack.c.l.s4 1966171168
  %v892 = vunpack.c.0.s8 %v891
  %v893 = vlaneseq
  %v894 = vshrl.u32 %v893, 7
  %v895 = vsub.s32 %v892, %v894
  %v896 = vrot.slane %v888, %v895
  %v897 = vcombine.high %v896, %v896
  %v899 = vunpack.c.l.s4 1966171168
  %v900 = vunpack.c.0.s8 %v899
  %v901 = vlaneseq
  %v902 = vshrl.u32 %v901, 7
  %v903 = vsub.s32 %v900, %v902
  %v904 = vrot.slane %v896, %v903
  %v906 = vunpack.c.l.s4 1966171168
  %v907 = vunpack.c.0.s8 %v906
  %v908 = vlaneseq
  %v909 = vshrl.u32 %v908, 7
  %v910 = vsub.s32 %v907, %v909
  %v911 = vrot.slane %v897, %v910
  %v912 = vsel %vm127, %v904, 0
  %914 = vmatprep.subr.mxu0 0.0
  %915 = vmatpush1.xpose.msra.mxu0 %v315
  %916 = vmatprep.subr.mxu0 0.0
  %917 = vmatpush1.xpose.msra.mxu0 0.0
  %918 = vmatprep.subr.mxu0 0.0
  %919 = vmatpush1.xpose.msra.mxu0 0.0
  %920 = vmatprep.subr.mxu0 0.0
  %921 = vmatpush1.xpose.msra.mxu0 0.0
  %922 = vmatprep.subr.mxu0 0.0
  %923 = vmatpush1.xpose.msra.mxu0 0.0
  %924 = vmatprep.subr.mxu0 0.0
  %925 = vmatpush1.xpose.msra.mxu0 0.0
  %926 = vmatprep.subr.mxu0 0.0
  %927 = vmatpush1.xpose.msra.mxu0 0.0
  %928 = vmatprep.subr.mxu0 0.0
  %929 = vmatpush1.xpose.msra.mxu0 0.0
  %930 = vmatprep.subr.mxu0 0.0
  %931 = vmatpush1.xpose.msra.mxu0 0.0
  %932 = vmatprep.subr.mxu0 0.0
  %933 = vmatpush1.xpose.msra.mxu0 0.0
  %934 = vmatprep.subr.mxu0 0.0
  %935 = vmatpush1.xpose.msra.mxu0 0.0
  %936 = vmatprep.subr.mxu0 0.0
  %937 = vmatpush1.xpose.msra.mxu0 0.0
  %938 = vmatprep.subr.mxu0 0.0
  %939 = vmatpush1.xpose.msra.mxu0 0.0
  %940 = vmatprep.subr.mxu0 0.0
  %941 = vmatpush1.xpose.msra.mxu0 0.0
  %942 = vmatprep.subr.mxu0 0.0
  %943 = vmatpush1.xpose.msra.mxu0 0.0
  %944 = vmatprep.subr.mxu0 0.0
  %945 = vmatpush1.xpose.msra.mxu0 0.0
  %946 = vmatprep.subr.mxu0 0.0
  %947 = vmatpush1.xpose.msra.mxu0 0.0
  %948 = vmatprep.subr.mxu0 0.0
  %949 = vmatpush1.xpose.msra.mxu0 0.0
  %950 = vmatprep.subr.mxu0 0.0
  %951 = vmatpush1.xpose.msra.mxu0 0.0
  %952 = vmatprep.subr.mxu0 0.0
  %953 = vmatpush1.xpose.msra.mxu0 0.0
  %954 = vmatprep.subr.mxu0 0.0
  %955 = vmatpush1.xpose.msra.mxu0 0.0
  %956 = vmatprep.subr.mxu0 0.0
  %957 = vmatpush1.xpose.msra.mxu0 0.0
  %958 = vmatprep.subr.mxu0 0.0
  %959 = vmatpush1.xpose.msra.mxu0 0.0
  %960 = vmatprep.subr.mxu0 0.0
  %961 = vmatpush1.xpose.msra.mxu0 0.0
  %962 = vmatprep.subr.mxu0 0.0
  %963 = vmatpush1.xpose.msra.mxu0 0.0
  %964 = vmatprep.subr.mxu0 0.0
  %965 = vmatpush1.xpose.msra.mxu0 0.0
  %966 = vmatprep.subr.mxu0 0.0
  %967 = vmatpush1.xpose.msra.mxu0 0.0
  %968 = vmatprep.subr.mxu0 0.0
  %969 = vmatpush1.xpose.msra.mxu0 0.0
  %970 = vmatprep.subr.mxu0 0.0
  %971 = vmatpush1.xpose.msra.mxu0 0.0
  %972 = vmatprep.subr.mxu0 0.0
  %973 = vmatpush1.xpose.msra.mxu0 0.0
  %974 = vmatprep.subr.mxu0 0.0
  %975 = vmatpush1.xpose.msra.mxu0 0.0
  %976 = vmatprep.subr.mxu0 0.0
  %977 = vmatpush1.xpose.msra.mxu0 0.0
  %978 = vmatprep.mubr.f32.mxu0 0.0
  %979 = vmatmul.mubr.f32.gmra.mrb[0].mxu0 %v912
  %v980 = vpop.f32.mrb[0].mxu0
  %v981 = vadd.f32 0.0, %v980
  %v982 = vpop.f32.mrb[0].mxu0
  %983 = vdwg.mxu0
  %v984 = vsel %vm127, %v911, 0
  %986 = vmatprep.subr.mxu0 0.0
  %987 = vmatpush1.xpose.msra.mxu0 %v390
  %988 = vmatprep.subr.mxu0 0.0
  %989 = vmatpush1.xpose.msra.mxu0 0.0
  %990 = vmatprep.subr.mxu0 0.0
  %991 = vmatpush1.xpose.msra.mxu0 0.0
  %992 = vmatprep.subr.mxu0 0.0
  %993 = vmatpush1.xpose.msra.mxu0 0.0
  %994 = vmatprep.subr.mxu0 0.0
  %995 = vmatpush1.xpose.msra.mxu0 0.0
  %996 = vmatprep.subr.mxu0 0.0
  %997 = vmatpush1.xpose.msra.mxu0 0.0
  %998 = vmatprep.subr.mxu0 0.0
  %999 = vmatpush1.xpose.msra.mxu0 0.0
  %1000 = vmatprep.subr.mxu0 0.0
  %1001 = vmatpush1.xpose.msra.mxu0 0.0
  %1002 = vmatprep.subr.mxu0 0.0
  %1003 = vmatpush1.xpose.msra.mxu0 0.0
  %1004 = vmatprep.subr.mxu0 0.0
  %1005 = vmatpush1.xpose.msra.mxu0 0.0
  %1006 = vmatprep.subr.mxu0 0.0
  %1007 = vmatpush1.xpose.msra.mxu0 0.0
  %1008 = vmatprep.subr.mxu0 0.0
  %1009 = vmatpush1.xpose.msra.mxu0 0.0
  %1010 = vmatprep.subr.mxu0 0.0
  %1011 = vmatpush1.xpose.msra.mxu0 0.0
  %1012 = vmatprep.subr.mxu0 0.0
  %1013 = vmatpush1.xpose.msra.mxu0 0.0
  %1014 = vmatprep.subr.mxu0 0.0
  %1015 = vmatpush1.xpose.msra.mxu0 0.0
  %1016 = vmatprep.subr.mxu0 0.0
  %1017 = vmatpush1.xpose.msra.mxu0 0.0
  %1018 = vmatprep.subr.mxu0 0.0
  %1019 = vmatpush1.xpose.msra.mxu0 0.0
  %1020 = vmatprep.subr.mxu0 0.0
  %1021 = vmatpush1.xpose.msra.mxu0 0.0
  %1022 = vmatprep.subr.mxu0 0.0
  %1023 = vmatpush1.xpose.msra.mxu0 0.0
  %1024 = vmatprep.subr.mxu0 0.0
  %1025 = vmatpush1.xpose.msra.mxu0 0.0
  %1026 = vmatprep.subr.mxu0 0.0
  %1027 = vmatpush1.xpose.msra.mxu0 0.0
  %1028 = vmatprep.subr.mxu0 0.0
  %1029 = vmatpush1.xpose.msra.mxu0 0.0
  %1030 = vmatprep.subr.mxu0 0.0
  %1031 = vmatpush1.xpose.msra.mxu0 0.0
  %1032 = vmatprep.subr.mxu0 0.0
  %1033 = vmatpush1.xpose.msra.mxu0 0.0
  %1034 = vmatprep.subr.mxu0 0.0
  %1035 = vmatpush1.xpose.msra.mxu0 0.0
  %1036 = vmatprep.subr.mxu0 0.0
  %1037 = vmatpush1.xpose.msra.mxu0 0.0
  %1038 = vmatprep.subr.mxu0 0.0
  %1039 = vmatpush1.xpose.msra.mxu0 0.0
  %1040 = vmatprep.subr.mxu0 0.0
  %1041 = vmatpush1.xpose.msra.mxu0 0.0
  %1042 = vmatprep.subr.mxu0 0.0
  %1043 = vmatpush1.xpose.msra.mxu0 0.0
  %1044 = vmatprep.subr.mxu0 0.0
  %1045 = vmatpush1.xpose.msra.mxu0 0.0
  %1046 = vmatprep.subr.mxu0 0.0
  %1047 = vmatpush1.xpose.msra.mxu0 0.0
  %1048 = vmatprep.subr.mxu0 0.0
  %1049 = vmatpush1.xpose.msra.mxu0 0.0
  %1050 = vmatprep.mubr.f32.mxu0 0.0
  %1051 = vmatmul.mubr.f32.gmra.mrb[0].mxu0 %v984
  %v1052 = vpop.f32.mrb[0].mxu0
  %v1053 = vadd.f32 0.0, %v1052
  %v1054 = vpop.f32.mrb[0].mxu0
  %1055 = vdwg.mxu0
  %v1056 = vmul.f32 %v981, 2.0
  %v1057 = vmul.f32 %v1053, 2.0
  %v1058 = vsel %vm71, %v1056, -1e+30
  %v1059 = vsel %vm72, %v1057, -1e+30
  %v1060 = vsel %vm466, %v1058, -inf
  %1061 = vmax.xlane.f32.xlu0 %v1060
  %v1062 = vpop.xlane.xlu0 %1061
  %v1063 = vsel %vm466, %v1059, -inf
  %1064 = vmax.xlane.f32.xlu0 %v1063
  %v1065 = vpop.xlane.xlu0 %1064
  %v1066 = vsub.f32 %v1058, %v1062
  %v1067 = vsub.f32 %v1059, %v1065
  %v1068 = vmul.f32 %v1066, 1.442695
  %v1069 = vpow.pop %v1068
  %v1070 = vmul.f32 %v1067, 1.442695
  %v1071 = vpow.pop %v1070
  %v1072 = vsel %vm466, %v1069, 0.0
  %1073 = vadd.xlane.f32.xlu0 %v1072
  %v1074 = vpop.xlane.xlu0 %1073
  %v1075 = vsel %vm466, %v1071, 0.0
  %1076 = vadd.xlane.f32.xlu0 %v1075
  %v1077 = vpop.xlane.xlu0 %1076
  %v1078 = vrcp.pop %v1074
  %v1079 = vmul.f32 %v1069, %v1078
  %v1080 = vrcp.pop %v1077
  %v1081 = vmul.f32 %v1071, %v1080
  %v1083 = vsel %vm489, %v1079, 0
  %1085 = vmatprep.subr.mxu0 0.0
  %1086 = vmatpush1.msra.mxu0 %v42
  %1087 = vmatprep.subr.mxu0 0.0
  %1088 = vmatpush1.msra.mxu0 0.0
  %1089 = vmatprep.subr.mxu0 0.0
  %1090 = vmatpush1.msra.mxu0 0.0
  %1091 = vmatprep.subr.mxu0 0.0
  %1092 = vmatpush1.msra.mxu0 0.0
  %1093 = vmatprep.subr.mxu0 0.0
  %1094 = vmatpush1.msra.mxu0 0.0
  %1095 = vmatprep.subr.mxu0 0.0
  %1096 = vmatpush1.msra.mxu0 0.0
  %1097 = vmatprep.subr.mxu0 0.0
  %1098 = vmatpush1.msra.mxu0 0.0
  %1099 = vmatprep.subr.mxu0 0.0
  %1100 = vmatpush1.msra.mxu0 0.0
  %1101 = vmatprep.subr.mxu0 0.0
  %1102 = vmatpush1.msra.mxu0 0.0
  %1103 = vmatprep.subr.mxu0 0.0
  %1104 = vmatpush1.msra.mxu0 0.0
  %1105 = vmatprep.subr.mxu0 0.0
  %1106 = vmatpush1.msra.mxu0 0.0
  %1107 = vmatprep.subr.mxu0 0.0
  %1108 = vmatpush1.msra.mxu0 0.0
  %1109 = vmatprep.subr.mxu0 0.0
  %1110 = vmatpush1.msra.mxu0 0.0
  %1111 = vmatprep.subr.mxu0 0.0
  %1112 = vmatpush1.msra.mxu0 0.0
  %1113 = vmatprep.subr.mxu0 0.0
  %1114 = vmatpush1.msra.mxu0 0.0
  %1115 = vmatprep.subr.mxu0 0.0
  %1116 = vmatpush1.msra.mxu0 0.0
  %1117 = vmatprep.subr.mxu0 0.0
  %1118 = vmatpush1.msra.mxu0 0.0
  %1119 = vmatprep.subr.mxu0 0.0
  %1120 = vmatpush1.msra.mxu0 0.0
  %1121 = vmatprep.subr.mxu0 0.0
  %1122 = vmatpush1.msra.mxu0 0.0
  %1123 = vmatprep.subr.mxu0 0.0
  %1124 = vmatpush1.msra.mxu0 0.0
  %1125 = vmatprep.subr.mxu0 0.0
  %1126 = vmatpush1.msra.mxu0 0.0
  %1127 = vmatprep.subr.mxu0 0.0
  %1128 = vmatpush1.msra.mxu0 0.0
  %1129 = vmatprep.subr.mxu0 0.0
  %1130 = vmatpush1.msra.mxu0 0.0
  %1131 = vmatprep.subr.mxu0 0.0
  %1132 = vmatpush1.msra.mxu0 0.0
  %1133 = vmatprep.subr.mxu0 0.0
  %1134 = vmatpush1.msra.mxu0 0.0
  %1135 = vmatprep.subr.mxu0 0.0
  %1136 = vmatpush1.msra.mxu0 0.0
  %1137 = vmatprep.subr.mxu0 0.0
  %1138 = vmatpush1.msra.mxu0 0.0
  %1139 = vmatprep.subr.mxu0 0.0
  %1140 = vmatpush1.msra.mxu0 0.0
  %1141 = vmatprep.subr.mxu0 0.0
  %1142 = vmatpush1.msra.mxu0 0.0
  %1143 = vmatprep.subr.mxu0 0.0
  %1144 = vmatpush1.msra.mxu0 0.0
  %1145 = vmatprep.subr.mxu0 0.0
  %1146 = vmatpush1.msra.mxu0 0.0
  %1147 = vmatprep.subr.mxu0 0.0
  %1148 = vmatpush1.msra.mxu0 0.0
  %1149 = vmatprep.mubr.f32.mxu0 0.0
  %1150 = vmatmul.mubr.f32.gmra.mrb[0].mxu0 %v1083
  %v1151 = vpop.f32.mrb[0].mxu0
  %v1152 = vadd.f32 0.0, %v1151
  %v1153 = vpop.f32.mrb[0].mxu0
  %1154 = vdwg.mxu0
  %v1156 = vsel %vm489, %v1081, 0
  %1158 = vmatprep.subr.mxu0 0.0
  %1159 = vmatpush1.msra.mxu0 %v43
  %1160 = vmatprep.subr.mxu0 0.0
  %1161 = vmatpush1.msra.mxu0 0.0
  %1162 = vmatprep.subr.mxu0 0.0
  %1163 = vmatpush1.msra.mxu0 0.0
  %1164 = vmatprep.subr.mxu0 0.0
  %1165 = vmatpush1.msra.mxu0 0.0
  %1166 = vmatprep.subr.mxu0 0.0
  %1167 = vmatpush1.msra.mxu0 0.0
  %1168 = vmatprep.subr.mxu0 0.0
  %1169 = vmatpush1.msra.mxu0 0.0
  %1170 = vmatprep.subr.mxu0 0.0
  %1171 = vmatpush1.msra.mxu0 0.0
  %1172 = vmatprep.subr.mxu0 0.0
  %1173 = vmatpush1.msra.mxu0 0.0
  %1174 = vmatprep.subr.mxu0 0.0
  %1175 = vmatpush1.msra.mxu0 0.0
  %1176 = vmatprep.subr.mxu0 0.0
  %1177 = vmatpush1.msra.mxu0 0.0
  %1178 = vmatprep.subr.mxu0 0.0
  %1179 = vmatpush1.msra.mxu0 0.0
  %1180 = vmatprep.subr.mxu0 0.0
  %1181 = vmatpush1.msra.mxu0 0.0
  %1182 = vmatprep.subr.mxu0 0.0
  %1183 = vmatpush1.msra.mxu0 0.0
  %1184 = vmatprep.subr.mxu0 0.0
  %1185 = vmatpush1.msra.mxu0 0.0
  %1186 = vmatprep.subr.mxu0 0.0
  %1187 = vmatpush1.msra.mxu0 0.0
  %1188 = vmatprep.subr.mxu0 0.0
  %1189 = vmatpush1.msra.mxu0 0.0
  %1190 = vmatprep.subr.mxu0 0.0
  %1191 = vmatpush1.msra.mxu0 0.0
  %1192 = vmatprep.subr.mxu0 0.0
  %1193 = vmatpush1.msra.mxu0 0.0
  %1194 = vmatprep.subr.mxu0 0.0
  %1195 = vmatpush1.msra.mxu0 0.0
  %1196 = vmatprep.subr.mxu0 0.0
  %1197 = vmatpush1.msra.mxu0 0.0
  %1198 = vmatprep.subr.mxu0 0.0
  %1199 = vmatpush1.msra.mxu0 0.0
  %1200 = vmatprep.subr.mxu0 0.0
  %1201 = vmatpush1.msra.mxu0 0.0
  %1202 = vmatprep.subr.mxu0 0.0
  %1203 = vmatpush1.msra.mxu0 0.0
  %1204 = vmatprep.subr.mxu0 0.0
  %1205 = vmatpush1.msra.mxu0 0.0
  %1206 = vmatprep.subr.mxu0 0.0
  %1207 = vmatpush1.msra.mxu0 0.0
  %1208 = vmatprep.subr.mxu0 0.0
  %1209 = vmatpush1.msra.mxu0 0.0
  %1210 = vmatprep.subr.mxu0 0.0
  %1211 = vmatpush1.msra.mxu0 0.0
  %1212 = vmatprep.subr.mxu0 0.0
  %1213 = vmatpush1.msra.mxu0 0.0
  %1214 = vmatprep.subr.mxu0 0.0
  %1215 = vmatpush1.msra.mxu0 0.0
  %1216 = vmatprep.subr.mxu0 0.0
  %1217 = vmatpush1.msra.mxu0 0.0
  %1218 = vmatprep.subr.mxu0 0.0
  %1219 = vmatpush1.msra.mxu0 0.0
  %1220 = vmatprep.subr.mxu0 0.0
  %1221 = vmatpush1.msra.mxu0 0.0
  %1222 = vmatprep.mubr.f32.mxu0 0.0
  %1223 = vmatmul.mubr.f32.gmra.mrb[0].mxu0 %v1156
  %v1224 = vpop.f32.mrb[0].mxu0
  %v1225 = vadd.f32 0.0, %v1224
  %v1226 = vpop.f32.mrb[0].mxu0
  %1227 = vdwg.mxu0
  %s1228 = scalar_lea.vmem [#allocation2], 2
  %v1229 = vld [vmem:[%s1228] sm:$0x3]
  %v1232 = vrot.slane %v1225, 7
  %v1233 = vsel %vm640, %v1232, %v1152
  %v1234 = vsel %vm127, %v1233, 0
  %1236 = vmatprep.subr.mxu0 0.0
  %1237 = vmatpush1.msra.mxu0 %v76
  %1238 = vmatprep.subr.mxu0 0.0
  %1239 = vmatpush1.msra.mxu0 %v77
  %1240 = vmatprep.subr.mxu0 0.0
  %1241 = vmatpush1.msra.mxu0 0.0
  %1242 = vmatprep.subr.mxu0 0.0
  %1243 = vmatpush1.msra.mxu0 0.0
  %1244 = vmatprep.subr.mxu0 0.0
  %1245 = vmatpush1.msra.mxu0 0.0
  %1246 = vmatprep.subr.mxu0 0.0
  %1247 = vmatpush1.msra.mxu0 0.0
  %1248 = vmatprep.subr.mxu0 0.0
  %1249 = vmatpush1.msra.mxu0 0.0
  %1250 = vmatprep.subr.mxu0 0.0
  %1251 = vmatpush1.msra.mxu0 0.0
  %1252 = vmatprep.subr.mxu0 0.0
  %1253 = vmatpush1.msra.mxu0 0.0
  %1254 = vmatprep.subr.mxu0 0.0
  %1255 = vmatpush1.msra.mxu0 0.0
  %1256 = vmatprep.subr.mxu0 0.0
  %1257 = vmatpush1.msra.mxu0 0.0
  %1258 = vmatprep.subr.mxu0 0.0
  %1259 = vmatpush1.msra.mxu0 0.0
  %1260 = vmatprep.subr.mxu0 0.0
  %1261 = vmatpush1.msra.mxu0 0.0
  %1262 = vmatprep.subr.mxu0 0.0
  %1263 = vmatpush1.msra.mxu0 0.0
  %1264 = vmatprep.subr.mxu0 0.0
  %1265 = vmatpush1.msra.mxu0 0.0
  %1266 = vmatprep.subr.mxu0 0.0
  %1267 = vmatpush1.msra.mxu0 0.0
  %1268 = vmatprep.subr.mxu0 0.0
  %1269 = vmatpush1.msra.mxu0 0.0
  %1270 = vmatprep.subr.mxu0 0.0
  %1271 = vmatpush1.msra.mxu0 0.0
  %1272 = vmatprep.subr.mxu0 0.0
  %1273 = vmatpush1.msra.mxu0 0.0
  %1274 = vmatprep.subr.mxu0 0.0
  %1275 = vmatpush1.msra.mxu0 0.0
  %1276 = vmatprep.subr.mxu0 0.0
  %1277 = vmatpush1.msra.mxu0 0.0
  %1278 = vmatprep.subr.mxu0 0.0
  %1279 = vmatpush1.msra.mxu0 0.0
  %1280 = vmatprep.subr.mxu0 0.0
  %1281 = vmatpush1.msra.mxu0 0.0
  %1282 = vmatprep.subr.mxu0 0.0
  %1283 = vmatpush1.msra.mxu0 0.0
  %1284 = vmatprep.subr.mxu0 0.0
  %1285 = vmatpush1.msra.mxu0 0.0
  %1286 = vmatprep.subr.mxu0 0.0
  %1287 = vmatpush1.msra.mxu0 0.0
  %1288 = vmatprep.subr.mxu0 0.0
  %1289 = vmatpush1.msra.mxu0 0.0
  %1290 = vmatprep.subr.mxu0 0.0
  %1291 = vmatpush1.msra.mxu0 0.0
  %1292 = vmatprep.subr.mxu0 0.0
  %1293 = vmatpush1.msra.mxu0 0.0
  %1294 = vmatprep.subr.mxu0 0.0
  %1295 = vmatpush1.msra.mxu0 0.0
  %1296 = vmatprep.subr.mxu0 0.0
  %1297 = vmatpush1.msra.mxu0 0.0
  %1298 = vmatprep.subr.mxu0 0.0
  %1299 = vmatpush1.msra.mxu0 0.0
  %1300 = vmatprep.mubr.f32.mxu0 0.0
  %1301 = vmatmul.mubr.f32.gmra.mrb[0].mxu0 %v1234
  %v1302 = vpop.f32.mrb[0].mxu0
  %v1303 = vadd.f32 0.0, %v1302
  %v1304 = vpop.f32.mrb[0].mxu0
  %1305 = vdwg.mxu0
  %v1306 = vadd.f32 %v1229, %v1303
  %1307 = vmatprep.subr.mxu0 0.0
  %1308 = vmatpush1.msra.mxu0 %v78
  %1309 = vmatprep.subr.mxu0 0.0
  %1310 = vmatpush1.msra.mxu0 %v79
  %1311 = vmatprep.subr.mxu0 0.0
  %1312 = vmatpush1.msra.mxu0 0.0
  %1313 = vmatprep.subr.mxu0 0.0
  %1314 = vmatpush1.msra.mxu0 0.0
  %1315 = vmatprep.subr.mxu0 0.0
  %1316 = vmatpush1.msra.mxu0 0.0
  %1317 = vmatprep.subr.mxu0 0.0
  %1318 = vmatpush1.msra.mxu0 0.0
  %1319 = vmatprep.subr.mxu0 0.0
  %1320 = vmatpush1.msra.mxu0 0.0
  %1321 = vmatprep.subr.mxu0 0.0
  %1322 = vmatpush1.msra.mxu0 0.0
  %1323 = vmatprep.subr.mxu0 0.0
  %1324 = vmatpush1.msra.mxu0 0.0
  %1325 = vmatprep.subr.mxu0 0.0
  %1326 = vmatpush1.msra.mxu0 0.0
  %1327 = vmatprep.subr.mxu0 0.0
  %1328 = vmatpush1.msra.mxu0 0.0
  %1329 = vmatprep.subr.mxu0 0.0
  %1330 = vmatpush1.msra.mxu0 0.0
  %1331 = vmatprep.subr.mxu0 0.0
  %1332 = vmatpush1.msra.mxu0 0.0
  %1333 = vmatprep.subr.mxu0 0.0
  %1334 = vmatpush1.msra.mxu0 0.0
  %1335 = vmatprep.subr.mxu0 0.0
  %1336 = vmatpush1.msra.mxu0 0.0
  %1337 = vmatprep.subr.mxu0 0.0
  %1338 = vmatpush1.msra.mxu0 0.0
  %1339 = vmatprep.subr.mxu0 0.0
  %1340 = vmatpush1.msra.mxu0 0.0
  %1341 = vmatprep.subr.mxu0 0.0
  %1342 = vmatpush1.msra.mxu0 0.0
  %1343 = vmatprep.subr.mxu0 0.0
  %1344 = vmatpush1.msra.mxu0 0.0
  %1345 = vmatprep.subr.mxu0 0.0
  %1346 = vmatpush1.msra.mxu0 0.0
  %1347 = vmatprep.subr.mxu0 0.0
  %1348 = vmatpush1.msra.mxu0 0.0
  %1349 = vmatprep.subr.mxu0 0.0
  %1350 = vmatpush1.msra.mxu0 0.0
  %1351 = vmatprep.subr.mxu0 0.0
  %1352 = vmatpush1.msra.mxu0 0.0
  %1353 = vmatprep.subr.mxu0 0.0
  %1354 = vmatpush1.msra.mxu0 0.0
  %1355 = vmatprep.subr.mxu0 0.0
  %1356 = vmatpush1.msra.mxu0 0.0
  %1357 = vmatprep.subr.mxu0 0.0
  %1358 = vmatpush1.msra.mxu0 0.0
  %1359 = vmatprep.subr.mxu0 0.0
  %1360 = vmatpush1.msra.mxu0 0.0
  %1361 = vmatprep.subr.mxu0 0.0
  %1362 = vmatpush1.msra.mxu0 0.0
  %1363 = vmatprep.subr.mxu0 0.0
  %1364 = vmatpush1.msra.mxu0 0.0
  %1365 = vmatprep.subr.mxu0 0.0
  %1366 = vmatpush1.msra.mxu0 0.0
  %1367 = vmatprep.subr.mxu0 0.0
  %1368 = vmatpush1.msra.mxu0 0.0
  %1369 = vmatprep.subr.mxu0 0.0
  %1370 = vmatpush1.msra.mxu0 0.0
  %1371 = vmatprep.mubr.f32.mxu0 0.0
  %1372 = vmatmul.mubr.f32.gmra.mrb[0].mxu0 %v816
  %v1373 = vpop.f32.mrb[0].mxu0
  %v1374 = vadd.f32 0.0, %v1373
  %v1375 = vpop.f32.mrb[0].mxu0
  %1376 = vdwg.mxu0
  %v1377 = vadd.f32 %v1306, %v1374
  %v1378 = vxor.u32 %v1377, 2147483648
  %v1379 = vmul.f32 %v1378, 1.442695
  %v1380 = vpow.pop %v1379
  %v1381 = vadd.f32 %v1380, 1.0
  %v1382 = vrcp.pop %v1381
  %v1383 = vmul.f32 1.0, %v1382
  %v1384 = vtanh.pop %v1377
  %v1385 = vmul.f32 %v1383, %v803
  %1387 = vrot.lane.b32.xlu0 %v1384, 96
  %v1388 = vpop.permute.xlu0 %1387
  %v1390 = vmul.f32 %v1383, %v1388
  %1392 = vrot.lane.b32.xlu0 %v1390, 16
  %v1393 = vpop.permute.xlu0 %1392
  %v1395 = vadd.f32 %v1385, %v1393
  %v1396 = vtanh.pop %v1395
  %1398 = vrot.lane.b32.xlu0 %v1396, 32
  %v1399 = vpop.permute.xlu0 %1398
  %v1401 = vmul.f32 %v1383, %v1399
  %1403 = vrot.lane.b32.xlu0 %v1401, 80
  %v1404 = vpop.permute.xlu0 %1403
  %s1406 = scalar_lea.vmem [#allocation3], 2
  %1407 = vst.msk [vmem:[%s1406] sm:$0x3] %vm814, %v1404
  %v1408 = vsel %vm127, %v1404, 0
  %1410 = vmatprep.subr.mxu0 0.0
  %1411 = vmatpush1.msra.mxu0 %v73
  %1412 = vmatprep.subr.mxu0 0.0
  %1413 = vmatpush1.msra.mxu0 %v74
  %1414 = vmatprep.subr.mxu0 0.0
  %1415 = vmatpush1.msra.mxu0 0.0
  %1416 = vmatprep.subr.mxu0 0.0
  %1417 = vmatpush1.msra.mxu0 0.0
  %1418 = vmatprep.subr.mxu0 0.0
  %1419 = vmatpush1.msra.mxu0 0.0
  %1420 = vmatprep.subr.mxu0 0.0
  %1421 = vmatpush1.msra.mxu0 0.0
  %1422 = vmatprep.subr.mxu0 0.0
  %1423 = vmatpush1.msra.mxu0 0.0
  %1424 = vmatprep.subr.mxu0 0.0
  %1425 = vmatpush1.msra.mxu0 0.0
  %1426 = vmatprep.subr.mxu0 0.0
  %1427 = vmatpush1.msra.mxu0 0.0
  %1428 = vmatprep.subr.mxu0 0.0
  %1429 = vmatpush1.msra.mxu0 0.0
  %1430 = vmatprep.subr.mxu0 0.0
  %1431 = vmatpush1.msra.mxu0 0.0
  %1432 = vmatprep.subr.mxu0 0.0
  %1433 = vmatpush1.msra.mxu0 0.0
  %1434 = vmatprep.subr.mxu0 0.0
  %1435 = vmatpush1.msra.mxu0 0.0
  %1436 = vmatprep.subr.mxu0 0.0
  %1437 = vmatpush1.msra.mxu0 0.0
  %1438 = vmatprep.subr.mxu0 0.0
  %1439 = vmatpush1.msra.mxu0 0.0
  %1440 = vmatprep.subr.mxu0 0.0
  %1441 = vmatpush1.msra.mxu0 0.0
  %1442 = vmatprep.subr.mxu0 0.0
  %1443 = vmatpush1.msra.mxu0 0.0
  %1444 = vmatprep.subr.mxu0 0.0
  %1445 = vmatpush1.msra.mxu0 0.0
  %1446 = vmatprep.subr.mxu0 0.0
  %1447 = vmatpush1.msra.mxu0 0.0
  %1448 = vmatprep.subr.mxu0 0.0
  %1449 = vmatpush1.msra.mxu0 0.0
  %1450 = vmatprep.subr.mxu0 0.0
  %1451 = vmatpush1.msra.mxu0 0.0
  %1452 = vmatprep.subr.mxu0 0.0
  %1453 = vmatpush1.msra.mxu0 0.0
  %1454 = vmatprep.subr.mxu0 0.0
  %1455 = vmatpush1.msra.mxu0 0.0
  %1456 = vmatprep.subr.mxu0 0.0
  %1457 = vmatpush1.msra.mxu0 0.0
  %1458 = vmatprep.subr.mxu0 0.0
  %1459 = vmatpush1.msra.mxu0 0.0
  %1460 = vmatprep.subr.mxu0 0.0
  %1461 = vmatpush1.msra.mxu0 0.0
  %1462 = vmatprep.subr.mxu0 0.0
  %1463 = vmatpush1.msra.mxu0 0.0
  %1464 = vmatprep.subr.mxu0 0.0
  %1465 = vmatpush1.msra.mxu0 0.0
  %1466 = vmatprep.subr.mxu0 0.0
  %1467 = vmatpush1.msra.mxu0 0.0
  %1468 = vmatprep.subr.mxu0 0.0
  %1469 = vmatpush1.msra.mxu0 0.0
  %1470 = vmatprep.subr.mxu0 0.0
  %1471 = vmatpush1.msra.mxu0 0.0
  %1472 = vmatprep.subr.mxu0 0.0
  %1473 = vmatpush1.msra.mxu0 0.0
  %1474 = vmatprep.mubr.f32.mxu0 0.0
  %1475 = vmatmul.mubr.f32.gmra.mrb[0].mxu0 %v1408
  %v1476 = vpop.f32.mrb[0].mxu0
  %v1477 = vadd.f32 %v213, %v1476
  %v1478 = vpop.f32.mrb[0].mxu0
  %1479 = vdwg.mxu0
  %v1480 = vtanh.pop %v1477
  %v1483 = vunpack.c.l.s4 1966171168
  %v1484 = vunpack.c.0.s8 %v1483
  %v1485 = vlaneseq
  %v1486 = vshrl.u32 %v1485, 7
  %v1487 = vsub.s32 %v1484, %v1486
  %v1488 = vrot.slane %v1480, %v1487
  %v1489 = vcombine.high %v1488, %v1488
  %v1491 = vunpack.c.l.s4 1966171168
  %v1492 = vunpack.c.0.s8 %v1491
  %v1493 = vlaneseq
  %v1494 = vshrl.u32 %v1493, 7
  %v1495 = vsub.s32 %v1492, %v1494
  %v1496 = vrot.slane %v1488, %v1495
  %v1498 = vunpack.c.l.s4 1966171168
  %v1499 = vunpack.c.0.s8 %v1498
  %v1500 = vlaneseq
  %v1501 = vshrl.u32 %v1500, 7
  %v1502 = vsub.s32 %v1499, %v1501
  %v1503 = vrot.slane %v1489, %v1502
  %v1504 = vsel %vm127, %v1496, 0
  %1506 = vmatprep.subr.mxu0 0.0
  %1507 = vmatpush1.xpose.msra.mxu0 %v315
  %1508 = vmatprep.subr.mxu0 0.0
  %1509 = vmatpush1.xpose.msra.mxu0 0.0
  %1510 = vmatprep.subr.mxu0 0.0
  %1511 = vmatpush1.xpose.msra.mxu0 0.0
  %1512 = vmatprep.subr.mxu0 0.0
  %1513 = vmatpush1.xpose.msra.mxu0 0.0
  %1514 = vmatprep.subr.mxu0 0.0
  %1515 = vmatpush1.xpose.msra.mxu0 0.0
  %1516 = vmatprep.subr.mxu0 0.0
  %1517 = vmatpush1.xpose.msra.mxu0 0.0
  %1518 = vmatprep.subr.mxu0 0.0
  %1519 = vmatpush1.xpose.msra.mxu0 0.0
  %1520 = vmatprep.subr.mxu0 0.0
  %1521 = vmatpush1.xpose.msra.mxu0 0.0
  %1522 = vmatprep.subr.mxu0 0.0
  %1523 = vmatpush1.xpose.msra.mxu0 0.0
  %1524 = vmatprep.subr.mxu0 0.0
  %1525 = vmatpush1.xpose.msra.mxu0 0.0
  %1526 = vmatprep.subr.mxu0 0.0
  %1527 = vmatpush1.xpose.msra.mxu0 0.0
  %1528 = vmatprep.subr.mxu0 0.0
  %1529 = vmatpush1.xpose.msra.mxu0 0.0
  %1530 = vmatprep.subr.mxu0 0.0
  %1531 = vmatpush1.xpose.msra.mxu0 0.0
  %1532 = vmatprep.subr.mxu0 0.0
  %1533 = vmatpush1.xpose.msra.mxu0 0.0
  %1534 = vmatprep.subr.mxu0 0.0
  %1535 = vmatpush1.xpose.msra.mxu0 0.0
  %1536 = vmatprep.subr.mxu0 0.0
  %1537 = vmatpush1.xpose.msra.mxu0 0.0
  %1538 = vmatprep.subr.mxu0 0.0
  %1539 = vmatpush1.xpose.msra.mxu0 0.0
  %1540 = vmatprep.subr.mxu0 0.0
  %1541 = vmatpush1.xpose.msra.mxu0 0.0
  %1542 = vmatprep.subr.mxu0 0.0
  %1543 = vmatpush1.xpose.msra.mxu0 0.0
  %1544 = vmatprep.subr.mxu0 0.0
  %1545 = vmatpush1.xpose.msra.mxu0 0.0
  %1546 = vmatprep.subr.mxu0 0.0
  %1547 = vmatpush1.xpose.msra.mxu0 0.0
  %1548 = vmatprep.subr.mxu0 0.0
  %1549 = vmatpush1.xpose.msra.mxu0 0.0
  %1550 = vmatprep.subr.mxu0 0.0
  %1551 = vmatpush1.xpose.msra.mxu0 0.0
  %1552 = vmatprep.subr.mxu0 0.0
  %1553 = vmatpush1.xpose.msra.mxu0 0.0
  %1554 = vmatprep.subr.mxu0 0.0
  %1555 = vmatpush1.xpose.msra.mxu0 0.0
  %1556 = vmatprep.subr.mxu0 0.0
  %1557 = vmatpush1.xpose.msra.mxu0 0.0
  %1558 = vmatprep.subr.mxu0 0.0
  %1559 = vmatpush1.xpose.msra.mxu0 0.0
  %1560 = vmatprep.subr.mxu0 0.0
  %1561 = vmatpush1.xpose.msra.mxu0 0.0
  %1562 = vmatprep.subr.mxu0 0.0
  %1563 = vmatpush1.xpose.msra.mxu0 0.0
  %1564 = vmatprep.subr.mxu0 0.0
  %1565 = vmatpush1.xpose.msra.mxu0 0.0
  %1566 = vmatprep.subr.mxu0 0.0
  %1567 = vmatpush1.xpose.msra.mxu0 0.0
  %1568 = vmatprep.subr.mxu0 0.0
  %1569 = vmatpush1.xpose.msra.mxu0 0.0
  %1570 = vmatprep.mubr.f32.mxu0 0.0
  %1571 = vmatmul.mubr.f32.gmra.mrb[0].mxu0 %v1504
  %v1572 = vpop.f32.mrb[0].mxu0
  %v1573 = vadd.f32 0.0, %v1572
  %v1574 = vpop.f32.mrb[0].mxu0
  %1575 = vdwg.mxu0
  %v1576 = vsel %vm127, %v1503, 0
  %1578 = vmatprep.subr.mxu0 0.0
  %1579 = vmatpush1.xpose.msra.mxu0 %v390
  %1580 = vmatprep.subr.mxu0 0.0
  %1581 = vmatpush1.xpose.msra.mxu0 0.0
  %1582 = vmatprep.subr.mxu0 0.0
  %1583 = vmatpush1.xpose.msra.mxu0 0.0
  %1584 = vmatprep.subr.mxu0 0.0
  %1585 = vmatpush1.xpose.msra.mxu0 0.0
  %1586 = vmatprep.subr.mxu0 0.0
  %1587 = vmatpush1.xpose.msra.mxu0 0.0
  %1588 = vmatprep.subr.mxu0 0.0
  %1589 = vmatpush1.xpose.msra.mxu0 0.0
  %1590 = vmatprep.subr.mxu0 0.0
  %1591 = vmatpush1.xpose.msra.mxu0 0.0
  %1592 = vmatprep.subr.mxu0 0.0
  %1593 = vmatpush1.xpose.msra.mxu0 0.0
  %1594 = vmatprep.subr.mxu0 0.0
  %1595 = vmatpush1.xpose.msra.mxu0 0.0
  %1596 = vmatprep.subr.mxu0 0.0
  %1597 = vmatpush1.xpose.msra.mxu0 0.0
  %1598 = vmatprep.subr.mxu0 0.0
  %1599 = vmatpush1.xpose.msra.mxu0 0.0
  %1600 = vmatprep.subr.mxu0 0.0
  %1601 = vmatpush1.xpose.msra.mxu0 0.0
  %1602 = vmatprep.subr.mxu0 0.0
  %1603 = vmatpush1.xpose.msra.mxu0 0.0
  %1604 = vmatprep.subr.mxu0 0.0
  %1605 = vmatpush1.xpose.msra.mxu0 0.0
  %1606 = vmatprep.subr.mxu0 0.0
  %1607 = vmatpush1.xpose.msra.mxu0 0.0
  %1608 = vmatprep.subr.mxu0 0.0
  %1609 = vmatpush1.xpose.msra.mxu0 0.0
  %1610 = vmatprep.subr.mxu0 0.0
  %1611 = vmatpush1.xpose.msra.mxu0 0.0
  %1612 = vmatprep.subr.mxu0 0.0
  %1613 = vmatpush1.xpose.msra.mxu0 0.0
  %1614 = vmatprep.subr.mxu0 0.0
  %1615 = vmatpush1.xpose.msra.mxu0 0.0
  %1616 = vmatprep.subr.mxu0 0.0
  %1617 = vmatpush1.xpose.msra.mxu0 0.0
  %1618 = vmatprep.subr.mxu0 0.0
  %1619 = vmatpush1.xpose.msra.mxu0 0.0
  %1620 = vmatprep.subr.mxu0 0.0
  %1621 = vmatpush1.xpose.msra.mxu0 0.0
  %1622 = vmatprep.subr.mxu0 0.0
  %1623 = vmatpush1.xpose.msra.mxu0 0.0
  %1624 = vmatprep.subr.mxu0 0.0
  %1625 = vmatpush1.xpose.msra.mxu0 0.0
  %1626 = vmatprep.subr.mxu0 0.0
  %1627 = vmatpush1.xpose.msra.mxu0 0.0
  %1628 = vmatprep.subr.mxu0 0.0
  %1629 = vmatpush1.xpose.msra.mxu0 0.0
  %1630 = vmatprep.subr.mxu0 0.0
  %1631 = vmatpush1.xpose.msra.mxu0 0.0
  %1632 = vmatprep.subr.mxu0 0.0
  %1633 = vmatpush1.xpose.msra.mxu0 0.0
  %1634 = vmatprep.subr.mxu0 0.0
  %1635 = vmatpush1.xpose.msra.mxu0 0.0
  %1636 = vmatprep.subr.mxu0 0.0
  %1637 = vmatpush1.xpose.msra.mxu0 0.0
  %1638 = vmatprep.subr.mxu0 0.0
  %1639 = vmatpush1.xpose.msra.mxu0 0.0
  %1640 = vmatprep.subr.mxu0 0.0
  %1641 = vmatpush1.xpose.msra.mxu0 0.0
  %1642 = vmatprep.mubr.f32.mxu0 0.0
  %1643 = vmatmul.mubr.f32.gmra.mrb[0].mxu0 %v1576
  %v1644 = vpop.f32.mrb[0].mxu0
  %v1645 = vadd.f32 0.0, %v1644
  %v1646 = vpop.f32.mrb[0].mxu0
  %1647 = vdwg.mxu0
  %v1648 = vmul.f32 %v1573, 2.0
  %v1649 = vmul.f32 %v1645, 2.0
  %v1650 = vsel %vm71, %v1648, -1e+30
  %v1651 = vsel %vm72, %v1649, -1e+30
  %v1652 = vsel %vm466, %v1650, -inf
  %1653 = vmax.xlane.f32.xlu0 %v1652
  %v1654 = vpop.xlane.xlu0 %1653
  %v1655 = vsel %vm466, %v1651, -inf
  %1656 = vmax.xlane.f32.xlu0 %v1655
  %v1657 = vpop.xlane.xlu0 %1656
  %v1658 = vsub.f32 %v1650, %v1654
  %v1659 = vsub.f32 %v1651, %v1657
  %v1660 = vmul.f32 %v1658, 1.442695
  %v1661 = vpow.pop %v1660
  %v1662 = vmul.f32 %v1659, 1.442695
  %v1663 = vpow.pop %v1662
  %v1664 = vsel %vm466, %v1661, 0.0
  %1665 = vadd.xlane.f32.xlu0 %v1664
  %v1666 = vpop.xlane.xlu0 %1665
  %v1667 = vsel %vm466, %v1663, 0.0
  %1668 = vadd.xlane.f32.xlu0 %v1667
  %v1669 = vpop.xlane.xlu0 %1668
  %v1670 = vrcp.pop %v1666
  %v1671 = vmul.f32 %v1661, %v1670
  %v1672 = vrcp.pop %v1669
  %v1673 = vmul.f32 %v1663, %v1672
  %v1675 = vsel %vm489, %v1671, 0
  %1677 = vmatprep.subr.mxu0 0.0
  %1678 = vmatpush1.msra.mxu0 %v42
  %1679 = vmatprep.subr.mxu0 0.0
  %1680 = vmatpush1.msra.mxu0 0.0
  %1681 = vmatprep.subr.mxu0 0.0
  %1682 = vmatpush1.msra.mxu0 0.0
  %1683 = vmatprep.subr.mxu0 0.0
  %1684 = vmatpush1.msra.mxu0 0.0
  %1685 = vmatprep.subr.mxu0 0.0
  %1686 = vmatpush1.msra.mxu0 0.0
  %1687 = vmatprep.subr.mxu0 0.0
  %1688 = vmatpush1.msra.mxu0 0.0
  %1689 = vmatprep.subr.mxu0 0.0
  %1690 = vmatpush1.msra.mxu0 0.0
  %1691 = vmatprep.subr.mxu0 0.0
  %1692 = vmatpush1.msra.mxu0 0.0
  %1693 = vmatprep.subr.mxu0 0.0
  %1694 = vmatpush1.msra.mxu0 0.0
  %1695 = vmatprep.subr.mxu0 0.0
  %1696 = vmatpush1.msra.mxu0 0.0
  %1697 = vmatprep.subr.mxu0 0.0
  %1698 = vmatpush1.msra.mxu0 0.0
  %1699 = vmatprep.subr.mxu0 0.0
  %1700 = vmatpush1.msra.mxu0 0.0
  %1701 = vmatprep.subr.mxu0 0.0
  %1702 = vmatpush1.msra.mxu0 0.0
  %1703 = vmatprep.subr.mxu0 0.0
  %1704 = vmatpush1.msra.mxu0 0.0
  %1705 = vmatprep.subr.mxu0 0.0
  %1706 = vmatpush1.msra.mxu0 0.0
  %1707 = vmatprep.subr.mxu0 0.0
  %1708 = vmatpush1.msra.mxu0 0.0
  %1709 = vmatprep.subr.mxu0 0.0
  %1710 = vmatpush1.msra.mxu0 0.0
  %1711 = vmatprep.subr.mxu0 0.0
  %1712 = vmatpush1.msra.mxu0 0.0
  %1713 = vmatprep.subr.mxu0 0.0
  %1714 = vmatpush1.msra.mxu0 0.0
  %1715 = vmatprep.subr.mxu0 0.0
  %1716 = vmatpush1.msra.mxu0 0.0
  %1717 = vmatprep.subr.mxu0 0.0
  %1718 = vmatpush1.msra.mxu0 0.0
  %1719 = vmatprep.subr.mxu0 0.0
  %1720 = vmatpush1.msra.mxu0 0.0
  %1721 = vmatprep.subr.mxu0 0.0
  %1722 = vmatpush1.msra.mxu0 0.0
  %1723 = vmatprep.subr.mxu0 0.0
  %1724 = vmatpush1.msra.mxu0 0.0
  %1725 = vmatprep.subr.mxu0 0.0
  %1726 = vmatpush1.msra.mxu0 0.0
  %1727 = vmatprep.subr.mxu0 0.0
  %1728 = vmatpush1.msra.mxu0 0.0
  %1729 = vmatprep.subr.mxu0 0.0
  %1730 = vmatpush1.msra.mxu0 0.0
  %1731 = vmatprep.subr.mxu0 0.0
  %1732 = vmatpush1.msra.mxu0 0.0
  %1733 = vmatprep.subr.mxu0 0.0
  %1734 = vmatpush1.msra.mxu0 0.0
  %1735 = vmatprep.subr.mxu0 0.0
  %1736 = vmatpush1.msra.mxu0 0.0
  %1737 = vmatprep.subr.mxu0 0.0
  %1738 = vmatpush1.msra.mxu0 0.0
  %1739 = vmatprep.subr.mxu0 0.0
  %1740 = vmatpush1.msra.mxu0 0.0
  %1741 = vmatprep.mubr.f32.mxu0 0.0
  %1742 = vmatmul.mubr.f32.gmra.mrb[0].mxu0 %v1675
  %v1743 = vpop.f32.mrb[0].mxu0
  %v1744 = vadd.f32 0.0, %v1743
  %v1745 = vpop.f32.mrb[0].mxu0
  %1746 = vdwg.mxu0
  %v1748 = vsel %vm489, %v1673, 0
  %1750 = vmatprep.subr.mxu0 0.0
  %1751 = vmatpush1.msra.mxu0 %v43
  %1752 = vmatprep.subr.mxu0 0.0
  %1753 = vmatpush1.msra.mxu0 0.0
  %1754 = vmatprep.subr.mxu0 0.0
  %1755 = vmatpush1.msra.mxu0 0.0
  %1756 = vmatprep.subr.mxu0 0.0
  %1757 = vmatpush1.msra.mxu0 0.0
  %1758 = vmatprep.subr.mxu0 0.0
  %1759 = vmatpush1.msra.mxu0 0.0
  %1760 = vmatprep.subr.mxu0 0.0
  %1761 = vmatpush1.msra.mxu0 0.0
  %1762 = vmatprep.subr.mxu0 0.0
  %1763 = vmatpush1.msra.mxu0 0.0
  %1764 = vmatprep.subr.mxu0 0.0
  %1765 = vmatpush1.msra.mxu0 0.0
  %1766 = vmatprep.subr.mxu0 0.0
  %1767 = vmatpush1.msra.mxu0 0.0
  %1768 = vmatprep.subr.mxu0 0.0
  %1769 = vmatpush1.msra.mxu0 0.0
  %1770 = vmatprep.subr.mxu0 0.0
  %1771 = vmatpush1.msra.mxu0 0.0
  %1772 = vmatprep.subr.mxu0 0.0
  %1773 = vmatpush1.msra.mxu0 0.0
  %1774 = vmatprep.subr.mxu0 0.0
  %1775 = vmatpush1.msra.mxu0 0.0
  %1776 = vmatprep.subr.mxu0 0.0
  %1777 = vmatpush1.msra.mxu0 0.0
  %1778 = vmatprep.subr.mxu0 0.0
  %1779 = vmatpush1.msra.mxu0 0.0
  %1780 = vmatprep.subr.mxu0 0.0
  %1781 = vmatpush1.msra.mxu0 0.0
  %1782 = vmatprep.subr.mxu0 0.0
  %1783 = vmatpush1.msra.mxu0 0.0
  %1784 = vmatprep.subr.mxu0 0.0
  %1785 = vmatpush1.msra.mxu0 0.0
  %1786 = vmatprep.subr.mxu0 0.0
  %1787 = vmatpush1.msra.mxu0 0.0
  %1788 = vmatprep.subr.mxu0 0.0
  %1789 = vmatpush1.msra.mxu0 0.0
  %1790 = vmatprep.subr.mxu0 0.0
  %1791 = vmatpush1.msra.mxu0 0.0
  %1792 = vmatprep.subr.mxu0 0.0
  %1793 = vmatpush1.msra.mxu0 0.0
  %1794 = vmatprep.subr.mxu0 0.0
  %1795 = vmatpush1.msra.mxu0 0.0
  %1796 = vmatprep.subr.mxu0 0.0
  %1797 = vmatpush1.msra.mxu0 0.0
  %1798 = vmatprep.subr.mxu0 0.0
  %1799 = vmatpush1.msra.mxu0 0.0
  %1800 = vmatprep.subr.mxu0 0.0
  %1801 = vmatpush1.msra.mxu0 0.0
  %1802 = vmatprep.subr.mxu0 0.0
  %1803 = vmatpush1.msra.mxu0 0.0
  %1804 = vmatprep.subr.mxu0 0.0
  %1805 = vmatpush1.msra.mxu0 0.0
  %1806 = vmatprep.subr.mxu0 0.0
  %1807 = vmatpush1.msra.mxu0 0.0
  %1808 = vmatprep.subr.mxu0 0.0
  %1809 = vmatpush1.msra.mxu0 0.0
  %1810 = vmatprep.subr.mxu0 0.0
  %1811 = vmatpush1.msra.mxu0 0.0
  %1812 = vmatprep.subr.mxu0 0.0
  %1813 = vmatpush1.msra.mxu0 0.0
  %1814 = vmatprep.mubr.f32.mxu0 0.0
  %1815 = vmatmul.mubr.f32.gmra.mrb[0].mxu0 %v1748
  %v1816 = vpop.f32.mrb[0].mxu0
  %v1817 = vadd.f32 0.0, %v1816
  %v1818 = vpop.f32.mrb[0].mxu0
  %1819 = vdwg.mxu0
  %s1820 = scalar_lea.vmem [#allocation2], 4
  %v1821 = vld [vmem:[%s1820] sm:$0x3]
  %v1824 = vrot.slane %v1817, 7
  %v1825 = vsel %vm640, %v1824, %v1744
  %v1826 = vsel %vm127, %v1825, 0
  %1828 = vmatprep.subr.mxu0 0.0
  %1829 = vmatpush1.msra.mxu0 %v76
  %1830 = vmatprep.subr.mxu0 0.0
  %1831 = vmatpush1.msra.mxu0 %v77
  %1832 = vmatprep.subr.mxu0 0.0
  %1833 = vmatpush1.msra.mxu0 0.0
  %1834 = vmatprep.subr.mxu0 0.0
  %1835 = vmatpush1.msra.mxu0 0.0
  %1836 = vmatprep.subr.mxu0 0.0
  %1837 = vmatpush1.msra.mxu0 0.0
  %1838 = vmatprep.subr.mxu0 0.0
  %1839 = vmatpush1.msra.mxu0 0.0
  %1840 = vmatprep.subr.mxu0 0.0
  %1841 = vmatpush1.msra.mxu0 0.0
  %1842 = vmatprep.subr.mxu0 0.0
  %1843 = vmatpush1.msra.mxu0 0.0
  %1844 = vmatprep.subr.mxu0 0.0
  %1845 = vmatpush1.msra.mxu0 0.0
  %1846 = vmatprep.subr.mxu0 0.0
  %1847 = vmatpush1.msra.mxu0 0.0
  %1848 = vmatprep.subr.mxu0 0.0
  %1849 = vmatpush1.msra.mxu0 0.0
  %1850 = vmatprep.subr.mxu0 0.0
  %1851 = vmatpush1.msra.mxu0 0.0
  %1852 = vmatprep.subr.mxu0 0.0
  %1853 = vmatpush1.msra.mxu0 0.0
  %1854 = vmatprep.subr.mxu0 0.0
  %1855 = vmatpush1.msra.mxu0 0.0
  %1856 = vmatprep.subr.mxu0 0.0
  %1857 = vmatpush1.msra.mxu0 0.0
  %1858 = vmatprep.subr.mxu0 0.0
  %1859 = vmatpush1.msra.mxu0 0.0
  %1860 = vmatprep.subr.mxu0 0.0
  %1861 = vmatpush1.msra.mxu0 0.0
  %1862 = vmatprep.subr.mxu0 0.0
  %1863 = vmatpush1.msra.mxu0 0.0
  %1864 = vmatprep.subr.mxu0 0.0
  %1865 = vmatpush1.msra.mxu0 0.0
  %1866 = vmatprep.subr.mxu0 0.0
  %1867 = vmatpush1.msra.mxu0 0.0
  %1868 = vmatprep.subr.mxu0 0.0
  %1869 = vmatpush1.msra.mxu0 0.0
  %1870 = vmatprep.subr.mxu0 0.0
  %1871 = vmatpush1.msra.mxu0 0.0
  %1872 = vmatprep.subr.mxu0 0.0
  %1873 = vmatpush1.msra.mxu0 0.0
  %1874 = vmatprep.subr.mxu0 0.0
  %1875 = vmatpush1.msra.mxu0 0.0
  %1876 = vmatprep.subr.mxu0 0.0
  %1877 = vmatpush1.msra.mxu0 0.0
  %1878 = vmatprep.subr.mxu0 0.0
  %1879 = vmatpush1.msra.mxu0 0.0
  %1880 = vmatprep.subr.mxu0 0.0
  %1881 = vmatpush1.msra.mxu0 0.0
  %1882 = vmatprep.subr.mxu0 0.0
  %1883 = vmatpush1.msra.mxu0 0.0
  %1884 = vmatprep.subr.mxu0 0.0
  %1885 = vmatpush1.msra.mxu0 0.0
  %1886 = vmatprep.subr.mxu0 0.0
  %1887 = vmatpush1.msra.mxu0 0.0
  %1888 = vmatprep.subr.mxu0 0.0
  %1889 = vmatpush1.msra.mxu0 0.0
  %1890 = vmatprep.subr.mxu0 0.0
  %1891 = vmatpush1.msra.mxu0 0.0
  %1892 = vmatprep.mubr.f32.mxu0 0.0
  %1893 = vmatmul.mubr.f32.gmra.mrb[0].mxu0 %v1826
  %v1894 = vpop.f32.mrb[0].mxu0
  %v1895 = vadd.f32 0.0, %v1894
  %v1896 = vpop.f32.mrb[0].mxu0
  %1897 = vdwg.mxu0
  %v1898 = vadd.f32 %v1821, %v1895
  %1899 = vmatprep.subr.mxu0 0.0
  %1900 = vmatpush1.msra.mxu0 %v78
  %1901 = vmatprep.subr.mxu0 0.0
  %1902 = vmatpush1.msra.mxu0 %v79
  %1903 = vmatprep.subr.mxu0 0.0
  %1904 = vmatpush1.msra.mxu0 0.0
  %1905 = vmatprep.subr.mxu0 0.0
  %1906 = vmatpush1.msra.mxu0 0.0
  %1907 = vmatprep.subr.mxu0 0.0
  %1908 = vmatpush1.msra.mxu0 0.0
  %1909 = vmatprep.subr.mxu0 0.0
  %1910 = vmatpush1.msra.mxu0 0.0
  %1911 = vmatprep.subr.mxu0 0.0
  %1912 = vmatpush1.msra.mxu0 0.0
  %1913 = vmatprep.subr.mxu0 0.0
  %1914 = vmatpush1.msra.mxu0 0.0
  %1915 = vmatprep.subr.mxu0 0.0
  %1916 = vmatpush1.msra.mxu0 0.0
  %1917 = vmatprep.subr.mxu0 0.0
  %1918 = vmatpush1.msra.mxu0 0.0
  %1919 = vmatprep.subr.mxu0 0.0
  %1920 = vmatpush1.msra.mxu0 0.0
  %1921 = vmatprep.subr.mxu0 0.0
  %1922 = vmatpush1.msra.mxu0 0.0
  %1923 = vmatprep.subr.mxu0 0.0
  %1924 = vmatpush1.msra.mxu0 0.0
  %1925 = vmatprep.subr.mxu0 0.0
  %1926 = vmatpush1.msra.mxu0 0.0
  %1927 = vmatprep.subr.mxu0 0.0
  %1928 = vmatpush1.msra.mxu0 0.0
  %1929 = vmatprep.subr.mxu0 0.0
  %1930 = vmatpush1.msra.mxu0 0.0
  %1931 = vmatprep.subr.mxu0 0.0
  %1932 = vmatpush1.msra.mxu0 0.0
  %1933 = vmatprep.subr.mxu0 0.0
  %1934 = vmatpush1.msra.mxu0 0.0
  %1935 = vmatprep.subr.mxu0 0.0
  %1936 = vmatpush1.msra.mxu0 0.0
  %1937 = vmatprep.subr.mxu0 0.0
  %1938 = vmatpush1.msra.mxu0 0.0
  %1939 = vmatprep.subr.mxu0 0.0
  %1940 = vmatpush1.msra.mxu0 0.0
  %1941 = vmatprep.subr.mxu0 0.0
  %1942 = vmatpush1.msra.mxu0 0.0
  %1943 = vmatprep.subr.mxu0 0.0
  %1944 = vmatpush1.msra.mxu0 0.0
  %1945 = vmatprep.subr.mxu0 0.0
  %1946 = vmatpush1.msra.mxu0 0.0
  %1947 = vmatprep.subr.mxu0 0.0
  %1948 = vmatpush1.msra.mxu0 0.0
  %1949 = vmatprep.subr.mxu0 0.0
  %1950 = vmatpush1.msra.mxu0 0.0
  %1951 = vmatprep.subr.mxu0 0.0
  %1952 = vmatpush1.msra.mxu0 0.0
  %1953 = vmatprep.subr.mxu0 0.0
  %1954 = vmatpush1.msra.mxu0 0.0
  %1955 = vmatprep.subr.mxu0 0.0
  %1956 = vmatpush1.msra.mxu0 0.0
  %1957 = vmatprep.subr.mxu0 0.0
  %1958 = vmatpush1.msra.mxu0 0.0
  %1959 = vmatprep.subr.mxu0 0.0
  %1960 = vmatpush1.msra.mxu0 0.0
  %1961 = vmatprep.subr.mxu0 0.0
  %1962 = vmatpush1.msra.mxu0 0.0
  %1963 = vmatprep.mubr.f32.mxu0 0.0
  %1964 = vmatmul.mubr.f32.gmra.mrb[0].mxu0 %v1408
  %v1965 = vpop.f32.mrb[0].mxu0
  %v1966 = vadd.f32 0.0, %v1965
  %v1967 = vpop.f32.mrb[0].mxu0
  %1968 = vdwg.mxu0
  %v1969 = vadd.f32 %v1898, %v1966
  %v1970 = vxor.u32 %v1969, 2147483648
  %v1971 = vmul.f32 %v1970, 1.442695
  %v1972 = vpow.pop %v1971
  %v1973 = vadd.f32 %v1972, 1.0
  %v1974 = vrcp.pop %v1973
  %v1975 = vmul.f32 1.0, %v1974
  %v1976 = vtanh.pop %v1969
  %v1977 = vmul.f32 %v1975, %v1395
  %1979 = vrot.lane.b32.xlu0 %v1976, 96
  %v1980 = vpop.permute.xlu0 %1979
  %v1982 = vmul.f32 %v1975, %v1980
  %1984 = vrot.lane.b32.xlu0 %v1982, 16
  %v1985 = vpop.permute.xlu0 %1984
  %v1987 = vadd.f32 %v1977, %v1985
  %v1988 = vtanh.pop %v1987
  %1990 = vrot.lane.b32.xlu0 %v1988, 32
  %v1991 = vpop.permute.xlu0 %1990
  %v1993 = vmul.f32 %v1975, %v1991
  %1995 = vrot.lane.b32.xlu0 %v1993, 80
  %v1996 = vpop.permute.xlu0 %1995
  %s1998 = scalar_lea.vmem [#allocation3], 4
  %1999 = vst.msk [vmem:[%s1998] sm:$0x3] %vm814, %v1996
  %v2000 = vsel %vm127, %v1996, 0
  %2002 = vmatprep.subr.mxu0 0.0
  %2003 = vmatpush1.msra.mxu0 %v73
  %2004 = vmatprep.subr.mxu0 0.0
  %2005 = vmatpush1.msra.mxu0 %v74
  %2006 = vmatprep.subr.mxu0 0.0
  %2007 = vmatpush1.msra.mxu0 0.0
  %2008 = vmatprep.subr.mxu0 0.0
  %2009 = vmatpush1.msra.mxu0 0.0
  %2010 = vmatprep.subr.mxu0 0.0
  %2011 = vmatpush1.msra.mxu0 0.0
  %2012 = vmatprep.subr.mxu0 0.0
  %2013 = vmatpush1.msra.mxu0 0.0
  %2014 = vmatprep.subr.mxu0 0.0
  %2015 = vmatpush1.msra.mxu0 0.0
  %2016 = vmatprep.subr.mxu0 0.0
  %2017 = vmatpush1.msra.mxu0 0.0
  %2018 = vmatprep.subr.mxu0 0.0
  %2019 = vmatpush1.msra.mxu0 0.0
  %2020 = vmatprep.subr.mxu0 0.0
  %2021 = vmatpush1.msra.mxu0 0.0
  %2022 = vmatprep.subr.mxu0 0.0
  %2023 = vmatpush1.msra.mxu0 0.0
  %2024 = vmatprep.subr.mxu0 0.0
  %2025 = vmatpush1.msra.mxu0 0.0
  %2026 = vmatprep.subr.mxu0 0.0
  %2027 = vmatpush1.msra.mxu0 0.0
  %2028 = vmatprep.subr.mxu0 0.0
  %2029 = vmatpush1.msra.mxu0 0.0
  %2030 = vmatprep.subr.mxu0 0.0
  %2031 = vmatpush1.msra.mxu0 0.0
  %2032 = vmatprep.subr.mxu0 0.0
  %2033 = vmatpush1.msra.mxu0 0.0
  %2034 = vmatprep.subr.mxu0 0.0
  %2035 = vmatpush1.msra.mxu0 0.0
  %2036 = vmatprep.subr.mxu0 0.0
  %2037 = vmatpush1.msra.mxu0 0.0
  %2038 = vmatprep.subr.mxu0 0.0
  %2039 = vmatpush1.msra.mxu0 0.0
  %2040 = vmatprep.subr.mxu0 0.0
  %2041 = vmatpush1.msra.mxu0 0.0
  %2042 = vmatprep.subr.mxu0 0.0
  %2043 = vmatpush1.msra.mxu0 0.0
  %2044 = vmatprep.subr.mxu0 0.0
  %2045 = vmatpush1.msra.mxu0 0.0
  %2046 = vmatprep.subr.mxu0 0.0
  %2047 = vmatpush1.msra.mxu0 0.0
  %2048 = vmatprep.subr.mxu0 0.0
  %2049 = vmatpush1.msra.mxu0 0.0
  %2050 = vmatprep.subr.mxu0 0.0
  %2051 = vmatpush1.msra.mxu0 0.0
  %2052 = vmatprep.subr.mxu0 0.0
  %2053 = vmatpush1.msra.mxu0 0.0
  %2054 = vmatprep.subr.mxu0 0.0
  %2055 = vmatpush1.msra.mxu0 0.0
  %2056 = vmatprep.subr.mxu0 0.0
  %2057 = vmatpush1.msra.mxu0 0.0
  %2058 = vmatprep.subr.mxu0 0.0
  %2059 = vmatpush1.msra.mxu0 0.0
  %2060 = vmatprep.subr.mxu0 0.0
  %2061 = vmatpush1.msra.mxu0 0.0
  %2062 = vmatprep.subr.mxu0 0.0
  %2063 = vmatpush1.msra.mxu0 0.0
  %2064 = vmatprep.subr.mxu0 0.0
  %2065 = vmatpush1.msra.mxu0 0.0
  %2066 = vmatprep.mubr.f32.mxu0 0.0
  %2067 = vmatmul.mubr.f32.gmra.mrb[0].mxu0 %v2000
  %v2068 = vpop.f32.mrb[0].mxu0
  %v2069 = vadd.f32 %v213, %v2068
  %v2070 = vpop.f32.mrb[0].mxu0
  %2071 = vdwg.mxu0
  %v2072 = vtanh.pop %v2069
  %v2075 = vunpack.c.l.s4 1966171168
  %v2076 = vunpack.c.0.s8 %v2075
  %v2077 = vlaneseq
  %v2078 = vshrl.u32 %v2077, 7
  %v2079 = vsub.s32 %v2076, %v2078
  %v2080 = vrot.slane %v2072, %v2079
  %v2081 = vcombine.high %v2080, %v2080
  %v2083 = vunpack.c.l.s4 1966171168
  %v2084 = vunpack.c.0.s8 %v2083
  %v2085 = vlaneseq
  %v2086 = vshrl.u32 %v2085, 7
  %v2087 = vsub.s32 %v2084, %v2086
  %v2088 = vrot.slane %v2080, %v2087
  %v2090 = vunpack.c.l.s4 1966171168
  %v2091 = vunpack.c.0.s8 %v2090
  %v2092 = vlaneseq
  %v2093 = vshrl.u32 %v2092, 7
  %v2094 = vsub.s32 %v2091, %v2093
  %v2095 = vrot.slane %v2081, %v2094
  %v2096 = vsel %vm127, %v2088, 0
  %2098 = vmatprep.subr.mxu0 0.0
  %2099 = vmatpush1.xpose.msra.mxu0 %v315
  %2100 = vmatprep.subr.mxu0 0.0
  %2101 = vmatpush1.xpose.msra.mxu0 0.0
  %2102 = vmatprep.subr.mxu0 0.0
  %2103 = vmatpush1.xpose.msra.mxu0 0.0
  %2104 = vmatprep.subr.mxu0 0.0
  %2105 = vmatpush1.xpose.msra.mxu0 0.0
  %2106 = vmatprep.subr.mxu0 0.0
  %2107 = vmatpush1.xpose.msra.mxu0 0.0
  %2108 = vmatprep.subr.mxu0 0.0
  %2109 = vmatpush1.xpose.msra.mxu0 0.0
  %2110 = vmatprep.subr.mxu0 0.0
  %2111 = vmatpush1.xpose.msra.mxu0 0.0
  %2112 = vmatprep.subr.mxu0 0.0
  %2113 = vmatpush1.xpose.msra.mxu0 0.0
  %2114 = vmatprep.subr.mxu0 0.0
  %2115 = vmatpush1.xpose.msra.mxu0 0.0
  %2116 = vmatprep.subr.mxu0 0.0
  %2117 = vmatpush1.xpose.msra.mxu0 0.0
  %2118 = vmatprep.subr.mxu0 0.0
  %2119 = vmatpush1.xpose.msra.mxu0 0.0
  %2120 = vmatprep.subr.mxu0 0.0
  %2121 = vmatpush1.xpose.msra.mxu0 0.0
  %2122 = vmatprep.subr.mxu0 0.0
  %2123 = vmatpush1.xpose.msra.mxu0 0.0
  %2124 = vmatprep.subr.mxu0 0.0
  %2125 = vmatpush1.xpose.msra.mxu0 0.0
  %2126 = vmatprep.subr.mxu0 0.0
  %2127 = vmatpush1.xpose.msra.mxu0 0.0
  %2128 = vmatprep.subr.mxu0 0.0
  %2129 = vmatpush1.xpose.msra.mxu0 0.0
  %2130 = vmatprep.subr.mxu0 0.0
  %2131 = vmatpush1.xpose.msra.mxu0 0.0
  %2132 = vmatprep.subr.mxu0 0.0
  %2133 = vmatpush1.xpose.msra.mxu0 0.0
  %2134 = vmatprep.subr.mxu0 0.0
  %2135 = vmatpush1.xpose.msra.mxu0 0.0
  %2136 = vmatprep.subr.mxu0 0.0
  %2137 = vmatpush1.xpose.msra.mxu0 0.0
  %2138 = vmatprep.subr.mxu0 0.0
  %2139 = vmatpush1.xpose.msra.mxu0 0.0
  %2140 = vmatprep.subr.mxu0 0.0
  %2141 = vmatpush1.xpose.msra.mxu0 0.0
  %2142 = vmatprep.subr.mxu0 0.0
  %2143 = vmatpush1.xpose.msra.mxu0 0.0
  %2144 = vmatprep.subr.mxu0 0.0
  %2145 = vmatpush1.xpose.msra.mxu0 0.0
  %2146 = vmatprep.subr.mxu0 0.0
  %2147 = vmatpush1.xpose.msra.mxu0 0.0
  %2148 = vmatprep.subr.mxu0 0.0
  %2149 = vmatpush1.xpose.msra.mxu0 0.0
  %2150 = vmatprep.subr.mxu0 0.0
  %2151 = vmatpush1.xpose.msra.mxu0 0.0
  %2152 = vmatprep.subr.mxu0 0.0
  %2153 = vmatpush1.xpose.msra.mxu0 0.0
  %2154 = vmatprep.subr.mxu0 0.0
  %2155 = vmatpush1.xpose.msra.mxu0 0.0
  %2156 = vmatprep.subr.mxu0 0.0
  %2157 = vmatpush1.xpose.msra.mxu0 0.0
  %2158 = vmatprep.subr.mxu0 0.0
  %2159 = vmatpush1.xpose.msra.mxu0 0.0
  %2160 = vmatprep.subr.mxu0 0.0
  %2161 = vmatpush1.xpose.msra.mxu0 0.0
  %2162 = vmatprep.mubr.f32.mxu0 0.0
  %2163 = vmatmul.mubr.f32.gmra.mrb[0].mxu0 %v2096
  %v2164 = vpop.f32.mrb[0].mxu0
  %v2165 = vadd.f32 0.0, %v2164
  %v2166 = vpop.f32.mrb[0].mxu0
  %2167 = vdwg.mxu0
  %v2168 = vsel %vm127, %v2095, 0
  %2170 = vmatprep.subr.mxu0 0.0
  %2171 = vmatpush1.xpose.msra.mxu0 %v390
  %2172 = vmatprep.subr.mxu0 0.0
  %2173 = vmatpush1.xpose.msra.mxu0 0.0
  %2174 = vmatprep.subr.mxu0 0.0
  %2175 = vmatpush1.xpose.msra.mxu0 0.0
  %2176 = vmatprep.subr.mxu0 0.0
  %2177 = vmatpush1.xpose.msra.mxu0 0.0
  %2178 = vmatprep.subr.mxu0 0.0
  %2179 = vmatpush1.xpose.msra.mxu0 0.0
  %2180 = vmatprep.subr.mxu0 0.0
  %2181 = vmatpush1.xpose.msra.mxu0 0.0
  %2182 = vmatprep.subr.mxu0 0.0
  %2183 = vmatpush1.xpose.msra.mxu0 0.0
  %2184 = vmatprep.subr.mxu0 0.0
  %2185 = vmatpush1.xpose.msra.mxu0 0.0
  %2186 = vmatprep.subr.mxu0 0.0
  %2187 = vmatpush1.xpose.msra.mxu0 0.0
  %2188 = vmatprep.subr.mxu0 0.0
  %2189 = vmatpush1.xpose.msra.mxu0 0.0
  %2190 = vmatprep.subr.mxu0 0.0
  %2191 = vmatpush1.xpose.msra.mxu0 0.0
  %2192 = vmatprep.subr.mxu0 0.0
  %2193 = vmatpush1.xpose.msra.mxu0 0.0
  %2194 = vmatprep.subr.mxu0 0.0
  %2195 = vmatpush1.xpose.msra.mxu0 0.0
  %2196 = vmatprep.subr.mxu0 0.0
  %2197 = vmatpush1.xpose.msra.mxu0 0.0
  %2198 = vmatprep.subr.mxu0 0.0
  %2199 = vmatpush1.xpose.msra.mxu0 0.0
  %2200 = vmatprep.subr.mxu0 0.0
  %2201 = vmatpush1.xpose.msra.mxu0 0.0
  %2202 = vmatprep.subr.mxu0 0.0
  %2203 = vmatpush1.xpose.msra.mxu0 0.0
  %2204 = vmatprep.subr.mxu0 0.0
  %2205 = vmatpush1.xpose.msra.mxu0 0.0
  %2206 = vmatprep.subr.mxu0 0.0
  %2207 = vmatpush1.xpose.msra.mxu0 0.0
  %2208 = vmatprep.subr.mxu0 0.0
  %2209 = vmatpush1.xpose.msra.mxu0 0.0
  %2210 = vmatprep.subr.mxu0 0.0
  %2211 = vmatpush1.xpose.msra.mxu0 0.0
  %2212 = vmatprep.subr.mxu0 0.0
  %2213 = vmatpush1.xpose.msra.mxu0 0.0
  %2214 = vmatprep.subr.mxu0 0.0
  %2215 = vmatpush1.xpose.msra.mxu0 0.0
  %2216 = vmatprep.subr.mxu0 0.0
  %2217 = vmatpush1.xpose.msra.mxu0 0.0
  %2218 = vmatprep.subr.mxu0 0.0
  %2219 = vmatpush1.xpose.msra.mxu0 0.0
  %2220 = vmatprep.subr.mxu0 0.0
  %2221 = vmatpush1.xpose.msra.mxu0 0.0
  %2222 = vmatprep.subr.mxu0 0.0
  %2223 = vmatpush1.xpose.msra.mxu0 0.0
  %2224 = vmatprep.subr.mxu0 0.0
  %2225 = vmatpush1.xpose.msra.mxu0 0.0
  %2226 = vmatprep.subr.mxu0 0.0
  %2227 = vmatpush1.xpose.msra.mxu0 0.0
  %2228 = vmatprep.subr.mxu0 0.0
  %2229 = vmatpush1.xpose.msra.mxu0 0.0
  %2230 = vmatprep.subr.mxu0 0.0
  %2231 = vmatpush1.xpose.msra.mxu0 0.0
  %2232 = vmatprep.subr.mxu0 0.0
  %2233 = vmatpush1.xpose.msra.mxu0 0.0
  %2234 = vmatprep.mubr.f32.mxu0 0.0
  %2235 = vmatmul.mubr.f32.gmra.mrb[0].mxu0 %v2168
  %v2236 = vpop.f32.mrb[0].mxu0
  %v2237 = vadd.f32 0.0, %v2236
  %v2238 = vpop.f32.mrb[0].mxu0
  %2239 = vdwg.mxu0
  %v2240 = vmul.f32 %v2165, 2.0
  %v2241 = vmul.f32 %v2237, 2.0
  %v2242 = vsel %vm71, %v2240, -1e+30
  %v2243 = vsel %vm72, %v2241, -1e+30
  %v2244 = vsel %vm466, %v2242, -inf
  %2245 = vmax.xlane.f32.xlu0 %v2244
  %v2246 = vpop.xlane.xlu0 %2245
  %v2247 = vsel %vm466, %v2243, -inf
  %2248 = vmax.xlane.f32.xlu0 %v2247
  %v2249 = vpop.xlane.xlu0 %2248
  %v2250 = vsub.f32 %v2242, %v2246
  %v2251 = vsub.f32 %v2243, %v2249
  %v2252 = vmul.f32 %v2250, 1.442695
  %v2253 = vpow.pop %v2252
  %v2254 = vmul.f32 %v2251, 1.442695
  %v2255 = vpow.pop %v2254
  %v2256 = vsel %vm466, %v2253, 0.0
  %2257 = vadd.xlane.f32.xlu0 %v2256
  %v2258 = vpop.xlane.xlu0 %2257
  %v2259 = vsel %vm466, %v2255, 0.0
  %2260 = vadd.xlane.f32.xlu0 %v2259
  %v2261 = vpop.xlane.xlu0 %2260
  %v2262 = vrcp.pop %v2258
  %v2263 = vmul.f32 %v2253, %v2262
  %v2264 = vrcp.pop %v2261
  %v2265 = vmul.f32 %v2255, %v2264
  %v2267 = vsel %vm489, %v2263, 0
  %2269 = vmatprep.subr.mxu0 0.0
  %2270 = vmatpush1.msra.mxu0 %v42
  %2271 = vmatprep.subr.mxu0 0.0
  %2272 = vmatpush1.msra.mxu0 0.0
  %2273 = vmatprep.subr.mxu0 0.0
  %2274 = vmatpush1.msra.mxu0 0.0
  %2275 = vmatprep.subr.mxu0 0.0
  %2276 = vmatpush1.msra.mxu0 0.0
  %2277 = vmatprep.subr.mxu0 0.0
  %2278 = vmatpush1.msra.mxu0 0.0
  %2279 = vmatprep.subr.mxu0 0.0
  %2280 = vmatpush1.msra.mxu0 0.0
  %2281 = vmatprep.subr.mxu0 0.0
  %2282 = vmatpush1.msra.mxu0 0.0
  %2283 = vmatprep.subr.mxu0 0.0
  %2284 = vmatpush1.msra.mxu0 0.0
  %2285 = vmatprep.subr.mxu0 0.0
  %2286 = vmatpush1.msra.mxu0 0.0
  %2287 = vmatprep.subr.mxu0 0.0
  %2288 = vmatpush1.msra.mxu0 0.0
  %2289 = vmatprep.subr.mxu0 0.0
  %2290 = vmatpush1.msra.mxu0 0.0
  %2291 = vmatprep.subr.mxu0 0.0
  %2292 = vmatpush1.msra.mxu0 0.0
  %2293 = vmatprep.subr.mxu0 0.0
  %2294 = vmatpush1.msra.mxu0 0.0
  %2295 = vmatprep.subr.mxu0 0.0
  %2296 = vmatpush1.msra.mxu0 0.0
  %2297 = vmatprep.subr.mxu0 0.0
  %2298 = vmatpush1.msra.mxu0 0.0
  %2299 = vmatprep.subr.mxu0 0.0
  %2300 = vmatpush1.msra.mxu0 0.0
  %2301 = vmatprep.subr.mxu0 0.0
  %2302 = vmatpush1.msra.mxu0 0.0
  %2303 = vmatprep.subr.mxu0 0.0
  %2304 = vmatpush1.msra.mxu0 0.0
  %2305 = vmatprep.subr.mxu0 0.0
  %2306 = vmatpush1.msra.mxu0 0.0
  %2307 = vmatprep.subr.mxu0 0.0
  %2308 = vmatpush1.msra.mxu0 0.0
  %2309 = vmatprep.subr.mxu0 0.0
  %2310 = vmatpush1.msra.mxu0 0.0
  %2311 = vmatprep.subr.mxu0 0.0
  %2312 = vmatpush1.msra.mxu0 0.0
  %2313 = vmatprep.subr.mxu0 0.0
  %2314 = vmatpush1.msra.mxu0 0.0
  %2315 = vmatprep.subr.mxu0 0.0
  %2316 = vmatpush1.msra.mxu0 0.0
  %2317 = vmatprep.subr.mxu0 0.0
  %2318 = vmatpush1.msra.mxu0 0.0
  %2319 = vmatprep.subr.mxu0 0.0
  %2320 = vmatpush1.msra.mxu0 0.0
  %2321 = vmatprep.subr.mxu0 0.0
  %2322 = vmatpush1.msra.mxu0 0.0
  %2323 = vmatprep.subr.mxu0 0.0
  %2324 = vmatpush1.msra.mxu0 0.0
  %2325 = vmatprep.subr.mxu0 0.0
  %2326 = vmatpush1.msra.mxu0 0.0
  %2327 = vmatprep.subr.mxu0 0.0
  %2328 = vmatpush1.msra.mxu0 0.0
  %2329 = vmatprep.subr.mxu0 0.0
  %2330 = vmatpush1.msra.mxu0 0.0
  %2331 = vmatprep.subr.mxu0 0.0
  %2332 = vmatpush1.msra.mxu0 0.0
  %2333 = vmatprep.mubr.f32.mxu0 0.0
  %2334 = vmatmul.mubr.f32.gmra.mrb[0].mxu0 %v2267
  %v2335 = vpop.f32.mrb[0].mxu0
  %v2336 = vadd.f32 0.0, %v2335
  %v2337 = vpop.f32.mrb[0].mxu0
  %2338 = vdwg.mxu0
  %v2340 = vsel %vm489, %v2265, 0
  %2342 = vmatprep.subr.mxu0 0.0
  %2343 = vmatpush1.msra.mxu0 %v43
  %2344 = vmatprep.subr.mxu0 0.0
  %2345 = vmatpush1.msra.mxu0 0.0
  %2346 = vmatprep.subr.mxu0 0.0
  %2347 = vmatpush1.msra.mxu0 0.0
  %2348 = vmatprep.subr.mxu0 0.0
  %2349 = vmatpush1.msra.mxu0 0.0
  %2350 = vmatprep.subr.mxu0 0.0
  %2351 = vmatpush1.msra.mxu0 0.0
  %2352 = vmatprep.subr.mxu0 0.0
  %2353 = vmatpush1.msra.mxu0 0.0
  %2354 = vmatprep.subr.mxu0 0.0
  %2355 = vmatpush1.msra.mxu0 0.0
  %2356 = vmatprep.subr.mxu0 0.0
  %2357 = vmatpush1.msra.mxu0 0.0
  %2358 = vmatprep.subr.mxu0 0.0
  %2359 = vmatpush1.msra.mxu0 0.0
  %2360 = vmatprep.subr.mxu0 0.0
  %2361 = vmatpush1.msra.mxu0 0.0
  %2362 = vmatprep.subr.mxu0 0.0
  %2363 = vmatpush1.msra.mxu0 0.0
  %2364 = vmatprep.subr.mxu0 0.0
  %2365 = vmatpush1.msra.mxu0 0.0
  %2366 = vmatprep.subr.mxu0 0.0
  %2367 = vmatpush1.msra.mxu0 0.0
  %2368 = vmatprep.subr.mxu0 0.0
  %2369 = vmatpush1.msra.mxu0 0.0
  %2370 = vmatprep.subr.mxu0 0.0
  %2371 = vmatpush1.msra.mxu0 0.0
  %2372 = vmatprep.subr.mxu0 0.0
  %2373 = vmatpush1.msra.mxu0 0.0
  %2374 = vmatprep.subr.mxu0 0.0
  %2375 = vmatpush1.msra.mxu0 0.0
  %2376 = vmatprep.subr.mxu0 0.0
  %2377 = vmatpush1.msra.mxu0 0.0
  %2378 = vmatprep.subr.mxu0 0.0
  %2379 = vmatpush1.msra.mxu0 0.0
  %2380 = vmatprep.subr.mxu0 0.0
  %2381 = vmatpush1.msra.mxu0 0.0
  %2382 = vmatprep.subr.mxu0 0.0
  %2383 = vmatpush1.msra.mxu0 0.0
  %2384 = vmatprep.subr.mxu0 0.0
  %2385 = vmatpush1.msra.mxu0 0.0
  %2386 = vmatprep.subr.mxu0 0.0
  %2387 = vmatpush1.msra.mxu0 0.0
  %2388 = vmatprep.subr.mxu0 0.0
  %2389 = vmatpush1.msra.mxu0 0.0
  %2390 = vmatprep.subr.mxu0 0.0
  %2391 = vmatpush1.msra.mxu0 0.0
  %2392 = vmatprep.subr.mxu0 0.0
  %2393 = vmatpush1.msra.mxu0 0.0
  %2394 = vmatprep.subr.mxu0 0.0
  %2395 = vmatpush1.msra.mxu0 0.0
  %2396 = vmatprep.subr.mxu0 0.0
  %2397 = vmatpush1.msra.mxu0 0.0
  %2398 = vmatprep.subr.mxu0 0.0
  %2399 = vmatpush1.msra.mxu0 0.0
  %2400 = vmatprep.subr.mxu0 0.0
  %2401 = vmatpush1.msra.mxu0 0.0
  %2402 = vmatprep.subr.mxu0 0.0
  %2403 = vmatpush1.msra.mxu0 0.0
  %2404 = vmatprep.subr.mxu0 0.0
  %2405 = vmatpush1.msra.mxu0 0.0
  %2406 = vmatprep.mubr.f32.mxu0 0.0
  %2407 = vmatmul.mubr.f32.gmra.mrb[0].mxu0 %v2340
  %v2408 = vpop.f32.mrb[0].mxu0
  %v2409 = vadd.f32 0.0, %v2408
  %v2410 = vpop.f32.mrb[0].mxu0
  %2411 = vdwg.mxu0
  %s2412 = scalar_lea.vmem [#allocation2], 6
  %v2413 = vld [vmem:[%s2412] sm:$0x3]
  %v2416 = vrot.slane %v2409, 7
  %v2417 = vsel %vm640, %v2416, %v2336
  %v2418 = vsel %vm127, %v2417, 0
  %2420 = vmatprep.subr.mxu0 0.0
  %2421 = vmatpush1.msra.mxu0 %v76
  %2422 = vmatprep.subr.mxu0 0.0
  %2423 = vmatpush1.msra.mxu0 %v77
  %2424 = vmatprep.subr.mxu0 0.0
  %2425 = vmatpush1.msra.mxu0 0.0
  %2426 = vmatprep.subr.mxu0 0.0
  %2427 = vmatpush1.msra.mxu0 0.0
  %2428 = vmatprep.subr.mxu0 0.0
  %2429 = vmatpush1.msra.mxu0 0.0
  %2430 = vmatprep.subr.mxu0 0.0
  %2431 = vmatpush1.msra.mxu0 0.0
  %2432 = vmatprep.subr.mxu0 0.0
  %2433 = vmatpush1.msra.mxu0 0.0
  %2434 = vmatprep.subr.mxu0 0.0
  %2435 = vmatpush1.msra.mxu0 0.0
  %2436 = vmatprep.subr.mxu0 0.0
  %2437 = vmatpush1.msra.mxu0 0.0
  %2438 = vmatprep.subr.mxu0 0.0
  %2439 = vmatpush1.msra.mxu0 0.0
  %2440 = vmatprep.subr.mxu0 0.0
  %2441 = vmatpush1.msra.mxu0 0.0
  %2442 = vmatprep.subr.mxu0 0.0
  %2443 = vmatpush1.msra.mxu0 0.0
  %2444 = vmatprep.subr.mxu0 0.0
  %2445 = vmatpush1.msra.mxu0 0.0
  %2446 = vmatprep.subr.mxu0 0.0
  %2447 = vmatpush1.msra.mxu0 0.0
  %2448 = vmatprep.subr.mxu0 0.0
  %2449 = vmatpush1.msra.mxu0 0.0
  %2450 = vmatprep.subr.mxu0 0.0
  %2451 = vmatpush1.msra.mxu0 0.0
  %2452 = vmatprep.subr.mxu0 0.0
  %2453 = vmatpush1.msra.mxu0 0.0
  %2454 = vmatprep.subr.mxu0 0.0
  %2455 = vmatpush1.msra.mxu0 0.0
  %2456 = vmatprep.subr.mxu0 0.0
  %2457 = vmatpush1.msra.mxu0 0.0
  %2458 = vmatprep.subr.mxu0 0.0
  %2459 = vmatpush1.msra.mxu0 0.0
  %2460 = vmatprep.subr.mxu0 0.0
  %2461 = vmatpush1.msra.mxu0 0.0
  %2462 = vmatprep.subr.mxu0 0.0
  %2463 = vmatpush1.msra.mxu0 0.0
  %2464 = vmatprep.subr.mxu0 0.0
  %2465 = vmatpush1.msra.mxu0 0.0
  %2466 = vmatprep.subr.mxu0 0.0
  %2467 = vmatpush1.msra.mxu0 0.0
  %2468 = vmatprep.subr.mxu0 0.0
  %2469 = vmatpush1.msra.mxu0 0.0
  %2470 = vmatprep.subr.mxu0 0.0
  %2471 = vmatpush1.msra.mxu0 0.0
  %2472 = vmatprep.subr.mxu0 0.0
  %2473 = vmatpush1.msra.mxu0 0.0
  %2474 = vmatprep.subr.mxu0 0.0
  %2475 = vmatpush1.msra.mxu0 0.0
  %2476 = vmatprep.subr.mxu0 0.0
  %2477 = vmatpush1.msra.mxu0 0.0
  %2478 = vmatprep.subr.mxu0 0.0
  %2479 = vmatpush1.msra.mxu0 0.0
  %2480 = vmatprep.subr.mxu0 0.0
  %2481 = vmatpush1.msra.mxu0 0.0
  %2482 = vmatprep.subr.mxu0 0.0
  %2483 = vmatpush1.msra.mxu0 0.0
  %2484 = vmatprep.mubr.f32.mxu0 0.0
  %2485 = vmatmul.mubr.f32.gmra.mrb[0].mxu0 %v2418
  %v2486 = vpop.f32.mrb[0].mxu0
  %v2487 = vadd.f32 0.0, %v2486
  %v2488 = vpop.f32.mrb[0].mxu0
  %2489 = vdwg.mxu0
  %v2490 = vadd.f32 %v2413, %v2487
  %2491 = vmatprep.subr.mxu0 0.0
  %2492 = vmatpush1.msra.mxu0 %v78
  %2493 = vmatprep.subr.mxu0 0.0
  %2494 = vmatpush1.msra.mxu0 %v79
  %2495 = vmatprep.subr.mxu0 0.0
  %2496 = vmatpush1.msra.mxu0 0.0
  %2497 = vmatprep.subr.mxu0 0.0
  %2498 = vmatpush1.msra.mxu0 0.0
  %2499 = vmatprep.subr.mxu0 0.0
  %2500 = vmatpush1.msra.mxu0 0.0
  %2501 = vmatprep.subr.mxu0 0.0
  %2502 = vmatpush1.msra.mxu0 0.0
  %2503 = vmatprep.subr.mxu0 0.0
  %2504 = vmatpush1.msra.mxu0 0.0
  %2505 = vmatprep.subr.mxu0 0.0
  %2506 = vmatpush1.msra.mxu0 0.0
  %2507 = vmatprep.subr.mxu0 0.0
  %2508 = vmatpush1.msra.mxu0 0.0
  %2509 = vmatprep.subr.mxu0 0.0
  %2510 = vmatpush1.msra.mxu0 0.0
  %2511 = vmatprep.subr.mxu0 0.0
  %2512 = vmatpush1.msra.mxu0 0.0
  %2513 = vmatprep.subr.mxu0 0.0
  %2514 = vmatpush1.msra.mxu0 0.0
  %2515 = vmatprep.subr.mxu0 0.0
  %2516 = vmatpush1.msra.mxu0 0.0
  %2517 = vmatprep.subr.mxu0 0.0
  %2518 = vmatpush1.msra.mxu0 0.0
  %2519 = vmatprep.subr.mxu0 0.0
  %2520 = vmatpush1.msra.mxu0 0.0
  %2521 = vmatprep.subr.mxu0 0.0
  %2522 = vmatpush1.msra.mxu0 0.0
  %2523 = vmatprep.subr.mxu0 0.0
  %2524 = vmatpush1.msra.mxu0 0.0
  %2525 = vmatprep.subr.mxu0 0.0
  %2526 = vmatpush1.msra.mxu0 0.0
  %2527 = vmatprep.subr.mxu0 0.0
  %2528 = vmatpush1.msra.mxu0 0.0
  %2529 = vmatprep.subr.mxu0 0.0
  %2530 = vmatpush1.msra.mxu0 0.0
  %2531 = vmatprep.subr.mxu0 0.0
  %2532 = vmatpush1.msra.mxu0 0.0
  %2533 = vmatprep.subr.mxu0 0.0
  %2534 = vmatpush1.msra.mxu0 0.0
  %2535 = vmatprep.subr.mxu0 0.0
  %2536 = vmatpush1.msra.mxu0 0.0
  %2537 = vmatprep.subr.mxu0 0.0
  %2538 = vmatpush1.msra.mxu0 0.0
  %2539 = vmatprep.subr.mxu0 0.0
  %2540 = vmatpush1.msra.mxu0 0.0
  %2541 = vmatprep.subr.mxu0 0.0
  %2542 = vmatpush1.msra.mxu0 0.0
  %2543 = vmatprep.subr.mxu0 0.0
  %2544 = vmatpush1.msra.mxu0 0.0
  %2545 = vmatprep.subr.mxu0 0.0
  %2546 = vmatpush1.msra.mxu0 0.0
  %2547 = vmatprep.subr.mxu0 0.0
  %2548 = vmatpush1.msra.mxu0 0.0
  %2549 = vmatprep.subr.mxu0 0.0
  %2550 = vmatpush1.msra.mxu0 0.0
  %2551 = vmatprep.subr.mxu0 0.0
  %2552 = vmatpush1.msra.mxu0 0.0
  %2553 = vmatprep.subr.mxu0 0.0
  %2554 = vmatpush1.msra.mxu0 0.0
  %2555 = vmatprep.mubr.f32.mxu0 0.0
  %2556 = vmatmul.mubr.f32.gmra.mrb[0].mxu0 %v2000
  %v2557 = vpop.f32.mrb[0].mxu0
  %v2558 = vadd.f32 0.0, %v2557
  %v2559 = vpop.f32.mrb[0].mxu0
  %2560 = vdwg.mxu0
  %v2561 = vadd.f32 %v2490, %v2558
  %v2562 = vxor.u32 %v2561, 2147483648
  %v2563 = vmul.f32 %v2562, 1.442695
  %v2564 = vpow.pop %v2563
  %v2565 = vadd.f32 %v2564, 1.0
  %v2566 = vrcp.pop %v2565
  %v2567 = vmul.f32 1.0, %v2566
  %v2568 = vtanh.pop %v2561
  %v2569 = vmul.f32 %v2567, %v1987
  %2571 = vrot.lane.b32.xlu0 %v2568, 96
  %v2572 = vpop.permute.xlu0 %2571
  %v2574 = vmul.f32 %v2567, %v2572
  %2576 = vrot.lane.b32.xlu0 %v2574, 16
  %v2577 = vpop.permute.xlu0 %2576
  %v2579 = vadd.f32 %v2569, %v2577
  %v2580 = vtanh.pop %v2579
  %2582 = vrot.lane.b32.xlu0 %v2580, 32
  %v2583 = vpop.permute.xlu0 %2582
  %v2585 = vmul.f32 %v2567, %v2583
  %2587 = vrot.lane.b32.xlu0 %v2585, 80
  %v2588 = vpop.permute.xlu0 %2587
  %s2590 = scalar_lea.vmem [#allocation3], 6
  %2591 = vst.msk [vmem:[%s2590] sm:$0x3] %vm814, %v2588
  %v2592 = vsel %vm127, %v2588, 0
  %2594 = vmatprep.subr.mxu0 0.0
  %2595 = vmatpush1.msra.mxu0 %v73
  %2596 = vmatprep.subr.mxu0 0.0
  %2597 = vmatpush1.msra.mxu0 %v74
  %2598 = vmatprep.subr.mxu0 0.0
  %2599 = vmatpush1.msra.mxu0 0.0
  %2600 = vmatprep.subr.mxu0 0.0
  %2601 = vmatpush1.msra.mxu0 0.0
  %2602 = vmatprep.subr.mxu0 0.0
  %2603 = vmatpush1.msra.mxu0 0.0
  %2604 = vmatprep.subr.mxu0 0.0
  %2605 = vmatpush1.msra.mxu0 0.0
  %2606 = vmatprep.subr.mxu0 0.0
  %2607 = vmatpush1.msra.mxu0 0.0
  %2608 = vmatprep.subr.mxu0 0.0
  %2609 = vmatpush1.msra.mxu0 0.0
  %2610 = vmatprep.subr.mxu0 0.0
  %2611 = vmatpush1.msra.mxu0 0.0
  %2612 = vmatprep.subr.mxu0 0.0
  %2613 = vmatpush1.msra.mxu0 0.0
  %2614 = vmatprep.subr.mxu0 0.0
  %2615 = vmatpush1.msra.mxu0 0.0
  %2616 = vmatprep.subr.mxu0 0.0
  %2617 = vmatpush1.msra.mxu0 0.0
  %2618 = vmatprep.subr.mxu0 0.0
  %2619 = vmatpush1.msra.mxu0 0.0
  %2620 = vmatprep.subr.mxu0 0.0
  %2621 = vmatpush1.msra.mxu0 0.0
  %2622 = vmatprep.subr.mxu0 0.0
  %2623 = vmatpush1.msra.mxu0 0.0
  %2624 = vmatprep.subr.mxu0 0.0
  %2625 = vmatpush1.msra.mxu0 0.0
  %2626 = vmatprep.subr.mxu0 0.0
  %2627 = vmatpush1.msra.mxu0 0.0
  %2628 = vmatprep.subr.mxu0 0.0
  %2629 = vmatpush1.msra.mxu0 0.0
  %2630 = vmatprep.subr.mxu0 0.0
  %2631 = vmatpush1.msra.mxu0 0.0
  %2632 = vmatprep.subr.mxu0 0.0
  %2633 = vmatpush1.msra.mxu0 0.0
  %2634 = vmatprep.subr.mxu0 0.0
  %2635 = vmatpush1.msra.mxu0 0.0
  %2636 = vmatprep.subr.mxu0 0.0
  %2637 = vmatpush1.msra.mxu0 0.0
  %2638 = vmatprep.subr.mxu0 0.0
  %2639 = vmatpush1.msra.mxu0 0.0
  %2640 = vmatprep.subr.mxu0 0.0
  %2641 = vmatpush1.msra.mxu0 0.0
  %2642 = vmatprep.subr.mxu0 0.0
  %2643 = vmatpush1.msra.mxu0 0.0
  %2644 = vmatprep.subr.mxu0 0.0
  %2645 = vmatpush1.msra.mxu0 0.0
  %2646 = vmatprep.subr.mxu0 0.0
  %2647 = vmatpush1.msra.mxu0 0.0
  %2648 = vmatprep.subr.mxu0 0.0
  %2649 = vmatpush1.msra.mxu0 0.0
  %2650 = vmatprep.subr.mxu0 0.0
  %2651 = vmatpush1.msra.mxu0 0.0
  %2652 = vmatprep.subr.mxu0 0.0
  %2653 = vmatpush1.msra.mxu0 0.0
  %2654 = vmatprep.subr.mxu0 0.0
  %2655 = vmatpush1.msra.mxu0 0.0
  %2656 = vmatprep.subr.mxu0 0.0
  %2657 = vmatpush1.msra.mxu0 0.0
  %2658 = vmatprep.mubr.f32.mxu0 0.0
  %2659 = vmatmul.mubr.f32.gmra.mrb[0].mxu0 %v2592
  %v2660 = vpop.f32.mrb[0].mxu0
  %v2661 = vadd.f32 %v213, %v2660
  %v2662 = vpop.f32.mrb[0].mxu0
  %2663 = vdwg.mxu0
  %v2664 = vtanh.pop %v2661
  %v2667 = vunpack.c.l.s4 1966171168
  %v2668 = vunpack.c.0.s8 %v2667
  %v2669 = vlaneseq
  %v2670 = vshrl.u32 %v2669, 7
  %v2671 = vsub.s32 %v2668, %v2670
  %v2672 = vrot.slane %v2664, %v2671
  %v2673 = vcombine.high %v2672, %v2672
  %v2675 = vunpack.c.l.s4 1966171168
  %v2676 = vunpack.c.0.s8 %v2675
  %v2677 = vlaneseq
  %v2678 = vshrl.u32 %v2677, 7
  %v2679 = vsub.s32 %v2676, %v2678
  %v2680 = vrot.slane %v2672, %v2679
  %v2682 = vunpack.c.l.s4 1966171168
  %v2683 = vunpack.c.0.s8 %v2682
  %v2684 = vlaneseq
  %v2685 = vshrl.u32 %v2684, 7
  %v2686 = vsub.s32 %v2683, %v2685
  %v2687 = vrot.slane %v2673, %v2686
  %v2688 = vsel %vm127, %v2680, 0
  %2690 = vmatprep.subr.mxu0 0.0
  %2691 = vmatpush1.xpose.msra.mxu0 %v315
  %2692 = vmatprep.subr.mxu0 0.0
  %2693 = vmatpush1.xpose.msra.mxu0 0.0
  %2694 = vmatprep.subr.mxu0 0.0
  %2695 = vmatpush1.xpose.msra.mxu0 0.0
  %2696 = vmatprep.subr.mxu0 0.0
  %2697 = vmatpush1.xpose.msra.mxu0 0.0
  %2698 = vmatprep.subr.mxu0 0.0
  %2699 = vmatpush1.xpose.msra.mxu0 0.0
  %2700 = vmatprep.subr.mxu0 0.0
  %2701 = vmatpush1.xpose.msra.mxu0 0.0
  %2702 = vmatprep.subr.mxu0 0.0
  %2703 = vmatpush1.xpose.msra.mxu0 0.0
  %2704 = vmatprep.subr.mxu0 0.0
  %2705 = vmatpush1.xpose.msra.mxu0 0.0
  %2706 = vmatprep.subr.mxu0 0.0
  %2707 = vmatpush1.xpose.msra.mxu0 0.0
  %2708 = vmatprep.subr.mxu0 0.0
  %2709 = vmatpush1.xpose.msra.mxu0 0.0
  %2710 = vmatprep.subr.mxu0 0.0
  %2711 = vmatpush1.xpose.msra.mxu0 0.0
  %2712 = vmatprep.subr.mxu0 0.0
  %2713 = vmatpush1.xpose.msra.mxu0 0.0
  %2714 = vmatprep.subr.mxu0 0.0
  %2715 = vmatpush1.xpose.msra.mxu0 0.0
  %2716 = vmatprep.subr.mxu0 0.0
  %2717 = vmatpush1.xpose.msra.mxu0 0.0
  %2718 = vmatprep.subr.mxu0 0.0
  %2719 = vmatpush1.xpose.msra.mxu0 0.0
  %2720 = vmatprep.subr.mxu0 0.0
  %2721 = vmatpush1.xpose.msra.mxu0 0.0
  %2722 = vmatprep.subr.mxu0 0.0
  %2723 = vmatpush1.xpose.msra.mxu0 0.0
  %2724 = vmatprep.subr.mxu0 0.0
  %2725 = vmatpush1.xpose.msra.mxu0 0.0
  %2726 = vmatprep.subr.mxu0 0.0
  %2727 = vmatpush1.xpose.msra.mxu0 0.0
  %2728 = vmatprep.subr.mxu0 0.0
  %2729 = vmatpush1.xpose.msra.mxu0 0.0
  %2730 = vmatprep.subr.mxu0 0.0
  %2731 = vmatpush1.xpose.msra.mxu0 0.0
  %2732 = vmatprep.subr.mxu0 0.0
  %2733 = vmatpush1.xpose.msra.mxu0 0.0
  %2734 = vmatprep.subr.mxu0 0.0
  %2735 = vmatpush1.xpose.msra.mxu0 0.0
  %2736 = vmatprep.subr.mxu0 0.0
  %2737 = vmatpush1.xpose.msra.mxu0 0.0
  %2738 = vmatprep.subr.mxu0 0.0
  %2739 = vmatpush1.xpose.msra.mxu0 0.0
  %2740 = vmatprep.subr.mxu0 0.0
  %2741 = vmatpush1.xpose.msra.mxu0 0.0
  %2742 = vmatprep.subr.mxu0 0.0
  %2743 = vmatpush1.xpose.msra.mxu0 0.0
  %2744 = vmatprep.subr.mxu0 0.0
  %2745 = vmatpush1.xpose.msra.mxu0 0.0
  %2746 = vmatprep.subr.mxu0 0.0
  %2747 = vmatpush1.xpose.msra.mxu0 0.0
  %2748 = vmatprep.subr.mxu0 0.0
  %2749 = vmatpush1.xpose.msra.mxu0 0.0
  %2750 = vmatprep.subr.mxu0 0.0
  %2751 = vmatpush1.xpose.msra.mxu0 0.0
  %2752 = vmatprep.subr.mxu0 0.0
  %2753 = vmatpush1.xpose.msra.mxu0 0.0
  %2754 = vmatprep.mubr.f32.mxu0 0.0
  %2755 = vmatmul.mubr.f32.gmra.mrb[0].mxu0 %v2688
  %v2756 = vpop.f32.mrb[0].mxu0
  %v2757 = vadd.f32 0.0, %v2756
  %v2758 = vpop.f32.mrb[0].mxu0
  %2759 = vdwg.mxu0
  %v2760 = vsel %vm127, %v2687, 0
  %2762 = vmatprep.subr.mxu0 0.0
  %2763 = vmatpush1.xpose.msra.mxu0 %v390
  %2764 = vmatprep.subr.mxu0 0.0
  %2765 = vmatpush1.xpose.msra.mxu0 0.0
  %2766 = vmatprep.subr.mxu0 0.0
  %2767 = vmatpush1.xpose.msra.mxu0 0.0
  %2768 = vmatprep.subr.mxu0 0.0
  %2769 = vmatpush1.xpose.msra.mxu0 0.0
  %2770 = vmatprep.subr.mxu0 0.0
  %2771 = vmatpush1.xpose.msra.mxu0 0.0
  %2772 = vmatprep.subr.mxu0 0.0
  %2773 = vmatpush1.xpose.msra.mxu0 0.0
  %2774 = vmatprep.subr.mxu0 0.0
  %2775 = vmatpush1.xpose.msra.mxu0 0.0
  %2776 = vmatprep.subr.mxu0 0.0
  %2777 = vmatpush1.xpose.msra.mxu0 0.0
  %2778 = vmatprep.subr.mxu0 0.0
  %2779 = vmatpush1.xpose.msra.mxu0 0.0
  %2780 = vmatprep.subr.mxu0 0.0
  %2781 = vmatpush1.xpose.msra.mxu0 0.0
  %2782 = vmatprep.subr.mxu0 0.0
  %2783 = vmatpush1.xpose.msra.mxu0 0.0
  %2784 = vmatprep.subr.mxu0 0.0
  %2785 = vmatpush1.xpose.msra.mxu0 0.0
  %2786 = vmatprep.subr.mxu0 0.0
  %2787 = vmatpush1.xpose.msra.mxu0 0.0
  %2788 = vmatprep.subr.mxu0 0.0
  %2789 = vmatpush1.xpose.msra.mxu0 0.0
  %2790 = vmatprep.subr.mxu0 0.0
  %2791 = vmatpush1.xpose.msra.mxu0 0.0
  %2792 = vmatprep.subr.mxu0 0.0
  %2793 = vmatpush1.xpose.msra.mxu0 0.0
  %2794 = vmatprep.subr.mxu0 0.0
  %2795 = vmatpush1.xpose.msra.mxu0 0.0
  %2796 = vmatprep.subr.mxu0 0.0
  %2797 = vmatpush1.xpose.msra.mxu0 0.0
  %2798 = vmatprep.subr.mxu0 0.0
  %2799 = vmatpush1.xpose.msra.mxu0 0.0
  %2800 = vmatprep.subr.mxu0 0.0
  %2801 = vmatpush1.xpose.msra.mxu0 0.0
  %2802 = vmatprep.subr.mxu0 0.0
  %2803 = vmatpush1.xpose.msra.mxu0 0.0
  %2804 = vmatprep.subr.mxu0 0.0
  %2805 = vmatpush1.xpose.msra.mxu0 0.0
  %2806 = vmatprep.subr.mxu0 0.0
  %2807 = vmatpush1.xpose.msra.mxu0 0.0
  %2808 = vmatprep.subr.mxu0 0.0
  %2809 = vmatpush1.xpose.msra.mxu0 0.0
  %2810 = vmatprep.subr.mxu0 0.0
  %2811 = vmatpush1.xpose.msra.mxu0 0.0
  %2812 = vmatprep.subr.mxu0 0.0
  %2813 = vmatpush1.xpose.msra.mxu0 0.0
  %2814 = vmatprep.subr.mxu0 0.0
  %2815 = vmatpush1.xpose.msra.mxu0 0.0
  %2816 = vmatprep.subr.mxu0 0.0
  %2817 = vmatpush1.xpose.msra.mxu0 0.0
  %2818 = vmatprep.subr.mxu0 0.0
  %2819 = vmatpush1.xpose.msra.mxu0 0.0
  %2820 = vmatprep.subr.mxu0 0.0
  %2821 = vmatpush1.xpose.msra.mxu0 0.0
  %2822 = vmatprep.subr.mxu0 0.0
  %2823 = vmatpush1.xpose.msra.mxu0 0.0
  %2824 = vmatprep.subr.mxu0 0.0
  %2825 = vmatpush1.xpose.msra.mxu0 0.0
  %2826 = vmatprep.mubr.f32.mxu0 0.0
  %2827 = vmatmul.mubr.f32.gmra.mrb[0].mxu0 %v2760
  %v2828 = vpop.f32.mrb[0].mxu0
  %v2829 = vadd.f32 0.0, %v2828
  %v2830 = vpop.f32.mrb[0].mxu0
  %2831 = vdwg.mxu0
  %v2832 = vmul.f32 %v2757, 2.0
  %v2833 = vmul.f32 %v2829, 2.0
  %v2834 = vsel %vm71, %v2832, -1e+30
  %v2835 = vsel %vm72, %v2833, -1e+30
  %v2836 = vsel %vm466, %v2834, -inf
  %2837 = vmax.xlane.f32.xlu0 %v2836
  %v2838 = vpop.xlane.xlu0 %2837
  %v2839 = vsel %vm466, %v2835, -inf
  %2840 = vmax.xlane.f32.xlu0 %v2839
  %v2841 = vpop.xlane.xlu0 %2840
  %v2842 = vsub.f32 %v2834, %v2838
  %v2843 = vsub.f32 %v2835, %v2841
  %v2844 = vmul.f32 %v2842, 1.442695
  %v2845 = vpow.pop %v2844
  %v2846 = vmul.f32 %v2843, 1.442695
  %v2847 = vpow.pop %v2846
  %v2848 = vsel %vm466, %v2845, 0.0
  %2849 = vadd.xlane.f32.xlu0 %v2848
  %v2850 = vpop.xlane.xlu0 %2849
  %v2851 = vsel %vm466, %v2847, 0.0
  %2852 = vadd.xlane.f32.xlu0 %v2851
  %v2853 = vpop.xlane.xlu0 %2852
  %v2854 = vrcp.pop %v2850
  %v2855 = vmul.f32 %v2845, %v2854
  %v2856 = vrcp.pop %v2853
  %v2857 = vmul.f32 %v2847, %v2856
  %v2859 = vsel %vm489, %v2855, 0
  %2861 = vmatprep.subr.mxu0 0.0
  %2862 = vmatpush1.msra.mxu0 %v42
  %2863 = vmatprep.subr.mxu0 0.0
  %2864 = vmatpush1.msra.mxu0 0.0
  %2865 = vmatprep.subr.mxu0 0.0
  %2866 = vmatpush1.msra.mxu0 0.0
  %2867 = vmatprep.subr.mxu0 0.0
  %2868 = vmatpush1.msra.mxu0 0.0
  %2869 = vmatprep.subr.mxu0 0.0
  %2870 = vmatpush1.msra.mxu0 0.0
  %2871 = vmatprep.subr.mxu0 0.0
  %2872 = vmatpush1.msra.mxu0 0.0
  %2873 = vmatprep.subr.mxu0 0.0
  %2874 = vmatpush1.msra.mxu0 0.0
  %2875 = vmatprep.subr.mxu0 0.0
  %2876 = vmatpush1.msra.mxu0 0.0
  %2877 = vmatprep.subr.mxu0 0.0
  %2878 = vmatpush1.msra.mxu0 0.0
  %2879 = vmatprep.subr.mxu0 0.0
  %2880 = vmatpush1.msra.mxu0 0.0
  %2881 = vmatprep.subr.mxu0 0.0
  %2882 = vmatpush1.msra.mxu0 0.0
  %2883 = vmatprep.subr.mxu0 0.0
  %2884 = vmatpush1.msra.mxu0 0.0
  %2885 = vmatprep.subr.mxu0 0.0
  %2886 = vmatpush1.msra.mxu0 0.0
  %2887 = vmatprep.subr.mxu0 0.0
  %2888 = vmatpush1.msra.mxu0 0.0
  %2889 = vmatprep.subr.mxu0 0.0
  %2890 = vmatpush1.msra.mxu0 0.0
  %2891 = vmatprep.subr.mxu0 0.0
  %2892 = vmatpush1.msra.mxu0 0.0
  %2893 = vmatprep.subr.mxu0 0.0
  %2894 = vmatpush1.msra.mxu0 0.0
  %2895 = vmatprep.subr.mxu0 0.0
  %2896 = vmatpush1.msra.mxu0 0.0
  %2897 = vmatprep.subr.mxu0 0.0
  %2898 = vmatpush1.msra.mxu0 0.0
  %2899 = vmatprep.subr.mxu0 0.0
  %2900 = vmatpush1.msra.mxu0 0.0
  %2901 = vmatprep.subr.mxu0 0.0
  %2902 = vmatpush1.msra.mxu0 0.0
  %2903 = vmatprep.subr.mxu0 0.0
  %2904 = vmatpush1.msra.mxu0 0.0
  %2905 = vmatprep.subr.mxu0 0.0
  %2906 = vmatpush1.msra.mxu0 0.0
  %2907 = vmatprep.subr.mxu0 0.0
  %2908 = vmatpush1.msra.mxu0 0.0
  %2909 = vmatprep.subr.mxu0 0.0
  %2910 = vmatpush1.msra.mxu0 0.0
  %2911 = vmatprep.subr.mxu0 0.0
  %2912 = vmatpush1.msra.mxu0 0.0
  %2913 = vmatprep.subr.mxu0 0.0
  %2914 = vmatpush1.msra.mxu0 0.0
  %2915 = vmatprep.subr.mxu0 0.0
  %2916 = vmatpush1.msra.mxu0 0.0
  %2917 = vmatprep.subr.mxu0 0.0
  %2918 = vmatpush1.msra.mxu0 0.0
  %2919 = vmatprep.subr.mxu0 0.0
  %2920 = vmatpush1.msra.mxu0 0.0
  %2921 = vmatprep.subr.mxu0 0.0
  %2922 = vmatpush1.msra.mxu0 0.0
  %2923 = vmatprep.subr.mxu0 0.0
  %2924 = vmatpush1.msra.mxu0 0.0
  %2925 = vmatprep.mubr.f32.mxu0 0.0
  %2926 = vmatmul.mubr.f32.gmra.mrb[0].mxu0 %v2859
  %v2927 = vpop.f32.mrb[0].mxu0
  %v2928 = vadd.f32 0.0, %v2927
  %v2929 = vpop.f32.mrb[0].mxu0
  %2930 = vdwg.mxu0
  %v2932 = vsel %vm489, %v2857, 0
  %2934 = vmatprep.subr.mxu0 0.0
  %2935 = vmatpush1.msra.mxu0 %v43
  %2936 = vmatprep.subr.mxu0 0.0
  %2937 = vmatpush1.msra.mxu0 0.0
  %2938 = vmatprep.subr.mxu0 0.0
  %2939 = vmatpush1.msra.mxu0 0.0
  %2940 = vmatprep.subr.mxu0 0.0
  %2941 = vmatpush1.msra.mxu0 0.0
  %2942 = vmatprep.subr.mxu0 0.0
  %2943 = vmatpush1.msra.mxu0 0.0
  %2944 = vmatprep.subr.mxu0 0.0
  %2945 = vmatpush1.msra.mxu0 0.0
  %2946 = vmatprep.subr.mxu0 0.0
  %2947 = vmatpush1.msra.mxu0 0.0
  %2948 = vmatprep.subr.mxu0 0.0
  %2949 = vmatpush1.msra.mxu0 0.0
  %2950 = vmatprep.subr.mxu0 0.0
  %2951 = vmatpush1.msra.mxu0 0.0
  %2952 = vmatprep.subr.mxu0 0.0
  %2953 = vmatpush1.msra.mxu0 0.0
  %2954 = vmatprep.subr.mxu0 0.0
  %2955 = vmatpush1.msra.mxu0 0.0
  %2956 = vmatprep.subr.mxu0 0.0
  %2957 = vmatpush1.msra.mxu0 0.0
  %2958 = vmatprep.subr.mxu0 0.0
  %2959 = vmatpush1.msra.mxu0 0.0
  %2960 = vmatprep.subr.mxu0 0.0
  %2961 = vmatpush1.msra.mxu0 0.0
  %2962 = vmatprep.subr.mxu0 0.0
  %2963 = vmatpush1.msra.mxu0 0.0
  %2964 = vmatprep.subr.mxu0 0.0
  %2965 = vmatpush1.msra.mxu0 0.0
  %2966 = vmatprep.subr.mxu0 0.0
  %2967 = vmatpush1.msra.mxu0 0.0
  %2968 = vmatprep.subr.mxu0 0.0
  %2969 = vmatpush1.msra.mxu0 0.0
  %2970 = vmatprep.subr.mxu0 0.0
  %2971 = vmatpush1.msra.mxu0 0.0
  %2972 = vmatprep.subr.mxu0 0.0
  %2973 = vmatpush1.msra.mxu0 0.0
  %2974 = vmatprep.subr.mxu0 0.0
  %2975 = vmatpush1.msra.mxu0 0.0
  %2976 = vmatprep.subr.mxu0 0.0
  %2977 = vmatpush1.msra.mxu0 0.0
  %2978 = vmatprep.subr.mxu0 0.0
  %2979 = vmatpush1.msra.mxu0 0.0
  %2980 = vmatprep.subr.mxu0 0.0
  %2981 = vmatpush1.msra.mxu0 0.0
  %2982 = vmatprep.subr.mxu0 0.0
  %2983 = vmatpush1.msra.mxu0 0.0
  %2984 = vmatprep.subr.mxu0 0.0
  %2985 = vmatpush1.msra.mxu0 0.0
  %2986 = vmatprep.subr.mxu0 0.0
  %2987 = vmatpush1.msra.mxu0 0.0
  %2988 = vmatprep.subr.mxu0 0.0
  %2989 = vmatpush1.msra.mxu0 0.0
  %2990 = vmatprep.subr.mxu0 0.0
  %2991 = vmatpush1.msra.mxu0 0.0
  %2992 = vmatprep.subr.mxu0 0.0
  %2993 = vmatpush1.msra.mxu0 0.0
  %2994 = vmatprep.subr.mxu0 0.0
  %2995 = vmatpush1.msra.mxu0 0.0
  %2996 = vmatprep.subr.mxu0 0.0
  %2997 = vmatpush1.msra.mxu0 0.0
  %2998 = vmatprep.mubr.f32.mxu0 0.0
  %2999 = vmatmul.mubr.f32.gmra.mrb[0].mxu0 %v2932
  %v3000 = vpop.f32.mrb[0].mxu0
  %v3001 = vadd.f32 0.0, %v3000
  %v3002 = vpop.f32.mrb[0].mxu0
  %3003 = vdwg.mxu0
  %s3004 = scalar_lea.vmem [#allocation2], 8
  %v3005 = vld [vmem:[%s3004] sm:$0x3]
  %v3008 = vrot.slane %v3001, 7
  %v3009 = vsel %vm640, %v3008, %v2928
  %v3010 = vsel %vm127, %v3009, 0
  %3012 = vmatprep.subr.mxu0 0.0
  %3013 = vmatpush1.msra.mxu0 %v76
  %3014 = vmatprep.subr.mxu0 0.0
  %3015 = vmatpush1.msra.mxu0 %v77
  %3016 = vmatprep.subr.mxu0 0.0
  %3017 = vmatpush1.msra.mxu0 0.0
  %3018 = vmatprep.subr.mxu0 0.0
  %3019 = vmatpush1.msra.mxu0 0.0
  %3020 = vmatprep.subr.mxu0 0.0
  %3021 = vmatpush1.msra.mxu0 0.0
  %3022 = vmatprep.subr.mxu0 0.0
  %3023 = vmatpush1.msra.mxu0 0.0
  %3024 = vmatprep.subr.mxu0 0.0
  %3025 = vmatpush1.msra.mxu0 0.0
  %3026 = vmatprep.subr.mxu0 0.0
  %3027 = vmatpush1.msra.mxu0 0.0
  %3028 = vmatprep.subr.mxu0 0.0
  %3029 = vmatpush1.msra.mxu0 0.0
  %3030 = vmatprep.subr.mxu0 0.0
  %3031 = vmatpush1.msra.mxu0 0.0
  %3032 = vmatprep.subr.mxu0 0.0
  %3033 = vmatpush1.msra.mxu0 0.0
  %3034 = vmatprep.subr.mxu0 0.0
  %3035 = vmatpush1.msra.mxu0 0.0
  %3036 = vmatprep.subr.mxu0 0.0
  %3037 = vmatpush1.msra.mxu0 0.0
  %3038 = vmatprep.subr.mxu0 0.0
  %3039 = vmatpush1.msra.mxu0 0.0
  %3040 = vmatprep.subr.mxu0 0.0
  %3041 = vmatpush1.msra.mxu0 0.0
  %3042 = vmatprep.subr.mxu0 0.0
  %3043 = vmatpush1.msra.mxu0 0.0
  %3044 = vmatprep.subr.mxu0 0.0
  %3045 = vmatpush1.msra.mxu0 0.0
  %3046 = vmatprep.subr.mxu0 0.0
  %3047 = vmatpush1.msra.mxu0 0.0
  %3048 = vmatprep.subr.mxu0 0.0
  %3049 = vmatpush1.msra.mxu0 0.0
  %3050 = vmatprep.subr.mxu0 0.0
  %3051 = vmatpush1.msra.mxu0 0.0
  %3052 = vmatprep.subr.mxu0 0.0
  %3053 = vmatpush1.msra.mxu0 0.0
  %3054 = vmatprep.subr.mxu0 0.0
  %3055 = vmatpush1.msra.mxu0 0.0
  %3056 = vmatprep.subr.mxu0 0.0
  %3057 = vmatpush1.msra.mxu0 0.0
  %3058 = vmatprep.subr.mxu0 0.0
  %3059 = vmatpush1.msra.mxu0 0.0
  %3060 = vmatprep.subr.mxu0 0.0
  %3061 = vmatpush1.msra.mxu0 0.0
  %3062 = vmatprep.subr.mxu0 0.0
  %3063 = vmatpush1.msra.mxu0 0.0
  %3064 = vmatprep.subr.mxu0 0.0
  %3065 = vmatpush1.msra.mxu0 0.0
  %3066 = vmatprep.subr.mxu0 0.0
  %3067 = vmatpush1.msra.mxu0 0.0
  %3068 = vmatprep.subr.mxu0 0.0
  %3069 = vmatpush1.msra.mxu0 0.0
  %3070 = vmatprep.subr.mxu0 0.0
  %3071 = vmatpush1.msra.mxu0 0.0
  %3072 = vmatprep.subr.mxu0 0.0
  %3073 = vmatpush1.msra.mxu0 0.0
  %3074 = vmatprep.subr.mxu0 0.0
  %3075 = vmatpush1.msra.mxu0 0.0
  %3076 = vmatprep.mubr.f32.mxu0 0.0
  %3077 = vmatmul.mubr.f32.gmra.mrb[0].mxu0 %v3010
  %v3078 = vpop.f32.mrb[0].mxu0
  %v3079 = vadd.f32 0.0, %v3078
  %v3080 = vpop.f32.mrb[0].mxu0
  %3081 = vdwg.mxu0
  %v3082 = vadd.f32 %v3005, %v3079
  %3083 = vmatprep.subr.mxu0 0.0
  %3084 = vmatpush1.msra.mxu0 %v78
  %3085 = vmatprep.subr.mxu0 0.0
  %3086 = vmatpush1.msra.mxu0 %v79
  %3087 = vmatprep.subr.mxu0 0.0
  %3088 = vmatpush1.msra.mxu0 0.0
  %3089 = vmatprep.subr.mxu0 0.0
  %3090 = vmatpush1.msra.mxu0 0.0
  %3091 = vmatprep.subr.mxu0 0.0
  %3092 = vmatpush1.msra.mxu0 0.0
  %3093 = vmatprep.subr.mxu0 0.0
  %3094 = vmatpush1.msra.mxu0 0.0
  %3095 = vmatprep.subr.mxu0 0.0
  %3096 = vmatpush1.msra.mxu0 0.0
  %3097 = vmatprep.subr.mxu0 0.0
  %3098 = vmatpush1.msra.mxu0 0.0
  %3099 = vmatprep.subr.mxu0 0.0
  %3100 = vmatpush1.msra.mxu0 0.0
  %3101 = vmatprep.subr.mxu0 0.0
  %3102 = vmatpush1.msra.mxu0 0.0
  %3103 = vmatprep.subr.mxu0 0.0
  %3104 = vmatpush1.msra.mxu0 0.0
  %3105 = vmatprep.subr.mxu0 0.0
  %3106 = vmatpush1.msra.mxu0 0.0
  %3107 = vmatprep.subr.mxu0 0.0
  %3108 = vmatpush1.msra.mxu0 0.0
  %3109 = vmatprep.subr.mxu0 0.0
  %3110 = vmatpush1.msra.mxu0 0.0
  %3111 = vmatprep.subr.mxu0 0.0
  %3112 = vmatpush1.msra.mxu0 0.0
  %3113 = vmatprep.subr.mxu0 0.0
  %3114 = vmatpush1.msra.mxu0 0.0
  %3115 = vmatprep.subr.mxu0 0.0
  %3116 = vmatpush1.msra.mxu0 0.0
  %3117 = vmatprep.subr.mxu0 0.0
  %3118 = vmatpush1.msra.mxu0 0.0
  %3119 = vmatprep.subr.mxu0 0.0
  %3120 = vmatpush1.msra.mxu0 0.0
  %3121 = vmatprep.subr.mxu0 0.0
  %3122 = vmatpush1.msra.mxu0 0.0
  %3123 = vmatprep.subr.mxu0 0.0
  %3124 = vmatpush1.msra.mxu0 0.0
  %3125 = vmatprep.subr.mxu0 0.0
  %3126 = vmatpush1.msra.mxu0 0.0
  %3127 = vmatprep.subr.mxu0 0.0
  %3128 = vmatpush1.msra.mxu0 0.0
  %3129 = vmatprep.subr.mxu0 0.0
  %3130 = vmatpush1.msra.mxu0 0.0
  %3131 = vmatprep.subr.mxu0 0.0
  %3132 = vmatpush1.msra.mxu0 0.0
  %3133 = vmatprep.subr.mxu0 0.0
  %3134 = vmatpush1.msra.mxu0 0.0
  %3135 = vmatprep.subr.mxu0 0.0
  %3136 = vmatpush1.msra.mxu0 0.0
  %3137 = vmatprep.subr.mxu0 0.0
  %3138 = vmatpush1.msra.mxu0 0.0
  %3139 = vmatprep.subr.mxu0 0.0
  %3140 = vmatpush1.msra.mxu0 0.0
  %3141 = vmatprep.subr.mxu0 0.0
  %3142 = vmatpush1.msra.mxu0 0.0
  %3143 = vmatprep.subr.mxu0 0.0
  %3144 = vmatpush1.msra.mxu0 0.0
  %3145 = vmatprep.subr.mxu0 0.0
  %3146 = vmatpush1.msra.mxu0 0.0
  %3147 = vmatprep.mubr.f32.mxu0 0.0
  %3148 = vmatmul.mubr.f32.gmra.mrb[0].mxu0 %v2592
  %v3149 = vpop.f32.mrb[0].mxu0
  %v3150 = vadd.f32 0.0, %v3149
  %v3151 = vpop.f32.mrb[0].mxu0
  %3152 = vdwg.mxu0
  %v3153 = vadd.f32 %v3082, %v3150
  %v3154 = vxor.u32 %v3153, 2147483648
  %v3155 = vmul.f32 %v3154, 1.442695
  %v3156 = vpow.pop %v3155
  %v3157 = vadd.f32 %v3156, 1.0
  %v3158 = vrcp.pop %v3157
  %v3159 = vmul.f32 1.0, %v3158
  %v3160 = vtanh.pop %v3153
  %v3161 = vmul.f32 %v3159, %v2579
  %3163 = vrot.lane.b32.xlu0 %v3160, 96
  %v3164 = vpop.permute.xlu0 %3163
  %v3166 = vmul.f32 %v3159, %v3164
  %3168 = vrot.lane.b32.xlu0 %v3166, 16
  %v3169 = vpop.permute.xlu0 %3168
  %v3171 = vadd.f32 %v3161, %v3169
  %v3172 = vtanh.pop %v3171
  %3174 = vrot.lane.b32.xlu0 %v3172, 32
  %v3175 = vpop.permute.xlu0 %3174
  %v3177 = vmul.f32 %v3159, %v3175
  %3179 = vrot.lane.b32.xlu0 %v3177, 80
  %v3180 = vpop.permute.xlu0 %3179
  %s3182 = scalar_lea.vmem [#allocation3], 8
  %3183 = vst.msk [vmem:[%s3182] sm:$0x3] %vm814, %v3180
  %v3184 = vld [vmem:[#allocation3] sm:$0x3]
  %v3185 = vld [vmem:[#allocation3 + $0x2] sm:$0x3]
  %v3186 = vld [vmem:[#allocation3 + $0x4] sm:$0x3]
  %v3187 = vld [vmem:[#allocation3 + $0x6] sm:$0x3]
  %v3188 = vld [vmem:[#allocation3 + $0x8] sm:$0x3]
  %v3194 = vcombine.low %v3184, %v3185
  %v3195 = vcombine.low %v3186, %v3187
  %v3197 = vunpack.c.l.s4 1983009808
  %v3198 = vunpack.c.0.s8 %v3197
  %v3199 = vlaneseq
  %v3200 = vshrl.u32 %v3199, 7
  %v3201 = vsub.s32 %v3198, %v3200
  %v3202 = vrot.slane %v3194, %v3201
  %v3204 = vunpack.c.l.s4 1983009808
  %v3205 = vunpack.c.0.s8 %v3204
  %v3206 = vlaneseq
  %v3207 = vshrl.u32 %v3206, 7
  %v3208 = vsub.s32 %v3205, %v3207
  %v3209 = vrot.slane %v3195, %v3208
  %v3210 = vcombine.low %v3202, %v3209
  %v3212 = vunpack.c.l.s4 1983009808
  %v3213 = vunpack.c.0.s8 %v3212
  %v3214 = vlaneseq
  %v3215 = vshrl.u32 %v3214, 7
  %v3216 = vsub.s32 %v3213, %v3215
  %v3217 = vrot.slane %v3188, %v3216
  %v3220 = vpack.c.bf16 %v3217, %v3210
  %v3221 = vld [vmem:[%s10] sm:$0xff]
  %v3222 = vld [vmem:[%s10 + $0x8] sm:$0xff]
  %v3223 = vpack.c.bf16 %v3222, %v3221
  %v3224 = vld [vmem:[%s11] sm:$0x1]
  %v3226 = vlaneseq
  %v3227 = vshrl.u32 %v3226, 7
  %v3228 = vsub.s32 0, %v3227
  %v3229 = vrot.slane %v3224, %v3228
  %v3232 = vsel %vm127, %v3220, 0
  %3234 = vmatprep.subr.bf16.mxu0 0
  %3235 = vmatpush1.bf16.msra.mxu0 %v3223
  %3236 = vmatprep.subr.bf16.mxu0 0
  %3237 = vmatpush1.bf16.msra.mxu0 0
  %3238 = vmatprep.subr.bf16.mxu0 0
  %3239 = vmatpush1.bf16.msra.mxu0 0
  %3240 = vmatprep.subr.bf16.mxu0 0
  %3241 = vmatpush1.bf16.msra.mxu0 0
  %3242 = vmatprep.subr.bf16.mxu0 0
  %3243 = vmatpush1.bf16.msra.mxu0 0
  %3244 = vmatprep.subr.bf16.mxu0 0
  %3245 = vmatpush1.bf16.msra.mxu0 0
  %3246 = vmatprep.subr.bf16.mxu0 0
  %3247 = vmatpush1.bf16.msra.mxu0 0
  %3248 = vmatprep.subr.bf16.mxu0 0
  %3249 = vmatpush1.bf16.msra.mxu0 0
  %3250 = vmatprep.subr.bf16.mxu0 0
  %3251 = vmatpush1.bf16.msra.mxu0 0
  %3252 = vmatprep.subr.bf16.mxu0 0
  %3253 = vmatpush1.bf16.msra.mxu0 0
  %3254 = vmatprep.subr.bf16.mxu0 0
  %3255 = vmatpush1.bf16.msra.mxu0 0
  %3256 = vmatprep.subr.bf16.mxu0 0
  %3257 = vmatpush1.bf16.msra.mxu0 0
  %3258 = vmatprep.subr.bf16.mxu0 0
  %3259 = vmatpush1.bf16.msra.mxu0 0
  %3260 = vmatprep.subr.bf16.mxu0 0
  %3261 = vmatpush1.bf16.msra.mxu0 0
  %3262 = vmatprep.subr.bf16.mxu0 0
  %3263 = vmatpush1.bf16.msra.mxu0 0
  %3264 = vmatprep.subr.bf16.mxu0 0
  %3265 = vmatpush1.bf16.msra.mxu0 0
  %3266 = vmatprep.mubr.bf16.mxu0 0
  %3267 = vmatmul.mubr.bf16.gmra.mrb[0].mxu0 %v3232
  %v3268 = vpop.f32.mrb[0].mxu0
  %v3269 = vadd.f32 %v3229, %v3268
  %v3270 = vpop.f32.mrb[0].mxu0
  %v3271 = vpop.f32.mrb[0].mxu0
  %v3272 = vadd.f32 %v3229, %v3271
  %v3273 = vpop.f32.mrb[0].mxu0
  %3274 = vdwg.mxu0
  %v3277 = vcombine.high %v3269, %v3269
  %v3279 = vunpack.c.l.s4 1983009808
  %v3280 = vunpack.c.0.s8 %v3279
  %v3281 = vlaneseq
  %v3282 = vshrl.u32 %v3281, 7
  %v3283 = vsub.s32 %v3280, %v3282
  %v3284 = vrot.slane %v3269, %v3283
  %v3286 = vunpack.c.l.s4 1983009808
  %v3287 = vunpack.c.0.s8 %v3286
  %v3288 = vlaneseq
  %v3289 = vshrl.u32 %v3288, 7
  %v3290 = vsub.s32 %v3287, %v3289
  %v3291 = vrot.slane %v3277, %v3290
  %v3292 = vcombine.high %v3284, %v3284
  %v3293 = vcombine.high %v3291, %v3291
  %v3295 = vunpack.c.l.s4 1983009808
  %v3296 = vunpack.c.0.s8 %v3295
  %v3297 = vlaneseq
  %v3298 = vshrl.u32 %v3297, 7
  %v3299 = vsub.s32 %v3296, %v3298
  %v3300 = vrot.slane %v3272, %v3299
  %vm3306 = vcmask 91136
  %3307 = vst.msk [vmem:[%s12] sm:$0x3] %vm3306, %v3284
  %3308 = vst.msk [vmem:[%s12 + $0x2] sm:$0x3] %vm3306, %v3292
  %3309 = vst.msk [vmem:[%s12 + $0x4] sm:$0x3] %vm3306, %v3291
  %3310 = vst.msk [vmem:[%s12 + $0x6] sm:$0x3] %vm3306, %v3293
  %3311 = vst.msk [vmem:[%s12 + $0x8] sm:$0x3] %vm3306, %v3300
  // Predicated region
  $region50: #{e2e_forward.7} parent=0 // pred_check
    _
  $region51: #{e2e_forward.7} parent=0 // pred_check_branch
    %3313 = sbr.rel (0) target = $region53
  $region52: #{e2e_forward.7} parent=0 // pred_region
    _
  $region53: #{e2e_forward.7} parent=0 // pred_fallthru
    _
  // Predicated region
  $region54: #{e2e_forward.7} parent=0 // pred_check
    _
  $region55: #{e2e_forward.7} parent=0 // pred_check_branch
    %3315 = sbr.rel (0) target = $region57
  $region56: #{e2e_forward.7} parent=0 // pred_region
    _
  $region57: #{e2e_forward.7} parent=0 // pred_fallthru
    _

</llo_original>
